<compile_context>
chip_gen: v7x
topology: tpu7x:2x2x1
jax: 0.10.0
libtpu: 0.0.40
codegen_flags: <defaults>
</compile_context>

<pallas_src>
import math
import functools

import jax
import jax.numpy as jnp
from jax import lax
from jax.experimental import pallas as pl
from jax.experimental.pallas import tpu as pltpu


def _softplus(x):
    return float(math.log1p(math.exp(x)))


# -----------------------------------------------------------------------------
# Fused kernel: Kxx/Kxy + masked-noise operator + CG solve + output contractions.
# Flat layout: lane index l = ch*m + j  (channel-major, output point minor).
# -----------------------------------------------------------------------------
def _gp_cg_fused_kernel(xcol_ref, xrow_ref, xoutrep_ref, meanin_ref, mask_ref,
                        noise_ref, unc_ref, meanout_ref, kyx_ref,
                        *, amp, inv_two_ls2, cg_iters):
    x_col = xcol_ref[0]                       # (n, 1)
    x_row = xrow_ref[0]                       # (1, n)
    xo = xoutrep_ref[...]                     # (1, C)  xout[l % m]
    meanin = meanin_ref[0]                    # (n, C)  meanin[:, l // m]
    mask = mask_ref[0]                        # (n, C)  mask[:, l // m]
    noise = noise_ref[0]                      # (n, C)  stdin^2[:, l // m]
    unc = unc_ref[...]                        # (1, C)  unc_scales[l // m]

    # RBF kernel matrices, computed once per batch (exp runs on the EUP slot).
    dxx = x_col - x_row                       # (n, n)
    kxx = amp * jnp.exp(-(dxx * dxx) * inv_two_ls2)
    dxy = x_col - xo                          # (n, C)  == Kxy broadcast over channels
    kxy = amp * jnp.exp(-(dxy * dxy) * inv_two_ls2)

    # Loop-invariant pre-folded factors for the MaskedKxxwNoiseLazy operator:
    #   A M = mask * (Kxx @ (mask_ind * unc * M)) + (noise * mask_ind * mask + 1e-5) * M
    mask_ind = (mask > 0.0).astype(jnp.float32)
    w1 = mask_ind * unc                       # RHS pre-multiplier feeding the MXU
    w2 = noise * mask_ind * mask + 1e-5       # diagonal (per-channel noise + jitter)

    def matvec(p):
        kv = jnp.dot(kxx, w1 * p, preferred_element_type=jnp.float32)  # (n,n)@(n,C)
        return mask * kv + w2 * p

    # inv_matmul rhs: mask * (Kxy_rep * mask)  ==  mask^2 * Kxy_rep
    rhs = mask * mask * kxy                   # (n, C)

    # Per-column CG (alpha/beta per lane, i.e. per (channel, output point) column).
    def body(_, state):
        xs, r, p, rr = state
        ap = matvec(p)
        pap = jnp.sum(p * ap, axis=0, keepdims=True)                   # (1, C)
        alpha = jnp.where(pap > 0.0, rr / jnp.where(pap > 0.0, pap, 1.0), 0.0)
        xs = xs + alpha * p
        r = r - alpha * ap
        rr_new = jnp.sum(r * r, axis=0, keepdims=True)                 # (1, C)
        beta = jnp.where(rr > 0.0, rr_new / jnp.where(rr > 0.0, rr, 1.0), 0.0)
        p = r + beta * p
        return (xs, r, p, rr_new)

    x0 = jnp.zeros_like(rhs)
    rr0 = jnp.sum(rhs * rhs, axis=0, keepdims=True)
    z, _, _, _ = lax.fori_loop(0, cg_iters, body, (x0, rhs, rhs, rr0), unroll=True)

    # KinvKxy = (mask * z) * mask * unc_scales   (flattened layout)
    kinvkxy = z * mask * mask * unc           # (n, C)

    # Output contractions: sublane (n) reductions into lane-dense (1, C) stores.
    meanout_ref[0] = jnp.sum(meanin * kinvkxy, axis=0, keepdims=True)  # (1, C)
    kyx_ref[0] = jnp.sum(kxy * kinvkxy, axis=0, keepdims=True)         # (1, C)


# -----------------------------------------------------------------------------
# GPinterpolateLayer.forward
# -----------------------------------------------------------------------------
def gp_interpolate_forward(x, unc_scales, *, d=1, res=32, nounc=False, cg_iters=32,
                           gp_length_scale_raw=-1.0, gp_scale_raw=-1.0):
    x_in, meanin, stdin, mask, ids = x
    bs, n, dd = x_in.shape
    assert dd == 1, "Implemented for time series"
    c = meanin.shape[2]
    m = res
    C = c * m

    length_scale = _softplus(gp_length_scale_raw)   # F.softplus(self._gp_length_scale)
    scale = _softplus(gp_scale_raw)                 # F.softplus(self._gp_scale)
    amp = scale / (2.0 * math.pi * length_scale ** 2) ** (d / 2.0)
    inv_two_ls2 = 1.0 / (2.0 * length_scale ** 2)

    xout_1d = jnp.linspace(-2.0, 2.0, m, dtype=jnp.float32)             # (m,)
    x_out = jnp.broadcast_to(xout_1d[None, :, None], (bs, m, 1))

    # One-time, tiny layout prep (flat lane index l = ch*m + j, channel-major).
    x_in = x_in.astype(jnp.float32)
    x_row = jnp.transpose(x_in, (0, 2, 1))                              # (bs, 1, n)
    xout_rep = jnp.tile(xout_1d, (c,))[None, :]                         # (1, C)
    meanin_rep = jnp.repeat(meanin.astype(jnp.float32), m, axis=-1)     # (bs, n, C)
    mask_rep = jnp.repeat(mask.astype(jnp.float32), m, axis=-1)         # (bs, n, C)
    noise_rep = jnp.repeat((stdin.astype(jnp.float32)) ** 2, m, axis=-1)  # (bs, n, C)
    unc_rep = jnp.repeat(unc_scales.astype(jnp.float32), m)[None, :]    # (1, C)

    kern = functools.partial(_gp_cg_fused_kernel, amp=amp,
                             inv_two_ls2=inv_two_ls2, cg_iters=cg_iters)

    meanout_flat, kyx_flat = pl.pallas_call(
        kern,
        out_shape=(jax.ShapeDtypeStruct((bs, 1, C), jnp.float32),
                   jax.ShapeDtypeStruct((bs, 1, C), jnp.float32)),
        grid=(bs,),
        in_specs=[pl.BlockSpec((1, n, 1), lambda b: (b, 0, 0)),   # x_in  (column)
                  pl.BlockSpec((1, 1, n), lambda b: (b, 0, 0)),   # x_in  (row)
                  pl.BlockSpec((1, C), lambda b: (0, 0)),         # x_out tiled over c
                  pl.BlockSpec((1, n, C), lambda b: (b, 0, 0)),   # meanin repeated over m
                  pl.BlockSpec((1, n, C), lambda b: (b, 0, 0)),   # mask repeated over m
                  pl.BlockSpec((1, n, C), lambda b: (b, 0, 0)),   # stdin^2 repeated over m
                  pl.BlockSpec((1, C), lambda b: (0, 0))],        # unc_scales per lane
        out_specs=(pl.BlockSpec((1, 1, C), lambda b: (b, 0, 0)),
                   pl.BlockSpec((1, 1, C), lambda b: (b, 0, 0))),
        compiler_params=pltpu.CompilerParams(dimension_semantics=("parallel",)),
    )(x_in, x_row, xout_rep, meanin_rep, mask_rep, noise_rep, unc_rep)

    meanout = jnp.transpose(meanout_flat.reshape(bs, c, m), (0, 2, 1))   # (bs, m, c)

    if nounc:
        return x_out, meanout, jnp.zeros_like(meanout), ids

    k0 = amp                                                            # K0(x_out)
    Kyy = jnp.full((bs, m, 1), k0, jnp.float32) * unc_scales[None, None, :]       # (bs,m,c)
    KyxKinvKxy = (jnp.transpose(kyx_flat.reshape(bs, c, m), (0, 2, 1))
                  * unc_scales[None, None, :])                                     # (bs,m,c)
    std_out = jnp.sqrt(jnp.maximum(Kyy - KyxKinvKxy + 1e-7, 1e-7))
    return x_out, meanout, std_out, ids


if __name__ == "__main__":
    key = jax.random.PRNGKey(0)
    bs, n, cin, res = 2, 16, 4, 32
    k1, k2, k3, k4 = jax.random.split(key, 4)

    x_in = jnp.sort(jax.random.uniform(k1, (bs, n, 1), jnp.float32, -2.0, 2.0), axis=1)
    meanin = jax.random.normal(k2, (bs, n, cin), dtype=jnp.float32)
    stdin = 0.05 + 0.1 * jax.random.uniform(k3, (bs, n, cin), jnp.float32)
    mask = (jax.random.uniform(k4, (bs, n, cin)) > 0.3).astype(jnp.float32)
    ids = jnp.arange(bs, dtype=jnp.int32)

    # Deterministic parameter init (matches the module's __init__):
    #   _gp_unc_scales = 0.55 * ones(cin) ; _gp_length_scale = _gp_scale = -1.0
    unc_scales = jnp.full((cin,), _softplus(0.55), dtype=jnp.float32)

    fwd = jax.jit(functools.partial(gp_interpolate_forward, d=1, res=res,
                                    nounc=False, cg_iters=32))
    x_out, meanout, std_out, ids_out = fwd((x_in, meanin, stdin, mask, ids), unc_scales)
    jax.block_until_ready((x_out, meanout, std_out, ids_out))

    assert x_out.shape == (bs, res, 1)
    assert meanout.shape == (bs, res, cin)
    assert std_out.shape == (bs, res, cin)
    assert bool(jnp.all(jnp.isfinite(meanout))) and bool(jnp.all(jnp.isfinite(std_out)))
    print("KERNEL_OK")
</pallas_src>

<mosaic_0001>
module attributes {stable_mosaic.version = 11 : i64} {
  func.func @_gp_cg_fused_kernel(%arg0: i32, %arg1: memref<1x16x1xf32, #tpu.memory_space<vmem>>, %arg2: memref<1x1x16xf32, #tpu.memory_space<vmem>>, %arg3: memref<1x128xf32, #tpu.memory_space<vmem>>, %arg4: memref<1x16x128xf32, #tpu.memory_space<vmem>>, %arg5: memref<1x16x128xf32, #tpu.memory_space<vmem>>, %arg6: memref<1x16x128xf32, #tpu.memory_space<vmem>>, %arg7: memref<1x128xf32, #tpu.memory_space<vmem>>, %arg8: memref<1x1x128xf32, #tpu.memory_space<vmem>>, %arg9: memref<1x1x128xf32, #tpu.memory_space<vmem>>) attributes {dimension_semantics = [#tpu.dimension_semantics<parallel>], iteration_bounds = array<i64: 2>, scalar_prefetch = 0 : i64, scratch_operands = 0 : i64, tpu.core_type = #tpu.core_type<tc>, window_params = [{transform_indices = @transform_0, window_bounds = array<i64: 1, 16, 1>}, {transform_indices = @transform_1, window_bounds = array<i64: 1, 1, 16>}, {pipeline_mode = #tpu.pipeline_mode<synchronous>, transform_indices = @transform_2, window_bounds = array<i64: 1, 128>}, {transform_indices = @transform_3, window_bounds = array<i64: 1, 16, 128>}, {transform_indices = @transform_4, window_bounds = array<i64: 1, 16, 128>}, {transform_indices = @transform_5, window_bounds = array<i64: 1, 16, 128>}, {pipeline_mode = #tpu.pipeline_mode<synchronous>, transform_indices = @transform_6, window_bounds = array<i64: 1, 128>}, {transform_indices = @transform_7, window_bounds = array<i64: 1, 1, 128>}, {transform_indices = @transform_8, window_bounds = array<i64: 1, 1, 128>}]} {
    %c0 = arith.constant 0 : index
    %c0_0 = arith.constant 0 : index
    %c0_1 = arith.constant 0 : index
    %0 = vector.load %arg1[%c0, %c0_0, %c0_1] : memref<1x16x1xf32, #tpu.memory_space<vmem>>, vector<1x16x1xf32>
    %1 = vector.shape_cast %0 : vector<1x16x1xf32> to vector<16x1xf32>
    %c0_2 = arith.constant 0 : index
    %c0_3 = arith.constant 0 : index
    %c0_4 = arith.constant 0 : index
    %2 = vector.load %arg2[%c0_2, %c0_3, %c0_4] : memref<1x1x16xf32, #tpu.memory_space<vmem>>, vector<1x1x16xf32>
    %3 = vector.shape_cast %2 : vector<1x1x16xf32> to vector<1x16xf32>
    %c0_5 = arith.constant 0 : index
    %c0_6 = arith.constant 0 : index
    %4 = vector.load %arg3[%c0_5, %c0_6] : memref<1x128xf32, #tpu.memory_space<vmem>>, vector<1x128xf32>
    %c0_7 = arith.constant 0 : index
    %c0_8 = arith.constant 0 : index
    %c0_9 = arith.constant 0 : index
    %5 = vector.load %arg4[%c0_7, %c0_8, %c0_9] : memref<1x16x128xf32, #tpu.memory_space<vmem>>, vector<1x16x128xf32>
    %6 = vector.shape_cast %5 : vector<1x16x128xf32> to vector<16x128xf32>
    %c0_10 = arith.constant 0 : index
    %c0_11 = arith.constant 0 : index
    %c0_12 = arith.constant 0 : index
    %7 = vector.load %arg5[%c0_10, %c0_11, %c0_12] : memref<1x16x128xf32, #tpu.memory_space<vmem>>, vector<1x16x128xf32>
    %8 = vector.shape_cast %7 : vector<1x16x128xf32> to vector<16x128xf32>
    %c0_13 = arith.constant 0 : index
    %c0_14 = arith.constant 0 : index
    %c0_15 = arith.constant 0 : index
    %9 = vector.load %arg6[%c0_13, %c0_14, %c0_15] : memref<1x16x128xf32, #tpu.memory_space<vmem>>, vector<1x16x128xf32>
    %10 = vector.shape_cast %9 : vector<1x16x128xf32> to vector<16x128xf32>
    %c0_16 = arith.constant 0 : index
    %c0_17 = arith.constant 0 : index
    %11 = vector.load %arg7[%c0_16, %c0_17] : memref<1x128xf32, #tpu.memory_space<vmem>>, vector<1x128xf32>
    %12 = vector.broadcast %1 : vector<16x1xf32> to vector<16x16xf32>
    %13 = vector.broadcast %3 : vector<1x16xf32> to vector<16x16xf32>
    %14 = arith.subf %12, %13 : vector<16x16xf32>
    %15 = arith.mulf %14, %14 : vector<16x16xf32>
    %cst = arith.constant 0.000000e+00 : f32
    %16 = vector.broadcast %cst : f32 to vector<16x16xf32>
    %17 = arith.subf %16, %15 : vector<16x16xf32>
    %cst_18 = arith.constant 5.09513187 : f32
    %18 = vector.broadcast %cst_18 : f32 to vector<16x16xf32>
    %19 = arith.mulf %17, %18 : vector<16x16xf32>
    %20 = math.exp %19 : vector<16x16xf32>
    %cst_19 = arith.constant 0.398942292 : f32
    %21 = vector.broadcast %cst_19 : f32 to vector<16x16xf32>
    %22 = arith.mulf %21, %20 : vector<16x16xf32>
    %23 = vector.broadcast %1 : vector<16x1xf32> to vector<16x128xf32>
    %24 = vector.broadcast %4 : vector<1x128xf32> to vector<16x128xf32>
    %25 = arith.subf %23, %24 : vector<16x128xf32>
    %26 = arith.mulf %25, %25 : vector<16x128xf32>
    %cst_20 = arith.constant 0.000000e+00 : f32
    %27 = vector.broadcast %cst_20 : f32 to vector<16x128xf32>
    %28 = arith.subf %27, %26 : vector<16x128xf32>
    %cst_21 = arith.constant 5.09513187 : f32
    %29 = vector.broadcast %cst_21 : f32 to vector<16x128xf32>
    %30 = arith.mulf %28, %29 : vector<16x128xf32>
    %31 = math.exp %30 : vector<16x128xf32>
    %cst_22 = arith.constant 0.398942292 : f32
    %32 = vector.broadcast %cst_22 : f32 to vector<16x128xf32>
    %33 = arith.mulf %32, %31 : vector<16x128xf32>
    %cst_23 = arith.constant 0.000000e+00 : f32
    %34 = vector.broadcast %cst_23 : f32 to vector<16x128xf32>
    %35 = arith.cmpf ogt, %8, %34 : vector<16x128xf32>
    %36 = arith.extui %35 : vector<16x128xi1> to vector<16x128xi32>
    %37 = arith.sitofp %36 : vector<16x128xi32> to vector<16x128xf32>
    %38 = vector.broadcast %11 : vector<1x128xf32> to vector<16x128xf32>
    %39 = arith.mulf %37, %38 : vector<16x128xf32>
    %40 = arith.mulf %10, %37 : vector<16x128xf32>
    %41 = arith.mulf %40, %8 : vector<16x128xf32>
    %cst_24 = arith.constant 9.99999974E-6 : f32
    %42 = vector.broadcast %cst_24 : f32 to vector<16x128xf32>
    %43 = arith.addf %41, %42 : vector<16x128xf32>
    %44 = arith.mulf %8, %8 : vector<16x128xf32>
    %45 = arith.mulf %44, %33 : vector<16x128xf32>
    %cst_25 = arith.constant 0.000000e+00 : f32
    %46 = vector.broadcast %cst_25 : f32 to vector<16x128xf32>
    %47 = arith.mulf %45, %45 : vector<16x128xf32>
    %cst_26 = arith.constant dense<0.000000e+00> : vector<128xf32>
    %48 = vector.multi_reduction <add>, %47, %cst_26 [0] : vector<16x128xf32> to vector<128xf32>
    %49 = vector.shape_cast %48 : vector<128xf32> to vector<1x128xf32>
    %c0_i32 = arith.constant 0 : i32
    %50 = arith.mulf %39, %45 : vector<16x128xf32>
    %cst_27 = arith.constant dense<0.000000e+00> : vector<16x128xf32>
    %51 = tpu.matmul %22, %50, %cst_27 {dimension_numbers = #tpu.dot_dimension_numbers<[1], [0], [0], [1], [0, 0, 1, 1], [], []>} : vector<16x16xf32>, vector<16x128xf32>, vector<16x128xf32> -> vector<16x128xf32>
    %52 = arith.mulf %8, %51 : vector<16x128xf32>
    %53 = arith.mulf %43, %45 : vector<16x128xf32>
    %54 = arith.addf %52, %53 : vector<16x128xf32>
    %55 = arith.mulf %45, %54 : vector<16x128xf32>
    %cst_28 = arith.constant dense<0.000000e+00> : vector<128xf32>
    %56 = vector.multi_reduction <add>, %55, %cst_28 [0] : vector<16x128xf32> to vector<128xf32>
    %57 = vector.shape_cast %56 : vector<128xf32> to vector<1x128xf32>
    %cst_29 = arith.constant 0.000000e+00 : f32
    %58 = vector.broadcast %cst_29 : f32 to vector<1x128xf32>
    %59 = arith.cmpf ogt, %57, %58 : vector<1x128xf32>
    %cst_30 = arith.constant 0.000000e+00 : f32
    %60 = vector.broadcast %cst_30 : f32 to vector<1x128xf32>
    %61 = arith.cmpf ogt, %57, %60 : vector<1x128xf32>
    %cst_31 = arith.constant 1.000000e+00 : f32
    %62 = vector.broadcast %cst_31 : f32 to vector<1x128xf32>
    %63 = arith.select %61, %57, %62 : vector<1x128xi1>, vector<1x128xf32>
    %64 = arith.divf %49, %63 : vector<1x128xf32>
    %cst_32 = arith.constant 0.000000e+00 : f32
    %65 = vector.broadcast %cst_32 : f32 to vector<1x128xf32>
    %66 = arith.select %59, %64, %65 : vector<1x128xi1>, vector<1x128xf32>
    %67 = vector.broadcast %66 : vector<1x128xf32> to vector<16x128xf32>
    %68 = arith.mulf %67, %45 : vector<16x128xf32>
    %69 = arith.addf %46, %68 : vector<16x128xf32>
    %70 = vector.broadcast %66 : vector<1x128xf32> to vector<16x128xf32>
    %71 = arith.mulf %70, %54 : vector<16x128xf32>
    %72 = arith.subf %45, %71 : vector<16x128xf32>
    %73 = arith.mulf %72, %72 : vector<16x128xf32>
    %cst_33 = arith.constant dense<0.000000e+00> : vector<128xf32>
    %74 = vector.multi_reduction <add>, %73, %cst_33 [0] : vector<16x128xf32> to vector<128xf32>
    %75 = vector.shape_cast %74 : vector<128xf32> to vector<1x128xf32>
    %cst_34 = arith.constant 0.000000e+00 : f32
    %76 = vector.broadcast %cst_34 : f32 to vector<1x128xf32>
    %77 = arith.cmpf ogt, %49, %76 : vector<1x128xf32>
    %cst_35 = arith.constant 0.000000e+00 : f32
    %78 = vector.broadcast %cst_35 : f32 to vector<1x128xf32>
    %79 = arith.cmpf ogt, %49, %78 : vector<1x128xf32>
    %cst_36 = arith.constant 1.000000e+00 : f32
    %80 = vector.broadcast %cst_36 : f32 to vector<1x128xf32>
    %81 = arith.select %79, %49, %80 : vector<1x128xi1>, vector<1x128xf32>
    %82 = arith.divf %75, %81 : vector<1x128xf32>
    %cst_37 = arith.constant 0.000000e+00 : f32
    %83 = vector.broadcast %cst_37 : f32 to vector<1x128xf32>
    %84 = arith.select %77, %82, %83 : vector<1x128xi1>, vector<1x128xf32>
    %85 = vector.broadcast %84 : vector<1x128xf32> to vector<16x128xf32>
    %86 = arith.mulf %85, %45 : vector<16x128xf32>
    %87 = arith.addf %72, %86 : vector<16x128xf32>
    %c1_i32 = arith.constant 1 : i32
    %88 = arith.mulf %39, %87 : vector<16x128xf32>
    %cst_38 = arith.constant dense<0.000000e+00> : vector<16x128xf32>
    %89 = tpu.matmul %22, %88, %cst_38 {dimension_numbers = #tpu.dot_dimension_numbers<[1], [0], [0], [1], [0, 0, 1, 1], [], []>} : vector<16x16xf32>, vector<16x128xf32>, vector<16x128xf32> -> vector<16x128xf32>
    %90 = arith.mulf %8, %89 : vector<16x128xf32>
    %91 = arith.mulf %43, %87 : vector<16x128xf32>
    %92 = arith.addf %90, %91 : vector<16x128xf32>
    %93 = arith.mulf %87, %92 : vector<16x128xf32>
    %cst_39 = arith.constant dense<0.000000e+00> : vector<128xf32>
    %94 = vector.multi_reduction <add>, %93, %cst_39 [0] : vector<16x128xf32> to vector<128xf32>
    %95 = vector.shape_cast %94 : vector<128xf32> to vector<1x128xf32>
    %cst_40 = arith.constant 0.000000e+00 : f32
    %96 = vector.broadcast %cst_40 : f32 to vector<1x128xf32>
    %97 = arith.cmpf ogt, %95, %96 : vector<1x128xf32>
    %cst_41 = arith.constant 0.000000e+00 : f32
    %98 = vector.broadcast %cst_41 : f32 to vector<1x128xf32>
    %99 = arith.cmpf ogt, %95, %98 : vector<1x128xf32>
    %cst_42 = arith.constant 1.000000e+00 : f32
    %100 = vector.broadcast %cst_42 : f32 to vector<1x128xf32>
    %101 = arith.select %99, %95, %100 : vector<1x128xi1>, vector<1x128xf32>
    %102 = arith.divf %75, %101 : vector<1x128xf32>
    %cst_43 = arith.constant 0.000000e+00 : f32
    %103 = vector.broadcast %cst_43 : f32 to vector<1x128xf32>
    %104 = arith.select %97, %102, %103 : vector<1x128xi1>, vector<1x128xf32>
    %105 = vector.broadcast %104 : vector<1x128xf32> to vector<16x128xf32>
    %106 = arith.mulf %105, %87 : vector<16x128xf32>
    %107 = arith.addf %69, %106 : vector<16x128xf32>
    %108 = vector.broadcast %104 : vector<1x128xf32> to vector<16x128xf32>
    %109 = arith.mulf %108, %92 : vector<16x128xf32>
    %110 = arith.subf %72, %109 : vector<16x128xf32>
    %111 = arith.mulf %110, %110 : vector<16x128xf32>
    %cst_44 = arith.constant dense<0.000000e+00> : vector<128xf32>
    %112 = vector.multi_reduction <add>, %111, %cst_44 [0] : vector<16x128xf32> to vector<128xf32>
    %113 = vector.shape_cast %112 : vector<128xf32> to vector<1x128xf32>
    %cst_45 = arith.constant 0.000000e+00 : f32
    %114 = vector.broadcast %cst_45 : f32 to vector<1x128xf32>
    %115 = arith.cmpf ogt, %75, %114 : vector<1x128xf32>
    %cst_46 = arith.constant 0.000000e+00 : f32
    %116 = vector.broadcast %cst_46 : f32 to vector<1x128xf32>
    %117 = arith.cmpf ogt, %75, %116 : vector<1x128xf32>
    %cst_47 = arith.constant 1.000000e+00 : f32
    %118 = vector.broadcast %cst_47 : f32 to vector<1x128xf32>
    %119 = arith.select %117, %75, %118 : vector<1x128xi1>, vector<1x128xf32>
    %120 = arith.divf %113, %119 : vector<1x128xf32>
    %cst_48 = arith.constant 0.000000e+00 : f32
    %121 = vector.broadcast %cst_48 : f32 to vector<1x128xf32>
    %122 = arith.select %115, %120, %121 : vector<1x128xi1>, vector<1x128xf32>
    %123 = vector.broadcast %122 : vector<1x128xf32> to vector<16x128xf32>
    %124 = arith.mulf %123, %87 : vector<16x128xf32>
    %125 = arith.addf %110, %124 : vector<16x128xf32>
    %c2_i32 = arith.constant 2 : i32
    %126 = arith.mulf %39, %125 : vector<16x128xf32>
    %cst_49 = arith.constant dense<0.000000e+00> : vector<16x128xf32>
    %127 = tpu.matmul %22, %126, %cst_49 {dimension_numbers = #tpu.dot_dimension_numbers<[1], [0], [0], [1], [0, 0, 1, 1], [], []>} : vector<16x16xf32>, vector<16x128xf32>, vector<16x128xf32> -> vector<16x128xf32>
    %128 = arith.mulf %8, %127 : vector<16x128xf32>
    %129 = arith.mulf %43, %125 : vector<16x128xf32>
    %130 = arith.addf %128, %129 : vector<16x128xf32>
    %131 = arith.mulf %125, %130 : vector<16x128xf32>
    %cst_50 = arith.constant dense<0.000000e+00> : vector<128xf32>
    %132 = vector.multi_reduction <add>, %131, %cst_50 [0] : vector<16x128xf32> to vector<128xf32>
    %133 = vector.shape_cast %132 : vector<128xf32> to vector<1x128xf32>
    %cst_51 = arith.constant 0.000000e+00 : f32
    %134 = vector.broadcast %cst_51 : f32 to vector<1x128xf32>
    %135 = arith.cmpf ogt, %133, %134 : vector<1x128xf32>
    %cst_52 = arith.constant 0.000000e+00 : f32
    %136 = vector.broadcast %cst_52 : f32 to vector<1x128xf32>
    %137 = arith.cmpf ogt, %133, %136 : vector<1x128xf32>
    %cst_53 = arith.constant 1.000000e+00 : f32
    %138 = vector.broadcast %cst_53 : f32 to vector<1x128xf32>
    %139 = arith.select %137, %133, %138 : vector<1x128xi1>, vector<1x128xf32>
    %140 = arith.divf %113, %139 : vector<1x128xf32>
    %cst_54 = arith.constant 0.000000e+00 : f32
    %141 = vector.broadcast %cst_54 : f32 to vector<1x128xf32>
    %142 = arith.select %135, %140, %141 : vector<1x128xi1>, vector<1x128xf32>
    %143 = vector.broadcast %142 : vector<1x128xf32> to vector<16x128xf32>
    %144 = arith.mulf %143, %125 : vector<16x128xf32>
    %145 = arith.addf %107, %144 : vector<16x128xf32>
    %146 = vector.broadcast %142 : vector<1x128xf32> to vector<16x128xf32>
    %147 = arith.mulf %146, %130 : vector<16x128xf32>
    %148 = arith.subf %110, %147 : vector<16x128xf32>
    %149 = arith.mulf %148, %148 : vector<16x128xf32>
    %cst_55 = arith.constant dense<0.000000e+00> : vector<128xf32>
    %150 = vector.multi_reduction <add>, %149, %cst_55 [0] : vector<16x128xf32> to vector<128xf32>
    %151 = vector.shape_cast %150 : vector<128xf32> to vector<1x128xf32>
    %cst_56 = arith.constant 0.000000e+00 : f32
    %152 = vector.broadcast %cst_56 : f32 to vector<1x128xf32>
    %153 = arith.cmpf ogt, %113, %152 : vector<1x128xf32>
    %cst_57 = arith.constant 0.000000e+00 : f32
    %154 = vector.broadcast %cst_57 : f32 to vector<1x128xf32>
    %155 = arith.cmpf ogt, %113, %154 : vector<1x128xf32>
    %cst_58 = arith.constant 1.000000e+00 : f32
    %156 = vector.broadcast %cst_58 : f32 to vector<1x128xf32>
    %157 = arith.select %155, %113, %156 : vector<1x128xi1>, vector<1x128xf32>
    %158 = arith.divf %151, %157 : vector<1x128xf32>
    %cst_59 = arith.constant 0.000000e+00 : f32
    %159 = vector.broadcast %cst_59 : f32 to vector<1x128xf32>
    %160 = arith.select %153, %158, %159 : vector<1x128xi1>, vector<1x128xf32>
    %161 = vector.broadcast %160 : vector<1x128xf32> to vector<16x128xf32>
    %162 = arith.mulf %161, %125 : vector<16x128xf32>
    %163 = arith.addf %148, %162 : vector<16x128xf32>
    %c3_i32 = arith.constant 3 : i32
    %164 = arith.mulf %39, %163 : vector<16x128xf32>
    %cst_60 = arith.constant dense<0.000000e+00> : vector<16x128xf32>
    %165 = tpu.matmul %22, %164, %cst_60 {dimension_numbers = #tpu.dot_dimension_numbers<[1], [0], [0], [1], [0, 0, 1, 1], [], []>} : vector<16x16xf32>, vector<16x128xf32>, vector<16x128xf32> -> vector<16x128xf32>
    %166 = arith.mulf %8, %165 : vector<16x128xf32>
    %167 = arith.mulf %43, %163 : vector<16x128xf32>
    %168 = arith.addf %166, %167 : vector<16x128xf32>
    %169 = arith.mulf %163, %168 : vector<16x128xf32>
    %cst_61 = arith.constant dense<0.000000e+00> : vector<128xf32>
    %170 = vector.multi_reduction <add>, %169, %cst_61 [0] : vector<16x128xf32> to vector<128xf32>
    %171 = vector.shape_cast %170 : vector<128xf32> to vector<1x128xf32>
    %cst_62 = arith.constant 0.000000e+00 : f32
    %172 = vector.broadcast %cst_62 : f32 to vector<1x128xf32>
    %173 = arith.cmpf ogt, %171, %172 : vector<1x128xf32>
    %cst_63 = arith.constant 0.000000e+00 : f32
    %174 = vector.broadcast %cst_63 : f32 to vector<1x128xf32>
    %175 = arith.cmpf ogt, %171, %174 : vector<1x128xf32>
    %cst_64 = arith.constant 1.000000e+00 : f32
    %176 = vector.broadcast %cst_64 : f32 to vector<1x128xf32>
    %177 = arith.select %175, %171, %176 : vector<1x128xi1>, vector<1x128xf32>
    %178 = arith.divf %151, %177 : vector<1x128xf32>
    %cst_65 = arith.constant 0.000000e+00 : f32
    %179 = vector.broadcast %cst_65 : f32 to vector<1x128xf32>
    %180 = arith.select %173, %178, %179 : vector<1x128xi1>, vector<1x128xf32>
    %181 = vector.broadcast %180 : vector<1x128xf32> to vector<16x128xf32>
    %182 = arith.mulf %181, %163 : vector<16x128xf32>
    %183 = arith.addf %145, %182 : vector<16x128xf32>
    %184 = vector.broadcast %180 : vector<1x128xf32> to vector<16x128xf32>
    %185 = arith.mulf %184, %168 : vector<16x128xf32>
    %186 = arith.subf %148, %185 : vector<16x128xf32>
    %187 = arith.mulf %186, %186 : vector<16x128xf32>
    %cst_66 = arith.constant dense<0.000000e+00> : vector<128xf32>
    %188 = vector.multi_reduction <add>, %187, %cst_66 [0] : vector<16x128xf32> to vector<128xf32>
    %189 = vector.shape_cast %188 : vector<128xf32> to vector<1x128xf32>
    %cst_67 = arith.constant 0.000000e+00 : f32
    %190 = vector.broadcast %cst_67 : f32 to vector<1x128xf32>
    %191 = arith.cmpf ogt, %151, %190 : vector<1x128xf32>
    %cst_68 = arith.constant 0.000000e+00 : f32
    %192 = vector.broadcast %cst_68 : f32 to vector<1x128xf32>
    %193 = arith.cmpf ogt, %151, %192 : vector<1x128xf32>
    %cst_69 = arith.constant 1.000000e+00 : f32
    %194 = vector.broadcast %cst_69 : f32 to vector<1x128xf32>
    %195 = arith.select %193, %151, %194 : vector<1x128xi1>, vector<1x128xf32>
    %196 = arith.divf %189, %195 : vector<1x128xf32>
    %cst_70 = arith.constant 0.000000e+00 : f32
    %197 = vector.broadcast %cst_70 : f32 to vector<1x128xf32>
    %198 = arith.select %191, %196, %197 : vector<1x128xi1>, vector<1x128xf32>
    %199 = vector.broadcast %198 : vector<1x128xf32> to vector<16x128xf32>
    %200 = arith.mulf %199, %163 : vector<16x128xf32>
    %201 = arith.addf %186, %200 : vector<16x128xf32>
    %c4_i32 = arith.constant 4 : i32
    %202 = arith.mulf %39, %201 : vector<16x128xf32>
    %cst_71 = arith.constant dense<0.000000e+00> : vector<16x128xf32>
    %203 = tpu.matmul %22, %202, %cst_71 {dimension_numbers = #tpu.dot_dimension_numbers<[1], [0], [0], [1], [0, 0, 1, 1], [], []>} : vector<16x16xf32>, vector<16x128xf32>, vector<16x128xf32> -> vector<16x128xf32>
    %204 = arith.mulf %8, %203 : vector<16x128xf32>
    %205 = arith.mulf %43, %201 : vector<16x128xf32>
    %206 = arith.addf %204, %205 : vector<16x128xf32>
    %207 = arith.mulf %201, %206 : vector<16x128xf32>
    %cst_72 = arith.constant dense<0.000000e+00> : vector<128xf32>
    %208 = vector.multi_reduction <add>, %207, %cst_72 [0] : vector<16x128xf32> to vector<128xf32>
    %209 = vector.shape_cast %208 : vector<128xf32> to vector<1x128xf32>
    %cst_73 = arith.constant 0.000000e+00 : f32
    %210 = vector.broadcast %cst_73 : f32 to vector<1x128xf32>
    %211 = arith.cmpf ogt, %209, %210 : vector<1x128xf32>
    %cst_74 = arith.constant 0.000000e+00 : f32
    %212 = vector.broadcast %cst_74 : f32 to vector<1x128xf32>
    %213 = arith.cmpf ogt, %209, %212 : vector<1x128xf32>
    %cst_75 = arith.constant 1.000000e+00 : f32
    %214 = vector.broadcast %cst_75 : f32 to vector<1x128xf32>
    %215 = arith.select %213, %209, %214 : vector<1x128xi1>, vector<1x128xf32>
    %216 = arith.divf %189, %215 : vector<1x128xf32>
    %cst_76 = arith.constant 0.000000e+00 : f32
    %217 = vector.broadcast %cst_76 : f32 to vector<1x128xf32>
    %218 = arith.select %211, %216, %217 : vector<1x128xi1>, vector<1x128xf32>
    %219 = vector.broadcast %218 : vector<1x128xf32> to vector<16x128xf32>
    %220 = arith.mulf %219, %201 : vector<16x128xf32>
    %221 = arith.addf %183, %220 : vector<16x128xf32>
    %222 = vector.broadcast %218 : vector<1x128xf32> to vector<16x128xf32>
    %223 = arith.mulf %222, %206 : vector<16x128xf32>
    %224 = arith.subf %186, %223 : vector<16x128xf32>
    %225 = arith.mulf %224, %224 : vector<16x128xf32>
    %cst_77 = arith.constant dense<0.000000e+00> : vector<128xf32>
    %226 = vector.multi_reduction <add>, %225, %cst_77 [0] : vector<16x128xf32> to vector<128xf32>
    %227 = vector.shape_cast %226 : vector<128xf32> to vector<1x128xf32>
    %cst_78 = arith.constant 0.000000e+00 : f32
    %228 = vector.broadcast %cst_78 : f32 to vector<1x128xf32>
    %229 = arith.cmpf ogt, %189, %228 : vector<1x128xf32>
    %cst_79 = arith.constant 0.000000e+00 : f32
    %230 = vector.broadcast %cst_79 : f32 to vector<1x128xf32>
    %231 = arith.cmpf ogt, %189, %230 : vector<1x128xf32>
    %cst_80 = arith.constant 1.000000e+00 : f32
    %232 = vector.broadcast %cst_80 : f32 to vector<1x128xf32>
    %233 = arith.select %231, %189, %232 : vector<1x128xi1>, vector<1x128xf32>
    %234 = arith.divf %227, %233 : vector<1x128xf32>
    %cst_81 = arith.constant 0.000000e+00 : f32
    %235 = vector.broadcast %cst_81 : f32 to vector<1x128xf32>
    %236 = arith.select %229, %234, %235 : vector<1x128xi1>, vector<1x128xf32>
    %237 = vector.broadcast %236 : vector<1x128xf32> to vector<16x128xf32>
    %238 = arith.mulf %237, %201 : vector<16x128xf32>
    %239 = arith.addf %224, %238 : vector<16x128xf32>
    %c5_i32 = arith.constant 5 : i32
    %240 = arith.mulf %39, %239 : vector<16x128xf32>
    %cst_82 = arith.constant dense<0.000000e+00> : vector<16x128xf32>
    %241 = tpu.matmul %22, %240, %cst_82 {dimension_numbers = #tpu.dot_dimension_numbers<[1], [0], [0], [1], [0, 0, 1, 1], [], []>} : vector<16x16xf32>, vector<16x128xf32>, vector<16x128xf32> -> vector<16x128xf32>
    %242 = arith.mulf %8, %241 : vector<16x128xf32>
    %243 = arith.mulf %43, %239 : vector<16x128xf32>
    %244 = arith.addf %242, %243 : vector<16x128xf32>
    %245 = arith.mulf %239, %244 : vector<16x128xf32>
    %cst_83 = arith.constant dense<0.000000e+00> : vector<128xf32>
    %246 = vector.multi_reduction <add>, %245, %cst_83 [0] : vector<16x128xf32> to vector<128xf32>
    %247 = vector.shape_cast %246 : vector<128xf32> to vector<1x128xf32>
    %cst_84 = arith.constant 0.000000e+00 : f32
    %248 = vector.broadcast %cst_84 : f32 to vector<1x128xf32>
    %249 = arith.cmpf ogt, %247, %248 : vector<1x128xf32>
    %cst_85 = arith.constant 0.000000e+00 : f32
    %250 = vector.broadcast %cst_85 : f32 to vector<1x128xf32>
    %251 = arith.cmpf ogt, %247, %250 : vector<1x128xf32>
    %cst_86 = arith.constant 1.000000e+00 : f32
    %252 = vector.broadcast %cst_86 : f32 to vector<1x128xf32>
    %253 = arith.select %251, %247, %252 : vector<1x128xi1>, vector<1x128xf32>
    %254 = arith.divf %227, %253 : vector<1x128xf32>
    %cst_87 = arith.constant 0.000000e+00 : f32
    %255 = vector.broadcast %cst_87 : f32 to vector<1x128xf32>
    %256 = arith.select %249, %254, %255 : vector<1x128xi1>, vector<1x128xf32>
    %257 = vector.broadcast %256 : vector<1x128xf32> to vector<16x128xf32>
    %258 = arith.mulf %257, %239 : vector<16x128xf32>
    %259 = arith.addf %221, %258 : vector<16x128xf32>
    %260 = vector.broadcast %256 : vector<1x128xf32> to vector<16x128xf32>
    %261 = arith.mulf %260, %244 : vector<16x128xf32>
    %262 = arith.subf %224, %261 : vector<16x128xf32>
    %263 = arith.mulf %262, %262 : vector<16x128xf32>
    %cst_88 = arith.constant dense<0.000000e+00> : vector<128xf32>
    %264 = vector.multi_reduction <add>, %263, %cst_88 [0] : vector<16x128xf32> to vector<128xf32>
    %265 = vector.shape_cast %264 : vector<128xf32> to vector<1x128xf32>
    %cst_89 = arith.constant 0.000000e+00 : f32
    %266 = vector.broadcast %cst_89 : f32 to vector<1x128xf32>
    %267 = arith.cmpf ogt, %227, %266 : vector<1x128xf32>
    %cst_90 = arith.constant 0.000000e+00 : f32
    %268 = vector.broadcast %cst_90 : f32 to vector<1x128xf32>
    %269 = arith.cmpf ogt, %227, %268 : vector<1x128xf32>
    %cst_91 = arith.constant 1.000000e+00 : f32
    %270 = vector.broadcast %cst_91 : f32 to vector<1x128xf32>
    %271 = arith.select %269, %227, %270 : vector<1x128xi1>, vector<1x128xf32>
    %272 = arith.divf %265, %271 : vector<1x128xf32>
    %cst_92 = arith.constant 0.000000e+00 : f32
    %273 = vector.broadcast %cst_92 : f32 to vector<1x128xf32>
    %274 = arith.select %267, %272, %273 : vector<1x128xi1>, vector<1x128xf32>
    %275 = vector.broadcast %274 : vector<1x128xf32> to vector<16x128xf32>
    %276 = arith.mulf %275, %239 : vector<16x128xf32>
    %277 = arith.addf %262, %276 : vector<16x128xf32>
    %c6_i32 = arith.constant 6 : i32
    %278 = arith.mulf %39, %277 : vector<16x128xf32>
    %cst_93 = arith.constant dense<0.000000e+00> : vector<16x128xf32>
    %279 = tpu.matmul %22, %278, %cst_93 {dimension_numbers = #tpu.dot_dimension_numbers<[1], [0], [0], [1], [0, 0, 1, 1], [], []>} : vector<16x16xf32>, vector<16x128xf32>, vector<16x128xf32> -> vector<16x128xf32>
    %280 = arith.mulf %8, %279 : vector<16x128xf32>
    %281 = arith.mulf %43, %277 : vector<16x128xf32>
    %282 = arith.addf %280, %281 : vector<16x128xf32>
    %283 = arith.mulf %277, %282 : vector<16x128xf32>
    %cst_94 = arith.constant dense<0.000000e+00> : vector<128xf32>
    %284 = vector.multi_reduction <add>, %283, %cst_94 [0] : vector<16x128xf32> to vector<128xf32>
    %285 = vector.shape_cast %284 : vector<128xf32> to vector<1x128xf32>
    %cst_95 = arith.constant 0.000000e+00 : f32
    %286 = vector.broadcast %cst_95 : f32 to vector<1x128xf32>
    %287 = arith.cmpf ogt, %285, %286 : vector<1x128xf32>
    %cst_96 = arith.constant 0.000000e+00 : f32
    %288 = vector.broadcast %cst_96 : f32 to vector<1x128xf32>
    %289 = arith.cmpf ogt, %285, %288 : vector<1x128xf32>
    %cst_97 = arith.constant 1.000000e+00 : f32
    %290 = vector.broadcast %cst_97 : f32 to vector<1x128xf32>
    %291 = arith.select %289, %285, %290 : vector<1x128xi1>, vector<1x128xf32>
    %292 = arith.divf %265, %291 : vector<1x128xf32>
    %cst_98 = arith.constant 0.000000e+00 : f32
    %293 = vector.broadcast %cst_98 : f32 to vector<1x128xf32>
    %294 = arith.select %287, %292, %293 : vector<1x128xi1>, vector<1x128xf32>
    %295 = vector.broadcast %294 : vector<1x128xf32> to vector<16x128xf32>
    %296 = arith.mulf %295, %277 : vector<16x128xf32>
    %297 = arith.addf %259, %296 : vector<16x128xf32>
    %298 = vector.broadcast %294 : vector<1x128xf32> to vector<16x128xf32>
    %299 = arith.mulf %298, %282 : vector<16x128xf32>
    %300 = arith.subf %262, %299 : vector<16x128xf32>
    %301 = arith.mulf %300, %300 : vector<16x128xf32>
    %cst_99 = arith.constant dense<0.000000e+00> : vector<128xf32>
    %302 = vector.multi_reduction <add>, %301, %cst_99 [0] : vector<16x128xf32> to vector<128xf32>
    %303 = vector.shape_cast %302 : vector<128xf32> to vector<1x128xf32>
    %cst_100 = arith.constant 0.000000e+00 : f32
    %304 = vector.broadcast %cst_100 : f32 to vector<1x128xf32>
    %305 = arith.cmpf ogt, %265, %304 : vector<1x128xf32>
    %cst_101 = arith.constant 0.000000e+00 : f32
    %306 = vector.broadcast %cst_101 : f32 to vector<1x128xf32>
    %307 = arith.cmpf ogt, %265, %306 : vector<1x128xf32>
    %cst_102 = arith.constant 1.000000e+00 : f32
    %308 = vector.broadcast %cst_102 : f32 to vector<1x128xf32>
    %309 = arith.select %307, %265, %308 : vector<1x128xi1>, vector<1x128xf32>
    %310 = arith.divf %303, %309 : vector<1x128xf32>
    %cst_103 = arith.constant 0.000000e+00 : f32
    %311 = vector.broadcast %cst_103 : f32 to vector<1x128xf32>
    %312 = arith.select %305, %310, %311 : vector<1x128xi1>, vector<1x128xf32>
    %313 = vector.broadcast %312 : vector<1x128xf32> to vector<16x128xf32>
    %314 = arith.mulf %313, %277 : vector<16x128xf32>
    %315 = arith.addf %300, %314 : vector<16x128xf32>
    %c7_i32 = arith.constant 7 : i32
    %316 = arith.mulf %39, %315 : vector<16x128xf32>
    %cst_104 = arith.constant dense<0.000000e+00> : vector<16x128xf32>
    %317 = tpu.matmul %22, %316, %cst_104 {dimension_numbers = #tpu.dot_dimension_numbers<[1], [0], [0], [1], [0, 0, 1, 1], [], []>} : vector<16x16xf32>, vector<16x128xf32>, vector<16x128xf32> -> vector<16x128xf32>
    %318 = arith.mulf %8, %317 : vector<16x128xf32>
    %319 = arith.mulf %43, %315 : vector<16x128xf32>
    %320 = arith.addf %318, %319 : vector<16x128xf32>
    %321 = arith.mulf %315, %320 : vector<16x128xf32>
    %cst_105 = arith.constant dense<0.000000e+00> : vector<128xf32>
    %322 = vector.multi_reduction <add>, %321, %cst_105 [0] : vector<16x128xf32> to vector<128xf32>
    %323 = vector.shape_cast %322 : vector<128xf32> to vector<1x128xf32>
    %cst_106 = arith.constant 0.000000e+00 : f32
    %324 = vector.broadcast %cst_106 : f32 to vector<1x128xf32>
    %325 = arith.cmpf ogt, %323, %324 : vector<1x128xf32>
    %cst_107 = arith.constant 0.000000e+00 : f32
    %326 = vector.broadcast %cst_107 : f32 to vector<1x128xf32>
    %327 = arith.cmpf ogt, %323, %326 : vector<1x128xf32>
    %cst_108 = arith.constant 1.000000e+00 : f32
    %328 = vector.broadcast %cst_108 : f32 to vector<1x128xf32>
    %329 = arith.select %327, %323, %328 : vector<1x128xi1>, vector<1x128xf32>
    %330 = arith.divf %303, %329 : vector<1x128xf32>
    %cst_109 = arith.constant 0.000000e+00 : f32
    %331 = vector.broadcast %cst_109 : f32 to vector<1x128xf32>
    %332 = arith.select %325, %330, %331 : vector<1x128xi1>, vector<1x128xf32>
    %333 = vector.broadcast %332 : vector<1x128xf32> to vector<16x128xf32>
    %334 = arith.mulf %333, %315 : vector<16x128xf32>
    %335 = arith.addf %297, %334 : vector<16x128xf32>
    %336 = vector.broadcast %332 : vector<1x128xf32> to vector<16x128xf32>
    %337 = arith.mulf %336, %320 : vector<16x128xf32>
    %338 = arith.subf %300, %337 : vector<16x128xf32>
    %339 = arith.mulf %338, %338 : vector<16x128xf32>
    %cst_110 = arith.constant dense<0.000000e+00> : vector<128xf32>
    %340 = vector.multi_reduction <add>, %339, %cst_110 [0] : vector<16x128xf32> to vector<128xf32>
    %341 = vector.shape_cast %340 : vector<128xf32> to vector<1x128xf32>
    %cst_111 = arith.constant 0.000000e+00 : f32
    %342 = vector.broadcast %cst_111 : f32 to vector<1x128xf32>
    %343 = arith.cmpf ogt, %303, %342 : vector<1x128xf32>
    %cst_112 = arith.constant 0.000000e+00 : f32
    %344 = vector.broadcast %cst_112 : f32 to vector<1x128xf32>
    %345 = arith.cmpf ogt, %303, %344 : vector<1x128xf32>
    %cst_113 = arith.constant 1.000000e+00 : f32
    %346 = vector.broadcast %cst_113 : f32 to vector<1x128xf32>
    %347 = arith.select %345, %303, %346 : vector<1x128xi1>, vector<1x128xf32>
    %348 = arith.divf %341, %347 : vector<1x128xf32>
    %cst_114 = arith.constant 0.000000e+00 : f32
    %349 = vector.broadcast %cst_114 : f32 to vector<1x128xf32>
    %350 = arith.select %343, %348, %349 : vector<1x128xi1>, vector<1x128xf32>
    %351 = vector.broadcast %350 : vector<1x128xf32> to vector<16x128xf32>
    %352 = arith.mulf %351, %315 : vector<16x128xf32>
    %353 = arith.addf %338, %352 : vector<16x128xf32>
    %c8_i32 = arith.constant 8 : i32
    %354 = arith.mulf %39, %353 : vector<16x128xf32>
    %cst_115 = arith.constant dense<0.000000e+00> : vector<16x128xf32>
    %355 = tpu.matmul %22, %354, %cst_115 {dimension_numbers = #tpu.dot_dimension_numbers<[1], [0], [0], [1], [0, 0, 1, 1], [], []>} : vector<16x16xf32>, vector<16x128xf32>, vector<16x128xf32> -> vector<16x128xf32>
    %356 = arith.mulf %8, %355 : vector<16x128xf32>
    %357 = arith.mulf %43, %353 : vector<16x128xf32>
    %358 = arith.addf %356, %357 : vector<16x128xf32>
    %359 = arith.mulf %353, %358 : vector<16x128xf32>
    %cst_116 = arith.constant dense<0.000000e+00> : vector<128xf32>
    %360 = vector.multi_reduction <add>, %359, %cst_116 [0] : vector<16x128xf32> to vector<128xf32>
    %361 = vector.shape_cast %360 : vector<128xf32> to vector<1x128xf32>
    %cst_117 = arith.constant 0.000000e+00 : f32
    %362 = vector.broadcast %cst_117 : f32 to vector<1x128xf32>
    %363 = arith.cmpf ogt, %361, %362 : vector<1x128xf32>
    %cst_118 = arith.constant 0.000000e+00 : f32
    %364 = vector.broadcast %cst_118 : f32 to vector<1x128xf32>
    %365 = arith.cmpf ogt, %361, %364 : vector<1x128xf32>
    %cst_119 = arith.constant 1.000000e+00 : f32
    %366 = vector.broadcast %cst_119 : f32 to vector<1x128xf32>
    %367 = arith.select %365, %361, %366 : vector<1x128xi1>, vector<1x128xf32>
    %368 = arith.divf %341, %367 : vector<1x128xf32>
    %cst_120 = arith.constant 0.000000e+00 : f32
    %369 = vector.broadcast %cst_120 : f32 to vector<1x128xf32>
    %370 = arith.select %363, %368, %369 : vector<1x128xi1>, vector<1x128xf32>
    %371 = vector.broadcast %370 : vector<1x128xf32> to vector<16x128xf32>
    %372 = arith.mulf %371, %353 : vector<16x128xf32>
    %373 = arith.addf %335, %372 : vector<16x128xf32>
    %374 = vector.broadcast %370 : vector<1x128xf32> to vector<16x128xf32>
    %375 = arith.mulf %374, %358 : vector<16x128xf32>
    %376 = arith.subf %338, %375 : vector<16x128xf32>
    %377 = arith.mulf %376, %376 : vector<16x128xf32>
    %cst_121 = arith.constant dense<0.000000e+00> : vector<128xf32>
    %378 = vector.multi_reduction <add>, %377, %cst_121 [0] : vector<16x128xf32> to vector<128xf32>
    %379 = vector.shape_cast %378 : vector<128xf32> to vector<1x128xf32>
    %cst_122 = arith.constant 0.000000e+00 : f32
    %380 = vector.broadcast %cst_122 : f32 to vector<1x128xf32>
    %381 = arith.cmpf ogt, %341, %380 : vector<1x128xf32>
    %cst_123 = arith.constant 0.000000e+00 : f32
    %382 = vector.broadcast %cst_123 : f32 to vector<1x128xf32>
    %383 = arith.cmpf ogt, %341, %382 : vector<1x128xf32>
    %cst_124 = arith.constant 1.000000e+00 : f32
    %384 = vector.broadcast %cst_124 : f32 to vector<1x128xf32>
    %385 = arith.select %383, %341, %384 : vector<1x128xi1>, vector<1x128xf32>
    %386 = arith.divf %379, %385 : vector<1x128xf32>
    %cst_125 = arith.constant 0.000000e+00 : f32
    %387 = vector.broadcast %cst_125 : f32 to vector<1x128xf32>
    %388 = arith.select %381, %386, %387 : vector<1x128xi1>, vector<1x128xf32>
    %389 = vector.broadcast %388 : vector<1x128xf32> to vector<16x128xf32>
    %390 = arith.mulf %389, %353 : vector<16x128xf32>
    %391 = arith.addf %376, %390 : vector<16x128xf32>
    %c9_i32 = arith.constant 9 : i32
    %392 = arith.mulf %39, %391 : vector<16x128xf32>
    %cst_126 = arith.constant dense<0.000000e+00> : vector<16x128xf32>
    %393 = tpu.matmul %22, %392, %cst_126 {dimension_numbers = #tpu.dot_dimension_numbers<[1], [0], [0], [1], [0, 0, 1, 1], [], []>} : vector<16x16xf32>, vector<16x128xf32>, vector<16x128xf32> -> vector<16x128xf32>
    %394 = arith.mulf %8, %393 : vector<16x128xf32>
    %395 = arith.mulf %43, %391 : vector<16x128xf32>
    %396 = arith.addf %394, %395 : vector<16x128xf32>
    %397 = arith.mulf %391, %396 : vector<16x128xf32>
    %cst_127 = arith.constant dense<0.000000e+00> : vector<128xf32>
    %398 = vector.multi_reduction <add>, %397, %cst_127 [0] : vector<16x128xf32> to vector<128xf32>
    %399 = vector.shape_cast %398 : vector<128xf32> to vector<1x128xf32>
    %cst_128 = arith.constant 0.000000e+00 : f32
    %400 = vector.broadcast %cst_128 : f32 to vector<1x128xf32>
    %401 = arith.cmpf ogt, %399, %400 : vector<1x128xf32>
    %cst_129 = arith.constant 0.000000e+00 : f32
    %402 = vector.broadcast %cst_129 : f32 to vector<1x128xf32>
    %403 = arith.cmpf ogt, %399, %402 : vector<1x128xf32>
    %cst_130 = arith.constant 1.000000e+00 : f32
    %404 = vector.broadcast %cst_130 : f32 to vector<1x128xf32>
    %405 = arith.select %403, %399, %404 : vector<1x128xi1>, vector<1x128xf32>
    %406 = arith.divf %379, %405 : vector<1x128xf32>
    %cst_131 = arith.constant 0.000000e+00 : f32
    %407 = vector.broadcast %cst_131 : f32 to vector<1x128xf32>
    %408 = arith.select %401, %406, %407 : vector<1x128xi1>, vector<1x128xf32>
    %409 = vector.broadcast %408 : vector<1x128xf32> to vector<16x128xf32>
    %410 = arith.mulf %409, %391 : vector<16x128xf32>
    %411 = arith.addf %373, %410 : vector<16x128xf32>
    %412 = vector.broadcast %408 : vector<1x128xf32> to vector<16x128xf32>
    %413 = arith.mulf %412, %396 : vector<16x128xf32>
    %414 = arith.subf %376, %413 : vector<16x128xf32>
    %415 = arith.mulf %414, %414 : vector<16x128xf32>
    %cst_132 = arith.constant dense<0.000000e+00> : vector<128xf32>
    %416 = vector.multi_reduction <add>, %415, %cst_132 [0] : vector<16x128xf32> to vector<128xf32>
    %417 = vector.shape_cast %416 : vector<128xf32> to vector<1x128xf32>
    %cst_133 = arith.constant 0.000000e+00 : f32
    %418 = vector.broadcast %cst_133 : f32 to vector<1x128xf32>
    %419 = arith.cmpf ogt, %379, %418 : vector<1x128xf32>
    %cst_134 = arith.constant 0.000000e+00 : f32
    %420 = vector.broadcast %cst_134 : f32 to vector<1x128xf32>
    %421 = arith.cmpf ogt, %379, %420 : vector<1x128xf32>
    %cst_135 = arith.constant 1.000000e+00 : f32
    %422 = vector.broadcast %cst_135 : f32 to vector<1x128xf32>
    %423 = arith.select %421, %379, %422 : vector<1x128xi1>, vector<1x128xf32>
    %424 = arith.divf %417, %423 : vector<1x128xf32>
    %cst_136 = arith.constant 0.000000e+00 : f32
    %425 = vector.broadcast %cst_136 : f32 to vector<1x128xf32>
    %426 = arith.select %419, %424, %425 : vector<1x128xi1>, vector<1x128xf32>
    %427 = vector.broadcast %426 : vector<1x128xf32> to vector<16x128xf32>
    %428 = arith.mulf %427, %391 : vector<16x128xf32>
    %429 = arith.addf %414, %428 : vector<16x128xf32>
    %c10_i32 = arith.constant 10 : i32
    %430 = arith.mulf %39, %429 : vector<16x128xf32>
    %cst_137 = arith.constant dense<0.000000e+00> : vector<16x128xf32>
    %431 = tpu.matmul %22, %430, %cst_137 {dimension_numbers = #tpu.dot_dimension_numbers<[1], [0], [0], [1], [0, 0, 1, 1], [], []>} : vector<16x16xf32>, vector<16x128xf32>, vector<16x128xf32> -> vector<16x128xf32>
    %432 = arith.mulf %8, %431 : vector<16x128xf32>
    %433 = arith.mulf %43, %429 : vector<16x128xf32>
    %434 = arith.addf %432, %433 : vector<16x128xf32>
    %435 = arith.mulf %429, %434 : vector<16x128xf32>
    %cst_138 = arith.constant dense<0.000000e+00> : vector<128xf32>
    %436 = vector.multi_reduction <add>, %435, %cst_138 [0] : vector<16x128xf32> to vector<128xf32>
    %437 = vector.shape_cast %436 : vector<128xf32> to vector<1x128xf32>
    %cst_139 = arith.constant 0.000000e+00 : f32
    %438 = vector.broadcast %cst_139 : f32 to vector<1x128xf32>
    %439 = arith.cmpf ogt, %437, %438 : vector<1x128xf32>
    %cst_140 = arith.constant 0.000000e+00 : f32
    %440 = vector.broadcast %cst_140 : f32 to vector<1x128xf32>
    %441 = arith.cmpf ogt, %437, %440 : vector<1x128xf32>
    %cst_141 = arith.constant 1.000000e+00 : f32
    %442 = vector.broadcast %cst_141 : f32 to vector<1x128xf32>
    %443 = arith.select %441, %437, %442 : vector<1x128xi1>, vector<1x128xf32>
    %444 = arith.divf %417, %443 : vector<1x128xf32>
    %cst_142 = arith.constant 0.000000e+00 : f32
    %445 = vector.broadcast %cst_142 : f32 to vector<1x128xf32>
    %446 = arith.select %439, %444, %445 : vector<1x128xi1>, vector<1x128xf32>
    %447 = vector.broadcast %446 : vector<1x128xf32> to vector<16x128xf32>
    %448 = arith.mulf %447, %429 : vector<16x128xf32>
    %449 = arith.addf %411, %448 : vector<16x128xf32>
    %450 = vector.broadcast %446 : vector<1x128xf32> to vector<16x128xf32>
    %451 = arith.mulf %450, %434 : vector<16x128xf32>
    %452 = arith.subf %414, %451 : vector<16x128xf32>
    %453 = arith.mulf %452, %452 : vector<16x128xf32>
    %cst_143 = arith.constant dense<0.000000e+00> : vector<128xf32>
    %454 = vector.multi_reduction <add>, %453, %cst_143 [0] : vector<16x128xf32> to vector<128xf32>
    %455 = vector.shape_cast %454 : vector<128xf32> to vector<1x128xf32>
    %cst_144 = arith.constant 0.000000e+00 : f32
    %456 = vector.broadcast %cst_144 : f32 to vector<1x128xf32>
    %457 = arith.cmpf ogt, %417, %456 : vector<1x128xf32>
    %cst_145 = arith.constant 0.000000e+00 : f32
    %458 = vector.broadcast %cst_145 : f32 to vector<1x128xf32>
    %459 = arith.cmpf ogt, %417, %458 : vector<1x128xf32>
    %cst_146 = arith.constant 1.000000e+00 : f32
    %460 = vector.broadcast %cst_146 : f32 to vector<1x128xf32>
    %461 = arith.select %459, %417, %460 : vector<1x128xi1>, vector<1x128xf32>
    %462 = arith.divf %455, %461 : vector<1x128xf32>
    %cst_147 = arith.constant 0.000000e+00 : f32
    %463 = vector.broadcast %cst_147 : f32 to vector<1x128xf32>
    %464 = arith.select %457, %462, %463 : vector<1x128xi1>, vector<1x128xf32>
    %465 = vector.broadcast %464 : vector<1x128xf32> to vector<16x128xf32>
    %466 = arith.mulf %465, %429 : vector<16x128xf32>
    %467 = arith.addf %452, %466 : vector<16x128xf32>
    %c11_i32 = arith.constant 11 : i32
    %468 = arith.mulf %39, %467 : vector<16x128xf32>
    %cst_148 = arith.constant dense<0.000000e+00> : vector<16x128xf32>
    %469 = tpu.matmul %22, %468, %cst_148 {dimension_numbers = #tpu.dot_dimension_numbers<[1], [0], [0], [1], [0, 0, 1, 1], [], []>} : vector<16x16xf32>, vector<16x128xf32>, vector<16x128xf32> -> vector<16x128xf32>
    %470 = arith.mulf %8, %469 : vector<16x128xf32>
    %471 = arith.mulf %43, %467 : vector<16x128xf32>
    %472 = arith.addf %470, %471 : vector<16x128xf32>
    %473 = arith.mulf %467, %472 : vector<16x128xf32>
    %cst_149 = arith.constant dense<0.000000e+00> : vector<128xf32>
    %474 = vector.multi_reduction <add>, %473, %cst_149 [0] : vector<16x128xf32> to vector<128xf32>
    %475 = vector.shape_cast %474 : vector<128xf32> to vector<1x128xf32>
    %cst_150 = arith.constant 0.000000e+00 : f32
    %476 = vector.broadcast %cst_150 : f32 to vector<1x128xf32>
    %477 = arith.cmpf ogt, %475, %476 : vector<1x128xf32>
    %cst_151 = arith.constant 0.000000e+00 : f32
    %478 = vector.broadcast %cst_151 : f32 to vector<1x128xf32>
    %479 = arith.cmpf ogt, %475, %478 : vector<1x128xf32>
    %cst_152 = arith.constant 1.000000e+00 : f32
    %480 = vector.broadcast %cst_152 : f32 to vector<1x128xf32>
    %481 = arith.select %479, %475, %480 : vector<1x128xi1>, vector<1x128xf32>
    %482 = arith.divf %455, %481 : vector<1x128xf32>
    %cst_153 = arith.constant 0.000000e+00 : f32
    %483 = vector.broadcast %cst_153 : f32 to vector<1x128xf32>
    %484 = arith.select %477, %482, %483 : vector<1x128xi1>, vector<1x128xf32>
    %485 = vector.broadcast %484 : vector<1x128xf32> to vector<16x128xf32>
    %486 = arith.mulf %485, %467 : vector<16x128xf32>
    %487 = arith.addf %449, %486 : vector<16x128xf32>
    %488 = vector.broadcast %484 : vector<1x128xf32> to vector<16x128xf32>
    %489 = arith.mulf %488, %472 : vector<16x128xf32>
    %490 = arith.subf %452, %489 : vector<16x128xf32>
    %491 = arith.mulf %490, %490 : vector<16x128xf32>
    %cst_154 = arith.constant dense<0.000000e+00> : vector<128xf32>
    %492 = vector.multi_reduction <add>, %491, %cst_154 [0] : vector<16x128xf32> to vector<128xf32>
    %493 = vector.shape_cast %492 : vector<128xf32> to vector<1x128xf32>
    %cst_155 = arith.constant 0.000000e+00 : f32
    %494 = vector.broadcast %cst_155 : f32 to vector<1x128xf32>
    %495 = arith.cmpf ogt, %455, %494 : vector<1x128xf32>
    %cst_156 = arith.constant 0.000000e+00 : f32
    %496 = vector.broadcast %cst_156 : f32 to vector<1x128xf32>
    %497 = arith.cmpf ogt, %455, %496 : vector<1x128xf32>
    %cst_157 = arith.constant 1.000000e+00 : f32
    %498 = vector.broadcast %cst_157 : f32 to vector<1x128xf32>
    %499 = arith.select %497, %455, %498 : vector<1x128xi1>, vector<1x128xf32>
    %500 = arith.divf %493, %499 : vector<1x128xf32>
    %cst_158 = arith.constant 0.000000e+00 : f32
    %501 = vector.broadcast %cst_158 : f32 to vector<1x128xf32>
    %502 = arith.select %495, %500, %501 : vector<1x128xi1>, vector<1x128xf32>
    %503 = vector.broadcast %502 : vector<1x128xf32> to vector<16x128xf32>
    %504 = arith.mulf %503, %467 : vector<16x128xf32>
    %505 = arith.addf %490, %504 : vector<16x128xf32>
    %c12_i32 = arith.constant 12 : i32
    %506 = arith.mulf %39, %505 : vector<16x128xf32>
    %cst_159 = arith.constant dense<0.000000e+00> : vector<16x128xf32>
    %507 = tpu.matmul %22, %506, %cst_159 {dimension_numbers = #tpu.dot_dimension_numbers<[1], [0], [0], [1], [0, 0, 1, 1], [], []>} : vector<16x16xf32>, vector<16x128xf32>, vector<16x128xf32> -> vector<16x128xf32>
    %508 = arith.mulf %8, %507 : vector<16x128xf32>
    %509 = arith.mulf %43, %505 : vector<16x128xf32>
    %510 = arith.addf %508, %509 : vector<16x128xf32>
    %511 = arith.mulf %505, %510 : vector<16x128xf32>
    %cst_160 = arith.constant dense<0.000000e+00> : vector<128xf32>
    %512 = vector.multi_reduction <add>, %511, %cst_160 [0] : vector<16x128xf32> to vector<128xf32>
    %513 = vector.shape_cast %512 : vector<128xf32> to vector<1x128xf32>
    %cst_161 = arith.constant 0.000000e+00 : f32
    %514 = vector.broadcast %cst_161 : f32 to vector<1x128xf32>
    %515 = arith.cmpf ogt, %513, %514 : vector<1x128xf32>
    %cst_162 = arith.constant 0.000000e+00 : f32
    %516 = vector.broadcast %cst_162 : f32 to vector<1x128xf32>
    %517 = arith.cmpf ogt, %513, %516 : vector<1x128xf32>
    %cst_163 = arith.constant 1.000000e+00 : f32
    %518 = vector.broadcast %cst_163 : f32 to vector<1x128xf32>
    %519 = arith.select %517, %513, %518 : vector<1x128xi1>, vector<1x128xf32>
    %520 = arith.divf %493, %519 : vector<1x128xf32>
    %cst_164 = arith.constant 0.000000e+00 : f32
    %521 = vector.broadcast %cst_164 : f32 to vector<1x128xf32>
    %522 = arith.select %515, %520, %521 : vector<1x128xi1>, vector<1x128xf32>
    %523 = vector.broadcast %522 : vector<1x128xf32> to vector<16x128xf32>
    %524 = arith.mulf %523, %505 : vector<16x128xf32>
    %525 = arith.addf %487, %524 : vector<16x128xf32>
    %526 = vector.broadcast %522 : vector<1x128xf32> to vector<16x128xf32>
    %527 = arith.mulf %526, %510 : vector<16x128xf32>
    %528 = arith.subf %490, %527 : vector<16x128xf32>
    %529 = arith.mulf %528, %528 : vector<16x128xf32>
    %cst_165 = arith.constant dense<0.000000e+00> : vector<128xf32>
    %530 = vector.multi_reduction <add>, %529, %cst_165 [0] : vector<16x128xf32> to vector<128xf32>
    %531 = vector.shape_cast %530 : vector<128xf32> to vector<1x128xf32>
    %cst_166 = arith.constant 0.000000e+00 : f32
    %532 = vector.broadcast %cst_166 : f32 to vector<1x128xf32>
    %533 = arith.cmpf ogt, %493, %532 : vector<1x128xf32>
    %cst_167 = arith.constant 0.000000e+00 : f32
    %534 = vector.broadcast %cst_167 : f32 to vector<1x128xf32>
    %535 = arith.cmpf ogt, %493, %534 : vector<1x128xf32>
    %cst_168 = arith.constant 1.000000e+00 : f32
    %536 = vector.broadcast %cst_168 : f32 to vector<1x128xf32>
    %537 = arith.select %535, %493, %536 : vector<1x128xi1>, vector<1x128xf32>
    %538 = arith.divf %531, %537 : vector<1x128xf32>
    %cst_169 = arith.constant 0.000000e+00 : f32
    %539 = vector.broadcast %cst_169 : f32 to vector<1x128xf32>
    %540 = arith.select %533, %538, %539 : vector<1x128xi1>, vector<1x128xf32>
    %541 = vector.broadcast %540 : vector<1x128xf32> to vector<16x128xf32>
    %542 = arith.mulf %541, %505 : vector<16x128xf32>
    %543 = arith.addf %528, %542 : vector<16x128xf32>
    %c13_i32 = arith.constant 13 : i32
    %544 = arith.mulf %39, %543 : vector<16x128xf32>
    %cst_170 = arith.constant dense<0.000000e+00> : vector<16x128xf32>
    %545 = tpu.matmul %22, %544, %cst_170 {dimension_numbers = #tpu.dot_dimension_numbers<[1], [0], [0], [1], [0, 0, 1, 1], [], []>} : vector<16x16xf32>, vector<16x128xf32>, vector<16x128xf32> -> vector<16x128xf32>
    %546 = arith.mulf %8, %545 : vector<16x128xf32>
    %547 = arith.mulf %43, %543 : vector<16x128xf32>
    %548 = arith.addf %546, %547 : vector<16x128xf32>
    %549 = arith.mulf %543, %548 : vector<16x128xf32>
    %cst_171 = arith.constant dense<0.000000e+00> : vector<128xf32>
    %550 = vector.multi_reduction <add>, %549, %cst_171 [0] : vector<16x128xf32> to vector<128xf32>
    %551 = vector.shape_cast %550 : vector<128xf32> to vector<1x128xf32>
    %cst_172 = arith.constant 0.000000e+00 : f32
    %552 = vector.broadcast %cst_172 : f32 to vector<1x128xf32>
    %553 = arith.cmpf ogt, %551, %552 : vector<1x128xf32>
    %cst_173 = arith.constant 0.000000e+00 : f32
    %554 = vector.broadcast %cst_173 : f32 to vector<1x128xf32>
    %555 = arith.cmpf ogt, %551, %554 : vector<1x128xf32>
    %cst_174 = arith.constant 1.000000e+00 : f32
    %556 = vector.broadcast %cst_174 : f32 to vector<1x128xf32>
    %557 = arith.select %555, %551, %556 : vector<1x128xi1>, vector<1x128xf32>
    %558 = arith.divf %531, %557 : vector<1x128xf32>
    %cst_175 = arith.constant 0.000000e+00 : f32
    %559 = vector.broadcast %cst_175 : f32 to vector<1x128xf32>
    %560 = arith.select %553, %558, %559 : vector<1x128xi1>, vector<1x128xf32>
    %561 = vector.broadcast %560 : vector<1x128xf32> to vector<16x128xf32>
    %562 = arith.mulf %561, %543 : vector<16x128xf32>
    %563 = arith.addf %525, %562 : vector<16x128xf32>
    %564 = vector.broadcast %560 : vector<1x128xf32> to vector<16x128xf32>
    %565 = arith.mulf %564, %548 : vector<16x128xf32>
    %566 = arith.subf %528, %565 : vector<16x128xf32>
    %567 = arith.mulf %566, %566 : vector<16x128xf32>
    %cst_176 = arith.constant dense<0.000000e+00> : vector<128xf32>
    %568 = vector.multi_reduction <add>, %567, %cst_176 [0] : vector<16x128xf32> to vector<128xf32>
    %569 = vector.shape_cast %568 : vector<128xf32> to vector<1x128xf32>
    %cst_177 = arith.constant 0.000000e+00 : f32
    %570 = vector.broadcast %cst_177 : f32 to vector<1x128xf32>
    %571 = arith.cmpf ogt, %531, %570 : vector<1x128xf32>
    %cst_178 = arith.constant 0.000000e+00 : f32
    %572 = vector.broadcast %cst_178 : f32 to vector<1x128xf32>
    %573 = arith.cmpf ogt, %531, %572 : vector<1x128xf32>
    %cst_179 = arith.constant 1.000000e+00 : f32
    %574 = vector.broadcast %cst_179 : f32 to vector<1x128xf32>
    %575 = arith.select %573, %531, %574 : vector<1x128xi1>, vector<1x128xf32>
    %576 = arith.divf %569, %575 : vector<1x128xf32>
    %cst_180 = arith.constant 0.000000e+00 : f32
    %577 = vector.broadcast %cst_180 : f32 to vector<1x128xf32>
    %578 = arith.select %571, %576, %577 : vector<1x128xi1>, vector<1x128xf32>
    %579 = vector.broadcast %578 : vector<1x128xf32> to vector<16x128xf32>
    %580 = arith.mulf %579, %543 : vector<16x128xf32>
    %581 = arith.addf %566, %580 : vector<16x128xf32>
    %c14_i32 = arith.constant 14 : i32
    %582 = arith.mulf %39, %581 : vector<16x128xf32>
    %cst_181 = arith.constant dense<0.000000e+00> : vector<16x128xf32>
    %583 = tpu.matmul %22, %582, %cst_181 {dimension_numbers = #tpu.dot_dimension_numbers<[1], [0], [0], [1], [0, 0, 1, 1], [], []>} : vector<16x16xf32>, vector<16x128xf32>, vector<16x128xf32> -> vector<16x128xf32>
    %584 = arith.mulf %8, %583 : vector<16x128xf32>
    %585 = arith.mulf %43, %581 : vector<16x128xf32>
    %586 = arith.addf %584, %585 : vector<16x128xf32>
    %587 = arith.mulf %581, %586 : vector<16x128xf32>
    %cst_182 = arith.constant dense<0.000000e+00> : vector<128xf32>
    %588 = vector.multi_reduction <add>, %587, %cst_182 [0] : vector<16x128xf32> to vector<128xf32>
    %589 = vector.shape_cast %588 : vector<128xf32> to vector<1x128xf32>
    %cst_183 = arith.constant 0.000000e+00 : f32
    %590 = vector.broadcast %cst_183 : f32 to vector<1x128xf32>
    %591 = arith.cmpf ogt, %589, %590 : vector<1x128xf32>
    %cst_184 = arith.constant 0.000000e+00 : f32
    %592 = vector.broadcast %cst_184 : f32 to vector<1x128xf32>
    %593 = arith.cmpf ogt, %589, %592 : vector<1x128xf32>
    %cst_185 = arith.constant 1.000000e+00 : f32
    %594 = vector.broadcast %cst_185 : f32 to vector<1x128xf32>
    %595 = arith.select %593, %589, %594 : vector<1x128xi1>, vector<1x128xf32>
    %596 = arith.divf %569, %595 : vector<1x128xf32>
    %cst_186 = arith.constant 0.000000e+00 : f32
    %597 = vector.broadcast %cst_186 : f32 to vector<1x128xf32>
    %598 = arith.select %591, %596, %597 : vector<1x128xi1>, vector<1x128xf32>
    %599 = vector.broadcast %598 : vector<1x128xf32> to vector<16x128xf32>
    %600 = arith.mulf %599, %581 : vector<16x128xf32>
    %601 = arith.addf %563, %600 : vector<16x128xf32>
    %602 = vector.broadcast %598 : vector<1x128xf32> to vector<16x128xf32>
    %603 = arith.mulf %602, %586 : vector<16x128xf32>
    %604 = arith.subf %566, %603 : vector<16x128xf32>
    %605 = arith.mulf %604, %604 : vector<16x128xf32>
    %cst_187 = arith.constant dense<0.000000e+00> : vector<128xf32>
    %606 = vector.multi_reduction <add>, %605, %cst_187 [0] : vector<16x128xf32> to vector<128xf32>
    %607 = vector.shape_cast %606 : vector<128xf32> to vector<1x128xf32>
    %cst_188 = arith.constant 0.000000e+00 : f32
    %608 = vector.broadcast %cst_188 : f32 to vector<1x128xf32>
    %609 = arith.cmpf ogt, %569, %608 : vector<1x128xf32>
    %cst_189 = arith.constant 0.000000e+00 : f32
    %610 = vector.broadcast %cst_189 : f32 to vector<1x128xf32>
    %611 = arith.cmpf ogt, %569, %610 : vector<1x128xf32>
    %cst_190 = arith.constant 1.000000e+00 : f32
    %612 = vector.broadcast %cst_190 : f32 to vector<1x128xf32>
    %613 = arith.select %611, %569, %612 : vector<1x128xi1>, vector<1x128xf32>
    %614 = arith.divf %607, %613 : vector<1x128xf32>
    %cst_191 = arith.constant 0.000000e+00 : f32
    %615 = vector.broadcast %cst_191 : f32 to vector<1x128xf32>
    %616 = arith.select %609, %614, %615 : vector<1x128xi1>, vector<1x128xf32>
    %617 = vector.broadcast %616 : vector<1x128xf32> to vector<16x128xf32>
    %618 = arith.mulf %617, %581 : vector<16x128xf32>
    %619 = arith.addf %604, %618 : vector<16x128xf32>
    %c15_i32 = arith.constant 15 : i32
    %620 = arith.mulf %39, %619 : vector<16x128xf32>
    %cst_192 = arith.constant dense<0.000000e+00> : vector<16x128xf32>
    %621 = tpu.matmul %22, %620, %cst_192 {dimension_numbers = #tpu.dot_dimension_numbers<[1], [0], [0], [1], [0, 0, 1, 1], [], []>} : vector<16x16xf32>, vector<16x128xf32>, vector<16x128xf32> -> vector<16x128xf32>
    %622 = arith.mulf %8, %621 : vector<16x128xf32>
    %623 = arith.mulf %43, %619 : vector<16x128xf32>
    %624 = arith.addf %622, %623 : vector<16x128xf32>
    %625 = arith.mulf %619, %624 : vector<16x128xf32>
    %cst_193 = arith.constant dense<0.000000e+00> : vector<128xf32>
    %626 = vector.multi_reduction <add>, %625, %cst_193 [0] : vector<16x128xf32> to vector<128xf32>
    %627 = vector.shape_cast %626 : vector<128xf32> to vector<1x128xf32>
    %cst_194 = arith.constant 0.000000e+00 : f32
    %628 = vector.broadcast %cst_194 : f32 to vector<1x128xf32>
    %629 = arith.cmpf ogt, %627, %628 : vector<1x128xf32>
    %cst_195 = arith.constant 0.000000e+00 : f32
    %630 = vector.broadcast %cst_195 : f32 to vector<1x128xf32>
    %631 = arith.cmpf ogt, %627, %630 : vector<1x128xf32>
    %cst_196 = arith.constant 1.000000e+00 : f32
    %632 = vector.broadcast %cst_196 : f32 to vector<1x128xf32>
    %633 = arith.select %631, %627, %632 : vector<1x128xi1>, vector<1x128xf32>
    %634 = arith.divf %607, %633 : vector<1x128xf32>
    %cst_197 = arith.constant 0.000000e+00 : f32
    %635 = vector.broadcast %cst_197 : f32 to vector<1x128xf32>
    %636 = arith.select %629, %634, %635 : vector<1x128xi1>, vector<1x128xf32>
    %637 = vector.broadcast %636 : vector<1x128xf32> to vector<16x128xf32>
    %638 = arith.mulf %637, %619 : vector<16x128xf32>
    %639 = arith.addf %601, %638 : vector<16x128xf32>
    %640 = vector.broadcast %636 : vector<1x128xf32> to vector<16x128xf32>
    %641 = arith.mulf %640, %624 : vector<16x128xf32>
    %642 = arith.subf %604, %641 : vector<16x128xf32>
    %643 = arith.mulf %642, %642 : vector<16x128xf32>
    %cst_198 = arith.constant dense<0.000000e+00> : vector<128xf32>
    %644 = vector.multi_reduction <add>, %643, %cst_198 [0] : vector<16x128xf32> to vector<128xf32>
    %645 = vector.shape_cast %644 : vector<128xf32> to vector<1x128xf32>
    %cst_199 = arith.constant 0.000000e+00 : f32
    %646 = vector.broadcast %cst_199 : f32 to vector<1x128xf32>
    %647 = arith.cmpf ogt, %607, %646 : vector<1x128xf32>
    %cst_200 = arith.constant 0.000000e+00 : f32
    %648 = vector.broadcast %cst_200 : f32 to vector<1x128xf32>
    %649 = arith.cmpf ogt, %607, %648 : vector<1x128xf32>
    %cst_201 = arith.constant 1.000000e+00 : f32
    %650 = vector.broadcast %cst_201 : f32 to vector<1x128xf32>
    %651 = arith.select %649, %607, %650 : vector<1x128xi1>, vector<1x128xf32>
    %652 = arith.divf %645, %651 : vector<1x128xf32>
    %cst_202 = arith.constant 0.000000e+00 : f32
    %653 = vector.broadcast %cst_202 : f32 to vector<1x128xf32>
    %654 = arith.select %647, %652, %653 : vector<1x128xi1>, vector<1x128xf32>
    %655 = vector.broadcast %654 : vector<1x128xf32> to vector<16x128xf32>
    %656 = arith.mulf %655, %619 : vector<16x128xf32>
    %657 = arith.addf %642, %656 : vector<16x128xf32>
    %c16_i32 = arith.constant 16 : i32
    %658 = arith.mulf %39, %657 : vector<16x128xf32>
    %cst_203 = arith.constant dense<0.000000e+00> : vector<16x128xf32>
    %659 = tpu.matmul %22, %658, %cst_203 {dimension_numbers = #tpu.dot_dimension_numbers<[1], [0], [0], [1], [0, 0, 1, 1], [], []>} : vector<16x16xf32>, vector<16x128xf32>, vector<16x128xf32> -> vector<16x128xf32>
    %660 = arith.mulf %8, %659 : vector<16x128xf32>
    %661 = arith.mulf %43, %657 : vector<16x128xf32>
    %662 = arith.addf %660, %661 : vector<16x128xf32>
    %663 = arith.mulf %657, %662 : vector<16x128xf32>
    %cst_204 = arith.constant dense<0.000000e+00> : vector<128xf32>
    %664 = vector.multi_reduction <add>, %663, %cst_204 [0] : vector<16x128xf32> to vector<128xf32>
    %665 = vector.shape_cast %664 : vector<128xf32> to vector<1x128xf32>
    %cst_205 = arith.constant 0.000000e+00 : f32
    %666 = vector.broadcast %cst_205 : f32 to vector<1x128xf32>
    %667 = arith.cmpf ogt, %665, %666 : vector<1x128xf32>
    %cst_206 = arith.constant 0.000000e+00 : f32
    %668 = vector.broadcast %cst_206 : f32 to vector<1x128xf32>
    %669 = arith.cmpf ogt, %665, %668 : vector<1x128xf32>
    %cst_207 = arith.constant 1.000000e+00 : f32
    %670 = vector.broadcast %cst_207 : f32 to vector<1x128xf32>
    %671 = arith.select %669, %665, %670 : vector<1x128xi1>, vector<1x128xf32>
    %672 = arith.divf %645, %671 : vector<1x128xf32>
    %cst_208 = arith.constant 0.000000e+00 : f32
    %673 = vector.broadcast %cst_208 : f32 to vector<1x128xf32>
    %674 = arith.select %667, %672, %673 : vector<1x128xi1>, vector<1x128xf32>
    %675 = vector.broadcast %674 : vector<1x128xf32> to vector<16x128xf32>
    %676 = arith.mulf %675, %657 : vector<16x128xf32>
    %677 = arith.addf %639, %676 : vector<16x128xf32>
    %678 = vector.broadcast %674 : vector<1x128xf32> to vector<16x128xf32>
    %679 = arith.mulf %678, %662 : vector<16x128xf32>
    %680 = arith.subf %642, %679 : vector<16x128xf32>
    %681 = arith.mulf %680, %680 : vector<16x128xf32>
    %cst_209 = arith.constant dense<0.000000e+00> : vector<128xf32>
    %682 = vector.multi_reduction <add>, %681, %cst_209 [0] : vector<16x128xf32> to vector<128xf32>
    %683 = vector.shape_cast %682 : vector<128xf32> to vector<1x128xf32>
    %cst_210 = arith.constant 0.000000e+00 : f32
    %684 = vector.broadcast %cst_210 : f32 to vector<1x128xf32>
    %685 = arith.cmpf ogt, %645, %684 : vector<1x128xf32>
    %cst_211 = arith.constant 0.000000e+00 : f32
    %686 = vector.broadcast %cst_211 : f32 to vector<1x128xf32>
    %687 = arith.cmpf ogt, %645, %686 : vector<1x128xf32>
    %cst_212 = arith.constant 1.000000e+00 : f32
    %688 = vector.broadcast %cst_212 : f32 to vector<1x128xf32>
    %689 = arith.select %687, %645, %688 : vector<1x128xi1>, vector<1x128xf32>
    %690 = arith.divf %683, %689 : vector<1x128xf32>
    %cst_213 = arith.constant 0.000000e+00 : f32
    %691 = vector.broadcast %cst_213 : f32 to vector<1x128xf32>
    %692 = arith.select %685, %690, %691 : vector<1x128xi1>, vector<1x128xf32>
    %693 = vector.broadcast %692 : vector<1x128xf32> to vector<16x128xf32>
    %694 = arith.mulf %693, %657 : vector<16x128xf32>
    %695 = arith.addf %680, %694 : vector<16x128xf32>
    %c17_i32 = arith.constant 17 : i32
    %696 = arith.mulf %39, %695 : vector<16x128xf32>
    %cst_214 = arith.constant dense<0.000000e+00> : vector<16x128xf32>
    %697 = tpu.matmul %22, %696, %cst_214 {dimension_numbers = #tpu.dot_dimension_numbers<[1], [0], [0], [1], [0, 0, 1, 1], [], []>} : vector<16x16xf32>, vector<16x128xf32>, vector<16x128xf32> -> vector<16x128xf32>
    %698 = arith.mulf %8, %697 : vector<16x128xf32>
    %699 = arith.mulf %43, %695 : vector<16x128xf32>
    %700 = arith.addf %698, %699 : vector<16x128xf32>
    %701 = arith.mulf %695, %700 : vector<16x128xf32>
    %cst_215 = arith.constant dense<0.000000e+00> : vector<128xf32>
    %702 = vector.multi_reduction <add>, %701, %cst_215 [0] : vector<16x128xf32> to vector<128xf32>
    %703 = vector.shape_cast %702 : vector<128xf32> to vector<1x128xf32>
    %cst_216 = arith.constant 0.000000e+00 : f32
    %704 = vector.broadcast %cst_216 : f32 to vector<1x128xf32>
    %705 = arith.cmpf ogt, %703, %704 : vector<1x128xf32>
    %cst_217 = arith.constant 0.000000e+00 : f32
    %706 = vector.broadcast %cst_217 : f32 to vector<1x128xf32>
    %707 = arith.cmpf ogt, %703, %706 : vector<1x128xf32>
    %cst_218 = arith.constant 1.000000e+00 : f32
    %708 = vector.broadcast %cst_218 : f32 to vector<1x128xf32>
    %709 = arith.select %707, %703, %708 : vector<1x128xi1>, vector<1x128xf32>
    %710 = arith.divf %683, %709 : vector<1x128xf32>
    %cst_219 = arith.constant 0.000000e+00 : f32
    %711 = vector.broadcast %cst_219 : f32 to vector<1x128xf32>
    %712 = arith.select %705, %710, %711 : vector<1x128xi1>, vector<1x128xf32>
    %713 = vector.broadcast %712 : vector<1x128xf32> to vector<16x128xf32>
    %714 = arith.mulf %713, %695 : vector<16x128xf32>
    %715 = arith.addf %677, %714 : vector<16x128xf32>
    %716 = vector.broadcast %712 : vector<1x128xf32> to vector<16x128xf32>
    %717 = arith.mulf %716, %700 : vector<16x128xf32>
    %718 = arith.subf %680, %717 : vector<16x128xf32>
    %719 = arith.mulf %718, %718 : vector<16x128xf32>
    %cst_220 = arith.constant dense<0.000000e+00> : vector<128xf32>
    %720 = vector.multi_reduction <add>, %719, %cst_220 [0] : vector<16x128xf32> to vector<128xf32>
    %721 = vector.shape_cast %720 : vector<128xf32> to vector<1x128xf32>
    %cst_221 = arith.constant 0.000000e+00 : f32
    %722 = vector.broadcast %cst_221 : f32 to vector<1x128xf32>
    %723 = arith.cmpf ogt, %683, %722 : vector<1x128xf32>
    %cst_222 = arith.constant 0.000000e+00 : f32
    %724 = vector.broadcast %cst_222 : f32 to vector<1x128xf32>
    %725 = arith.cmpf ogt, %683, %724 : vector<1x128xf32>
    %cst_223 = arith.constant 1.000000e+00 : f32
    %726 = vector.broadcast %cst_223 : f32 to vector<1x128xf32>
    %727 = arith.select %725, %683, %726 : vector<1x128xi1>, vector<1x128xf32>
    %728 = arith.divf %721, %727 : vector<1x128xf32>
    %cst_224 = arith.constant 0.000000e+00 : f32
    %729 = vector.broadcast %cst_224 : f32 to vector<1x128xf32>
    %730 = arith.select %723, %728, %729 : vector<1x128xi1>, vector<1x128xf32>
    %731 = vector.broadcast %730 : vector<1x128xf32> to vector<16x128xf32>
    %732 = arith.mulf %731, %695 : vector<16x128xf32>
    %733 = arith.addf %718, %732 : vector<16x128xf32>
    %c18_i32 = arith.constant 18 : i32
    %734 = arith.mulf %39, %733 : vector<16x128xf32>
    %cst_225 = arith.constant dense<0.000000e+00> : vector<16x128xf32>
    %735 = tpu.matmul %22, %734, %cst_225 {dimension_numbers = #tpu.dot_dimension_numbers<[1], [0], [0], [1], [0, 0, 1, 1], [], []>} : vector<16x16xf32>, vector<16x128xf32>, vector<16x128xf32> -> vector<16x128xf32>
    %736 = arith.mulf %8, %735 : vector<16x128xf32>
    %737 = arith.mulf %43, %733 : vector<16x128xf32>
    %738 = arith.addf %736, %737 : vector<16x128xf32>
    %739 = arith.mulf %733, %738 : vector<16x128xf32>
    %cst_226 = arith.constant dense<0.000000e+00> : vector<128xf32>
    %740 = vector.multi_reduction <add>, %739, %cst_226 [0] : vector<16x128xf32> to vector<128xf32>
    %741 = vector.shape_cast %740 : vector<128xf32> to vector<1x128xf32>
    %cst_227 = arith.constant 0.000000e+00 : f32
    %742 = vector.broadcast %cst_227 : f32 to vector<1x128xf32>
    %743 = arith.cmpf ogt, %741, %742 : vector<1x128xf32>
    %cst_228 = arith.constant 0.000000e+00 : f32
    %744 = vector.broadcast %cst_228 : f32 to vector<1x128xf32>
    %745 = arith.cmpf ogt, %741, %744 : vector<1x128xf32>
    %cst_229 = arith.constant 1.000000e+00 : f32
    %746 = vector.broadcast %cst_229 : f32 to vector<1x128xf32>
    %747 = arith.select %745, %741, %746 : vector<1x128xi1>, vector<1x128xf32>
    %748 = arith.divf %721, %747 : vector<1x128xf32>
    %cst_230 = arith.constant 0.000000e+00 : f32
    %749 = vector.broadcast %cst_230 : f32 to vector<1x128xf32>
    %750 = arith.select %743, %748, %749 : vector<1x128xi1>, vector<1x128xf32>
    %751 = vector.broadcast %750 : vector<1x128xf32> to vector<16x128xf32>
    %752 = arith.mulf %751, %733 : vector<16x128xf32>
    %753 = arith.addf %715, %752 : vector<16x128xf32>
    %754 = vector.broadcast %750 : vector<1x128xf32> to vector<16x128xf32>
    %755 = arith.mulf %754, %738 : vector<16x128xf32>
    %756 = arith.subf %718, %755 : vector<16x128xf32>
    %757 = arith.mulf %756, %756 : vector<16x128xf32>
    %cst_231 = arith.constant dense<0.000000e+00> : vector<128xf32>
    %758 = vector.multi_reduction <add>, %757, %cst_231 [0] : vector<16x128xf32> to vector<128xf32>
    %759 = vector.shape_cast %758 : vector<128xf32> to vector<1x128xf32>
    %cst_232 = arith.constant 0.000000e+00 : f32
    %760 = vector.broadcast %cst_232 : f32 to vector<1x128xf32>
    %761 = arith.cmpf ogt, %721, %760 : vector<1x128xf32>
    %cst_233 = arith.constant 0.000000e+00 : f32
    %762 = vector.broadcast %cst_233 : f32 to vector<1x128xf32>
    %763 = arith.cmpf ogt, %721, %762 : vector<1x128xf32>
    %cst_234 = arith.constant 1.000000e+00 : f32
    %764 = vector.broadcast %cst_234 : f32 to vector<1x128xf32>
    %765 = arith.select %763, %721, %764 : vector<1x128xi1>, vector<1x128xf32>
    %766 = arith.divf %759, %765 : vector<1x128xf32>
    %cst_235 = arith.constant 0.000000e+00 : f32
    %767 = vector.broadcast %cst_235 : f32 to vector<1x128xf32>
    %768 = arith.select %761, %766, %767 : vector<1x128xi1>, vector<1x128xf32>
    %769 = vector.broadcast %768 : vector<1x128xf32> to vector<16x128xf32>
    %770 = arith.mulf %769, %733 : vector<16x128xf32>
    %771 = arith.addf %756, %770 : vector<16x128xf32>
    %c19_i32 = arith.constant 19 : i32
    %772 = arith.mulf %39, %771 : vector<16x128xf32>
    %cst_236 = arith.constant dense<0.000000e+00> : vector<16x128xf32>
    %773 = tpu.matmul %22, %772, %cst_236 {dimension_numbers = #tpu.dot_dimension_numbers<[1], [0], [0], [1], [0, 0, 1, 1], [], []>} : vector<16x16xf32>, vector<16x128xf32>, vector<16x128xf32> -> vector<16x128xf32>
    %774 = arith.mulf %8, %773 : vector<16x128xf32>
    %775 = arith.mulf %43, %771 : vector<16x128xf32>
    %776 = arith.addf %774, %775 : vector<16x128xf32>
    %777 = arith.mulf %771, %776 : vector<16x128xf32>
    %cst_237 = arith.constant dense<0.000000e+00> : vector<128xf32>
    %778 = vector.multi_reduction <add>, %777, %cst_237 [0] : vector<16x128xf32> to vector<128xf32>
    %779 = vector.shape_cast %778 : vector<128xf32> to vector<1x128xf32>
    %cst_238 = arith.constant 0.000000e+00 : f32
    %780 = vector.broadcast %cst_238 : f32 to vector<1x128xf32>
    %781 = arith.cmpf ogt, %779, %780 : vector<1x128xf32>
    %cst_239 = arith.constant 0.000000e+00 : f32
    %782 = vector.broadcast %cst_239 : f32 to vector<1x128xf32>
    %783 = arith.cmpf ogt, %779, %782 : vector<1x128xf32>
    %cst_240 = arith.constant 1.000000e+00 : f32
    %784 = vector.broadcast %cst_240 : f32 to vector<1x128xf32>
    %785 = arith.select %783, %779, %784 : vector<1x128xi1>, vector<1x128xf32>
    %786 = arith.divf %759, %785 : vector<1x128xf32>
    %cst_241 = arith.constant 0.000000e+00 : f32
    %787 = vector.broadcast %cst_241 : f32 to vector<1x128xf32>
    %788 = arith.select %781, %786, %787 : vector<1x128xi1>, vector<1x128xf32>
    %789 = vector.broadcast %788 : vector<1x128xf32> to vector<16x128xf32>
    %790 = arith.mulf %789, %771 : vector<16x128xf32>
    %791 = arith.addf %753, %790 : vector<16x128xf32>
    %792 = vector.broadcast %788 : vector<1x128xf32> to vector<16x128xf32>
    %793 = arith.mulf %792, %776 : vector<16x128xf32>
    %794 = arith.subf %756, %793 : vector<16x128xf32>
    %795 = arith.mulf %794, %794 : vector<16x128xf32>
    %cst_242 = arith.constant dense<0.000000e+00> : vector<128xf32>
    %796 = vector.multi_reduction <add>, %795, %cst_242 [0] : vector<16x128xf32> to vector<128xf32>
    %797 = vector.shape_cast %796 : vector<128xf32> to vector<1x128xf32>
    %cst_243 = arith.constant 0.000000e+00 : f32
    %798 = vector.broadcast %cst_243 : f32 to vector<1x128xf32>
    %799 = arith.cmpf ogt, %759, %798 : vector<1x128xf32>
    %cst_244 = arith.constant 0.000000e+00 : f32
    %800 = vector.broadcast %cst_244 : f32 to vector<1x128xf32>
    %801 = arith.cmpf ogt, %759, %800 : vector<1x128xf32>
    %cst_245 = arith.constant 1.000000e+00 : f32
    %802 = vector.broadcast %cst_245 : f32 to vector<1x128xf32>
    %803 = arith.select %801, %759, %802 : vector<1x128xi1>, vector<1x128xf32>
    %804 = arith.divf %797, %803 : vector<1x128xf32>
    %cst_246 = arith.constant 0.000000e+00 : f32
    %805 = vector.broadcast %cst_246 : f32 to vector<1x128xf32>
    %806 = arith.select %799, %804, %805 : vector<1x128xi1>, vector<1x128xf32>
    %807 = vector.broadcast %806 : vector<1x128xf32> to vector<16x128xf32>
    %808 = arith.mulf %807, %771 : vector<16x128xf32>
    %809 = arith.addf %794, %808 : vector<16x128xf32>
    %c20_i32 = arith.constant 20 : i32
    %810 = arith.mulf %39, %809 : vector<16x128xf32>
    %cst_247 = arith.constant dense<0.000000e+00> : vector<16x128xf32>
    %811 = tpu.matmul %22, %810, %cst_247 {dimension_numbers = #tpu.dot_dimension_numbers<[1], [0], [0], [1], [0, 0, 1, 1], [], []>} : vector<16x16xf32>, vector<16x128xf32>, vector<16x128xf32> -> vector<16x128xf32>
    %812 = arith.mulf %8, %811 : vector<16x128xf32>
    %813 = arith.mulf %43, %809 : vector<16x128xf32>
    %814 = arith.addf %812, %813 : vector<16x128xf32>
    %815 = arith.mulf %809, %814 : vector<16x128xf32>
    %cst_248 = arith.constant dense<0.000000e+00> : vector<128xf32>
    %816 = vector.multi_reduction <add>, %815, %cst_248 [0] : vector<16x128xf32> to vector<128xf32>
    %817 = vector.shape_cast %816 : vector<128xf32> to vector<1x128xf32>
    %cst_249 = arith.constant 0.000000e+00 : f32
    %818 = vector.broadcast %cst_249 : f32 to vector<1x128xf32>
    %819 = arith.cmpf ogt, %817, %818 : vector<1x128xf32>
    %cst_250 = arith.constant 0.000000e+00 : f32
    %820 = vector.broadcast %cst_250 : f32 to vector<1x128xf32>
    %821 = arith.cmpf ogt, %817, %820 : vector<1x128xf32>
    %cst_251 = arith.constant 1.000000e+00 : f32
    %822 = vector.broadcast %cst_251 : f32 to vector<1x128xf32>
    %823 = arith.select %821, %817, %822 : vector<1x128xi1>, vector<1x128xf32>
    %824 = arith.divf %797, %823 : vector<1x128xf32>
    %cst_252 = arith.constant 0.000000e+00 : f32
    %825 = vector.broadcast %cst_252 : f32 to vector<1x128xf32>
    %826 = arith.select %819, %824, %825 : vector<1x128xi1>, vector<1x128xf32>
    %827 = vector.broadcast %826 : vector<1x128xf32> to vector<16x128xf32>
    %828 = arith.mulf %827, %809 : vector<16x128xf32>
    %829 = arith.addf %791, %828 : vector<16x128xf32>
    %830 = vector.broadcast %826 : vector<1x128xf32> to vector<16x128xf32>
    %831 = arith.mulf %830, %814 : vector<16x128xf32>
    %832 = arith.subf %794, %831 : vector<16x128xf32>
    %833 = arith.mulf %832, %832 : vector<16x128xf32>
    %cst_253 = arith.constant dense<0.000000e+00> : vector<128xf32>
    %834 = vector.multi_reduction <add>, %833, %cst_253 [0] : vector<16x128xf32> to vector<128xf32>
    %835 = vector.shape_cast %834 : vector<128xf32> to vector<1x128xf32>
    %cst_254 = arith.constant 0.000000e+00 : f32
    %836 = vector.broadcast %cst_254 : f32 to vector<1x128xf32>
    %837 = arith.cmpf ogt, %797, %836 : vector<1x128xf32>
    %cst_255 = arith.constant 0.000000e+00 : f32
    %838 = vector.broadcast %cst_255 : f32 to vector<1x128xf32>
    %839 = arith.cmpf ogt, %797, %838 : vector<1x128xf32>
    %cst_256 = arith.constant 1.000000e+00 : f32
    %840 = vector.broadcast %cst_256 : f32 to vector<1x128xf32>
    %841 = arith.select %839, %797, %840 : vector<1x128xi1>, vector<1x128xf32>
    %842 = arith.divf %835, %841 : vector<1x128xf32>
    %cst_257 = arith.constant 0.000000e+00 : f32
    %843 = vector.broadcast %cst_257 : f32 to vector<1x128xf32>
    %844 = arith.select %837, %842, %843 : vector<1x128xi1>, vector<1x128xf32>
    %845 = vector.broadcast %844 : vector<1x128xf32> to vector<16x128xf32>
    %846 = arith.mulf %845, %809 : vector<16x128xf32>
    %847 = arith.addf %832, %846 : vector<16x128xf32>
    %c21_i32 = arith.constant 21 : i32
    %848 = arith.mulf %39, %847 : vector<16x128xf32>
    %cst_258 = arith.constant dense<0.000000e+00> : vector<16x128xf32>
    %849 = tpu.matmul %22, %848, %cst_258 {dimension_numbers = #tpu.dot_dimension_numbers<[1], [0], [0], [1], [0, 0, 1, 1], [], []>} : vector<16x16xf32>, vector<16x128xf32>, vector<16x128xf32> -> vector<16x128xf32>
    %850 = arith.mulf %8, %849 : vector<16x128xf32>
    %851 = arith.mulf %43, %847 : vector<16x128xf32>
    %852 = arith.addf %850, %851 : vector<16x128xf32>
    %853 = arith.mulf %847, %852 : vector<16x128xf32>
    %cst_259 = arith.constant dense<0.000000e+00> : vector<128xf32>
    %854 = vector.multi_reduction <add>, %853, %cst_259 [0] : vector<16x128xf32> to vector<128xf32>
    %855 = vector.shape_cast %854 : vector<128xf32> to vector<1x128xf32>
    %cst_260 = arith.constant 0.000000e+00 : f32
    %856 = vector.broadcast %cst_260 : f32 to vector<1x128xf32>
    %857 = arith.cmpf ogt, %855, %856 : vector<1x128xf32>
    %cst_261 = arith.constant 0.000000e+00 : f32
    %858 = vector.broadcast %cst_261 : f32 to vector<1x128xf32>
    %859 = arith.cmpf ogt, %855, %858 : vector<1x128xf32>
    %cst_262 = arith.constant 1.000000e+00 : f32
    %860 = vector.broadcast %cst_262 : f32 to vector<1x128xf32>
    %861 = arith.select %859, %855, %860 : vector<1x128xi1>, vector<1x128xf32>
    %862 = arith.divf %835, %861 : vector<1x128xf32>
    %cst_263 = arith.constant 0.000000e+00 : f32
    %863 = vector.broadcast %cst_263 : f32 to vector<1x128xf32>
    %864 = arith.select %857, %862, %863 : vector<1x128xi1>, vector<1x128xf32>
    %865 = vector.broadcast %864 : vector<1x128xf32> to vector<16x128xf32>
    %866 = arith.mulf %865, %847 : vector<16x128xf32>
    %867 = arith.addf %829, %866 : vector<16x128xf32>
    %868 = vector.broadcast %864 : vector<1x128xf32> to vector<16x128xf32>
    %869 = arith.mulf %868, %852 : vector<16x128xf32>
    %870 = arith.subf %832, %869 : vector<16x128xf32>
    %871 = arith.mulf %870, %870 : vector<16x128xf32>
    %cst_264 = arith.constant dense<0.000000e+00> : vector<128xf32>
    %872 = vector.multi_reduction <add>, %871, %cst_264 [0] : vector<16x128xf32> to vector<128xf32>
    %873 = vector.shape_cast %872 : vector<128xf32> to vector<1x128xf32>
    %cst_265 = arith.constant 0.000000e+00 : f32
    %874 = vector.broadcast %cst_265 : f32 to vector<1x128xf32>
    %875 = arith.cmpf ogt, %835, %874 : vector<1x128xf32>
    %cst_266 = arith.constant 0.000000e+00 : f32
    %876 = vector.broadcast %cst_266 : f32 to vector<1x128xf32>
    %877 = arith.cmpf ogt, %835, %876 : vector<1x128xf32>
    %cst_267 = arith.constant 1.000000e+00 : f32
    %878 = vector.broadcast %cst_267 : f32 to vector<1x128xf32>
    %879 = arith.select %877, %835, %878 : vector<1x128xi1>, vector<1x128xf32>
    %880 = arith.divf %873, %879 : vector<1x128xf32>
    %cst_268 = arith.constant 0.000000e+00 : f32
    %881 = vector.broadcast %cst_268 : f32 to vector<1x128xf32>
    %882 = arith.select %875, %880, %881 : vector<1x128xi1>, vector<1x128xf32>
    %883 = vector.broadcast %882 : vector<1x128xf32> to vector<16x128xf32>
    %884 = arith.mulf %883, %847 : vector<16x128xf32>
    %885 = arith.addf %870, %884 : vector<16x128xf32>
    %c22_i32 = arith.constant 22 : i32
    %886 = arith.mulf %39, %885 : vector<16x128xf32>
    %cst_269 = arith.constant dense<0.000000e+00> : vector<16x128xf32>
    %887 = tpu.matmul %22, %886, %cst_269 {dimension_numbers = #tpu.dot_dimension_numbers<[1], [0], [0], [1], [0, 0, 1, 1], [], []>} : vector<16x16xf32>, vector<16x128xf32>, vector<16x128xf32> -> vector<16x128xf32>
    %888 = arith.mulf %8, %887 : vector<16x128xf32>
    %889 = arith.mulf %43, %885 : vector<16x128xf32>
    %890 = arith.addf %888, %889 : vector<16x128xf32>
    %891 = arith.mulf %885, %890 : vector<16x128xf32>
    %cst_270 = arith.constant dense<0.000000e+00> : vector<128xf32>
    %892 = vector.multi_reduction <add>, %891, %cst_270 [0] : vector<16x128xf32> to vector<128xf32>
    %893 = vector.shape_cast %892 : vector<128xf32> to vector<1x128xf32>
    %cst_271 = arith.constant 0.000000e+00 : f32
    %894 = vector.broadcast %cst_271 : f32 to vector<1x128xf32>
    %895 = arith.cmpf ogt, %893, %894 : vector<1x128xf32>
    %cst_272 = arith.constant 0.000000e+00 : f32
    %896 = vector.broadcast %cst_272 : f32 to vector<1x128xf32>
    %897 = arith.cmpf ogt, %893, %896 : vector<1x128xf32>
    %cst_273 = arith.constant 1.000000e+00 : f32
    %898 = vector.broadcast %cst_273 : f32 to vector<1x128xf32>
    %899 = arith.select %897, %893, %898 : vector<1x128xi1>, vector<1x128xf32>
    %900 = arith.divf %873, %899 : vector<1x128xf32>
    %cst_274 = arith.constant 0.000000e+00 : f32
    %901 = vector.broadcast %cst_274 : f32 to vector<1x128xf32>
    %902 = arith.select %895, %900, %901 : vector<1x128xi1>, vector<1x128xf32>
    %903 = vector.broadcast %902 : vector<1x128xf32> to vector<16x128xf32>
    %904 = arith.mulf %903, %885 : vector<16x128xf32>
    %905 = arith.addf %867, %904 : vector<16x128xf32>
    %906 = vector.broadcast %902 : vector<1x128xf32> to vector<16x128xf32>
    %907 = arith.mulf %906, %890 : vector<16x128xf32>
    %908 = arith.subf %870, %907 : vector<16x128xf32>
    %909 = arith.mulf %908, %908 : vector<16x128xf32>
    %cst_275 = arith.constant dense<0.000000e+00> : vector<128xf32>
    %910 = vector.multi_reduction <add>, %909, %cst_275 [0] : vector<16x128xf32> to vector<128xf32>
    %911 = vector.shape_cast %910 : vector<128xf32> to vector<1x128xf32>
    %cst_276 = arith.constant 0.000000e+00 : f32
    %912 = vector.broadcast %cst_276 : f32 to vector<1x128xf32>
    %913 = arith.cmpf ogt, %873, %912 : vector<1x128xf32>
    %cst_277 = arith.constant 0.000000e+00 : f32
    %914 = vector.broadcast %cst_277 : f32 to vector<1x128xf32>
    %915 = arith.cmpf ogt, %873, %914 : vector<1x128xf32>
    %cst_278 = arith.constant 1.000000e+00 : f32
    %916 = vector.broadcast %cst_278 : f32 to vector<1x128xf32>
    %917 = arith.select %915, %873, %916 : vector<1x128xi1>, vector<1x128xf32>
    %918 = arith.divf %911, %917 : vector<1x128xf32>
    %cst_279 = arith.constant 0.000000e+00 : f32
    %919 = vector.broadcast %cst_279 : f32 to vector<1x128xf32>
    %920 = arith.select %913, %918, %919 : vector<1x128xi1>, vector<1x128xf32>
    %921 = vector.broadcast %920 : vector<1x128xf32> to vector<16x128xf32>
    %922 = arith.mulf %921, %885 : vector<16x128xf32>
    %923 = arith.addf %908, %922 : vector<16x128xf32>
    %c23_i32 = arith.constant 23 : i32
    %924 = arith.mulf %39, %923 : vector<16x128xf32>
    %cst_280 = arith.constant dense<0.000000e+00> : vector<16x128xf32>
    %925 = tpu.matmul %22, %924, %cst_280 {dimension_numbers = #tpu.dot_dimension_numbers<[1], [0], [0], [1], [0, 0, 1, 1], [], []>} : vector<16x16xf32>, vector<16x128xf32>, vector<16x128xf32> -> vector<16x128xf32>
    %926 = arith.mulf %8, %925 : vector<16x128xf32>
    %927 = arith.mulf %43, %923 : vector<16x128xf32>
    %928 = arith.addf %926, %927 : vector<16x128xf32>
    %929 = arith.mulf %923, %928 : vector<16x128xf32>
    %cst_281 = arith.constant dense<0.000000e+00> : vector<128xf32>
    %930 = vector.multi_reduction <add>, %929, %cst_281 [0] : vector<16x128xf32> to vector<128xf32>
    %931 = vector.shape_cast %930 : vector<128xf32> to vector<1x128xf32>
    %cst_282 = arith.constant 0.000000e+00 : f32
    %932 = vector.broadcast %cst_282 : f32 to vector<1x128xf32>
    %933 = arith.cmpf ogt, %931, %932 : vector<1x128xf32>
    %cst_283 = arith.constant 0.000000e+00 : f32
    %934 = vector.broadcast %cst_283 : f32 to vector<1x128xf32>
    %935 = arith.cmpf ogt, %931, %934 : vector<1x128xf32>
    %cst_284 = arith.constant 1.000000e+00 : f32
    %936 = vector.broadcast %cst_284 : f32 to vector<1x128xf32>
    %937 = arith.select %935, %931, %936 : vector<1x128xi1>, vector<1x128xf32>
    %938 = arith.divf %911, %937 : vector<1x128xf32>
    %cst_285 = arith.constant 0.000000e+00 : f32
    %939 = vector.broadcast %cst_285 : f32 to vector<1x128xf32>
    %940 = arith.select %933, %938, %939 : vector<1x128xi1>, vector<1x128xf32>
    %941 = vector.broadcast %940 : vector<1x128xf32> to vector<16x128xf32>
    %942 = arith.mulf %941, %923 : vector<16x128xf32>
    %943 = arith.addf %905, %942 : vector<16x128xf32>
    %944 = vector.broadcast %940 : vector<1x128xf32> to vector<16x128xf32>
    %945 = arith.mulf %944, %928 : vector<16x128xf32>
    %946 = arith.subf %908, %945 : vector<16x128xf32>
    %947 = arith.mulf %946, %946 : vector<16x128xf32>
    %cst_286 = arith.constant dense<0.000000e+00> : vector<128xf32>
    %948 = vector.multi_reduction <add>, %947, %cst_286 [0] : vector<16x128xf32> to vector<128xf32>
    %949 = vector.shape_cast %948 : vector<128xf32> to vector<1x128xf32>
    %cst_287 = arith.constant 0.000000e+00 : f32
    %950 = vector.broadcast %cst_287 : f32 to vector<1x128xf32>
    %951 = arith.cmpf ogt, %911, %950 : vector<1x128xf32>
    %cst_288 = arith.constant 0.000000e+00 : f32
    %952 = vector.broadcast %cst_288 : f32 to vector<1x128xf32>
    %953 = arith.cmpf ogt, %911, %952 : vector<1x128xf32>
    %cst_289 = arith.constant 1.000000e+00 : f32
    %954 = vector.broadcast %cst_289 : f32 to vector<1x128xf32>
    %955 = arith.select %953, %911, %954 : vector<1x128xi1>, vector<1x128xf32>
    %956 = arith.divf %949, %955 : vector<1x128xf32>
    %cst_290 = arith.constant 0.000000e+00 : f32
    %957 = vector.broadcast %cst_290 : f32 to vector<1x128xf32>
    %958 = arith.select %951, %956, %957 : vector<1x128xi1>, vector<1x128xf32>
    %959 = vector.broadcast %958 : vector<1x128xf32> to vector<16x128xf32>
    %960 = arith.mulf %959, %923 : vector<16x128xf32>
    %961 = arith.addf %946, %960 : vector<16x128xf32>
    %c24_i32 = arith.constant 24 : i32
    %962 = arith.mulf %39, %961 : vector<16x128xf32>
    %cst_291 = arith.constant dense<0.000000e+00> : vector<16x128xf32>
    %963 = tpu.matmul %22, %962, %cst_291 {dimension_numbers = #tpu.dot_dimension_numbers<[1], [0], [0], [1], [0, 0, 1, 1], [], []>} : vector<16x16xf32>, vector<16x128xf32>, vector<16x128xf32> -> vector<16x128xf32>
    %964 = arith.mulf %8, %963 : vector<16x128xf32>
    %965 = arith.mulf %43, %961 : vector<16x128xf32>
    %966 = arith.addf %964, %965 : vector<16x128xf32>
    %967 = arith.mulf %961, %966 : vector<16x128xf32>
    %cst_292 = arith.constant dense<0.000000e+00> : vector<128xf32>
    %968 = vector.multi_reduction <add>, %967, %cst_292 [0] : vector<16x128xf32> to vector<128xf32>
    %969 = vector.shape_cast %968 : vector<128xf32> to vector<1x128xf32>
    %cst_293 = arith.constant 0.000000e+00 : f32
    %970 = vector.broadcast %cst_293 : f32 to vector<1x128xf32>
    %971 = arith.cmpf ogt, %969, %970 : vector<1x128xf32>
    %cst_294 = arith.constant 0.000000e+00 : f32
    %972 = vector.broadcast %cst_294 : f32 to vector<1x128xf32>
    %973 = arith.cmpf ogt, %969, %972 : vector<1x128xf32>
    %cst_295 = arith.constant 1.000000e+00 : f32
    %974 = vector.broadcast %cst_295 : f32 to vector<1x128xf32>
    %975 = arith.select %973, %969, %974 : vector<1x128xi1>, vector<1x128xf32>
    %976 = arith.divf %949, %975 : vector<1x128xf32>
    %cst_296 = arith.constant 0.000000e+00 : f32
    %977 = vector.broadcast %cst_296 : f32 to vector<1x128xf32>
    %978 = arith.select %971, %976, %977 : vector<1x128xi1>, vector<1x128xf32>
    %979 = vector.broadcast %978 : vector<1x128xf32> to vector<16x128xf32>
    %980 = arith.mulf %979, %961 : vector<16x128xf32>
    %981 = arith.addf %943, %980 : vector<16x128xf32>
    %982 = vector.broadcast %978 : vector<1x128xf32> to vector<16x128xf32>
    %983 = arith.mulf %982, %966 : vector<16x128xf32>
    %984 = arith.subf %946, %983 : vector<16x128xf32>
    %985 = arith.mulf %984, %984 : vector<16x128xf32>
    %cst_297 = arith.constant dense<0.000000e+00> : vector<128xf32>
    %986 = vector.multi_reduction <add>, %985, %cst_297 [0] : vector<16x128xf32> to vector<128xf32>
    %987 = vector.shape_cast %986 : vector<128xf32> to vector<1x128xf32>
    %cst_298 = arith.constant 0.000000e+00 : f32
    %988 = vector.broadcast %cst_298 : f32 to vector<1x128xf32>
    %989 = arith.cmpf ogt, %949, %988 : vector<1x128xf32>
    %cst_299 = arith.constant 0.000000e+00 : f32
    %990 = vector.broadcast %cst_299 : f32 to vector<1x128xf32>
    %991 = arith.cmpf ogt, %949, %990 : vector<1x128xf32>
    %cst_300 = arith.constant 1.000000e+00 : f32
    %992 = vector.broadcast %cst_300 : f32 to vector<1x128xf32>
    %993 = arith.select %991, %949, %992 : vector<1x128xi1>, vector<1x128xf32>
    %994 = arith.divf %987, %993 : vector<1x128xf32>
    %cst_301 = arith.constant 0.000000e+00 : f32
    %995 = vector.broadcast %cst_301 : f32 to vector<1x128xf32>
    %996 = arith.select %989, %994, %995 : vector<1x128xi1>, vector<1x128xf32>
    %997 = vector.broadcast %996 : vector<1x128xf32> to vector<16x128xf32>
    %998 = arith.mulf %997, %961 : vector<16x128xf32>
    %999 = arith.addf %984, %998 : vector<16x128xf32>
    %c25_i32 = arith.constant 25 : i32
    %1000 = arith.mulf %39, %999 : vector<16x128xf32>
    %cst_302 = arith.constant dense<0.000000e+00> : vector<16x128xf32>
    %1001 = tpu.matmul %22, %1000, %cst_302 {dimension_numbers = #tpu.dot_dimension_numbers<[1], [0], [0], [1], [0, 0, 1, 1], [], []>} : vector<16x16xf32>, vector<16x128xf32>, vector<16x128xf32> -> vector<16x128xf32>
    %1002 = arith.mulf %8, %1001 : vector<16x128xf32>
    %1003 = arith.mulf %43, %999 : vector<16x128xf32>
    %1004 = arith.addf %1002, %1003 : vector<16x128xf32>
    %1005 = arith.mulf %999, %1004 : vector<16x128xf32>
    %cst_303 = arith.constant dense<0.000000e+00> : vector<128xf32>
    %1006 = vector.multi_reduction <add>, %1005, %cst_303 [0] : vector<16x128xf32> to vector<128xf32>
    %1007 = vector.shape_cast %1006 : vector<128xf32> to vector<1x128xf32>
    %cst_304 = arith.constant 0.000000e+00 : f32
    %1008 = vector.broadcast %cst_304 : f32 to vector<1x128xf32>
    %1009 = arith.cmpf ogt, %1007, %1008 : vector<1x128xf32>
    %cst_305 = arith.constant 0.000000e+00 : f32
    %1010 = vector.broadcast %cst_305 : f32 to vector<1x128xf32>
    %1011 = arith.cmpf ogt, %1007, %1010 : vector<1x128xf32>
    %cst_306 = arith.constant 1.000000e+00 : f32
    %1012 = vector.broadcast %cst_306 : f32 to vector<1x128xf32>
    %1013 = arith.select %1011, %1007, %1012 : vector<1x128xi1>, vector<1x128xf32>
    %1014 = arith.divf %987, %1013 : vector<1x128xf32>
    %cst_307 = arith.constant 0.000000e+00 : f32
    %1015 = vector.broadcast %cst_307 : f32 to vector<1x128xf32>
    %1016 = arith.select %1009, %1014, %1015 : vector<1x128xi1>, vector<1x128xf32>
    %1017 = vector.broadcast %1016 : vector<1x128xf32> to vector<16x128xf32>
    %1018 = arith.mulf %1017, %999 : vector<16x128xf32>
    %1019 = arith.addf %981, %1018 : vector<16x128xf32>
    %1020 = vector.broadcast %1016 : vector<1x128xf32> to vector<16x128xf32>
    %1021 = arith.mulf %1020, %1004 : vector<16x128xf32>
    %1022 = arith.subf %984, %1021 : vector<16x128xf32>
    %1023 = arith.mulf %1022, %1022 : vector<16x128xf32>
    %cst_308 = arith.constant dense<0.000000e+00> : vector<128xf32>
    %1024 = vector.multi_reduction <add>, %1023, %cst_308 [0] : vector<16x128xf32> to vector<128xf32>
    %1025 = vector.shape_cast %1024 : vector<128xf32> to vector<1x128xf32>
    %cst_309 = arith.constant 0.000000e+00 : f32
    %1026 = vector.broadcast %cst_309 : f32 to vector<1x128xf32>
    %1027 = arith.cmpf ogt, %987, %1026 : vector<1x128xf32>
    %cst_310 = arith.constant 0.000000e+00 : f32
    %1028 = vector.broadcast %cst_310 : f32 to vector<1x128xf32>
    %1029 = arith.cmpf ogt, %987, %1028 : vector<1x128xf32>
    %cst_311 = arith.constant 1.000000e+00 : f32
    %1030 = vector.broadcast %cst_311 : f32 to vector<1x128xf32>
    %1031 = arith.select %1029, %987, %1030 : vector<1x128xi1>, vector<1x128xf32>
    %1032 = arith.divf %1025, %1031 : vector<1x128xf32>
    %cst_312 = arith.constant 0.000000e+00 : f32
    %1033 = vector.broadcast %cst_312 : f32 to vector<1x128xf32>
    %1034 = arith.select %1027, %1032, %1033 : vector<1x128xi1>, vector<1x128xf32>
    %1035 = vector.broadcast %1034 : vector<1x128xf32> to vector<16x128xf32>
    %1036 = arith.mulf %1035, %999 : vector<16x128xf32>
    %1037 = arith.addf %1022, %1036 : vector<16x128xf32>
    %c26_i32 = arith.constant 26 : i32
    %1038 = arith.mulf %39, %1037 : vector<16x128xf32>
    %cst_313 = arith.constant dense<0.000000e+00> : vector<16x128xf32>
    %1039 = tpu.matmul %22, %1038, %cst_313 {dimension_numbers = #tpu.dot_dimension_numbers<[1], [0], [0], [1], [0, 0, 1, 1], [], []>} : vector<16x16xf32>, vector<16x128xf32>, vector<16x128xf32> -> vector<16x128xf32>
    %1040 = arith.mulf %8, %1039 : vector<16x128xf32>
    %1041 = arith.mulf %43, %1037 : vector<16x128xf32>
    %1042 = arith.addf %1040, %1041 : vector<16x128xf32>
    %1043 = arith.mulf %1037, %1042 : vector<16x128xf32>
    %cst_314 = arith.constant dense<0.000000e+00> : vector<128xf32>
    %1044 = vector.multi_reduction <add>, %1043, %cst_314 [0] : vector<16x128xf32> to vector<128xf32>
    %1045 = vector.shape_cast %1044 : vector<128xf32> to vector<1x128xf32>
    %cst_315 = arith.constant 0.000000e+00 : f32
    %1046 = vector.broadcast %cst_315 : f32 to vector<1x128xf32>
    %1047 = arith.cmpf ogt, %1045, %1046 : vector<1x128xf32>
    %cst_316 = arith.constant 0.000000e+00 : f32
    %1048 = vector.broadcast %cst_316 : f32 to vector<1x128xf32>
    %1049 = arith.cmpf ogt, %1045, %1048 : vector<1x128xf32>
    %cst_317 = arith.constant 1.000000e+00 : f32
    %1050 = vector.broadcast %cst_317 : f32 to vector<1x128xf32>
    %1051 = arith.select %1049, %1045, %1050 : vector<1x128xi1>, vector<1x128xf32>
    %1052 = arith.divf %1025, %1051 : vector<1x128xf32>
    %cst_318 = arith.constant 0.000000e+00 : f32
    %1053 = vector.broadcast %cst_318 : f32 to vector<1x128xf32>
    %1054 = arith.select %1047, %1052, %1053 : vector<1x128xi1>, vector<1x128xf32>
    %1055 = vector.broadcast %1054 : vector<1x128xf32> to vector<16x128xf32>
    %1056 = arith.mulf %1055, %1037 : vector<16x128xf32>
    %1057 = arith.addf %1019, %1056 : vector<16x128xf32>
    %1058 = vector.broadcast %1054 : vector<1x128xf32> to vector<16x128xf32>
    %1059 = arith.mulf %1058, %1042 : vector<16x128xf32>
    %1060 = arith.subf %1022, %1059 : vector<16x128xf32>
    %1061 = arith.mulf %1060, %1060 : vector<16x128xf32>
    %cst_319 = arith.constant dense<0.000000e+00> : vector<128xf32>
    %1062 = vector.multi_reduction <add>, %1061, %cst_319 [0] : vector<16x128xf32> to vector<128xf32>
    %1063 = vector.shape_cast %1062 : vector<128xf32> to vector<1x128xf32>
    %cst_320 = arith.constant 0.000000e+00 : f32
    %1064 = vector.broadcast %cst_320 : f32 to vector<1x128xf32>
    %1065 = arith.cmpf ogt, %1025, %1064 : vector<1x128xf32>
    %cst_321 = arith.constant 0.000000e+00 : f32
    %1066 = vector.broadcast %cst_321 : f32 to vector<1x128xf32>
    %1067 = arith.cmpf ogt, %1025, %1066 : vector<1x128xf32>
    %cst_322 = arith.constant 1.000000e+00 : f32
    %1068 = vector.broadcast %cst_322 : f32 to vector<1x128xf32>
    %1069 = arith.select %1067, %1025, %1068 : vector<1x128xi1>, vector<1x128xf32>
    %1070 = arith.divf %1063, %1069 : vector<1x128xf32>
    %cst_323 = arith.constant 0.000000e+00 : f32
    %1071 = vector.broadcast %cst_323 : f32 to vector<1x128xf32>
    %1072 = arith.select %1065, %1070, %1071 : vector<1x128xi1>, vector<1x128xf32>
    %1073 = vector.broadcast %1072 : vector<1x128xf32> to vector<16x128xf32>
    %1074 = arith.mulf %1073, %1037 : vector<16x128xf32>
    %1075 = arith.addf %1060, %1074 : vector<16x128xf32>
    %c27_i32 = arith.constant 27 : i32
    %1076 = arith.mulf %39, %1075 : vector<16x128xf32>
    %cst_324 = arith.constant dense<0.000000e+00> : vector<16x128xf32>
    %1077 = tpu.matmul %22, %1076, %cst_324 {dimension_numbers = #tpu.dot_dimension_numbers<[1], [0], [0], [1], [0, 0, 1, 1], [], []>} : vector<16x16xf32>, vector<16x128xf32>, vector<16x128xf32> -> vector<16x128xf32>
    %1078 = arith.mulf %8, %1077 : vector<16x128xf32>
    %1079 = arith.mulf %43, %1075 : vector<16x128xf32>
    %1080 = arith.addf %1078, %1079 : vector<16x128xf32>
    %1081 = arith.mulf %1075, %1080 : vector<16x128xf32>
    %cst_325 = arith.constant dense<0.000000e+00> : vector<128xf32>
    %1082 = vector.multi_reduction <add>, %1081, %cst_325 [0] : vector<16x128xf32> to vector<128xf32>
    %1083 = vector.shape_cast %1082 : vector<128xf32> to vector<1x128xf32>
    %cst_326 = arith.constant 0.000000e+00 : f32
    %1084 = vector.broadcast %cst_326 : f32 to vector<1x128xf32>
    %1085 = arith.cmpf ogt, %1083, %1084 : vector<1x128xf32>
    %cst_327 = arith.constant 0.000000e+00 : f32
    %1086 = vector.broadcast %cst_327 : f32 to vector<1x128xf32>
    %1087 = arith.cmpf ogt, %1083, %1086 : vector<1x128xf32>
    %cst_328 = arith.constant 1.000000e+00 : f32
    %1088 = vector.broadcast %cst_328 : f32 to vector<1x128xf32>
    %1089 = arith.select %1087, %1083, %1088 : vector<1x128xi1>, vector<1x128xf32>
    %1090 = arith.divf %1063, %1089 : vector<1x128xf32>
    %cst_329 = arith.constant 0.000000e+00 : f32
    %1091 = vector.broadcast %cst_329 : f32 to vector<1x128xf32>
    %1092 = arith.select %1085, %1090, %1091 : vector<1x128xi1>, vector<1x128xf32>
    %1093 = vector.broadcast %1092 : vector<1x128xf32> to vector<16x128xf32>
    %1094 = arith.mulf %1093, %1075 : vector<16x128xf32>
    %1095 = arith.addf %1057, %1094 : vector<16x128xf32>
    %1096 = vector.broadcast %1092 : vector<1x128xf32> to vector<16x128xf32>
    %1097 = arith.mulf %1096, %1080 : vector<16x128xf32>
    %1098 = arith.subf %1060, %1097 : vector<16x128xf32>
    %1099 = arith.mulf %1098, %1098 : vector<16x128xf32>
    %cst_330 = arith.constant dense<0.000000e+00> : vector<128xf32>
    %1100 = vector.multi_reduction <add>, %1099, %cst_330 [0] : vector<16x128xf32> to vector<128xf32>
    %1101 = vector.shape_cast %1100 : vector<128xf32> to vector<1x128xf32>
    %cst_331 = arith.constant 0.000000e+00 : f32
    %1102 = vector.broadcast %cst_331 : f32 to vector<1x128xf32>
    %1103 = arith.cmpf ogt, %1063, %1102 : vector<1x128xf32>
    %cst_332 = arith.constant 0.000000e+00 : f32
    %1104 = vector.broadcast %cst_332 : f32 to vector<1x128xf32>
    %1105 = arith.cmpf ogt, %1063, %1104 : vector<1x128xf32>
    %cst_333 = arith.constant 1.000000e+00 : f32
    %1106 = vector.broadcast %cst_333 : f32 to vector<1x128xf32>
    %1107 = arith.select %1105, %1063, %1106 : vector<1x128xi1>, vector<1x128xf32>
    %1108 = arith.divf %1101, %1107 : vector<1x128xf32>
    %cst_334 = arith.constant 0.000000e+00 : f32
    %1109 = vector.broadcast %cst_334 : f32 to vector<1x128xf32>
    %1110 = arith.select %1103, %1108, %1109 : vector<1x128xi1>, vector<1x128xf32>
    %1111 = vector.broadcast %1110 : vector<1x128xf32> to vector<16x128xf32>
    %1112 = arith.mulf %1111, %1075 : vector<16x128xf32>
    %1113 = arith.addf %1098, %1112 : vector<16x128xf32>
    %c28_i32 = arith.constant 28 : i32
    %1114 = arith.mulf %39, %1113 : vector<16x128xf32>
    %cst_335 = arith.constant dense<0.000000e+00> : vector<16x128xf32>
    %1115 = tpu.matmul %22, %1114, %cst_335 {dimension_numbers = #tpu.dot_dimension_numbers<[1], [0], [0], [1], [0, 0, 1, 1], [], []>} : vector<16x16xf32>, vector<16x128xf32>, vector<16x128xf32> -> vector<16x128xf32>
    %1116 = arith.mulf %8, %1115 : vector<16x128xf32>
    %1117 = arith.mulf %43, %1113 : vector<16x128xf32>
    %1118 = arith.addf %1116, %1117 : vector<16x128xf32>
    %1119 = arith.mulf %1113, %1118 : vector<16x128xf32>
    %cst_336 = arith.constant dense<0.000000e+00> : vector<128xf32>
    %1120 = vector.multi_reduction <add>, %1119, %cst_336 [0] : vector<16x128xf32> to vector<128xf32>
    %1121 = vector.shape_cast %1120 : vector<128xf32> to vector<1x128xf32>
    %cst_337 = arith.constant 0.000000e+00 : f32
    %1122 = vector.broadcast %cst_337 : f32 to vector<1x128xf32>
    %1123 = arith.cmpf ogt, %1121, %1122 : vector<1x128xf32>
    %cst_338 = arith.constant 0.000000e+00 : f32
    %1124 = vector.broadcast %cst_338 : f32 to vector<1x128xf32>
    %1125 = arith.cmpf ogt, %1121, %1124 : vector<1x128xf32>
    %cst_339 = arith.constant 1.000000e+00 : f32
    %1126 = vector.broadcast %cst_339 : f32 to vector<1x128xf32>
    %1127 = arith.select %1125, %1121, %1126 : vector<1x128xi1>, vector<1x128xf32>
    %1128 = arith.divf %1101, %1127 : vector<1x128xf32>
    %cst_340 = arith.constant 0.000000e+00 : f32
    %1129 = vector.broadcast %cst_340 : f32 to vector<1x128xf32>
    %1130 = arith.select %1123, %1128, %1129 : vector<1x128xi1>, vector<1x128xf32>
    %1131 = vector.broadcast %1130 : vector<1x128xf32> to vector<16x128xf32>
    %1132 = arith.mulf %1131, %1113 : vector<16x128xf32>
    %1133 = arith.addf %1095, %1132 : vector<16x128xf32>
    %1134 = vector.broadcast %1130 : vector<1x128xf32> to vector<16x128xf32>
    %1135 = arith.mulf %1134, %1118 : vector<16x128xf32>
    %1136 = arith.subf %1098, %1135 : vector<16x128xf32>
    %1137 = arith.mulf %1136, %1136 : vector<16x128xf32>
    %cst_341 = arith.constant dense<0.000000e+00> : vector<128xf32>
    %1138 = vector.multi_reduction <add>, %1137, %cst_341 [0] : vector<16x128xf32> to vector<128xf32>
    %1139 = vector.shape_cast %1138 : vector<128xf32> to vector<1x128xf32>
    %cst_342 = arith.constant 0.000000e+00 : f32
    %1140 = vector.broadcast %cst_342 : f32 to vector<1x128xf32>
    %1141 = arith.cmpf ogt, %1101, %1140 : vector<1x128xf32>
    %cst_343 = arith.constant 0.000000e+00 : f32
    %1142 = vector.broadcast %cst_343 : f32 to vector<1x128xf32>
    %1143 = arith.cmpf ogt, %1101, %1142 : vector<1x128xf32>
    %cst_344 = arith.constant 1.000000e+00 : f32
    %1144 = vector.broadcast %cst_344 : f32 to vector<1x128xf32>
    %1145 = arith.select %1143, %1101, %1144 : vector<1x128xi1>, vector<1x128xf32>
    %1146 = arith.divf %1139, %1145 : vector<1x128xf32>
    %cst_345 = arith.constant 0.000000e+00 : f32
    %1147 = vector.broadcast %cst_345 : f32 to vector<1x128xf32>
    %1148 = arith.select %1141, %1146, %1147 : vector<1x128xi1>, vector<1x128xf32>
    %1149 = vector.broadcast %1148 : vector<1x128xf32> to vector<16x128xf32>
    %1150 = arith.mulf %1149, %1113 : vector<16x128xf32>
    %1151 = arith.addf %1136, %1150 : vector<16x128xf32>
    %c29_i32 = arith.constant 29 : i32
    %1152 = arith.mulf %39, %1151 : vector<16x128xf32>
    %cst_346 = arith.constant dense<0.000000e+00> : vector<16x128xf32>
    %1153 = tpu.matmul %22, %1152, %cst_346 {dimension_numbers = #tpu.dot_dimension_numbers<[1], [0], [0], [1], [0, 0, 1, 1], [], []>} : vector<16x16xf32>, vector<16x128xf32>, vector<16x128xf32> -> vector<16x128xf32>
    %1154 = arith.mulf %8, %1153 : vector<16x128xf32>
    %1155 = arith.mulf %43, %1151 : vector<16x128xf32>
    %1156 = arith.addf %1154, %1155 : vector<16x128xf32>
    %1157 = arith.mulf %1151, %1156 : vector<16x128xf32>
    %cst_347 = arith.constant dense<0.000000e+00> : vector<128xf32>
    %1158 = vector.multi_reduction <add>, %1157, %cst_347 [0] : vector<16x128xf32> to vector<128xf32>
    %1159 = vector.shape_cast %1158 : vector<128xf32> to vector<1x128xf32>
    %cst_348 = arith.constant 0.000000e+00 : f32
    %1160 = vector.broadcast %cst_348 : f32 to vector<1x128xf32>
    %1161 = arith.cmpf ogt, %1159, %1160 : vector<1x128xf32>
    %cst_349 = arith.constant 0.000000e+00 : f32
    %1162 = vector.broadcast %cst_349 : f32 to vector<1x128xf32>
    %1163 = arith.cmpf ogt, %1159, %1162 : vector<1x128xf32>
    %cst_350 = arith.constant 1.000000e+00 : f32
    %1164 = vector.broadcast %cst_350 : f32 to vector<1x128xf32>
    %1165 = arith.select %1163, %1159, %1164 : vector<1x128xi1>, vector<1x128xf32>
    %1166 = arith.divf %1139, %1165 : vector<1x128xf32>
    %cst_351 = arith.constant 0.000000e+00 : f32
    %1167 = vector.broadcast %cst_351 : f32 to vector<1x128xf32>
    %1168 = arith.select %1161, %1166, %1167 : vector<1x128xi1>, vector<1x128xf32>
    %1169 = vector.broadcast %1168 : vector<1x128xf32> to vector<16x128xf32>
    %1170 = arith.mulf %1169, %1151 : vector<16x128xf32>
    %1171 = arith.addf %1133, %1170 : vector<16x128xf32>
    %1172 = vector.broadcast %1168 : vector<1x128xf32> to vector<16x128xf32>
    %1173 = arith.mulf %1172, %1156 : vector<16x128xf32>
    %1174 = arith.subf %1136, %1173 : vector<16x128xf32>
    %1175 = arith.mulf %1174, %1174 : vector<16x128xf32>
    %cst_352 = arith.constant dense<0.000000e+00> : vector<128xf32>
    %1176 = vector.multi_reduction <add>, %1175, %cst_352 [0] : vector<16x128xf32> to vector<128xf32>
    %1177 = vector.shape_cast %1176 : vector<128xf32> to vector<1x128xf32>
    %cst_353 = arith.constant 0.000000e+00 : f32
    %1178 = vector.broadcast %cst_353 : f32 to vector<1x128xf32>
    %1179 = arith.cmpf ogt, %1139, %1178 : vector<1x128xf32>
    %cst_354 = arith.constant 0.000000e+00 : f32
    %1180 = vector.broadcast %cst_354 : f32 to vector<1x128xf32>
    %1181 = arith.cmpf ogt, %1139, %1180 : vector<1x128xf32>
    %cst_355 = arith.constant 1.000000e+00 : f32
    %1182 = vector.broadcast %cst_355 : f32 to vector<1x128xf32>
    %1183 = arith.select %1181, %1139, %1182 : vector<1x128xi1>, vector<1x128xf32>
    %1184 = arith.divf %1177, %1183 : vector<1x128xf32>
    %cst_356 = arith.constant 0.000000e+00 : f32
    %1185 = vector.broadcast %cst_356 : f32 to vector<1x128xf32>
    %1186 = arith.select %1179, %1184, %1185 : vector<1x128xi1>, vector<1x128xf32>
    %1187 = vector.broadcast %1186 : vector<1x128xf32> to vector<16x128xf32>
    %1188 = arith.mulf %1187, %1151 : vector<16x128xf32>
    %1189 = arith.addf %1174, %1188 : vector<16x128xf32>
    %c30_i32 = arith.constant 30 : i32
    %1190 = arith.mulf %39, %1189 : vector<16x128xf32>
    %cst_357 = arith.constant dense<0.000000e+00> : vector<16x128xf32>
    %1191 = tpu.matmul %22, %1190, %cst_357 {dimension_numbers = #tpu.dot_dimension_numbers<[1], [0], [0], [1], [0, 0, 1, 1], [], []>} : vector<16x16xf32>, vector<16x128xf32>, vector<16x128xf32> -> vector<16x128xf32>
    %1192 = arith.mulf %8, %1191 : vector<16x128xf32>
    %1193 = arith.mulf %43, %1189 : vector<16x128xf32>
    %1194 = arith.addf %1192, %1193 : vector<16x128xf32>
    %1195 = arith.mulf %1189, %1194 : vector<16x128xf32>
    %cst_358 = arith.constant dense<0.000000e+00> : vector<128xf32>
    %1196 = vector.multi_reduction <add>, %1195, %cst_358 [0] : vector<16x128xf32> to vector<128xf32>
    %1197 = vector.shape_cast %1196 : vector<128xf32> to vector<1x128xf32>
    %cst_359 = arith.constant 0.000000e+00 : f32
    %1198 = vector.broadcast %cst_359 : f32 to vector<1x128xf32>
    %1199 = arith.cmpf ogt, %1197, %1198 : vector<1x128xf32>
    %cst_360 = arith.constant 0.000000e+00 : f32
    %1200 = vector.broadcast %cst_360 : f32 to vector<1x128xf32>
    %1201 = arith.cmpf ogt, %1197, %1200 : vector<1x128xf32>
    %cst_361 = arith.constant 1.000000e+00 : f32
    %1202 = vector.broadcast %cst_361 : f32 to vector<1x128xf32>
    %1203 = arith.select %1201, %1197, %1202 : vector<1x128xi1>, vector<1x128xf32>
    %1204 = arith.divf %1177, %1203 : vector<1x128xf32>
    %cst_362 = arith.constant 0.000000e+00 : f32
    %1205 = vector.broadcast %cst_362 : f32 to vector<1x128xf32>
    %1206 = arith.select %1199, %1204, %1205 : vector<1x128xi1>, vector<1x128xf32>
    %1207 = vector.broadcast %1206 : vector<1x128xf32> to vector<16x128xf32>
    %1208 = arith.mulf %1207, %1189 : vector<16x128xf32>
    %1209 = arith.addf %1171, %1208 : vector<16x128xf32>
    %1210 = vector.broadcast %1206 : vector<1x128xf32> to vector<16x128xf32>
    %1211 = arith.mulf %1210, %1194 : vector<16x128xf32>
    %1212 = arith.subf %1174, %1211 : vector<16x128xf32>
    %1213 = arith.mulf %1212, %1212 : vector<16x128xf32>
    %cst_363 = arith.constant dense<0.000000e+00> : vector<128xf32>
    %1214 = vector.multi_reduction <add>, %1213, %cst_363 [0] : vector<16x128xf32> to vector<128xf32>
    %1215 = vector.shape_cast %1214 : vector<128xf32> to vector<1x128xf32>
    %cst_364 = arith.constant 0.000000e+00 : f32
    %1216 = vector.broadcast %cst_364 : f32 to vector<1x128xf32>
    %1217 = arith.cmpf ogt, %1177, %1216 : vector<1x128xf32>
    %cst_365 = arith.constant 0.000000e+00 : f32
    %1218 = vector.broadcast %cst_365 : f32 to vector<1x128xf32>
    %1219 = arith.cmpf ogt, %1177, %1218 : vector<1x128xf32>
    %cst_366 = arith.constant 1.000000e+00 : f32
    %1220 = vector.broadcast %cst_366 : f32 to vector<1x128xf32>
    %1221 = arith.select %1219, %1177, %1220 : vector<1x128xi1>, vector<1x128xf32>
    %1222 = arith.divf %1215, %1221 : vector<1x128xf32>
    %cst_367 = arith.constant 0.000000e+00 : f32
    %1223 = vector.broadcast %cst_367 : f32 to vector<1x128xf32>
    %1224 = arith.select %1217, %1222, %1223 : vector<1x128xi1>, vector<1x128xf32>
    %1225 = vector.broadcast %1224 : vector<1x128xf32> to vector<16x128xf32>
    %1226 = arith.mulf %1225, %1189 : vector<16x128xf32>
    %1227 = arith.addf %1212, %1226 : vector<16x128xf32>
    %c31_i32 = arith.constant 31 : i32
    %1228 = arith.mulf %39, %1227 : vector<16x128xf32>
    %cst_368 = arith.constant dense<0.000000e+00> : vector<16x128xf32>
    %1229 = tpu.matmul %22, %1228, %cst_368 {dimension_numbers = #tpu.dot_dimension_numbers<[1], [0], [0], [1], [0, 0, 1, 1], [], []>} : vector<16x16xf32>, vector<16x128xf32>, vector<16x128xf32> -> vector<16x128xf32>
    %1230 = arith.mulf %8, %1229 : vector<16x128xf32>
    %1231 = arith.mulf %43, %1227 : vector<16x128xf32>
    %1232 = arith.addf %1230, %1231 : vector<16x128xf32>
    %1233 = arith.mulf %1227, %1232 : vector<16x128xf32>
    %cst_369 = arith.constant dense<0.000000e+00> : vector<128xf32>
    %1234 = vector.multi_reduction <add>, %1233, %cst_369 [0] : vector<16x128xf32> to vector<128xf32>
    %1235 = vector.shape_cast %1234 : vector<128xf32> to vector<1x128xf32>
    %cst_370 = arith.constant 0.000000e+00 : f32
    %1236 = vector.broadcast %cst_370 : f32 to vector<1x128xf32>
    %1237 = arith.cmpf ogt, %1235, %1236 : vector<1x128xf32>
    %cst_371 = arith.constant 0.000000e+00 : f32
    %1238 = vector.broadcast %cst_371 : f32 to vector<1x128xf32>
    %1239 = arith.cmpf ogt, %1235, %1238 : vector<1x128xf32>
    %cst_372 = arith.constant 1.000000e+00 : f32
    %1240 = vector.broadcast %cst_372 : f32 to vector<1x128xf32>
    %1241 = arith.select %1239, %1235, %1240 : vector<1x128xi1>, vector<1x128xf32>
    %1242 = arith.divf %1215, %1241 : vector<1x128xf32>
    %cst_373 = arith.constant 0.000000e+00 : f32
    %1243 = vector.broadcast %cst_373 : f32 to vector<1x128xf32>
    %1244 = arith.select %1237, %1242, %1243 : vector<1x128xi1>, vector<1x128xf32>
    %1245 = vector.broadcast %1244 : vector<1x128xf32> to vector<16x128xf32>
    %1246 = arith.mulf %1245, %1227 : vector<16x128xf32>
    %1247 = arith.addf %1209, %1246 : vector<16x128xf32>
    %1248 = vector.broadcast %1244 : vector<1x128xf32> to vector<16x128xf32>
    %1249 = arith.mulf %1248, %1232 : vector<16x128xf32>
    %1250 = arith.subf %1212, %1249 : vector<16x128xf32>
    %1251 = arith.mulf %1250, %1250 : vector<16x128xf32>
    %cst_374 = arith.constant dense<0.000000e+00> : vector<128xf32>
    %1252 = vector.multi_reduction <add>, %1251, %cst_374 [0] : vector<16x128xf32> to vector<128xf32>
    %1253 = vector.shape_cast %1252 : vector<128xf32> to vector<1x128xf32>
    %cst_375 = arith.constant 0.000000e+00 : f32
    %1254 = vector.broadcast %cst_375 : f32 to vector<1x128xf32>
    %1255 = arith.cmpf ogt, %1215, %1254 : vector<1x128xf32>
    %cst_376 = arith.constant 0.000000e+00 : f32
    %1256 = vector.broadcast %cst_376 : f32 to vector<1x128xf32>
    %1257 = arith.cmpf ogt, %1215, %1256 : vector<1x128xf32>
    %cst_377 = arith.constant 1.000000e+00 : f32
    %1258 = vector.broadcast %cst_377 : f32 to vector<1x128xf32>
    %1259 = arith.select %1257, %1215, %1258 : vector<1x128xi1>, vector<1x128xf32>
    %1260 = arith.divf %1253, %1259 : vector<1x128xf32>
    %cst_378 = arith.constant 0.000000e+00 : f32
    %1261 = vector.broadcast %cst_378 : f32 to vector<1x128xf32>
    %1262 = arith.select %1255, %1260, %1261 : vector<1x128xi1>, vector<1x128xf32>
    %1263 = vector.broadcast %1262 : vector<1x128xf32> to vector<16x128xf32>
    %1264 = arith.mulf %1263, %1227 : vector<16x128xf32>
    %1265 = arith.addf %1250, %1264 : vector<16x128xf32>
    %1266 = arith.mulf %1247, %8 : vector<16x128xf32>
    %1267 = arith.mulf %1266, %8 : vector<16x128xf32>
    %1268 = vector.broadcast %11 : vector<1x128xf32> to vector<16x128xf32>
    %1269 = arith.mulf %1267, %1268 : vector<16x128xf32>
    %1270 = arith.mulf %6, %1269 : vector<16x128xf32>
    %cst_379 = arith.constant dense<0.000000e+00> : vector<128xf32>
    %1271 = vector.multi_reduction <add>, %1270, %cst_379 [0] : vector<16x128xf32> to vector<128xf32>
    %1272 = vector.shape_cast %1271 : vector<128xf32> to vector<1x128xf32>
    %c0_380 = arith.constant 0 : index
    %c0_381 = arith.constant 0 : index
    %c0_382 = arith.constant 0 : index
    %1273 = vector.load %arg8[%c0_380, %c0_381, %c0_382] : memref<1x1x128xf32, #tpu.memory_space<vmem>>, vector<1x1x128xf32>
    %1274 = vector.shape_cast %1273 : vector<1x1x128xf32> to vector<1x128xf32>
    %1275 = vector.shape_cast %1272 : vector<1x128xf32> to vector<1x1x128xf32>
    tpu.vector_store %arg8[%c0_380, %c0_381, %c0_382], %1275 {strides = array<i32>} : memref<1x1x128xf32, #tpu.memory_space<vmem>>, vector<1x1x128xf32>,
    %1276 = arith.mulf %33, %1269 : vector<16x128xf32>
    %cst_383 = arith.constant dense<0.000000e+00> : vector<128xf32>
    %1277 = vector.multi_reduction <add>, %1276, %cst_383 [0] : vector<16x128xf32> to vector<128xf32>
    %1278 = vector.shape_cast %1277 : vector<128xf32> to vector<1x128xf32>
    %c0_384 = arith.constant 0 : index
    %c0_385 = arith.constant 0 : index
    %c0_386 = arith.constant 0 : index
    %1279 = vector.load %arg9[%c0_384, %c0_385, %c0_386] : memref<1x1x128xf32, #tpu.memory_space<vmem>>, vector<1x1x128xf32>
    %1280 = vector.shape_cast %1279 : vector<1x1x128xf32> to vector<1x128xf32>
    %1281 = vector.shape_cast %1278 : vector<1x128xf32> to vector<1x1x128xf32>
    tpu.vector_store %arg9[%c0_384, %c0_385, %c0_386], %1281 {strides = array<i32>} : memref<1x1x128xf32, #tpu.memory_space<vmem>>, vector<1x1x128xf32>,
    return
  }
  func.func @transform_0(%arg0: i32) -> (i32, i32, i32) {
    %c0_i32 = arith.constant 0 : i32
    %c0_i32_0 = arith.constant 0 : i32
    %c0_i32_1 = arith.constant 0 : i32
    return %arg0, %c0_i32, %c0_i32_0 : i32, i32, i32
  }
  func.func @transform_1(%arg0: i32) -> (i32, i32, i32) {
    %c0_i32 = arith.constant 0 : i32
    %c0_i32_0 = arith.constant 0 : i32
    %c0_i32_1 = arith.constant 0 : i32
    return %arg0, %c0_i32, %c0_i32_0 : i32, i32, i32
  }
  func.func @transform_2(%arg0: i32) -> (i32, i32) {
    %c0_i32 = arith.constant 0 : i32
    %c0_i32_0 = arith.constant 0 : i32
    %c0_i32_1 = arith.constant 0 : i32
    return %c0_i32, %c0_i32_0 : i32, i32
  }
  func.func @transform_3(%arg0: i32) -> (i32, i32, i32) {
    %c0_i32 = arith.constant 0 : i32
    %c0_i32_0 = arith.constant 0 : i32
    %c0_i32_1 = arith.constant 0 : i32
    return %arg0, %c0_i32, %c0_i32_0 : i32, i32, i32
  }
  func.func @transform_4(%arg0: i32) -> (i32, i32, i32) {
    %c0_i32 = arith.constant 0 : i32
    %c0_i32_0 = arith.constant 0 : i32
    %c0_i32_1 = arith.constant 0 : i32
    return %arg0, %c0_i32, %c0_i32_0 : i32, i32, i32
  }
  func.func @transform_5(%arg0: i32) -> (i32, i32, i32) {
    %c0_i32 = arith.constant 0 : i32
    %c0_i32_0 = arith.constant 0 : i32
    %c0_i32_1 = arith.constant 0 : i32
    return %arg0, %c0_i32, %c0_i32_0 : i32, i32, i32
  }
  func.func @transform_6(%arg0: i32) -> (i32, i32) {
    %c0_i32 = arith.constant 0 : i32
    %c0_i32_0 = arith.constant 0 : i32
    %c0_i32_1 = arith.constant 0 : i32
    return %c0_i32, %c0_i32_0 : i32, i32
  }
  func.func @transform_7(%arg0: i32) -> (i32, i32, i32) {
    %c0_i32 = arith.constant 0 : i32
    %c0_i32_0 = arith.constant 0 : i32
    %c0_i32_1 = arith.constant 0 : i32
    return %arg0, %c0_i32, %c0_i32_0 : i32, i32, i32
  }
  func.func @transform_8(%arg0: i32) -> (i32, i32, i32) {
    %c0_i32 = arith.constant 0 : i32
    %c0_i32_0 = arith.constant 0 : i32
    %c0_i32_1 = arith.constant 0 : i32
    return %arg0, %c0_i32, %c0_i32_0 : i32, i32, i32
  }
}

</mosaic_0001>

<llo_original>
// kernel: tile.8
$region0: #{tile.8}
  #allocation0 [shape = 's32[1]{0}', space=sflag, size = 0x4, scoped, tag = 'scoped memory for tile.8']
  %s0 = inlined_call_operand.vmem [shape: f32[32], index: 0, kind: input, shape index: {}]
  %s1 = inlined_call_operand.vmem [shape: f32[4,32], index: 1, kind: output, shape index: {}]
  // Predicated region
  $region2: #{tile.8} parent=0 // pred_check
    _
  $region3: #{tile.8} parent=0 // pred_check_branch
    %3 = sbr.rel (0) target = $region5
  $region4: #{tile.8} parent=0 // pred_region
    _
  $region5: #{tile.8} parent=0 // pred_fallthru
    _
  %v4 = vld [vmem:[%s0] ss:$0 sm:$0xff]
  %5 = vst [vmem:[%s1] sm:$0xf] %v4

// kernel: tile.9
$region0: #{tile.9}
  %s0 = inlined_call_operand.vmem [shape: f32[4,32], index: 0, kind: input, shape index: {}]
  %s1 = inlined_call_operand.vmem [shape: f32[1,128], index: 1, kind: output, shape index: {}]
  $region1: #{tile.9} parent=0
    #allocation0 [shape = 'u8[4096]{0}', space=vmem, size = 0x1000, scoped, tag = 'scoped mem for output reshape']
    #allocation1 [shape = 'u8[4096]{0}', space=vmem, size = 0x1000, scoped, tag = 'scoped mem for input reshape']
    %s3 = sshllo.u32 0, 4
    %v4 = vld [vmem:[%s0] sm:%s3]
    %5 = vst [vmem:[#allocation1] sm:%s3] %v4
    %v6 = vld [vmem:[#allocation1] sm:$0x1]
    %vm7 = vcmask 261120
    %8 = vst.msk [vmem:[#allocation0] sm:$0x1] %vm7, %v6
    %s9 = scalar_lea.vmem [#allocation1], 3
    %v10 = vld [vmem:[%s9] sm:$0x1]
    %11 = vrot.lane.b32.xlu0 %v10, 96
    %v12 = vpop.permute.xlu0 %11
    %vm13 = vcmask 1048320
    %14 = vst.msk [vmem:[#allocation0] sm:$0x1] %vm13, %v12
    %s15 = scalar_lea.vmem [#allocation1], 2
    %v16 = vld [vmem:[%s15] sm:$0x1]
    %17 = vrot.lane.b32.xlu0 %v16, 64
    %v18 = vpop.permute.xlu0 %17
    %vm19 = vcmask 785920
    %20 = vst.msk [vmem:[#allocation0] sm:$0x1] %vm19, %v18
    %s21 = scalar_lea.vmem [#allocation1], 1
    %v22 = vld [vmem:[%s21] sm:$0x1]
    %23 = vrot.lane.b32.xlu0 %v22, 32
    %v24 = vpop.permute.xlu0 %23
    %vm25 = vcmask 523520
    %26 = vst.msk [vmem:[#allocation0] sm:$0x1] %vm25, %v24
    %s28 = sshllo.u32 0, 1
    %v30 = vld [vmem:[#allocation0] sm:%s28]
    %s31 = sshllo.u32 0, 1
    %32 = vst [vmem:[%s1] sm:%s31] %v30

// kernel: integer_pow.1
$region0: #{integer_pow.1}
  #allocation0 [shape = 's32[1]{0}', space=sflag, size = 0x4, scoped, tag = 'scoped memory for integer_pow.1']
  %s0 = inlined_call_operand.vmem [shape: f32[2,16,4], index: 0, kind: input, shape index: {}, may-alias: {0,1}]
  %s1 = inlined_call_operand.vmem [shape: f32[2,16,4], index: 1, kind: input, shape index: {}, may-alias: {0,1}]
  %s2 = inlined_call_operand.vmem [shape: f32[2,16,4], index: 2, kind: output, shape index: {}]
  %v3 = vld [vmem:[%s0] sm:$0xf]
  %v4 = vld [vmem:[%s1] sm:$0xf]
  %5 = xla_tuple %v3, %v4
  %6 = xla_tuple %5
  %v7 = vmul.f32 %v3, %v4
  %8 = xla_tuple %v7
  %9 = vst [vmem:[%s2] sm:$0xf] %v7
  %s10 = scalar_lea.vmem %s0, 4
  %v11 = vld [vmem:[%s10] sm:$0xf]
  %s12 = scalar_lea.vmem %s1, 4
  %v13 = vld [vmem:[%s12] sm:$0xf]
  %14 = xla_tuple %v11, %v13
  %15 = xla_tuple %14
  %v16 = vmul.f32 %v11, %v13
  %17 = xla_tuple %v16
  %s18 = scalar_lea.vmem %s2, 4
  %19 = vst [vmem:[%s18] sm:$0xf] %v16

// kernel: gp_interpolate_forward.1
$region0: #{gp_interpolate_forward.1}
  #allocation0 [shape = 'u32[]', space=smem, size = 0x4, offset = 0x4, fixed_abs, tag = 'smem constant byte address 0x4 - core index']
  #allocation1 [shape = 'u32[144,128]{1,0:T(1,128)}', space=vmem, size = 0x12000, scoped, tag = 'internal scratch']
  %s0 = inlined_call_operand.vmem [shape: f32[2,16,1], index: 0, kind: input, shape index: {}]
  %s1 = inlined_call_operand.vmem [shape: f32[2,1,16], index: 1, kind: input, shape index: {}]
  %s2 = inlined_call_operand.vmem [shape: f32[1,128], index: 2, kind: input, shape index: {}]
  %s3 = inlined_call_operand.vmem [shape: f32[2,16,128], index: 3, kind: input, shape index: {}]
  %s4 = inlined_call_operand.vmem [shape: f32[2,16,128], index: 4, kind: input, shape index: {}]
  %s5 = inlined_call_operand.vmem [shape: f32[2,16,128], index: 5, kind: input, shape index: {}]
  %s6 = inlined_call_operand.vmem [shape: f32[1,128], index: 6, kind: input, shape index: {}]
  %s7 = inlined_call_operand.vmem [shape: f32[2,1,128], index: 7, kind: output, shape index: {0}]
  %s8 = inlined_call_operand.vmem [shape: f32[2,1,128], index: 8, kind: output, shape index: {1}]
  %9 = xla_tuple %s7, %s8
  %s10 = sld [smem:[#allocation0]]
  $region69: #{gp_interpolate_forward.1} parent=0
    _
  %s12 = ssub.s32 1, %s10
  %s13 = scalar_select 0, %s12, %s10
  loop: start=0, step=1, limit=4
  $region2: #{gp_interpolate_forward.1} parent=0 // loop_pre_header
    _
  $region3: #{gp_interpolate_forward.1} parent=0 // loop_header
    %s15 = sphi 0, %s19
    %p16 = scmp.ge.s32.totalorder %s15, 4
    %s25 = sphi 0, %s27
    %s28 = sphi 0, %s25
    %s29 = sphi 0, %s28
    %s45 = sphi 0, %s29
    %s51 = sphi 0, %s53
    %s54 = sphi 0, %s51
    %s55 = sphi 0, %s54
    %s71 = sphi 0, %s55
    %s75 = sphi 0, %s75
    %s77 = sphi 0, %s75
    %s78 = sphi 0, %s77
    %s92 = sphi 0, %s78
    %s98 = sphi 0, %s100
    %s101 = sphi 0, %s98
    %s102 = sphi 0, %s101
    %s118 = sphi 0, %s102
    %s124 = sphi 0, %s126
    %s127 = sphi 0, %s124
    %s128 = sphi 0, %s127
    %s144 = sphi 0, %s128
    %s150 = sphi 0, %s152
    %s153 = sphi 0, %s150
    %s154 = sphi 0, %s153
    %s170 = sphi 0, %s154
    %s174 = sphi 0, %s174
    %s176 = sphi 0, %s174
    %s177 = sphi 0, %s176
    %s191 = sphi 0, %s177
    %s197 = sphi 0, %s199
    %s200 = sphi 0, %s197
    %s201 = sphi 0, %s200
    %s217 = sphi 0, %s201
    %s223 = sphi 0, %s225
    %s226 = sphi 0, %s223
    %s227 = sphi 0, %s226
    %s243 = sphi 0, %s227
  $region4: #{gp_interpolate_forward.1} parent=0 // loop_header_branch
    %18 = sbr.rel (%p16) target = $region8
  $region5: #{gp_interpolate_forward.1} parent=0 // loop_body
    %s20 = ssub.s32 %s15, 1
    %s21 = ssub.s32 %s15, 2
    %s22 = sadd.s32 %s15, 1
    %s23 = ssub.s32 %s15, %s22
    %p24 = scmp.eq.s32.totalorder %s23, 0
    %s26 = sadd.s32 %s25, 1
    %s27 = scalar_select %p24, %s25, %s26
    %p30 = pneg %p24
    %p31 = scmp.eq.s32.totalorder %s15, 1
    %p32 = por %p30, %p31
    %p33 = scmp.ne.s32.totalorder %s25, %s28
    %p34 = scmp.eq.s32.totalorder %s15, 0
    %p35 = por %p33, %p34
    %p36 = scmp.ne.s32.totalorder %s25, %s28
    %p37 = scmp.eq.s32.totalorder %s20, 1
    %p38 = por %p36, %p37
    %p39 = scmp.ne.s32.totalorder %s28, %s29
    %p40 = scmp.eq.s32.totalorder %s20, 0
    %p41 = por %p39, %p40
    %p42 = scmp.ne.s32.totalorder %s28, %s29
    %p43 = scmp.eq.s32.totalorder %s21, 1
    %p44 = por %p42, %p43
    %p46 = scmp.ne.s32.totalorder %s29, %s45
    %p47 = scmp.eq.s32.totalorder %s21, 0
    %p48 = por %p46, %p47
    %s49 = ssub.s32 %s15, %s22
    %p50 = scmp.eq.s32.totalorder %s49, 0
    %s52 = sadd.s32 %s51, 1
    %s53 = scalar_select %p50, %s51, %s52
    %p56 = pneg %p50
    %p57 = scmp.eq.s32.totalorder %s15, 1
    %p58 = por %p56, %p57
    %p59 = scmp.ne.s32.totalorder %s51, %s54
    %p60 = scmp.eq.s32.totalorder %s15, 0
    %p61 = por %p59, %p60
    %p62 = scmp.ne.s32.totalorder %s51, %s54
    %p63 = scmp.eq.s32.totalorder %s20, 1
    %p64 = por %p62, %p63
    %p65 = scmp.ne.s32.totalorder %s54, %s55
    %p66 = scmp.eq.s32.totalorder %s20, 0
    %p67 = por %p65, %p66
    %p68 = scmp.ne.s32.totalorder %s54, %s55
    %p69 = scmp.eq.s32.totalorder %s21, 1
    %p70 = por %p68, %p69
    %p72 = scmp.ne.s32.totalorder %s55, %s71
    %p73 = scmp.eq.s32.totalorder %s21, 0
    %p74 = por %p72, %p73
    %s76 = sadd.s32 %s75, 1
    %p79 = scmp.eq.s32.totalorder %s15, 1
    %p80 = scmp.ne.s32.totalorder %s75, %s77
    %p81 = scmp.eq.s32.totalorder %s15, 0
    %p82 = por %p80, %p81
    %p83 = scmp.ne.s32.totalorder %s75, %s77
    %p84 = scmp.eq.s32.totalorder %s20, 1
    %p85 = por %p83, %p84
    %p86 = scmp.ne.s32.totalorder %s77, %s78
    %p87 = scmp.eq.s32.totalorder %s20, 0
    %p88 = por %p86, %p87
    %p89 = scmp.ne.s32.totalorder %s77, %s78
    %p90 = scmp.eq.s32.totalorder %s21, 1
    %p91 = por %p89, %p90
    %p93 = scmp.ne.s32.totalorder %s78, %s92
    %p94 = scmp.eq.s32.totalorder %s21, 0
    %p95 = por %p93, %p94
    %s96 = ssub.s32 %s15, %s22
    %p97 = scmp.eq.s32.totalorder %s96, 0
    %s99 = sadd.s32 %s98, 1
    %s100 = scalar_select %p97, %s98, %s99
    %p103 = pneg %p97
    %p104 = scmp.eq.s32.totalorder %s15, 1
    %p105 = por %p103, %p104
    %p106 = scmp.ne.s32.totalorder %s98, %s101
    %p107 = scmp.eq.s32.totalorder %s15, 0
    %p108 = por %p106, %p107
    %p109 = scmp.ne.s32.totalorder %s98, %s101
    %p110 = scmp.eq.s32.totalorder %s20, 1
    %p111 = por %p109, %p110
    %p112 = scmp.ne.s32.totalorder %s101, %s102
    %p113 = scmp.eq.s32.totalorder %s20, 0
    %p114 = por %p112, %p113
    %p115 = scmp.ne.s32.totalorder %s101, %s102
    %p116 = scmp.eq.s32.totalorder %s21, 1
    %p117 = por %p115, %p116
    %p119 = scmp.ne.s32.totalorder %s102, %s118
    %p120 = scmp.eq.s32.totalorder %s21, 0
    %p121 = por %p119, %p120
    %s122 = ssub.s32 %s15, %s22
    %p123 = scmp.eq.s32.totalorder %s122, 0
    %s125 = sadd.s32 %s124, 1
    %s126 = scalar_select %p123, %s124, %s125
    %p129 = pneg %p123
    %p130 = scmp.eq.s32.totalorder %s15, 1
    %p131 = por %p129, %p130
    %p132 = scmp.ne.s32.totalorder %s124, %s127
    %p133 = scmp.eq.s32.totalorder %s15, 0
    %p134 = por %p132, %p133
    %p135 = scmp.ne.s32.totalorder %s124, %s127
    %p136 = scmp.eq.s32.totalorder %s20, 1
    %p137 = por %p135, %p136
    %p138 = scmp.ne.s32.totalorder %s127, %s128
    %p139 = scmp.eq.s32.totalorder %s20, 0
    %p140 = por %p138, %p139
    %p141 = scmp.ne.s32.totalorder %s127, %s128
    %p142 = scmp.eq.s32.totalorder %s21, 1
    %p143 = por %p141, %p142
    %p145 = scmp.ne.s32.totalorder %s128, %s144
    %p146 = scmp.eq.s32.totalorder %s21, 0
    %p147 = por %p145, %p146
    %s148 = ssub.s32 %s15, %s22
    %p149 = scmp.eq.s32.totalorder %s148, 0
    %s151 = sadd.s32 %s150, 1
    %s152 = scalar_select %p149, %s150, %s151
    %p155 = pneg %p149
    %p156 = scmp.eq.s32.totalorder %s15, 1
    %p157 = por %p155, %p156
    %p158 = scmp.ne.s32.totalorder %s150, %s153
    %p159 = scmp.eq.s32.totalorder %s15, 0
    %p160 = por %p158, %p159
    %p161 = scmp.ne.s32.totalorder %s150, %s153
    %p162 = scmp.eq.s32.totalorder %s20, 1
    %p163 = por %p161, %p162
    %p164 = scmp.ne.s32.totalorder %s153, %s154
    %p165 = scmp.eq.s32.totalorder %s20, 0
    %p166 = por %p164, %p165
    %p167 = scmp.ne.s32.totalorder %s153, %s154
    %p168 = scmp.eq.s32.totalorder %s21, 1
    %p169 = por %p167, %p168
    %p171 = scmp.ne.s32.totalorder %s154, %s170
    %p172 = scmp.eq.s32.totalorder %s21, 0
    %p173 = por %p171, %p172
    %s175 = sadd.s32 %s174, 1
    %p178 = scmp.eq.s32.totalorder %s15, 1
    %p179 = scmp.ne.s32.totalorder %s174, %s176
    %p180 = scmp.eq.s32.totalorder %s15, 0
    %p181 = por %p179, %p180
    %p182 = scmp.ne.s32.totalorder %s174, %s176
    %p183 = scmp.eq.s32.totalorder %s20, 1
    %p184 = por %p182, %p183
    %p185 = scmp.ne.s32.totalorder %s176, %s177
    %p186 = scmp.eq.s32.totalorder %s20, 0
    %p187 = por %p185, %p186
    %p188 = scmp.ne.s32.totalorder %s176, %s177
    %p189 = scmp.eq.s32.totalorder %s21, 1
    %p190 = por %p188, %p189
    %p192 = scmp.ne.s32.totalorder %s177, %s191
    %p193 = scmp.eq.s32.totalorder %s21, 0
    %p194 = por %p192, %p193
    %s195 = ssub.s32 %s15, %s22
    %p196 = scmp.eq.s32.totalorder %s195, 0
    %s198 = sadd.s32 %s197, 1
    %s199 = scalar_select %p196, %s197, %s198
    %p202 = pneg %p196
    %p203 = scmp.eq.s32.totalorder %s15, 1
    %p204 = por %p202, %p203
    %p205 = scmp.ne.s32.totalorder %s197, %s200
    %p206 = scmp.eq.s32.totalorder %s15, 0
    %p207 = por %p205, %p206
    %p208 = scmp.ne.s32.totalorder %s197, %s200
    %p209 = scmp.eq.s32.totalorder %s20, 1
    %p210 = por %p208, %p209
    %p211 = scmp.ne.s32.totalorder %s200, %s201
    %p212 = scmp.eq.s32.totalorder %s20, 0
    %p213 = por %p211, %p212
    %p214 = scmp.ne.s32.totalorder %s200, %s201
    %p215 = scmp.eq.s32.totalorder %s21, 1
    %p216 = por %p214, %p215
    %p218 = scmp.ne.s32.totalorder %s201, %s217
    %p219 = scmp.eq.s32.totalorder %s21, 0
    %p220 = por %p218, %p219
    %s221 = ssub.s32 %s15, %s22
    %p222 = scmp.eq.s32.totalorder %s221, 0
    %s224 = sadd.s32 %s223, 1
    %s225 = scalar_select %p222, %s223, %s224
    %p228 = pneg %p222
    %p229 = scmp.eq.s32.totalorder %s15, 1
    %p230 = por %p228, %p229
    %p231 = scmp.ne.s32.totalorder %s223, %s226
    %p232 = scmp.eq.s32.totalorder %s15, 0
    %p233 = por %p231, %p232
    %p234 = scmp.ne.s32.totalorder %s223, %s226
    %p235 = scmp.eq.s32.totalorder %s20, 1
    %p236 = por %p234, %p235
    %p237 = scmp.ne.s32.totalorder %s226, %s227
    %p238 = scmp.eq.s32.totalorder %s20, 0
    %p239 = por %p237, %p238
    %p240 = scmp.ne.s32.totalorder %s226, %s227
    %p241 = scmp.eq.s32.totalorder %s21, 1
    %p242 = por %p240, %p241
    %p244 = scmp.ne.s32.totalorder %s227, %s243
    %p245 = scmp.eq.s32.totalorder %s21, 0
    %p246 = por %p244, %p245
    %p247 = scmp.le.s32.totalorder 1, %s15
    %p248 = scmp.lt.s32.totalorder %s15, 3
    %p249 = pnand %p247, %p248
    %p250 = pneg %p249
    // Predicated region
    $region9: #{gp_interpolate_forward.1} parent=5 // pred_check
      _
    $region10: #{gp_interpolate_forward.1} parent=5 // pred_check_branch
      %252 = sbr.rel (%p249) target = $region12
    $region11: #{gp_interpolate_forward.1} parent=5 // pred_region
      %s253 = ssub.s32 %s15, 1
      // Predicated region
      $region13: #{gp_interpolate_forward.1} parent=11 // pred_check
        %p254 = pneg %p88
      $region14: #{gp_interpolate_forward.1} parent=11 // pred_check_branch
        %256 = sbr.rel (%p254) target = $region16
      $region15: #{gp_interpolate_forward.1} parent=11 // pred_region
        _
      $region16: #{gp_interpolate_forward.1} parent=11 // pred_fallthru
        _
      // Predicated region
      $region17: #{gp_interpolate_forward.1} parent=11 // pred_check
        %p257 = pneg %p187
      $region18: #{gp_interpolate_forward.1} parent=11 // pred_check_branch
        %259 = sbr.rel (%p257) target = $region20
      $region19: #{gp_interpolate_forward.1} parent=11 // pred_region
        _
      $region20: #{gp_interpolate_forward.1} parent=11 // pred_fallthru
        _
    $region12: #{gp_interpolate_forward.1} parent=5 // pred_fallthru
      _
    %p260 = scmp.lt.s32.totalorder %s15, 2
    // Predicated region
    $region21: #{gp_interpolate_forward.1} parent=5 // pred_check
      %p261 = pneg %p260
    $region22: #{gp_interpolate_forward.1} parent=5 // pred_check_branch
      %263 = sbr.rel (%p261) target = $region24
    $region23: #{gp_interpolate_forward.1} parent=5 // pred_region
      // Predicated region
      $region25: #{gp_interpolate_forward.1} parent=23 // pred_check
        %p264 = pneg %p35
      $region26: #{gp_interpolate_forward.1} parent=23 // pred_check_branch
        %266 = sbr.rel (%p264) target = $region28
      $region27: #{gp_interpolate_forward.1} parent=23 // pred_region
        %p267 = scmp.lt.s32.totalorder %s15, 1
        %s268 = scalar_select %p267, %s15, 1
        %s269 = smul.addr %s268, 2
        %s270 = smul.addr %s269, 8
        %s271 = scalar_lea.vmem %s0, %s270
      $region28: #{gp_interpolate_forward.1} parent=23 // pred_fallthru
        _
      // Predicated region
      $region29: #{gp_interpolate_forward.1} parent=23 // pred_check
        %p272 = pneg %p61
      $region30: #{gp_interpolate_forward.1} parent=23 // pred_check_branch
        %274 = sbr.rel (%p272) target = $region32
      $region31: #{gp_interpolate_forward.1} parent=23 // pred_region
        %p275 = scmp.lt.s32.totalorder %s15, 1
        %s276 = scalar_select %p275, %s15, 1
        %s277 = scalar_lea.vmem %s1, %s276
      $region32: #{gp_interpolate_forward.1} parent=23 // pred_fallthru
        _
      // Predicated region
      $region33: #{gp_interpolate_forward.1} parent=23 // pred_check
        %p278 = pneg %p108
      $region34: #{gp_interpolate_forward.1} parent=23 // pred_check_branch
        %280 = sbr.rel (%p278) target = $region36
      $region35: #{gp_interpolate_forward.1} parent=23 // pred_region
        %p281 = scmp.lt.s32.totalorder %s15, 1
        %s282 = scalar_select %p281, %s15, 1
        %s283 = smul.addr %s282, 2
        %s284 = smul.addr %s283, 8
        %s285 = scalar_lea.vmem %s3, %s284
      $region36: #{gp_interpolate_forward.1} parent=23 // pred_fallthru
        _
      // Predicated region
      $region37: #{gp_interpolate_forward.1} parent=23 // pred_check
        %p286 = pneg %p134
      $region38: #{gp_interpolate_forward.1} parent=23 // pred_check_branch
        %288 = sbr.rel (%p286) target = $region40
      $region39: #{gp_interpolate_forward.1} parent=23 // pred_region
        %p289 = scmp.lt.s32.totalorder %s15, 1
        %s290 = scalar_select %p289, %s15, 1
        %s291 = smul.addr %s290, 2
        %s292 = smul.addr %s291, 8
        %s293 = scalar_lea.vmem %s4, %s292
      $region40: #{gp_interpolate_forward.1} parent=23 // pred_fallthru
        _
      // Predicated region
      $region41: #{gp_interpolate_forward.1} parent=23 // pred_check
        %p294 = pneg %p160
      $region42: #{gp_interpolate_forward.1} parent=23 // pred_check_branch
        %296 = sbr.rel (%p294) target = $region44
      $region43: #{gp_interpolate_forward.1} parent=23 // pred_region
        %p297 = scmp.lt.s32.totalorder %s15, 1
        %s298 = scalar_select %p297, %s15, 1
        %s299 = smul.addr %s298, 2
        %s300 = smul.addr %s299, 8
        %s301 = scalar_lea.vmem %s5, %s300
      $region44: #{gp_interpolate_forward.1} parent=23 // pred_fallthru
        _
    $region24: #{gp_interpolate_forward.1} parent=5 // pred_fallthru
      _
    %p302 = scmp.le.s32.totalorder 1, %s15
    %p303 = scmp.lt.s32.totalorder %s15, 3
    %p304 = pnand %p302, %p303
    %p305 = pneg %p304
    // Predicated region
    $region45: #{gp_interpolate_forward.1} parent=5 // pred_check
      _
    $region46: #{gp_interpolate_forward.1} parent=5 // pred_check_branch
      %307 = sbr.rel (%p304) target = $region48
    $region47: #{gp_interpolate_forward.1} parent=5 // pred_region
      %s308 = ssub.s32 %s15, 1
      %p309 = scmp.lt.s32.totalorder %s20, 1
      %s310 = scalar_select %p309, %s20, 1
      %s311 = smul.addr %s310, 2
      %s312 = smul.addr %s311, 8
      %s313 = scalar_lea.vmem %s0, %s312
      %p314 = pneg %p41
      %p315 = pneg %p38
      %p316 = scmp.lt.s32.totalorder %s20, 1
      %s317 = scalar_select %p316, %s20, 1
      %s318 = scalar_lea.vmem %s1, %s317
      %p319 = pneg %p67
      %p320 = pneg %p64
      %p321 = pneg %p88
      %p322 = pneg %p85
      %p323 = scmp.lt.s32.totalorder %s20, 1
      %s324 = scalar_select %p323, %s20, 1
      %s325 = smul.addr %s324, 2
      %s326 = smul.addr %s325, 8
      %s327 = scalar_lea.vmem %s3, %s326
      %p328 = pneg %p114
      %p329 = pneg %p111
      %p330 = scmp.lt.s32.totalorder %s20, 1
      %s331 = scalar_select %p330, %s20, 1
      %s332 = smul.addr %s331, 2
      %s333 = smul.addr %s332, 8
      %s334 = scalar_lea.vmem %s4, %s333
      %p335 = pneg %p140
      %p336 = pneg %p137
      %p337 = scmp.lt.s32.totalorder %s20, 1
      %s338 = scalar_select %p337, %s20, 1
      %s339 = smul.addr %s338, 2
      %s340 = smul.addr %s339, 8
      %s341 = scalar_lea.vmem %s5, %s340
      %p342 = pneg %p166
      %p343 = pneg %p163
      %p344 = pneg %p187
      %p345 = pneg %p184
      %p346 = pneg %p213
      %p347 = pneg %p210
      %p348 = scmp.lt.s32.totalorder %s20, 1
      %s349 = scalar_select %p348, %s20, 1
      %s350 = scalar_lea.vmem %s7, %s349
      %p351 = pneg %p239
      %p352 = pneg %p236
      %p353 = scmp.lt.s32.totalorder %s20, 1
      %s354 = scalar_select %p353, %s20, 1
      %s355 = scalar_lea.vmem %s8, %s354
      %p356 = scmp.lt.s32.totalorder %s20, 1
      %s357 = scalar_select %p356, %s20, 1
      %s358 = smul.addr %s357, 2
      %s359 = smul.addr %s358, 8
      %s360 = scalar_lea.vmem %s0, %s359
      %p361 = scmp.lt.s32.totalorder %s20, 1
      %s362 = scalar_select %p361, %s20, 1
      %s363 = scalar_lea.vmem %s1, %s362
      %p364 = scmp.lt.s32.totalorder %s20, 1
      %s365 = scalar_select %p364, %s20, 1
      %s366 = smul.addr %s365, 2
      %s367 = smul.addr %s366, 8
      %s368 = scalar_lea.vmem %s3, %s367
      %p369 = scmp.lt.s32.totalorder %s20, 1
      %s370 = scalar_select %p369, %s20, 1
      %s371 = smul.addr %s370, 2
      %s372 = smul.addr %s371, 8
      %s373 = scalar_lea.vmem %s4, %s372
      %p374 = scmp.lt.s32.totalorder %s20, 1
      %s375 = scalar_select %p374, %s20, 1
      %s376 = smul.addr %s375, 2
      %s377 = smul.addr %s376, 8
      %s378 = scalar_lea.vmem %s5, %s377
      %p379 = scmp.lt.s32.totalorder %s20, 1
      %s380 = scalar_select %p379, %s20, 1
      %s381 = scalar_lea.vmem %s7, %s380
      %p382 = scmp.lt.s32.totalorder %s20, 1
      %s383 = scalar_select %p382, %s20, 1
      %s384 = scalar_lea.vmem %s8, %s383
      %v385 = vld [vmem:[%s360] sm:$0xff]
      %v386 = vld [vmem:[%s360 + $0x8] sm:$0xff]
      %v387 = vld [vmem:[%s363] sm:$0x1]
      %v388 = vld [vmem:[%s2] sm:$0x1]
      %v389 = vld [vmem:[%s368] sm:$0xff]
      %v390 = vld [vmem:[%s368 + $0x8] sm:$0xff]
      %v391 = vld [vmem:[%s373] sm:$0xff]
      %v392 = vld [vmem:[%s373 + $0x8] sm:$0xff]
      %v393 = vld [vmem:[%s378] sm:$0xff]
      %v394 = vld [vmem:[%s378 + $0x8] sm:$0xff]
      %v395 = vld [vmem:[%s6] sm:$0x1]
      %397 = vset.pattern.permute.xlu0 0
      %398 = vperm.xlu0 %397, %v385
      %v399 = vpop.permute.xlu0 %398
      %402 = vset.pattern.permute.xlu0 0
      %403 = vperm.xlu0 %402, %v386
      %v404 = vpop.permute.xlu0 %403
      %v407 = vlaneseq
      %v408 = vshrl.u32 %v407, 7
      %v409 = vsub.s32 0, %v408
      %v410 = vrot.slane %v387, %v409
      %v412 = vsub.f32 %v399, %v410
      %v413 = vsub.f32 %v404, %v410
      %v414 = vmul.f32 %v412, %v412
      %v415 = vmul.f32 %v413, %v413
      %v416 = vsub.f32 0.0, %v414
      %v417 = vsub.f32 0.0, %v415
      %v418 = vmul.f32 %v416, 5.095132
      %v419 = vmul.f32 %v417, 5.095132
      %v420 = vmul.f32 %v418, 1.442695
      %v421 = vpow.pop %v420
      %v422 = vmul.f32 %v419, 1.442695
      %v423 = vpow.pop %v422
      %v424 = vmul.f32 %v421, 0.3989423
      %v425 = vmul.f32 %v423, 0.3989423
      %v427 = vlaneseq
      %v428 = vshrl.u32 %v427, 7
      %v429 = vsub.s32 0, %v428
      %v430 = vrot.slane %v388, %v429
      %v432 = vsub.f32 %v399, %v430
      %v433 = vsub.f32 %v404, %v430
      %v434 = vmul.f32 %v432, %v432
      %v435 = vmul.f32 %v433, %v433
      %v436 = vsub.f32 0.0, %v434
      %v437 = vsub.f32 0.0, %v435
      %v438 = vmul.f32 %v436, 5.095132
      %v439 = vmul.f32 %v437, 5.095132
      %v440 = vmul.f32 %v438, 1.442695
      %v441 = vpow.pop %v440
      %v442 = vmul.f32 %v439, 1.442695
      %v443 = vpow.pop %v442
      %v444 = vmul.f32 %v441, 0.3989423
      %v445 = vmul.f32 %v443, 0.3989423
      %vm446 = vcmp.gt.f32.partialorder %v391, 0.0
      %vm447 = vcmp.gt.f32.partialorder %v392, 0.0
      %v448 = vsel %vm446, 1, 0
      %v449 = vsel %vm447, 1, 0
      %v450 = vcvt.s32.f32 %v448
      %v451 = vcvt.s32.f32 %v449
      %v453 = vlaneseq
      %v454 = vshrl.u32 %v453, 7
      %v455 = vsub.s32 0, %v454
      %v456 = vrot.slane %v395, %v455
      %v458 = vmul.f32 %v450, %v456
      %v459 = vmul.f32 %v451, %v456
      %v460 = vmul.f32 %v393, %v450
      %v461 = vmul.f32 %v394, %v451
      %v462 = vmul.f32 %v460, %v391
      %v463 = vmul.f32 %v461, %v392
      %v464 = vadd.f32 %v462, 1e-05
      %v465 = vadd.f32 %v463, 1e-05
      %v466 = vmul.f32 %v391, %v391
      %v467 = vmul.f32 %v392, %v392
      %v468 = vmul.f32 %v466, %v444
      %v469 = vmul.f32 %v467, %v445
      %v470 = vmul.f32 %v468, %v468
      %v471 = vmul.f32 %v469, %v469
      %v472 = vadd.f32 %v470, %v471
      %v473 = vrot.slane %v472, 4
      %v474 = vadd.f32 %v472, %v473
      %v475 = vrot.slane %v474, 2
      %v476 = vadd.f32 %v474, %v475
      %v477 = vrot.slane %v476, 1
      %v478 = vadd.f32 %v476, %v477
      %v479 = vmul.f32 %v458, %v468
      %v480 = vmul.f32 %v459, %v469
      %vm481 = vcmask 130048
      %v483 = vsel %vm481, %v424, 0
      %v486 = vsel %vm481, %v425, 0
      %488 = vmatprep.subr.mxu0 0.0
      %489 = vmatpush1.msra.mxu0 %v479
      %490 = vmatprep.subr.mxu0 0.0
      %491 = vmatpush1.msra.mxu0 %v480
      %492 = vmatprep.subr.mxu0 0.0
      %493 = vmatpush1.msra.mxu0 0.0
      %494 = vmatprep.subr.mxu0 0.0
      %495 = vmatpush1.msra.mxu0 0.0
      %496 = vmatprep.subr.mxu0 0.0
      %497 = vmatpush1.msra.mxu0 0.0
      %498 = vmatprep.subr.mxu0 0.0
      %499 = vmatpush1.msra.mxu0 0.0
      %500 = vmatprep.subr.mxu0 0.0
      %501 = vmatpush1.msra.mxu0 0.0
      %502 = vmatprep.subr.mxu0 0.0
      %503 = vmatpush1.msra.mxu0 0.0
      %504 = vmatprep.subr.mxu0 0.0
      %505 = vmatpush1.msra.mxu0 0.0
      %506 = vmatprep.subr.mxu0 0.0
      %507 = vmatpush1.msra.mxu0 0.0
      %508 = vmatprep.subr.mxu0 0.0
      %509 = vmatpush1.msra.mxu0 0.0
      %510 = vmatprep.subr.mxu0 0.0
      %511 = vmatpush1.msra.mxu0 0.0
      %512 = vmatprep.subr.mxu0 0.0
      %513 = vmatpush1.msra.mxu0 0.0
      %514 = vmatprep.subr.mxu0 0.0
      %515 = vmatpush1.msra.mxu0 0.0
      %516 = vmatprep.subr.mxu0 0.0
      %517 = vmatpush1.msra.mxu0 0.0
      %518 = vmatprep.subr.mxu0 0.0
      %519 = vmatpush1.msra.mxu0 0.0
      %520 = vmatprep.subr.mxu0 0.0
      %521 = vmatpush1.msra.mxu0 0.0
      %522 = vmatprep.subr.mxu0 0.0
      %523 = vmatpush1.msra.mxu0 0.0
      %524 = vmatprep.subr.mxu0 0.0
      %525 = vmatpush1.msra.mxu0 0.0
      %526 = vmatprep.subr.mxu0 0.0
      %527 = vmatpush1.msra.mxu0 0.0
      %528 = vmatprep.subr.mxu0 0.0
      %529 = vmatpush1.msra.mxu0 0.0
      %530 = vmatprep.subr.mxu0 0.0
      %531 = vmatpush1.msra.mxu0 0.0
      %532 = vmatprep.subr.mxu0 0.0
      %533 = vmatpush1.msra.mxu0 0.0
      %534 = vmatprep.subr.mxu0 0.0
      %535 = vmatpush1.msra.mxu0 0.0
      %536 = vmatprep.subr.mxu0 0.0
      %537 = vmatpush1.msra.mxu0 0.0
      %538 = vmatprep.subr.mxu0 0.0
      %539 = vmatpush1.msra.mxu0 0.0
      %540 = vmatprep.subr.mxu0 0.0
      %541 = vmatpush1.msra.mxu0 0.0
      %542 = vmatprep.subr.mxu0 0.0
      %543 = vmatpush1.msra.mxu0 0.0
      %544 = vmatprep.subr.mxu0 0.0
      %545 = vmatpush1.msra.mxu0 0.0
      %546 = vmatprep.subr.mxu0 0.0
      %547 = vmatpush1.msra.mxu0 0.0
      %548 = vmatprep.subr.mxu0 0.0
      %549 = vmatpush1.msra.mxu0 0.0
      %550 = vmatprep.subr.mxu0 0.0
      %551 = vmatpush1.msra.mxu0 0.0
      %552 = vmatprep.mubr.f32.mxu0 0.0
      %553 = vmatmul.mubr.f32.gmra.mrb[0].mxu0 %v483
      %v554 = vpop.f32.mrb[0].mxu0
      %v555 = vadd.f32 0.0, %v554
      %v556 = vpop.f32.mrb[0].mxu0
      %557 = vmatprep.mubr.f32.mxu0 0.0
      %558 = vmatmul.mubr.f32.gmra.mrb[0].mxu0 %v486
      %v559 = vpop.f32.mrb[0].mxu0
      %v560 = vadd.f32 0.0, %v559
      %v561 = vpop.f32.mrb[0].mxu0
      %562 = vdwg.mxu0
      %v563 = vmul.f32 %v391, %v555
      %v564 = vmul.f32 %v392, %v560
      %v565 = vmul.f32 %v464, %v468
      %v566 = vmul.f32 %v465, %v469
      %v567 = vadd.f32 %v563, %v565
      %v568 = vadd.f32 %v564, %v566
      %v569 = vmul.f32 %v468, %v567
      %v570 = vmul.f32 %v469, %v568
      %v571 = vadd.f32 %v569, %v570
      %v572 = vrot.slane %v571, 4
      %v573 = vadd.f32 %v571, %v572
      %v574 = vrot.slane %v573, 2
      %v575 = vadd.f32 %v573, %v574
      %v576 = vrot.slane %v575, 1
      %v577 = vadd.f32 %v575, %v576
      %vm578 = vcmp.gt.f32.partialorder %v577, 0.0
      %v579 = vsel %vm578, %v577, 1.0
      %v580 = vrcp.pop %v579
      %v581 = vmul.f32 %v478, %v580
      %v582 = vsel %vm578, %v581, 0.0
      %v583 = vmul.f32 %v582, %v468
      %v584 = vmul.f32 %v582, %v469
      %v585 = vadd.f32 %v583, 0.0
      %v586 = vadd.f32 %v584, 0.0
      %v587 = vmul.f32 %v582, %v567
      %v588 = vmul.f32 %v582, %v568
      %v589 = vsub.f32 %v468, %v587
      %v590 = vsub.f32 %v469, %v588
      %v591 = vmul.f32 %v589, %v589
      %v592 = vmul.f32 %v590, %v590
      %v593 = vadd.f32 %v591, %v592
      %v594 = vrot.slane %v593, 4
      %v595 = vadd.f32 %v593, %v594
      %v596 = vrot.slane %v595, 2
      %v597 = vadd.f32 %v595, %v596
      %v598 = vrot.slane %v597, 1
      %v599 = vadd.f32 %v597, %v598
      %vm600 = vcmp.gt.f32.partialorder %v478, 0.0
      %v601 = vsel %vm600, %v478, 1.0
      %v602 = vrcp.pop %v601
      %v603 = vmul.f32 %v599, %v602
      %v604 = vsel %vm600, %v603, 0.0
      %v605 = vmul.f32 %v604, %v468
      %v606 = vmul.f32 %v604, %v469
      %v607 = vadd.f32 %v589, %v605
      %v608 = vadd.f32 %v590, %v606
      %v609 = vmul.f32 %v458, %v607
      %v610 = vmul.f32 %v459, %v608
      %611 = vmatprep.subr.mxu0 0.0
      %612 = vmatpush1.msra.mxu0 %v609
      %613 = vmatprep.subr.mxu0 0.0
      %614 = vmatpush1.msra.mxu0 %v610
      %615 = vmatprep.subr.mxu0 0.0
      %616 = vmatpush1.msra.mxu0 0.0
      %617 = vmatprep.subr.mxu0 0.0
      %618 = vmatpush1.msra.mxu0 0.0
      %619 = vmatprep.subr.mxu0 0.0
      %620 = vmatpush1.msra.mxu0 0.0
      %621 = vmatprep.subr.mxu0 0.0
      %622 = vmatpush1.msra.mxu0 0.0
      %623 = vmatprep.subr.mxu0 0.0
      %624 = vmatpush1.msra.mxu0 0.0
      %625 = vmatprep.subr.mxu0 0.0
      %626 = vmatpush1.msra.mxu0 0.0
      %627 = vmatprep.subr.mxu0 0.0
      %628 = vmatpush1.msra.mxu0 0.0
      %629 = vmatprep.subr.mxu0 0.0
      %630 = vmatpush1.msra.mxu0 0.0
      %631 = vmatprep.subr.mxu0 0.0
      %632 = vmatpush1.msra.mxu0 0.0
      %633 = vmatprep.subr.mxu0 0.0
      %634 = vmatpush1.msra.mxu0 0.0
      %635 = vmatprep.subr.mxu0 0.0
      %636 = vmatpush1.msra.mxu0 0.0
      %637 = vmatprep.subr.mxu0 0.0
      %638 = vmatpush1.msra.mxu0 0.0
      %639 = vmatprep.subr.mxu0 0.0
      %640 = vmatpush1.msra.mxu0 0.0
      %641 = vmatprep.subr.mxu0 0.0
      %642 = vmatpush1.msra.mxu0 0.0
      %643 = vmatprep.subr.mxu0 0.0
      %644 = vmatpush1.msra.mxu0 0.0
      %645 = vmatprep.subr.mxu0 0.0
      %646 = vmatpush1.msra.mxu0 0.0
      %647 = vmatprep.subr.mxu0 0.0
      %648 = vmatpush1.msra.mxu0 0.0
      %649 = vmatprep.subr.mxu0 0.0
      %650 = vmatpush1.msra.mxu0 0.0
      %651 = vmatprep.subr.mxu0 0.0
      %652 = vmatpush1.msra.mxu0 0.0
      %653 = vmatprep.subr.mxu0 0.0
      %654 = vmatpush1.msra.mxu0 0.0
      %655 = vmatprep.subr.mxu0 0.0
      %656 = vmatpush1.msra.mxu0 0.0
      %657 = vmatprep.subr.mxu0 0.0
      %658 = vmatpush1.msra.mxu0 0.0
      %659 = vmatprep.subr.mxu0 0.0
      %660 = vmatpush1.msra.mxu0 0.0
      %661 = vmatprep.subr.mxu0 0.0
      %662 = vmatpush1.msra.mxu0 0.0
      %663 = vmatprep.subr.mxu0 0.0
      %664 = vmatpush1.msra.mxu0 0.0
      %665 = vmatprep.subr.mxu0 0.0
      %666 = vmatpush1.msra.mxu0 0.0
      %667 = vmatprep.subr.mxu0 0.0
      %668 = vmatpush1.msra.mxu0 0.0
      %669 = vmatprep.subr.mxu0 0.0
      %670 = vmatpush1.msra.mxu0 0.0
      %671 = vmatprep.subr.mxu0 0.0
      %672 = vmatpush1.msra.mxu0 0.0
      %673 = vmatprep.subr.mxu0 0.0
      %674 = vmatpush1.msra.mxu0 0.0
      %675 = vmatprep.mubr.f32.mxu0 0.0
      %676 = vmatmul.mubr.f32.gmra.mrb[0].mxu0 %v483
      %v677 = vpop.f32.mrb[0].mxu0
      %v678 = vadd.f32 0.0, %v677
      %v679 = vpop.f32.mrb[0].mxu0
      %680 = vmatprep.mubr.f32.mxu0 0.0
      %681 = vmatmul.mubr.f32.gmra.mrb[0].mxu0 %v486
      %v682 = vpop.f32.mrb[0].mxu0
      %v683 = vadd.f32 0.0, %v682
      %v684 = vpop.f32.mrb[0].mxu0
      %685 = vdwg.mxu0
      %v686 = vmul.f32 %v391, %v678
      %v687 = vmul.f32 %v392, %v683
      %v688 = vmul.f32 %v464, %v607
      %v689 = vmul.f32 %v465, %v608
      %v690 = vadd.f32 %v686, %v688
      %v691 = vadd.f32 %v687, %v689
      %v692 = vmul.f32 %v607, %v690
      %v693 = vmul.f32 %v608, %v691
      %v694 = vadd.f32 %v692, %v693
      %v695 = vrot.slane %v694, 4
      %v696 = vadd.f32 %v694, %v695
      %v697 = vrot.slane %v696, 2
      %v698 = vadd.f32 %v696, %v697
      %v699 = vrot.slane %v698, 1
      %v700 = vadd.f32 %v698, %v699
      %vm701 = vcmp.gt.f32.partialorder %v700, 0.0
      %v702 = vsel %vm701, %v700, 1.0
      %v703 = vrcp.pop %v702
      %v704 = vmul.f32 %v599, %v703
      %v705 = vsel %vm701, %v704, 0.0
      %v706 = vmul.f32 %v705, %v607
      %v707 = vmul.f32 %v705, %v608
      %v708 = vadd.f32 %v585, %v706
      %v709 = vadd.f32 %v586, %v707
      %v710 = vmul.f32 %v705, %v690
      %v711 = vmul.f32 %v705, %v691
      %v712 = vsub.f32 %v589, %v710
      %v713 = vsub.f32 %v590, %v711
      %v714 = vmul.f32 %v712, %v712
      %v715 = vmul.f32 %v713, %v713
      %v716 = vadd.f32 %v714, %v715
      %v717 = vrot.slane %v716, 4
      %v718 = vadd.f32 %v716, %v717
      %v719 = vrot.slane %v718, 2
      %v720 = vadd.f32 %v718, %v719
      %v721 = vrot.slane %v720, 1
      %v722 = vadd.f32 %v720, %v721
      %vm723 = vcmp.gt.f32.partialorder %v599, 0.0
      %v724 = vsel %vm723, %v599, 1.0
      %v725 = vrcp.pop %v724
      %v726 = vmul.f32 %v722, %v725
      %v727 = vsel %vm723, %v726, 0.0
      %v728 = vmul.f32 %v727, %v607
      %v729 = vmul.f32 %v727, %v608
      %v730 = vadd.f32 %v712, %v728
      %v731 = vadd.f32 %v713, %v729
      %v732 = vmul.f32 %v458, %v730
      %v733 = vmul.f32 %v459, %v731
      %734 = vmatprep.subr.mxu0 0.0
      %735 = vmatpush1.msra.mxu0 %v732
      %736 = vmatprep.subr.mxu0 0.0
      %737 = vmatpush1.msra.mxu0 %v733
      %738 = vmatprep.subr.mxu0 0.0
      %739 = vmatpush1.msra.mxu0 0.0
      %740 = vmatprep.subr.mxu0 0.0
      %741 = vmatpush1.msra.mxu0 0.0
      %742 = vmatprep.subr.mxu0 0.0
      %743 = vmatpush1.msra.mxu0 0.0
      %744 = vmatprep.subr.mxu0 0.0
      %745 = vmatpush1.msra.mxu0 0.0
      %746 = vmatprep.subr.mxu0 0.0
      %747 = vmatpush1.msra.mxu0 0.0
      %748 = vmatprep.subr.mxu0 0.0
      %749 = vmatpush1.msra.mxu0 0.0
      %750 = vmatprep.subr.mxu0 0.0
      %751 = vmatpush1.msra.mxu0 0.0
      %752 = vmatprep.subr.mxu0 0.0
      %753 = vmatpush1.msra.mxu0 0.0
      %754 = vmatprep.subr.mxu0 0.0
      %755 = vmatpush1.msra.mxu0 0.0
      %756 = vmatprep.subr.mxu0 0.0
      %757 = vmatpush1.msra.mxu0 0.0
      %758 = vmatprep.subr.mxu0 0.0
      %759 = vmatpush1.msra.mxu0 0.0
      %760 = vmatprep.subr.mxu0 0.0
      %761 = vmatpush1.msra.mxu0 0.0
      %762 = vmatprep.subr.mxu0 0.0
      %763 = vmatpush1.msra.mxu0 0.0
      %764 = vmatprep.subr.mxu0 0.0
      %765 = vmatpush1.msra.mxu0 0.0
      %766 = vmatprep.subr.mxu0 0.0
      %767 = vmatpush1.msra.mxu0 0.0
      %768 = vmatprep.subr.mxu0 0.0
      %769 = vmatpush1.msra.mxu0 0.0
      %770 = vmatprep.subr.mxu0 0.0
      %771 = vmatpush1.msra.mxu0 0.0
      %772 = vmatprep.subr.mxu0 0.0
      %773 = vmatpush1.msra.mxu0 0.0
      %774 = vmatprep.subr.mxu0 0.0
      %775 = vmatpush1.msra.mxu0 0.0
      %776 = vmatprep.subr.mxu0 0.0
      %777 = vmatpush1.msra.mxu0 0.0
      %778 = vmatprep.subr.mxu0 0.0
      %779 = vmatpush1.msra.mxu0 0.0
      %780 = vmatprep.subr.mxu0 0.0
      %781 = vmatpush1.msra.mxu0 0.0
      %782 = vmatprep.subr.mxu0 0.0
      %783 = vmatpush1.msra.mxu0 0.0
      %784 = vmatprep.subr.mxu0 0.0
      %785 = vmatpush1.msra.mxu0 0.0
      %786 = vmatprep.subr.mxu0 0.0
      %787 = vmatpush1.msra.mxu0 0.0
      %788 = vmatprep.subr.mxu0 0.0
      %789 = vmatpush1.msra.mxu0 0.0
      %790 = vmatprep.subr.mxu0 0.0
      %791 = vmatpush1.msra.mxu0 0.0
      %792 = vmatprep.subr.mxu0 0.0
      %793 = vmatpush1.msra.mxu0 0.0
      %794 = vmatprep.subr.mxu0 0.0
      %795 = vmatpush1.msra.mxu0 0.0
      %796 = vmatprep.subr.mxu0 0.0
      %797 = vmatpush1.msra.mxu0 0.0
      %798 = vmatprep.mubr.f32.mxu0 0.0
      %799 = vmatmul.mubr.f32.gmra.mrb[0].mxu0 %v483
      %v800 = vpop.f32.mrb[0].mxu0
      %v801 = vadd.f32 0.0, %v800
      %v802 = vpop.f32.mrb[0].mxu0
      %803 = vmatprep.mubr.f32.mxu0 0.0
      %804 = vmatmul.mubr.f32.gmra.mrb[0].mxu0 %v486
      %v805 = vpop.f32.mrb[0].mxu0
      %v806 = vadd.f32 0.0, %v805
      %v807 = vpop.f32.mrb[0].mxu0
      %808 = vdwg.mxu0
      %v809 = vmul.f32 %v391, %v801
      %v810 = vmul.f32 %v392, %v806
      %v811 = vmul.f32 %v464, %v730
      %v812 = vmul.f32 %v465, %v731
      %v813 = vadd.f32 %v809, %v811
      %v814 = vadd.f32 %v810, %v812
      %v815 = vmul.f32 %v730, %v813
      %v816 = vmul.f32 %v731, %v814
      %v817 = vadd.f32 %v815, %v816
      %v818 = vrot.slane %v817, 4
      %v819 = vadd.f32 %v817, %v818
      %v820 = vrot.slane %v819, 2
      %v821 = vadd.f32 %v819, %v820
      %v822 = vrot.slane %v821, 1
      %v823 = vadd.f32 %v821, %v822
      %vm824 = vcmp.gt.f32.partialorder %v823, 0.0
      %v825 = vsel %vm824, %v823, 1.0
      %v826 = vrcp.pop %v825
      %v827 = vmul.f32 %v722, %v826
      %v828 = vsel %vm824, %v827, 0.0
      %v829 = vmul.f32 %v828, %v730
      %v830 = vmul.f32 %v828, %v731
      %v831 = vadd.f32 %v708, %v829
      %v832 = vadd.f32 %v709, %v830
      %v833 = vmul.f32 %v828, %v813
      %v834 = vmul.f32 %v828, %v814
      %v835 = vsub.f32 %v712, %v833
      %v836 = vsub.f32 %v713, %v834
      %v837 = vmul.f32 %v835, %v835
      %v838 = vmul.f32 %v836, %v836
      %v839 = vadd.f32 %v837, %v838
      %v840 = vrot.slane %v839, 4
      %v841 = vadd.f32 %v839, %v840
      %v842 = vrot.slane %v841, 2
      %v843 = vadd.f32 %v841, %v842
      %v844 = vrot.slane %v843, 1
      %v845 = vadd.f32 %v843, %v844
      %vm846 = vcmp.gt.f32.partialorder %v722, 0.0
      %v847 = vsel %vm846, %v722, 1.0
      %v848 = vrcp.pop %v847
      %v849 = vmul.f32 %v845, %v848
      %v850 = vsel %vm846, %v849, 0.0
      %v851 = vmul.f32 %v850, %v730
      %v852 = vmul.f32 %v850, %v731
      %v853 = vadd.f32 %v835, %v851
      %v854 = vadd.f32 %v836, %v852
      %v855 = vmul.f32 %v458, %v853
      %v856 = vmul.f32 %v459, %v854
      %857 = vmatprep.subr.mxu0 0.0
      %858 = vmatpush1.msra.mxu0 %v855
      %859 = vmatprep.subr.mxu0 0.0
      %860 = vmatpush1.msra.mxu0 %v856
      %861 = vmatprep.subr.mxu0 0.0
      %862 = vmatpush1.msra.mxu0 0.0
      %863 = vmatprep.subr.mxu0 0.0
      %864 = vmatpush1.msra.mxu0 0.0
      %865 = vmatprep.subr.mxu0 0.0
      %866 = vmatpush1.msra.mxu0 0.0
      %867 = vmatprep.subr.mxu0 0.0
      %868 = vmatpush1.msra.mxu0 0.0
      %869 = vmatprep.subr.mxu0 0.0
      %870 = vmatpush1.msra.mxu0 0.0
      %871 = vmatprep.subr.mxu0 0.0
      %872 = vmatpush1.msra.mxu0 0.0
      %873 = vmatprep.subr.mxu0 0.0
      %874 = vmatpush1.msra.mxu0 0.0
      %875 = vmatprep.subr.mxu0 0.0
      %876 = vmatpush1.msra.mxu0 0.0
      %877 = vmatprep.subr.mxu0 0.0
      %878 = vmatpush1.msra.mxu0 0.0
      %879 = vmatprep.subr.mxu0 0.0
      %880 = vmatpush1.msra.mxu0 0.0
      %881 = vmatprep.subr.mxu0 0.0
      %882 = vmatpush1.msra.mxu0 0.0
      %883 = vmatprep.subr.mxu0 0.0
      %884 = vmatpush1.msra.mxu0 0.0
      %885 = vmatprep.subr.mxu0 0.0
      %886 = vmatpush1.msra.mxu0 0.0
      %887 = vmatprep.subr.mxu0 0.0
      %888 = vmatpush1.msra.mxu0 0.0
      %889 = vmatprep.subr.mxu0 0.0
      %890 = vmatpush1.msra.mxu0 0.0
      %891 = vmatprep.subr.mxu0 0.0
      %892 = vmatpush1.msra.mxu0 0.0
      %893 = vmatprep.subr.mxu0 0.0
      %894 = vmatpush1.msra.mxu0 0.0
      %895 = vmatprep.subr.mxu0 0.0
      %896 = vmatpush1.msra.mxu0 0.0
      %897 = vmatprep.subr.mxu0 0.0
      %898 = vmatpush1.msra.mxu0 0.0
      %899 = vmatprep.subr.mxu0 0.0
      %900 = vmatpush1.msra.mxu0 0.0
      %901 = vmatprep.subr.mxu0 0.0
      %902 = vmatpush1.msra.mxu0 0.0
      %903 = vmatprep.subr.mxu0 0.0
      %904 = vmatpush1.msra.mxu0 0.0
      %905 = vmatprep.subr.mxu0 0.0
      %906 = vmatpush1.msra.mxu0 0.0
      %907 = vmatprep.subr.mxu0 0.0
      %908 = vmatpush1.msra.mxu0 0.0
      %909 = vmatprep.subr.mxu0 0.0
      %910 = vmatpush1.msra.mxu0 0.0
      %911 = vmatprep.subr.mxu0 0.0
      %912 = vmatpush1.msra.mxu0 0.0
      %913 = vmatprep.subr.mxu0 0.0
      %914 = vmatpush1.msra.mxu0 0.0
      %915 = vmatprep.subr.mxu0 0.0
      %916 = vmatpush1.msra.mxu0 0.0
      %917 = vmatprep.subr.mxu0 0.0
      %918 = vmatpush1.msra.mxu0 0.0
      %919 = vmatprep.subr.mxu0 0.0
      %920 = vmatpush1.msra.mxu0 0.0
      %921 = vmatprep.mubr.f32.mxu0 0.0
      %922 = vmatmul.mubr.f32.gmra.mrb[0].mxu0 %v483
      %v923 = vpop.f32.mrb[0].mxu0
      %v924 = vadd.f32 0.0, %v923
      %v925 = vpop.f32.mrb[0].mxu0
      %926 = vmatprep.mubr.f32.mxu0 0.0
      %927 = vmatmul.mubr.f32.gmra.mrb[0].mxu0 %v486
      %v928 = vpop.f32.mrb[0].mxu0
      %v929 = vadd.f32 0.0, %v928
      %v930 = vpop.f32.mrb[0].mxu0
      %931 = vdwg.mxu0
      %v932 = vmul.f32 %v391, %v924
      %v933 = vmul.f32 %v392, %v929
      %v934 = vmul.f32 %v464, %v853
      %v935 = vmul.f32 %v465, %v854
      %v936 = vadd.f32 %v932, %v934
      %v937 = vadd.f32 %v933, %v935
      %v938 = vmul.f32 %v853, %v936
      %v939 = vmul.f32 %v854, %v937
      %v940 = vadd.f32 %v938, %v939
      %v941 = vrot.slane %v940, 4
      %v942 = vadd.f32 %v940, %v941
      %v943 = vrot.slane %v942, 2
      %v944 = vadd.f32 %v942, %v943
      %v945 = vrot.slane %v944, 1
      %v946 = vadd.f32 %v944, %v945
      %vm947 = vcmp.gt.f32.partialorder %v946, 0.0
      %v948 = vsel %vm947, %v946, 1.0
      %v949 = vrcp.pop %v948
      %v950 = vmul.f32 %v845, %v949
      %v951 = vsel %vm947, %v950, 0.0
      %v952 = vmul.f32 %v951, %v853
      %v953 = vmul.f32 %v951, %v854
      %v954 = vadd.f32 %v831, %v952
      %v955 = vadd.f32 %v832, %v953
      %v956 = vmul.f32 %v951, %v936
      %v957 = vmul.f32 %v951, %v937
      %v958 = vsub.f32 %v835, %v956
      %v959 = vsub.f32 %v836, %v957
      %v960 = vmul.f32 %v958, %v958
      %v961 = vmul.f32 %v959, %v959
      %v962 = vadd.f32 %v960, %v961
      %v963 = vrot.slane %v962, 4
      %v964 = vadd.f32 %v962, %v963
      %v965 = vrot.slane %v964, 2
      %v966 = vadd.f32 %v964, %v965
      %v967 = vrot.slane %v966, 1
      %v968 = vadd.f32 %v966, %v967
      %vm969 = vcmp.gt.f32.partialorder %v845, 0.0
      %v970 = vsel %vm969, %v845, 1.0
      %v971 = vrcp.pop %v970
      %v972 = vmul.f32 %v968, %v971
      %v973 = vsel %vm969, %v972, 0.0
      %v974 = vmul.f32 %v973, %v853
      %v975 = vmul.f32 %v973, %v854
      %v976 = vadd.f32 %v958, %v974
      %v977 = vadd.f32 %v959, %v975
      %v978 = vmul.f32 %v458, %v976
      %v979 = vmul.f32 %v459, %v977
      %980 = vmatprep.subr.mxu0 0.0
      %981 = vmatpush1.msra.mxu0 %v978
      %982 = vmatprep.subr.mxu0 0.0
      %983 = vmatpush1.msra.mxu0 %v979
      %984 = vmatprep.subr.mxu0 0.0
      %985 = vmatpush1.msra.mxu0 0.0
      %986 = vmatprep.subr.mxu0 0.0
      %987 = vmatpush1.msra.mxu0 0.0
      %988 = vmatprep.subr.mxu0 0.0
      %989 = vmatpush1.msra.mxu0 0.0
      %990 = vmatprep.subr.mxu0 0.0
      %991 = vmatpush1.msra.mxu0 0.0
      %992 = vmatprep.subr.mxu0 0.0
      %993 = vmatpush1.msra.mxu0 0.0
      %994 = vmatprep.subr.mxu0 0.0
      %995 = vmatpush1.msra.mxu0 0.0
      %996 = vmatprep.subr.mxu0 0.0
      %997 = vmatpush1.msra.mxu0 0.0
      %998 = vmatprep.subr.mxu0 0.0
      %999 = vmatpush1.msra.mxu0 0.0
      %1000 = vmatprep.subr.mxu0 0.0
      %1001 = vmatpush1.msra.mxu0 0.0
      %1002 = vmatprep.subr.mxu0 0.0
      %1003 = vmatpush1.msra.mxu0 0.0
      %1004 = vmatprep.subr.mxu0 0.0
      %1005 = vmatpush1.msra.mxu0 0.0
      %1006 = vmatprep.subr.mxu0 0.0
      %1007 = vmatpush1.msra.mxu0 0.0
      %1008 = vmatprep.subr.mxu0 0.0
      %1009 = vmatpush1.msra.mxu0 0.0
      %1010 = vmatprep.subr.mxu0 0.0
      %1011 = vmatpush1.msra.mxu0 0.0
      %1012 = vmatprep.subr.mxu0 0.0
      %1013 = vmatpush1.msra.mxu0 0.0
      %1014 = vmatprep.subr.mxu0 0.0
      %1015 = vmatpush1.msra.mxu0 0.0
      %1016 = vmatprep.subr.mxu0 0.0
      %1017 = vmatpush1.msra.mxu0 0.0
      %1018 = vmatprep.subr.mxu0 0.0
      %1019 = vmatpush1.msra.mxu0 0.0
      %1020 = vmatprep.subr.mxu0 0.0
      %1021 = vmatpush1.msra.mxu0 0.0
      %1022 = vmatprep.subr.mxu0 0.0
      %1023 = vmatpush1.msra.mxu0 0.0
      %1024 = vmatprep.subr.mxu0 0.0
      %1025 = vmatpush1.msra.mxu0 0.0
      %1026 = vmatprep.subr.mxu0 0.0
      %1027 = vmatpush1.msra.mxu0 0.0
      %1028 = vmatprep.subr.mxu0 0.0
      %1029 = vmatpush1.msra.mxu0 0.0
      %1030 = vmatprep.subr.mxu0 0.0
      %1031 = vmatpush1.msra.mxu0 0.0
      %1032 = vmatprep.subr.mxu0 0.0
      %1033 = vmatpush1.msra.mxu0 0.0
      %1034 = vmatprep.subr.mxu0 0.0
      %1035 = vmatpush1.msra.mxu0 0.0
      %1036 = vmatprep.subr.mxu0 0.0
      %1037 = vmatpush1.msra.mxu0 0.0
      %1038 = vmatprep.subr.mxu0 0.0
      %1039 = vmatpush1.msra.mxu0 0.0
      %1040 = vmatprep.subr.mxu0 0.0
      %1041 = vmatpush1.msra.mxu0 0.0
      %1042 = vmatprep.subr.mxu0 0.0
      %1043 = vmatpush1.msra.mxu0 0.0
      %1044 = vmatprep.mubr.f32.mxu0 0.0
      %1045 = vmatmul.mubr.f32.gmra.mrb[0].mxu0 %v483
      %v1046 = vpop.f32.mrb[0].mxu0
      %v1047 = vadd.f32 0.0, %v1046
      %v1048 = vpop.f32.mrb[0].mxu0
      %1049 = vmatprep.mubr.f32.mxu0 0.0
      %1050 = vmatmul.mubr.f32.gmra.mrb[0].mxu0 %v486
      %v1051 = vpop.f32.mrb[0].mxu0
      %v1052 = vadd.f32 0.0, %v1051
      %v1053 = vpop.f32.mrb[0].mxu0
      %1054 = vdwg.mxu0
      %v1055 = vmul.f32 %v391, %v1047
      %v1056 = vmul.f32 %v392, %v1052
      %v1057 = vmul.f32 %v464, %v976
      %v1058 = vmul.f32 %v465, %v977
      %v1059 = vadd.f32 %v1055, %v1057
      %v1060 = vadd.f32 %v1056, %v1058
      %v1061 = vmul.f32 %v976, %v1059
      %v1062 = vmul.f32 %v977, %v1060
      %v1063 = vadd.f32 %v1061, %v1062
      %v1064 = vrot.slane %v1063, 4
      %v1065 = vadd.f32 %v1063, %v1064
      %v1066 = vrot.slane %v1065, 2
      %v1067 = vadd.f32 %v1065, %v1066
      %v1068 = vrot.slane %v1067, 1
      %v1069 = vadd.f32 %v1067, %v1068
      %vm1070 = vcmp.gt.f32.partialorder %v1069, 0.0
      %v1071 = vsel %vm1070, %v1069, 1.0
      %v1072 = vrcp.pop %v1071
      %v1073 = vmul.f32 %v968, %v1072
      %v1074 = vsel %vm1070, %v1073, 0.0
      %v1075 = vmul.f32 %v1074, %v976
      %v1076 = vmul.f32 %v1074, %v977
      %v1077 = vadd.f32 %v954, %v1075
      %v1078 = vadd.f32 %v955, %v1076
      %v1079 = vmul.f32 %v1074, %v1059
      %v1080 = vmul.f32 %v1074, %v1060
      %v1081 = vsub.f32 %v958, %v1079
      %v1082 = vsub.f32 %v959, %v1080
      %v1083 = vmul.f32 %v1081, %v1081
      %v1084 = vmul.f32 %v1082, %v1082
      %v1085 = vadd.f32 %v1083, %v1084
      %v1086 = vrot.slane %v1085, 4
      %v1087 = vadd.f32 %v1085, %v1086
      %v1088 = vrot.slane %v1087, 2
      %v1089 = vadd.f32 %v1087, %v1088
      %v1090 = vrot.slane %v1089, 1
      %v1091 = vadd.f32 %v1089, %v1090
      %vm1092 = vcmp.gt.f32.partialorder %v968, 0.0
      %v1093 = vsel %vm1092, %v968, 1.0
      %v1094 = vrcp.pop %v1093
      %v1095 = vmul.f32 %v1091, %v1094
      %v1096 = vsel %vm1092, %v1095, 0.0
      %v1097 = vmul.f32 %v1096, %v976
      %v1098 = vmul.f32 %v1096, %v977
      %v1099 = vadd.f32 %v1081, %v1097
      %v1100 = vadd.f32 %v1082, %v1098
      %v1101 = vmul.f32 %v458, %v1099
      %v1102 = vmul.f32 %v459, %v1100
      %1103 = vmatprep.subr.mxu0 0.0
      %1104 = vmatpush1.msra.mxu0 %v1101
      %1105 = vmatprep.subr.mxu0 0.0
      %1106 = vmatpush1.msra.mxu0 %v1102
      %1107 = vmatprep.subr.mxu0 0.0
      %1108 = vmatpush1.msra.mxu0 0.0
      %1109 = vmatprep.subr.mxu0 0.0
      %1110 = vmatpush1.msra.mxu0 0.0
      %1111 = vmatprep.subr.mxu0 0.0
      %1112 = vmatpush1.msra.mxu0 0.0
      %1113 = vmatprep.subr.mxu0 0.0
      %1114 = vmatpush1.msra.mxu0 0.0
      %1115 = vmatprep.subr.mxu0 0.0
      %1116 = vmatpush1.msra.mxu0 0.0
      %1117 = vmatprep.subr.mxu0 0.0
      %1118 = vmatpush1.msra.mxu0 0.0
      %1119 = vmatprep.subr.mxu0 0.0
      %1120 = vmatpush1.msra.mxu0 0.0
      %1121 = vmatprep.subr.mxu0 0.0
      %1122 = vmatpush1.msra.mxu0 0.0
      %1123 = vmatprep.subr.mxu0 0.0
      %1124 = vmatpush1.msra.mxu0 0.0
      %1125 = vmatprep.subr.mxu0 0.0
      %1126 = vmatpush1.msra.mxu0 0.0
      %1127 = vmatprep.subr.mxu0 0.0
      %1128 = vmatpush1.msra.mxu0 0.0
      %1129 = vmatprep.subr.mxu0 0.0
      %1130 = vmatpush1.msra.mxu0 0.0
      %1131 = vmatprep.subr.mxu0 0.0
      %1132 = vmatpush1.msra.mxu0 0.0
      %1133 = vmatprep.subr.mxu0 0.0
      %1134 = vmatpush1.msra.mxu0 0.0
      %1135 = vmatprep.subr.mxu0 0.0
      %1136 = vmatpush1.msra.mxu0 0.0
      %1137 = vmatprep.subr.mxu0 0.0
      %1138 = vmatpush1.msra.mxu0 0.0
      %1139 = vmatprep.subr.mxu0 0.0
      %1140 = vmatpush1.msra.mxu0 0.0
      %1141 = vmatprep.subr.mxu0 0.0
      %1142 = vmatpush1.msra.mxu0 0.0
      %1143 = vmatprep.subr.mxu0 0.0
      %1144 = vmatpush1.msra.mxu0 0.0
      %1145 = vmatprep.subr.mxu0 0.0
      %1146 = vmatpush1.msra.mxu0 0.0
      %1147 = vmatprep.subr.mxu0 0.0
      %1148 = vmatpush1.msra.mxu0 0.0
      %1149 = vmatprep.subr.mxu0 0.0
      %1150 = vmatpush1.msra.mxu0 0.0
      %1151 = vmatprep.subr.mxu0 0.0
      %1152 = vmatpush1.msra.mxu0 0.0
      %1153 = vmatprep.subr.mxu0 0.0
      %1154 = vmatpush1.msra.mxu0 0.0
      %1155 = vmatprep.subr.mxu0 0.0
      %1156 = vmatpush1.msra.mxu0 0.0
      %1157 = vmatprep.subr.mxu0 0.0
      %1158 = vmatpush1.msra.mxu0 0.0
      %1159 = vmatprep.subr.mxu0 0.0
      %1160 = vmatpush1.msra.mxu0 0.0
      %1161 = vmatprep.subr.mxu0 0.0
      %1162 = vmatpush1.msra.mxu0 0.0
      %1163 = vmatprep.subr.mxu0 0.0
      %1164 = vmatpush1.msra.mxu0 0.0
      %1165 = vmatprep.subr.mxu0 0.0
      %1166 = vmatpush1.msra.mxu0 0.0
      %1167 = vmatprep.mubr.f32.mxu0 0.0
      %1168 = vmatmul.mubr.f32.gmra.mrb[0].mxu0 %v483
      %v1169 = vpop.f32.mrb[0].mxu0
      %v1170 = vadd.f32 0.0, %v1169
      %v1171 = vpop.f32.mrb[0].mxu0
      %1172 = vmatprep.mubr.f32.mxu0 0.0
      %1173 = vmatmul.mubr.f32.gmra.mrb[0].mxu0 %v486
      %v1174 = vpop.f32.mrb[0].mxu0
      %v1175 = vadd.f32 0.0, %v1174
      %v1176 = vpop.f32.mrb[0].mxu0
      %1177 = vdwg.mxu0
      %v1178 = vmul.f32 %v391, %v1170
      %v1179 = vmul.f32 %v392, %v1175
      %v1180 = vmul.f32 %v464, %v1099
      %v1181 = vmul.f32 %v465, %v1100
      %v1182 = vadd.f32 %v1178, %v1180
      %v1183 = vadd.f32 %v1179, %v1181
      %v1184 = vmul.f32 %v1099, %v1182
      %v1185 = vmul.f32 %v1100, %v1183
      %v1186 = vadd.f32 %v1184, %v1185
      %v1187 = vrot.slane %v1186, 4
      %v1188 = vadd.f32 %v1186, %v1187
      %v1189 = vrot.slane %v1188, 2
      %v1190 = vadd.f32 %v1188, %v1189
      %v1191 = vrot.slane %v1190, 1
      %v1192 = vadd.f32 %v1190, %v1191
      %vm1193 = vcmp.gt.f32.partialorder %v1192, 0.0
      %v1194 = vsel %vm1193, %v1192, 1.0
      %v1195 = vrcp.pop %v1194
      %v1196 = vmul.f32 %v1091, %v1195
      %v1197 = vsel %vm1193, %v1196, 0.0
      %v1198 = vmul.f32 %v1197, %v1099
      %v1199 = vmul.f32 %v1197, %v1100
      %v1200 = vadd.f32 %v1077, %v1198
      %v1201 = vadd.f32 %v1078, %v1199
      %v1202 = vmul.f32 %v1197, %v1182
      %v1203 = vmul.f32 %v1197, %v1183
      %v1204 = vsub.f32 %v1081, %v1202
      %v1205 = vsub.f32 %v1082, %v1203
      %v1206 = vmul.f32 %v1204, %v1204
      %v1207 = vmul.f32 %v1205, %v1205
      %v1208 = vadd.f32 %v1206, %v1207
      %v1209 = vrot.slane %v1208, 4
      %v1210 = vadd.f32 %v1208, %v1209
      %v1211 = vrot.slane %v1210, 2
      %v1212 = vadd.f32 %v1210, %v1211
      %v1213 = vrot.slane %v1212, 1
      %v1214 = vadd.f32 %v1212, %v1213
      %vm1215 = vcmp.gt.f32.partialorder %v1091, 0.0
      %v1216 = vsel %vm1215, %v1091, 1.0
      %v1217 = vrcp.pop %v1216
      %v1218 = vmul.f32 %v1214, %v1217
      %v1219 = vsel %vm1215, %v1218, 0.0
      %v1220 = vmul.f32 %v1219, %v1099
      %v1221 = vmul.f32 %v1219, %v1100
      %v1222 = vadd.f32 %v1204, %v1220
      %v1223 = vadd.f32 %v1205, %v1221
      %v1224 = vmul.f32 %v458, %v1222
      %v1225 = vmul.f32 %v459, %v1223
      %1226 = vmatprep.subr.mxu0 0.0
      %1227 = vmatpush1.msra.mxu0 %v1224
      %1228 = vmatprep.subr.mxu0 0.0
      %1229 = vmatpush1.msra.mxu0 %v1225
      %1230 = vmatprep.subr.mxu0 0.0
      %1231 = vmatpush1.msra.mxu0 0.0
      %1232 = vmatprep.subr.mxu0 0.0
      %1233 = vmatpush1.msra.mxu0 0.0
      %1234 = vmatprep.subr.mxu0 0.0
      %1235 = vmatpush1.msra.mxu0 0.0
      %1236 = vmatprep.subr.mxu0 0.0
      %1237 = vmatpush1.msra.mxu0 0.0
      %1238 = vmatprep.subr.mxu0 0.0
      %1239 = vmatpush1.msra.mxu0 0.0
      %1240 = vmatprep.subr.mxu0 0.0
      %1241 = vmatpush1.msra.mxu0 0.0
      %1242 = vmatprep.subr.mxu0 0.0
      %1243 = vmatpush1.msra.mxu0 0.0
      %1244 = vmatprep.subr.mxu0 0.0
      %1245 = vmatpush1.msra.mxu0 0.0
      %1246 = vmatprep.subr.mxu0 0.0
      %1247 = vmatpush1.msra.mxu0 0.0
      %1248 = vmatprep.subr.mxu0 0.0
      %1249 = vmatpush1.msra.mxu0 0.0
      %1250 = vmatprep.subr.mxu0 0.0
      %1251 = vmatpush1.msra.mxu0 0.0
      %1252 = vmatprep.subr.mxu0 0.0
      %1253 = vmatpush1.msra.mxu0 0.0
      %1254 = vmatprep.subr.mxu0 0.0
      %1255 = vmatpush1.msra.mxu0 0.0
      %1256 = vmatprep.subr.mxu0 0.0
      %1257 = vmatpush1.msra.mxu0 0.0
      %1258 = vmatprep.subr.mxu0 0.0
      %1259 = vmatpush1.msra.mxu0 0.0
      %1260 = vmatprep.subr.mxu0 0.0
      %1261 = vmatpush1.msra.mxu0 0.0
      %1262 = vmatprep.subr.mxu0 0.0
      %1263 = vmatpush1.msra.mxu0 0.0
      %1264 = vmatprep.subr.mxu0 0.0
      %1265 = vmatpush1.msra.mxu0 0.0
      %1266 = vmatprep.subr.mxu0 0.0
      %1267 = vmatpush1.msra.mxu0 0.0
      %1268 = vmatprep.subr.mxu0 0.0
      %1269 = vmatpush1.msra.mxu0 0.0
      %1270 = vmatprep.subr.mxu0 0.0
      %1271 = vmatpush1.msra.mxu0 0.0
      %1272 = vmatprep.subr.mxu0 0.0
      %1273 = vmatpush1.msra.mxu0 0.0
      %1274 = vmatprep.subr.mxu0 0.0
      %1275 = vmatpush1.msra.mxu0 0.0
      %1276 = vmatprep.subr.mxu0 0.0
      %1277 = vmatpush1.msra.mxu0 0.0
      %1278 = vmatprep.subr.mxu0 0.0
      %1279 = vmatpush1.msra.mxu0 0.0
      %1280 = vmatprep.subr.mxu0 0.0
      %1281 = vmatpush1.msra.mxu0 0.0
      %1282 = vmatprep.subr.mxu0 0.0
      %1283 = vmatpush1.msra.mxu0 0.0
      %1284 = vmatprep.subr.mxu0 0.0
      %1285 = vmatpush1.msra.mxu0 0.0
      %1286 = vmatprep.subr.mxu0 0.0
      %1287 = vmatpush1.msra.mxu0 0.0
      %1288 = vmatprep.subr.mxu0 0.0
      %1289 = vmatpush1.msra.mxu0 0.0
      %1290 = vmatprep.mubr.f32.mxu0 0.0
      %1291 = vmatmul.mubr.f32.gmra.mrb[0].mxu0 %v483
      %v1292 = vpop.f32.mrb[0].mxu0
      %v1293 = vadd.f32 0.0, %v1292
      %v1294 = vpop.f32.mrb[0].mxu0
      %1295 = vmatprep.mubr.f32.mxu0 0.0
      %1296 = vmatmul.mubr.f32.gmra.mrb[0].mxu0 %v486
      %v1297 = vpop.f32.mrb[0].mxu0
      %v1298 = vadd.f32 0.0, %v1297
      %v1299 = vpop.f32.mrb[0].mxu0
      %1300 = vdwg.mxu0
      %v1301 = vmul.f32 %v391, %v1293
      %v1302 = vmul.f32 %v392, %v1298
      %v1303 = vmul.f32 %v464, %v1222
      %v1304 = vmul.f32 %v465, %v1223
      %v1305 = vadd.f32 %v1301, %v1303
      %v1306 = vadd.f32 %v1302, %v1304
      %v1307 = vmul.f32 %v1222, %v1305
      %v1308 = vmul.f32 %v1223, %v1306
      %v1309 = vadd.f32 %v1307, %v1308
      %v1310 = vrot.slane %v1309, 4
      %v1311 = vadd.f32 %v1309, %v1310
      %v1312 = vrot.slane %v1311, 2
      %v1313 = vadd.f32 %v1311, %v1312
      %v1314 = vrot.slane %v1313, 1
      %v1315 = vadd.f32 %v1313, %v1314
      %vm1316 = vcmp.gt.f32.partialorder %v1315, 0.0
      %v1317 = vsel %vm1316, %v1315, 1.0
      %v1318 = vrcp.pop %v1317
      %v1319 = vmul.f32 %v1214, %v1318
      %v1320 = vsel %vm1316, %v1319, 0.0
      %v1321 = vmul.f32 %v1320, %v1222
      %v1322 = vmul.f32 %v1320, %v1223
      %v1323 = vadd.f32 %v1200, %v1321
      %v1324 = vadd.f32 %v1201, %v1322
      %v1325 = vmul.f32 %v1320, %v1305
      %v1326 = vmul.f32 %v1320, %v1306
      %v1327 = vsub.f32 %v1204, %v1325
      %v1328 = vsub.f32 %v1205, %v1326
      %v1329 = vmul.f32 %v1327, %v1327
      %v1330 = vmul.f32 %v1328, %v1328
      %v1331 = vadd.f32 %v1329, %v1330
      %v1332 = vrot.slane %v1331, 4
      %v1333 = vadd.f32 %v1331, %v1332
      %v1334 = vrot.slane %v1333, 2
      %v1335 = vadd.f32 %v1333, %v1334
      %v1336 = vrot.slane %v1335, 1
      %v1337 = vadd.f32 %v1335, %v1336
      %vm1338 = vcmp.gt.f32.partialorder %v1214, 0.0
      %v1339 = vsel %vm1338, %v1214, 1.0
      %v1340 = vrcp.pop %v1339
      %v1341 = vmul.f32 %v1337, %v1340
      %v1342 = vsel %vm1338, %v1341, 0.0
      %v1343 = vmul.f32 %v1342, %v1222
      %v1344 = vmul.f32 %v1342, %v1223
      %v1345 = vadd.f32 %v1327, %v1343
      %v1346 = vadd.f32 %v1328, %v1344
      %v1347 = vmul.f32 %v458, %v1345
      %v1348 = vmul.f32 %v459, %v1346
      %1349 = vmatprep.subr.mxu0 0.0
      %1350 = vmatpush1.msra.mxu0 %v1347
      %1351 = vmatprep.subr.mxu0 0.0
      %1352 = vmatpush1.msra.mxu0 %v1348
      %1353 = vmatprep.subr.mxu0 0.0
      %1354 = vmatpush1.msra.mxu0 0.0
      %1355 = vmatprep.subr.mxu0 0.0
      %1356 = vmatpush1.msra.mxu0 0.0
      %1357 = vmatprep.subr.mxu0 0.0
      %1358 = vmatpush1.msra.mxu0 0.0
      %1359 = vmatprep.subr.mxu0 0.0
      %1360 = vmatpush1.msra.mxu0 0.0
      %1361 = vmatprep.subr.mxu0 0.0
      %1362 = vmatpush1.msra.mxu0 0.0
      %1363 = vmatprep.subr.mxu0 0.0
      %1364 = vmatpush1.msra.mxu0 0.0
      %1365 = vmatprep.subr.mxu0 0.0
      %1366 = vmatpush1.msra.mxu0 0.0
      %1367 = vmatprep.subr.mxu0 0.0
      %1368 = vmatpush1.msra.mxu0 0.0
      %1369 = vmatprep.subr.mxu0 0.0
      %1370 = vmatpush1.msra.mxu0 0.0
      %1371 = vmatprep.subr.mxu0 0.0
      %1372 = vmatpush1.msra.mxu0 0.0
      %1373 = vmatprep.subr.mxu0 0.0
      %1374 = vmatpush1.msra.mxu0 0.0
      %1375 = vmatprep.subr.mxu0 0.0
      %1376 = vmatpush1.msra.mxu0 0.0
      %1377 = vmatprep.subr.mxu0 0.0
      %1378 = vmatpush1.msra.mxu0 0.0
      %1379 = vmatprep.subr.mxu0 0.0
      %1380 = vmatpush1.msra.mxu0 0.0
      %1381 = vmatprep.subr.mxu0 0.0
      %1382 = vmatpush1.msra.mxu0 0.0
      %1383 = vmatprep.subr.mxu0 0.0
      %1384 = vmatpush1.msra.mxu0 0.0
      %1385 = vmatprep.subr.mxu0 0.0
      %1386 = vmatpush1.msra.mxu0 0.0
      %1387 = vmatprep.subr.mxu0 0.0
      %1388 = vmatpush1.msra.mxu0 0.0
      %1389 = vmatprep.subr.mxu0 0.0
      %1390 = vmatpush1.msra.mxu0 0.0
      %1391 = vmatprep.subr.mxu0 0.0
      %1392 = vmatpush1.msra.mxu0 0.0
      %1393 = vmatprep.subr.mxu0 0.0
      %1394 = vmatpush1.msra.mxu0 0.0
      %1395 = vmatprep.subr.mxu0 0.0
      %1396 = vmatpush1.msra.mxu0 0.0
      %1397 = vmatprep.subr.mxu0 0.0
      %1398 = vmatpush1.msra.mxu0 0.0
      %1399 = vmatprep.subr.mxu0 0.0
      %1400 = vmatpush1.msra.mxu0 0.0
      %1401 = vmatprep.subr.mxu0 0.0
      %1402 = vmatpush1.msra.mxu0 0.0
      %1403 = vmatprep.subr.mxu0 0.0
      %1404 = vmatpush1.msra.mxu0 0.0
      %1405 = vmatprep.subr.mxu0 0.0
      %1406 = vmatpush1.msra.mxu0 0.0
      %1407 = vmatprep.subr.mxu0 0.0
      %1408 = vmatpush1.msra.mxu0 0.0
      %1409 = vmatprep.subr.mxu0 0.0
      %1410 = vmatpush1.msra.mxu0 0.0
      %1411 = vmatprep.subr.mxu0 0.0
      %1412 = vmatpush1.msra.mxu0 0.0
      %1413 = vmatprep.mubr.f32.mxu0 0.0
      %1414 = vmatmul.mubr.f32.gmra.mrb[0].mxu0 %v483
      %v1415 = vpop.f32.mrb[0].mxu0
      %v1416 = vadd.f32 0.0, %v1415
      %v1417 = vpop.f32.mrb[0].mxu0
      %1418 = vmatprep.mubr.f32.mxu0 0.0
      %1419 = vmatmul.mubr.f32.gmra.mrb[0].mxu0 %v486
      %v1420 = vpop.f32.mrb[0].mxu0
      %v1421 = vadd.f32 0.0, %v1420
      %v1422 = vpop.f32.mrb[0].mxu0
      %1423 = vdwg.mxu0
      %v1424 = vmul.f32 %v391, %v1416
      %v1425 = vmul.f32 %v392, %v1421
      %v1426 = vmul.f32 %v464, %v1345
      %v1427 = vmul.f32 %v465, %v1346
      %v1428 = vadd.f32 %v1424, %v1426
      %v1429 = vadd.f32 %v1425, %v1427
      %v1430 = vmul.f32 %v1345, %v1428
      %v1431 = vmul.f32 %v1346, %v1429
      %v1432 = vadd.f32 %v1430, %v1431
      %v1433 = vrot.slane %v1432, 4
      %v1434 = vadd.f32 %v1432, %v1433
      %v1435 = vrot.slane %v1434, 2
      %v1436 = vadd.f32 %v1434, %v1435
      %v1437 = vrot.slane %v1436, 1
      %v1438 = vadd.f32 %v1436, %v1437
      %vm1439 = vcmp.gt.f32.partialorder %v1438, 0.0
      %v1440 = vsel %vm1439, %v1438, 1.0
      %v1441 = vrcp.pop %v1440
      %v1442 = vmul.f32 %v1337, %v1441
      %v1443 = vsel %vm1439, %v1442, 0.0
      %v1444 = vmul.f32 %v1443, %v1345
      %v1445 = vmul.f32 %v1443, %v1346
      %v1446 = vadd.f32 %v1323, %v1444
      %v1447 = vadd.f32 %v1324, %v1445
      %v1448 = vmul.f32 %v1443, %v1428
      %v1449 = vmul.f32 %v1443, %v1429
      %v1450 = vsub.f32 %v1327, %v1448
      %v1451 = vsub.f32 %v1328, %v1449
      %v1452 = vmul.f32 %v1450, %v1450
      %v1453 = vmul.f32 %v1451, %v1451
      %v1454 = vadd.f32 %v1452, %v1453
      %v1455 = vrot.slane %v1454, 4
      %v1456 = vadd.f32 %v1454, %v1455
      %v1457 = vrot.slane %v1456, 2
      %v1458 = vadd.f32 %v1456, %v1457
      %v1459 = vrot.slane %v1458, 1
      %v1460 = vadd.f32 %v1458, %v1459
      %vm1461 = vcmp.gt.f32.partialorder %v1337, 0.0
      %v1462 = vsel %vm1461, %v1337, 1.0
      %v1463 = vrcp.pop %v1462
      %v1464 = vmul.f32 %v1460, %v1463
      %v1465 = vsel %vm1461, %v1464, 0.0
      %v1466 = vmul.f32 %v1465, %v1345
      %v1467 = vmul.f32 %v1465, %v1346
      %v1468 = vadd.f32 %v1450, %v1466
      %v1469 = vadd.f32 %v1451, %v1467
      %v1470 = vmul.f32 %v458, %v1468
      %v1471 = vmul.f32 %v459, %v1469
      %1472 = vmatprep.subr.mxu0 0.0
      %1473 = vmatpush1.msra.mxu0 %v1470
      %1474 = vmatprep.subr.mxu0 0.0
      %1475 = vmatpush1.msra.mxu0 %v1471
      %1476 = vmatprep.subr.mxu0 0.0
      %1477 = vmatpush1.msra.mxu0 0.0
      %1478 = vmatprep.subr.mxu0 0.0
      %1479 = vmatpush1.msra.mxu0 0.0
      %1480 = vmatprep.subr.mxu0 0.0
      %1481 = vmatpush1.msra.mxu0 0.0
      %1482 = vmatprep.subr.mxu0 0.0
      %1483 = vmatpush1.msra.mxu0 0.0
      %1484 = vmatprep.subr.mxu0 0.0
      %1485 = vmatpush1.msra.mxu0 0.0
      %1486 = vmatprep.subr.mxu0 0.0
      %1487 = vmatpush1.msra.mxu0 0.0
      %1488 = vmatprep.subr.mxu0 0.0
      %1489 = vmatpush1.msra.mxu0 0.0
      %1490 = vmatprep.subr.mxu0 0.0
      %1491 = vmatpush1.msra.mxu0 0.0
      %1492 = vmatprep.subr.mxu0 0.0
      %1493 = vmatpush1.msra.mxu0 0.0
      %1494 = vmatprep.subr.mxu0 0.0
      %1495 = vmatpush1.msra.mxu0 0.0
      %1496 = vmatprep.subr.mxu0 0.0
      %1497 = vmatpush1.msra.mxu0 0.0
      %1498 = vmatprep.subr.mxu0 0.0
      %1499 = vmatpush1.msra.mxu0 0.0
      %1500 = vmatprep.subr.mxu0 0.0
      %1501 = vmatpush1.msra.mxu0 0.0
      %1502 = vmatprep.subr.mxu0 0.0
      %1503 = vmatpush1.msra.mxu0 0.0
      %1504 = vmatprep.subr.mxu0 0.0
      %1505 = vmatpush1.msra.mxu0 0.0
      %1506 = vmatprep.subr.mxu0 0.0
      %1507 = vmatpush1.msra.mxu0 0.0
      %1508 = vmatprep.subr.mxu0 0.0
      %1509 = vmatpush1.msra.mxu0 0.0
      %1510 = vmatprep.subr.mxu0 0.0
      %1511 = vmatpush1.msra.mxu0 0.0
      %1512 = vmatprep.subr.mxu0 0.0
      %1513 = vmatpush1.msra.mxu0 0.0
      %1514 = vmatprep.subr.mxu0 0.0
      %1515 = vmatpush1.msra.mxu0 0.0
      %1516 = vmatprep.subr.mxu0 0.0
      %1517 = vmatpush1.msra.mxu0 0.0
      %1518 = vmatprep.subr.mxu0 0.0
      %1519 = vmatpush1.msra.mxu0 0.0
      %1520 = vmatprep.subr.mxu0 0.0
      %1521 = vmatpush1.msra.mxu0 0.0
      %1522 = vmatprep.subr.mxu0 0.0
      %1523 = vmatpush1.msra.mxu0 0.0
      %1524 = vmatprep.subr.mxu0 0.0
      %1525 = vmatpush1.msra.mxu0 0.0
      %1526 = vmatprep.subr.mxu0 0.0
      %1527 = vmatpush1.msra.mxu0 0.0
      %1528 = vmatprep.subr.mxu0 0.0
      %1529 = vmatpush1.msra.mxu0 0.0
      %1530 = vmatprep.subr.mxu0 0.0
      %1531 = vmatpush1.msra.mxu0 0.0
      %1532 = vmatprep.subr.mxu0 0.0
      %1533 = vmatpush1.msra.mxu0 0.0
      %1534 = vmatprep.subr.mxu0 0.0
      %1535 = vmatpush1.msra.mxu0 0.0
      %1536 = vmatprep.mubr.f32.mxu0 0.0
      %1537 = vmatmul.mubr.f32.gmra.mrb[0].mxu0 %v483
      %v1538 = vpop.f32.mrb[0].mxu0
      %v1539 = vadd.f32 0.0, %v1538
      %v1540 = vpop.f32.mrb[0].mxu0
      %1541 = vmatprep.mubr.f32.mxu0 0.0
      %1542 = vmatmul.mubr.f32.gmra.mrb[0].mxu0 %v486
      %v1543 = vpop.f32.mrb[0].mxu0
      %v1544 = vadd.f32 0.0, %v1543
      %v1545 = vpop.f32.mrb[0].mxu0
      %1546 = vdwg.mxu0
      %v1547 = vmul.f32 %v391, %v1539
      %v1548 = vmul.f32 %v392, %v1544
      %v1549 = vmul.f32 %v464, %v1468
      %v1550 = vmul.f32 %v465, %v1469
      %v1551 = vadd.f32 %v1547, %v1549
      %v1552 = vadd.f32 %v1548, %v1550
      %v1553 = vmul.f32 %v1468, %v1551
      %v1554 = vmul.f32 %v1469, %v1552
      %v1555 = vadd.f32 %v1553, %v1554
      %v1556 = vrot.slane %v1555, 4
      %v1557 = vadd.f32 %v1555, %v1556
      %v1558 = vrot.slane %v1557, 2
      %v1559 = vadd.f32 %v1557, %v1558
      %v1560 = vrot.slane %v1559, 1
      %v1561 = vadd.f32 %v1559, %v1560
      %vm1562 = vcmp.gt.f32.partialorder %v1561, 0.0
      %v1563 = vsel %vm1562, %v1561, 1.0
      %v1564 = vrcp.pop %v1563
      %v1565 = vmul.f32 %v1460, %v1564
      %v1566 = vsel %vm1562, %v1565, 0.0
      %v1567 = vmul.f32 %v1566, %v1468
      %v1568 = vmul.f32 %v1566, %v1469
      %v1569 = vadd.f32 %v1446, %v1567
      %v1570 = vadd.f32 %v1447, %v1568
      %v1571 = vmul.f32 %v1566, %v1551
      %v1572 = vmul.f32 %v1566, %v1552
      %v1573 = vsub.f32 %v1450, %v1571
      %v1574 = vsub.f32 %v1451, %v1572
      %v1575 = vmul.f32 %v1573, %v1573
      %v1576 = vmul.f32 %v1574, %v1574
      %v1577 = vadd.f32 %v1575, %v1576
      %v1578 = vrot.slane %v1577, 4
      %v1579 = vadd.f32 %v1577, %v1578
      %v1580 = vrot.slane %v1579, 2
      %v1581 = vadd.f32 %v1579, %v1580
      %v1582 = vrot.slane %v1581, 1
      %v1583 = vadd.f32 %v1581, %v1582
      %vm1584 = vcmp.gt.f32.partialorder %v1460, 0.0
      %v1585 = vsel %vm1584, %v1460, 1.0
      %v1586 = vrcp.pop %v1585
      %v1587 = vmul.f32 %v1583, %v1586
      %v1588 = vsel %vm1584, %v1587, 0.0
      %v1589 = vmul.f32 %v1588, %v1468
      %v1590 = vmul.f32 %v1588, %v1469
      %v1591 = vadd.f32 %v1573, %v1589
      %v1592 = vadd.f32 %v1574, %v1590
      %v1593 = vmul.f32 %v458, %v1591
      %v1594 = vmul.f32 %v459, %v1592
      %1595 = vmatprep.subr.mxu0 0.0
      %1596 = vmatpush1.msra.mxu0 %v1593
      %1597 = vmatprep.subr.mxu0 0.0
      %1598 = vmatpush1.msra.mxu0 %v1594
      %1599 = vmatprep.subr.mxu0 0.0
      %1600 = vmatpush1.msra.mxu0 0.0
      %1601 = vmatprep.subr.mxu0 0.0
      %1602 = vmatpush1.msra.mxu0 0.0
      %1603 = vmatprep.subr.mxu0 0.0
      %1604 = vmatpush1.msra.mxu0 0.0
      %1605 = vmatprep.subr.mxu0 0.0
      %1606 = vmatpush1.msra.mxu0 0.0
      %1607 = vmatprep.subr.mxu0 0.0
      %1608 = vmatpush1.msra.mxu0 0.0
      %1609 = vmatprep.subr.mxu0 0.0
      %1610 = vmatpush1.msra.mxu0 0.0
      %1611 = vmatprep.subr.mxu0 0.0
      %1612 = vmatpush1.msra.mxu0 0.0
      %1613 = vmatprep.subr.mxu0 0.0
      %1614 = vmatpush1.msra.mxu0 0.0
      %1615 = vmatprep.subr.mxu0 0.0
      %1616 = vmatpush1.msra.mxu0 0.0
      %1617 = vmatprep.subr.mxu0 0.0
      %1618 = vmatpush1.msra.mxu0 0.0
      %1619 = vmatprep.subr.mxu0 0.0
      %1620 = vmatpush1.msra.mxu0 0.0
      %1621 = vmatprep.subr.mxu0 0.0
      %1622 = vmatpush1.msra.mxu0 0.0
      %1623 = vmatprep.subr.mxu0 0.0
      %1624 = vmatpush1.msra.mxu0 0.0
      %1625 = vmatprep.subr.mxu0 0.0
      %1626 = vmatpush1.msra.mxu0 0.0
      %1627 = vmatprep.subr.mxu0 0.0
      %1628 = vmatpush1.msra.mxu0 0.0
      %1629 = vmatprep.subr.mxu0 0.0
      %1630 = vmatpush1.msra.mxu0 0.0
      %1631 = vmatprep.subr.mxu0 0.0
      %1632 = vmatpush1.msra.mxu0 0.0
      %1633 = vmatprep.subr.mxu0 0.0
      %1634 = vmatpush1.msra.mxu0 0.0
      %1635 = vmatprep.subr.mxu0 0.0
      %1636 = vmatpush1.msra.mxu0 0.0
      %1637 = vmatprep.subr.mxu0 0.0
      %1638 = vmatpush1.msra.mxu0 0.0
      %1639 = vmatprep.subr.mxu0 0.0
      %1640 = vmatpush1.msra.mxu0 0.0
      %1641 = vmatprep.subr.mxu0 0.0
      %1642 = vmatpush1.msra.mxu0 0.0
      %1643 = vmatprep.subr.mxu0 0.0
      %1644 = vmatpush1.msra.mxu0 0.0
      %1645 = vmatprep.subr.mxu0 0.0
      %1646 = vmatpush1.msra.mxu0 0.0
      %1647 = vmatprep.subr.mxu0 0.0
      %1648 = vmatpush1.msra.mxu0 0.0
      %1649 = vmatprep.subr.mxu0 0.0
      %1650 = vmatpush1.msra.mxu0 0.0
      %1651 = vmatprep.subr.mxu0 0.0
      %1652 = vmatpush1.msra.mxu0 0.0
      %1653 = vmatprep.subr.mxu0 0.0
      %1654 = vmatpush1.msra.mxu0 0.0
      %1655 = vmatprep.subr.mxu0 0.0
      %1656 = vmatpush1.msra.mxu0 0.0
      %1657 = vmatprep.subr.mxu0 0.0
      %1658 = vmatpush1.msra.mxu0 0.0
      %1659 = vmatprep.mubr.f32.mxu0 0.0
      %1660 = vmatmul.mubr.f32.gmra.mrb[0].mxu0 %v483
      %v1661 = vpop.f32.mrb[0].mxu0
      %v1662 = vadd.f32 0.0, %v1661
      %v1663 = vpop.f32.mrb[0].mxu0
      %1664 = vmatprep.mubr.f32.mxu0 0.0
      %1665 = vmatmul.mubr.f32.gmra.mrb[0].mxu0 %v486
      %v1666 = vpop.f32.mrb[0].mxu0
      %v1667 = vadd.f32 0.0, %v1666
      %v1668 = vpop.f32.mrb[0].mxu0
      %1669 = vdwg.mxu0
      %v1670 = vmul.f32 %v391, %v1662
      %v1671 = vmul.f32 %v392, %v1667
      %v1672 = vmul.f32 %v464, %v1591
      %v1673 = vmul.f32 %v465, %v1592
      %v1674 = vadd.f32 %v1670, %v1672
      %v1675 = vadd.f32 %v1671, %v1673
      %v1676 = vmul.f32 %v1591, %v1674
      %v1677 = vmul.f32 %v1592, %v1675
      %v1678 = vadd.f32 %v1676, %v1677
      %v1679 = vrot.slane %v1678, 4
      %v1680 = vadd.f32 %v1678, %v1679
      %v1681 = vrot.slane %v1680, 2
      %v1682 = vadd.f32 %v1680, %v1681
      %v1683 = vrot.slane %v1682, 1
      %v1684 = vadd.f32 %v1682, %v1683
      %vm1685 = vcmp.gt.f32.partialorder %v1684, 0.0
      %v1686 = vsel %vm1685, %v1684, 1.0
      %v1687 = vrcp.pop %v1686
      %v1688 = vmul.f32 %v1583, %v1687
      %v1689 = vsel %vm1685, %v1688, 0.0
      %v1690 = vmul.f32 %v1689, %v1591
      %v1691 = vmul.f32 %v1689, %v1592
      %v1692 = vadd.f32 %v1569, %v1690
      %v1693 = vadd.f32 %v1570, %v1691
      %v1694 = vmul.f32 %v1689, %v1674
      %v1695 = vmul.f32 %v1689, %v1675
      %v1696 = vsub.f32 %v1573, %v1694
      %v1697 = vsub.f32 %v1574, %v1695
      %v1698 = vmul.f32 %v1696, %v1696
      %v1699 = vmul.f32 %v1697, %v1697
      %v1700 = vadd.f32 %v1698, %v1699
      %v1701 = vrot.slane %v1700, 4
      %v1702 = vadd.f32 %v1700, %v1701
      %v1703 = vrot.slane %v1702, 2
      %v1704 = vadd.f32 %v1702, %v1703
      %v1705 = vrot.slane %v1704, 1
      %v1706 = vadd.f32 %v1704, %v1705
      %vm1707 = vcmp.gt.f32.partialorder %v1583, 0.0
      %v1708 = vsel %vm1707, %v1583, 1.0
      %v1709 = vrcp.pop %v1708
      %v1710 = vmul.f32 %v1706, %v1709
      %v1711 = vsel %vm1707, %v1710, 0.0
      %v1712 = vmul.f32 %v1711, %v1591
      %v1713 = vmul.f32 %v1711, %v1592
      %v1714 = vadd.f32 %v1696, %v1712
      %v1715 = vadd.f32 %v1697, %v1713
      %v1716 = vmul.f32 %v458, %v1714
      %v1717 = vmul.f32 %v459, %v1715
      %1718 = vmatprep.subr.mxu0 0.0
      %1719 = vmatpush1.msra.mxu0 %v1716
      %1720 = vmatprep.subr.mxu0 0.0
      %1721 = vmatpush1.msra.mxu0 %v1717
      %1722 = vmatprep.subr.mxu0 0.0
      %1723 = vmatpush1.msra.mxu0 0.0
      %1724 = vmatprep.subr.mxu0 0.0
      %1725 = vmatpush1.msra.mxu0 0.0
      %1726 = vmatprep.subr.mxu0 0.0
      %1727 = vmatpush1.msra.mxu0 0.0
      %1728 = vmatprep.subr.mxu0 0.0
      %1729 = vmatpush1.msra.mxu0 0.0
      %1730 = vmatprep.subr.mxu0 0.0
      %1731 = vmatpush1.msra.mxu0 0.0
      %1732 = vmatprep.subr.mxu0 0.0
      %1733 = vmatpush1.msra.mxu0 0.0
      %1734 = vmatprep.subr.mxu0 0.0
      %1735 = vmatpush1.msra.mxu0 0.0
      %1736 = vmatprep.subr.mxu0 0.0
      %1737 = vmatpush1.msra.mxu0 0.0
      %1738 = vmatprep.subr.mxu0 0.0
      %1739 = vmatpush1.msra.mxu0 0.0
      %1740 = vmatprep.subr.mxu0 0.0
      %1741 = vmatpush1.msra.mxu0 0.0
      %1742 = vmatprep.subr.mxu0 0.0
      %1743 = vmatpush1.msra.mxu0 0.0
      %1744 = vmatprep.subr.mxu0 0.0
      %1745 = vmatpush1.msra.mxu0 0.0
      %1746 = vmatprep.subr.mxu0 0.0
      %1747 = vmatpush1.msra.mxu0 0.0
      %1748 = vmatprep.subr.mxu0 0.0
      %1749 = vmatpush1.msra.mxu0 0.0
      %1750 = vmatprep.subr.mxu0 0.0
      %1751 = vmatpush1.msra.mxu0 0.0
      %1752 = vmatprep.subr.mxu0 0.0
      %1753 = vmatpush1.msra.mxu0 0.0
      %1754 = vmatprep.subr.mxu0 0.0
      %1755 = vmatpush1.msra.mxu0 0.0
      %1756 = vmatprep.subr.mxu0 0.0
      %1757 = vmatpush1.msra.mxu0 0.0
      %1758 = vmatprep.subr.mxu0 0.0
      %1759 = vmatpush1.msra.mxu0 0.0
      %1760 = vmatprep.subr.mxu0 0.0
      %1761 = vmatpush1.msra.mxu0 0.0
      %1762 = vmatprep.subr.mxu0 0.0
      %1763 = vmatpush1.msra.mxu0 0.0
      %1764 = vmatprep.subr.mxu0 0.0
      %1765 = vmatpush1.msra.mxu0 0.0
      %1766 = vmatprep.subr.mxu0 0.0
      %1767 = vmatpush1.msra.mxu0 0.0
      %1768 = vmatprep.subr.mxu0 0.0
      %1769 = vmatpush1.msra.mxu0 0.0
      %1770 = vmatprep.subr.mxu0 0.0
      %1771 = vmatpush1.msra.mxu0 0.0
      %1772 = vmatprep.subr.mxu0 0.0
      %1773 = vmatpush1.msra.mxu0 0.0
      %1774 = vmatprep.subr.mxu0 0.0
      %1775 = vmatpush1.msra.mxu0 0.0
      %1776 = vmatprep.subr.mxu0 0.0
      %1777 = vmatpush1.msra.mxu0 0.0
      %1778 = vmatprep.subr.mxu0 0.0
      %1779 = vmatpush1.msra.mxu0 0.0
      %1780 = vmatprep.subr.mxu0 0.0
      %1781 = vmatpush1.msra.mxu0 0.0
      %1782 = vmatprep.mubr.f32.mxu0 0.0
      %1783 = vmatmul.mubr.f32.gmra.mrb[0].mxu0 %v483
      %v1784 = vpop.f32.mrb[0].mxu0
      %v1785 = vadd.f32 0.0, %v1784
      %v1786 = vpop.f32.mrb[0].mxu0
      %1787 = vmatprep.mubr.f32.mxu0 0.0
      %1788 = vmatmul.mubr.f32.gmra.mrb[0].mxu0 %v486
      %v1789 = vpop.f32.mrb[0].mxu0
      %v1790 = vadd.f32 0.0, %v1789
      %v1791 = vpop.f32.mrb[0].mxu0
      %1792 = vdwg.mxu0
      %v1793 = vmul.f32 %v391, %v1785
      %v1794 = vmul.f32 %v392, %v1790
      %v1795 = vmul.f32 %v464, %v1714
      %v1796 = vmul.f32 %v465, %v1715
      %v1797 = vadd.f32 %v1793, %v1795
      %v1798 = vadd.f32 %v1794, %v1796
      %v1799 = vmul.f32 %v1714, %v1797
      %v1800 = vmul.f32 %v1715, %v1798
      %v1801 = vadd.f32 %v1799, %v1800
      %v1802 = vrot.slane %v1801, 4
      %v1803 = vadd.f32 %v1801, %v1802
      %v1804 = vrot.slane %v1803, 2
      %v1805 = vadd.f32 %v1803, %v1804
      %v1806 = vrot.slane %v1805, 1
      %v1807 = vadd.f32 %v1805, %v1806
      %vm1808 = vcmp.gt.f32.partialorder %v1807, 0.0
      %v1809 = vsel %vm1808, %v1807, 1.0
      %v1810 = vrcp.pop %v1809
      %v1811 = vmul.f32 %v1706, %v1810
      %v1812 = vsel %vm1808, %v1811, 0.0
      %v1813 = vmul.f32 %v1812, %v1714
      %v1814 = vmul.f32 %v1812, %v1715
      %v1815 = vadd.f32 %v1692, %v1813
      %v1816 = vadd.f32 %v1693, %v1814
      %v1817 = vmul.f32 %v1812, %v1797
      %v1818 = vmul.f32 %v1812, %v1798
      %v1819 = vsub.f32 %v1696, %v1817
      %v1820 = vsub.f32 %v1697, %v1818
      %v1821 = vmul.f32 %v1819, %v1819
      %v1822 = vmul.f32 %v1820, %v1820
      %v1823 = vadd.f32 %v1821, %v1822
      %v1824 = vrot.slane %v1823, 4
      %v1825 = vadd.f32 %v1823, %v1824
      %v1826 = vrot.slane %v1825, 2
      %v1827 = vadd.f32 %v1825, %v1826
      %v1828 = vrot.slane %v1827, 1
      %v1829 = vadd.f32 %v1827, %v1828
      %vm1830 = vcmp.gt.f32.partialorder %v1706, 0.0
      %v1831 = vsel %vm1830, %v1706, 1.0
      %v1832 = vrcp.pop %v1831
      %v1833 = vmul.f32 %v1829, %v1832
      %v1834 = vsel %vm1830, %v1833, 0.0
      %v1835 = vmul.f32 %v1834, %v1714
      %v1836 = vmul.f32 %v1834, %v1715
      %v1837 = vadd.f32 %v1819, %v1835
      %v1838 = vadd.f32 %v1820, %v1836
      %v1839 = vmul.f32 %v458, %v1837
      %v1840 = vmul.f32 %v459, %v1838
      %1841 = vmatprep.subr.mxu0 0.0
      %1842 = vmatpush1.msra.mxu0 %v1839
      %1843 = vmatprep.subr.mxu0 0.0
      %1844 = vmatpush1.msra.mxu0 %v1840
      %1845 = vmatprep.subr.mxu0 0.0
      %1846 = vmatpush1.msra.mxu0 0.0
      %1847 = vmatprep.subr.mxu0 0.0
      %1848 = vmatpush1.msra.mxu0 0.0
      %1849 = vmatprep.subr.mxu0 0.0
      %1850 = vmatpush1.msra.mxu0 0.0
      %1851 = vmatprep.subr.mxu0 0.0
      %1852 = vmatpush1.msra.mxu0 0.0
      %1853 = vmatprep.subr.mxu0 0.0
      %1854 = vmatpush1.msra.mxu0 0.0
      %1855 = vmatprep.subr.mxu0 0.0
      %1856 = vmatpush1.msra.mxu0 0.0
      %1857 = vmatprep.subr.mxu0 0.0
      %1858 = vmatpush1.msra.mxu0 0.0
      %1859 = vmatprep.subr.mxu0 0.0
      %1860 = vmatpush1.msra.mxu0 0.0
      %1861 = vmatprep.subr.mxu0 0.0
      %1862 = vmatpush1.msra.mxu0 0.0
      %1863 = vmatprep.subr.mxu0 0.0
      %1864 = vmatpush1.msra.mxu0 0.0
      %1865 = vmatprep.subr.mxu0 0.0
      %1866 = vmatpush1.msra.mxu0 0.0
      %1867 = vmatprep.subr.mxu0 0.0
      %1868 = vmatpush1.msra.mxu0 0.0
      %1869 = vmatprep.subr.mxu0 0.0
      %1870 = vmatpush1.msra.mxu0 0.0
      %1871 = vmatprep.subr.mxu0 0.0
      %1872 = vmatpush1.msra.mxu0 0.0
      %1873 = vmatprep.subr.mxu0 0.0
      %1874 = vmatpush1.msra.mxu0 0.0
      %1875 = vmatprep.subr.mxu0 0.0
      %1876 = vmatpush1.msra.mxu0 0.0
      %1877 = vmatprep.subr.mxu0 0.0
      %1878 = vmatpush1.msra.mxu0 0.0
      %1879 = vmatprep.subr.mxu0 0.0
      %1880 = vmatpush1.msra.mxu0 0.0
      %1881 = vmatprep.subr.mxu0 0.0
      %1882 = vmatpush1.msra.mxu0 0.0
      %1883 = vmatprep.subr.mxu0 0.0
      %1884 = vmatpush1.msra.mxu0 0.0
      %1885 = vmatprep.subr.mxu0 0.0
      %1886 = vmatpush1.msra.mxu0 0.0
      %1887 = vmatprep.subr.mxu0 0.0
      %1888 = vmatpush1.msra.mxu0 0.0
      %1889 = vmatprep.subr.mxu0 0.0
      %1890 = vmatpush1.msra.mxu0 0.0
      %1891 = vmatprep.subr.mxu0 0.0
      %1892 = vmatpush1.msra.mxu0 0.0
      %1893 = vmatprep.subr.mxu0 0.0
      %1894 = vmatpush1.msra.mxu0 0.0
      %1895 = vmatprep.subr.mxu0 0.0
      %1896 = vmatpush1.msra.mxu0 0.0
      %1897 = vmatprep.subr.mxu0 0.0
      %1898 = vmatpush1.msra.mxu0 0.0
      %1899 = vmatprep.subr.mxu0 0.0
      %1900 = vmatpush1.msra.mxu0 0.0
      %1901 = vmatprep.subr.mxu0 0.0
      %1902 = vmatpush1.msra.mxu0 0.0
      %1903 = vmatprep.subr.mxu0 0.0
      %1904 = vmatpush1.msra.mxu0 0.0
      %1905 = vmatprep.mubr.f32.mxu0 0.0
      %1906 = vmatmul.mubr.f32.gmra.mrb[0].mxu0 %v483
      %v1907 = vpop.f32.mrb[0].mxu0
      %v1908 = vadd.f32 0.0, %v1907
      %v1909 = vpop.f32.mrb[0].mxu0
      %1910 = vmatprep.mubr.f32.mxu0 0.0
      %1911 = vmatmul.mubr.f32.gmra.mrb[0].mxu0 %v486
      %v1912 = vpop.f32.mrb[0].mxu0
      %v1913 = vadd.f32 0.0, %v1912
      %v1914 = vpop.f32.mrb[0].mxu0
      %1915 = vdwg.mxu0
      %v1916 = vmul.f32 %v391, %v1908
      %v1917 = vmul.f32 %v392, %v1913
      %v1918 = vmul.f32 %v464, %v1837
      %v1919 = vmul.f32 %v465, %v1838
      %v1920 = vadd.f32 %v1916, %v1918
      %v1921 = vadd.f32 %v1917, %v1919
      %v1922 = vmul.f32 %v1837, %v1920
      %v1923 = vmul.f32 %v1838, %v1921
      %v1924 = vadd.f32 %v1922, %v1923
      %v1925 = vrot.slane %v1924, 4
      %v1926 = vadd.f32 %v1924, %v1925
      %v1927 = vrot.slane %v1926, 2
      %v1928 = vadd.f32 %v1926, %v1927
      %v1929 = vrot.slane %v1928, 1
      %v1930 = vadd.f32 %v1928, %v1929
      %vm1931 = vcmp.gt.f32.partialorder %v1930, 0.0
      %v1932 = vsel %vm1931, %v1930, 1.0
      %v1933 = vrcp.pop %v1932
      %v1934 = vmul.f32 %v1829, %v1933
      %v1935 = vsel %vm1931, %v1934, 0.0
      %v1936 = vmul.f32 %v1935, %v1837
      %v1937 = vmul.f32 %v1935, %v1838
      %v1938 = vadd.f32 %v1815, %v1936
      %v1939 = vadd.f32 %v1816, %v1937
      %v1940 = vmul.f32 %v1935, %v1920
      %v1941 = vmul.f32 %v1935, %v1921
      %v1942 = vsub.f32 %v1819, %v1940
      %v1943 = vsub.f32 %v1820, %v1941
      %v1944 = vmul.f32 %v1942, %v1942
      %v1945 = vmul.f32 %v1943, %v1943
      %v1946 = vadd.f32 %v1944, %v1945
      %v1947 = vrot.slane %v1946, 4
      %v1948 = vadd.f32 %v1946, %v1947
      %v1949 = vrot.slane %v1948, 2
      %v1950 = vadd.f32 %v1948, %v1949
      %v1951 = vrot.slane %v1950, 1
      %v1952 = vadd.f32 %v1950, %v1951
      %vm1953 = vcmp.gt.f32.partialorder %v1829, 0.0
      %v1954 = vsel %vm1953, %v1829, 1.0
      %v1955 = vrcp.pop %v1954
      %v1956 = vmul.f32 %v1952, %v1955
      %v1957 = vsel %vm1953, %v1956, 0.0
      %v1958 = vmul.f32 %v1957, %v1837
      %v1959 = vmul.f32 %v1957, %v1838
      %v1960 = vadd.f32 %v1942, %v1958
      %v1961 = vadd.f32 %v1943, %v1959
      %v1962 = vmul.f32 %v458, %v1960
      %v1963 = vmul.f32 %v459, %v1961
      %1964 = vmatprep.subr.mxu0 0.0
      %1965 = vmatpush1.msra.mxu0 %v1962
      %1966 = vmatprep.subr.mxu0 0.0
      %1967 = vmatpush1.msra.mxu0 %v1963
      %1968 = vmatprep.subr.mxu0 0.0
      %1969 = vmatpush1.msra.mxu0 0.0
      %1970 = vmatprep.subr.mxu0 0.0
      %1971 = vmatpush1.msra.mxu0 0.0
      %1972 = vmatprep.subr.mxu0 0.0
      %1973 = vmatpush1.msra.mxu0 0.0
      %1974 = vmatprep.subr.mxu0 0.0
      %1975 = vmatpush1.msra.mxu0 0.0
      %1976 = vmatprep.subr.mxu0 0.0
      %1977 = vmatpush1.msra.mxu0 0.0
      %1978 = vmatprep.subr.mxu0 0.0
      %1979 = vmatpush1.msra.mxu0 0.0
      %1980 = vmatprep.subr.mxu0 0.0
      %1981 = vmatpush1.msra.mxu0 0.0
      %1982 = vmatprep.subr.mxu0 0.0
      %1983 = vmatpush1.msra.mxu0 0.0
      %1984 = vmatprep.subr.mxu0 0.0
      %1985 = vmatpush1.msra.mxu0 0.0
      %1986 = vmatprep.subr.mxu0 0.0
      %1987 = vmatpush1.msra.mxu0 0.0
      %1988 = vmatprep.subr.mxu0 0.0
      %1989 = vmatpush1.msra.mxu0 0.0
      %1990 = vmatprep.subr.mxu0 0.0
      %1991 = vmatpush1.msra.mxu0 0.0
      %1992 = vmatprep.subr.mxu0 0.0
      %1993 = vmatpush1.msra.mxu0 0.0
      %1994 = vmatprep.subr.mxu0 0.0
      %1995 = vmatpush1.msra.mxu0 0.0
      %1996 = vmatprep.subr.mxu0 0.0
      %1997 = vmatpush1.msra.mxu0 0.0
      %1998 = vmatprep.subr.mxu0 0.0
      %1999 = vmatpush1.msra.mxu0 0.0
      %2000 = vmatprep.subr.mxu0 0.0
      %2001 = vmatpush1.msra.mxu0 0.0
      %2002 = vmatprep.subr.mxu0 0.0
      %2003 = vmatpush1.msra.mxu0 0.0
      %2004 = vmatprep.subr.mxu0 0.0
      %2005 = vmatpush1.msra.mxu0 0.0
      %2006 = vmatprep.subr.mxu0 0.0
      %2007 = vmatpush1.msra.mxu0 0.0
      %2008 = vmatprep.subr.mxu0 0.0
      %2009 = vmatpush1.msra.mxu0 0.0
      %2010 = vmatprep.subr.mxu0 0.0
      %2011 = vmatpush1.msra.mxu0 0.0
      %2012 = vmatprep.subr.mxu0 0.0
      %2013 = vmatpush1.msra.mxu0 0.0
      %2014 = vmatprep.subr.mxu0 0.0
      %2015 = vmatpush1.msra.mxu0 0.0
      %2016 = vmatprep.subr.mxu0 0.0
      %2017 = vmatpush1.msra.mxu0 0.0
      %2018 = vmatprep.subr.mxu0 0.0
      %2019 = vmatpush1.msra.mxu0 0.0
      %2020 = vmatprep.subr.mxu0 0.0
      %2021 = vmatpush1.msra.mxu0 0.0
      %2022 = vmatprep.subr.mxu0 0.0
      %2023 = vmatpush1.msra.mxu0 0.0
      %2024 = vmatprep.subr.mxu0 0.0
      %2025 = vmatpush1.msra.mxu0 0.0
      %2026 = vmatprep.subr.mxu0 0.0
      %2027 = vmatpush1.msra.mxu0 0.0
      %2028 = vmatprep.mubr.f32.mxu0 0.0
      %2029 = vmatmul.mubr.f32.gmra.mrb[0].mxu0 %v483
      %v2030 = vpop.f32.mrb[0].mxu0
      %v2031 = vadd.f32 0.0, %v2030
      %v2032 = vpop.f32.mrb[0].mxu0
      %2033 = vmatprep.mubr.f32.mxu0 0.0
      %2034 = vmatmul.mubr.f32.gmra.mrb[0].mxu0 %v486
      %v2035 = vpop.f32.mrb[0].mxu0
      %v2036 = vadd.f32 0.0, %v2035
      %v2037 = vpop.f32.mrb[0].mxu0
      %2038 = vdwg.mxu0
      %v2039 = vmul.f32 %v391, %v2031
      %v2040 = vmul.f32 %v392, %v2036
      %v2041 = vmul.f32 %v464, %v1960
      %v2042 = vmul.f32 %v465, %v1961
      %v2043 = vadd.f32 %v2039, %v2041
      %v2044 = vadd.f32 %v2040, %v2042
      %v2045 = vmul.f32 %v1960, %v2043
      %v2046 = vmul.f32 %v1961, %v2044
      %v2047 = vadd.f32 %v2045, %v2046
      %v2048 = vrot.slane %v2047, 4
      %v2049 = vadd.f32 %v2047, %v2048
      %v2050 = vrot.slane %v2049, 2
      %v2051 = vadd.f32 %v2049, %v2050
      %v2052 = vrot.slane %v2051, 1
      %v2053 = vadd.f32 %v2051, %v2052
      %vm2054 = vcmp.gt.f32.partialorder %v2053, 0.0
      %v2055 = vsel %vm2054, %v2053, 1.0
      %v2056 = vrcp.pop %v2055
      %v2057 = vmul.f32 %v1952, %v2056
      %v2058 = vsel %vm2054, %v2057, 0.0
      %v2059 = vmul.f32 %v2058, %v1960
      %v2060 = vmul.f32 %v2058, %v1961
      %v2061 = vadd.f32 %v1938, %v2059
      %v2062 = vadd.f32 %v1939, %v2060
      %v2063 = vmul.f32 %v2058, %v2043
      %v2064 = vmul.f32 %v2058, %v2044
      %v2065 = vsub.f32 %v1942, %v2063
      %v2066 = vsub.f32 %v1943, %v2064
      %v2067 = vmul.f32 %v2065, %v2065
      %v2068 = vmul.f32 %v2066, %v2066
      %v2069 = vadd.f32 %v2067, %v2068
      %v2070 = vrot.slane %v2069, 4
      %v2071 = vadd.f32 %v2069, %v2070
      %v2072 = vrot.slane %v2071, 2
      %v2073 = vadd.f32 %v2071, %v2072
      %v2074 = vrot.slane %v2073, 1
      %v2075 = vadd.f32 %v2073, %v2074
      %vm2076 = vcmp.gt.f32.partialorder %v1952, 0.0
      %v2077 = vsel %vm2076, %v1952, 1.0
      %v2078 = vrcp.pop %v2077
      %v2079 = vmul.f32 %v2075, %v2078
      %v2080 = vsel %vm2076, %v2079, 0.0
      %v2081 = vmul.f32 %v2080, %v1960
      %v2082 = vmul.f32 %v2080, %v1961
      %v2083 = vadd.f32 %v2065, %v2081
      %v2084 = vadd.f32 %v2066, %v2082
      %v2085 = vmul.f32 %v458, %v2083
      %v2086 = vmul.f32 %v459, %v2084
      %2087 = vmatprep.subr.mxu0 0.0
      %2088 = vmatpush1.msra.mxu0 %v2085
      %2089 = vmatprep.subr.mxu0 0.0
      %2090 = vmatpush1.msra.mxu0 %v2086
      %2091 = vmatprep.subr.mxu0 0.0
      %2092 = vmatpush1.msra.mxu0 0.0
      %2093 = vmatprep.subr.mxu0 0.0
      %2094 = vmatpush1.msra.mxu0 0.0
      %2095 = vmatprep.subr.mxu0 0.0
      %2096 = vmatpush1.msra.mxu0 0.0
      %2097 = vmatprep.subr.mxu0 0.0
      %2098 = vmatpush1.msra.mxu0 0.0
      %2099 = vmatprep.subr.mxu0 0.0
      %2100 = vmatpush1.msra.mxu0 0.0
      %2101 = vmatprep.subr.mxu0 0.0
      %2102 = vmatpush1.msra.mxu0 0.0
      %2103 = vmatprep.subr.mxu0 0.0
      %2104 = vmatpush1.msra.mxu0 0.0
      %2105 = vmatprep.subr.mxu0 0.0
      %2106 = vmatpush1.msra.mxu0 0.0
      %2107 = vmatprep.subr.mxu0 0.0
      %2108 = vmatpush1.msra.mxu0 0.0
      %2109 = vmatprep.subr.mxu0 0.0
      %2110 = vmatpush1.msra.mxu0 0.0
      %2111 = vmatprep.subr.mxu0 0.0
      %2112 = vmatpush1.msra.mxu0 0.0
      %2113 = vmatprep.subr.mxu0 0.0
      %2114 = vmatpush1.msra.mxu0 0.0
      %2115 = vmatprep.subr.mxu0 0.0
      %2116 = vmatpush1.msra.mxu0 0.0
      %2117 = vmatprep.subr.mxu0 0.0
      %2118 = vmatpush1.msra.mxu0 0.0
      %2119 = vmatprep.subr.mxu0 0.0
      %2120 = vmatpush1.msra.mxu0 0.0
      %2121 = vmatprep.subr.mxu0 0.0
      %2122 = vmatpush1.msra.mxu0 0.0
      %2123 = vmatprep.subr.mxu0 0.0
      %2124 = vmatpush1.msra.mxu0 0.0
      %2125 = vmatprep.subr.mxu0 0.0
      %2126 = vmatpush1.msra.mxu0 0.0
      %2127 = vmatprep.subr.mxu0 0.0
      %2128 = vmatpush1.msra.mxu0 0.0
      %2129 = vmatprep.subr.mxu0 0.0
      %2130 = vmatpush1.msra.mxu0 0.0
      %2131 = vmatprep.subr.mxu0 0.0
      %2132 = vmatpush1.msra.mxu0 0.0
      %2133 = vmatprep.subr.mxu0 0.0
      %2134 = vmatpush1.msra.mxu0 0.0
      %2135 = vmatprep.subr.mxu0 0.0
      %2136 = vmatpush1.msra.mxu0 0.0
      %2137 = vmatprep.subr.mxu0 0.0
      %2138 = vmatpush1.msra.mxu0 0.0
      %2139 = vmatprep.subr.mxu0 0.0
      %2140 = vmatpush1.msra.mxu0 0.0
      %2141 = vmatprep.subr.mxu0 0.0
      %2142 = vmatpush1.msra.mxu0 0.0
      %2143 = vmatprep.subr.mxu0 0.0
      %2144 = vmatpush1.msra.mxu0 0.0
      %2145 = vmatprep.subr.mxu0 0.0
      %2146 = vmatpush1.msra.mxu0 0.0
      %2147 = vmatprep.subr.mxu0 0.0
      %2148 = vmatpush1.msra.mxu0 0.0
      %2149 = vmatprep.subr.mxu0 0.0
      %2150 = vmatpush1.msra.mxu0 0.0
      %2151 = vmatprep.mubr.f32.mxu0 0.0
      %2152 = vmatmul.mubr.f32.gmra.mrb[0].mxu0 %v483
      %v2153 = vpop.f32.mrb[0].mxu0
      %v2154 = vadd.f32 0.0, %v2153
      %v2155 = vpop.f32.mrb[0].mxu0
      %2156 = vmatprep.mubr.f32.mxu0 0.0
      %2157 = vmatmul.mubr.f32.gmra.mrb[0].mxu0 %v486
      %v2158 = vpop.f32.mrb[0].mxu0
      %v2159 = vadd.f32 0.0, %v2158
      %v2160 = vpop.f32.mrb[0].mxu0
      %2161 = vdwg.mxu0
      %v2162 = vmul.f32 %v391, %v2154
      %v2163 = vmul.f32 %v392, %v2159
      %v2164 = vmul.f32 %v464, %v2083
      %v2165 = vmul.f32 %v465, %v2084
      %v2166 = vadd.f32 %v2162, %v2164
      %v2167 = vadd.f32 %v2163, %v2165
      %v2168 = vmul.f32 %v2083, %v2166
      %v2169 = vmul.f32 %v2084, %v2167
      %v2170 = vadd.f32 %v2168, %v2169
      %v2171 = vrot.slane %v2170, 4
      %v2172 = vadd.f32 %v2170, %v2171
      %v2173 = vrot.slane %v2172, 2
      %v2174 = vadd.f32 %v2172, %v2173
      %v2175 = vrot.slane %v2174, 1
      %v2176 = vadd.f32 %v2174, %v2175
      %vm2177 = vcmp.gt.f32.partialorder %v2176, 0.0
      %v2178 = vsel %vm2177, %v2176, 1.0
      %v2179 = vrcp.pop %v2178
      %v2180 = vmul.f32 %v2075, %v2179
      %v2181 = vsel %vm2177, %v2180, 0.0
      %v2182 = vmul.f32 %v2181, %v2083
      %v2183 = vmul.f32 %v2181, %v2084
      %v2184 = vadd.f32 %v2061, %v2182
      %v2185 = vadd.f32 %v2062, %v2183
      %v2186 = vmul.f32 %v2181, %v2166
      %v2187 = vmul.f32 %v2181, %v2167
      %v2188 = vsub.f32 %v2065, %v2186
      %v2189 = vsub.f32 %v2066, %v2187
      %v2190 = vmul.f32 %v2188, %v2188
      %v2191 = vmul.f32 %v2189, %v2189
      %v2192 = vadd.f32 %v2190, %v2191
      %v2193 = vrot.slane %v2192, 4
      %v2194 = vadd.f32 %v2192, %v2193
      %v2195 = vrot.slane %v2194, 2
      %v2196 = vadd.f32 %v2194, %v2195
      %v2197 = vrot.slane %v2196, 1
      %v2198 = vadd.f32 %v2196, %v2197
      %vm2199 = vcmp.gt.f32.partialorder %v2075, 0.0
      %v2200 = vsel %vm2199, %v2075, 1.0
      %v2201 = vrcp.pop %v2200
      %v2202 = vmul.f32 %v2198, %v2201
      %v2203 = vsel %vm2199, %v2202, 0.0
      %v2204 = vmul.f32 %v2203, %v2083
      %v2205 = vmul.f32 %v2203, %v2084
      %v2206 = vadd.f32 %v2188, %v2204
      %v2207 = vadd.f32 %v2189, %v2205
      %v2208 = vmul.f32 %v458, %v2206
      %v2209 = vmul.f32 %v459, %v2207
      %2210 = vmatprep.subr.mxu0 0.0
      %2211 = vmatpush1.msra.mxu0 %v2208
      %2212 = vmatprep.subr.mxu0 0.0
      %2213 = vmatpush1.msra.mxu0 %v2209
      %2214 = vmatprep.subr.mxu0 0.0
      %2215 = vmatpush1.msra.mxu0 0.0
      %2216 = vmatprep.subr.mxu0 0.0
      %2217 = vmatpush1.msra.mxu0 0.0
      %2218 = vmatprep.subr.mxu0 0.0
      %2219 = vmatpush1.msra.mxu0 0.0
      %2220 = vmatprep.subr.mxu0 0.0
      %2221 = vmatpush1.msra.mxu0 0.0
      %2222 = vmatprep.subr.mxu0 0.0
      %2223 = vmatpush1.msra.mxu0 0.0
      %2224 = vmatprep.subr.mxu0 0.0
      %2225 = vmatpush1.msra.mxu0 0.0
      %2226 = vmatprep.subr.mxu0 0.0
      %2227 = vmatpush1.msra.mxu0 0.0
      %2228 = vmatprep.subr.mxu0 0.0
      %2229 = vmatpush1.msra.mxu0 0.0
      %2230 = vmatprep.subr.mxu0 0.0
      %2231 = vmatpush1.msra.mxu0 0.0
      %2232 = vmatprep.subr.mxu0 0.0
      %2233 = vmatpush1.msra.mxu0 0.0
      %2234 = vmatprep.subr.mxu0 0.0
      %2235 = vmatpush1.msra.mxu0 0.0
      %2236 = vmatprep.subr.mxu0 0.0
      %2237 = vmatpush1.msra.mxu0 0.0
      %2238 = vmatprep.subr.mxu0 0.0
      %2239 = vmatpush1.msra.mxu0 0.0
      %2240 = vmatprep.subr.mxu0 0.0
      %2241 = vmatpush1.msra.mxu0 0.0
      %2242 = vmatprep.subr.mxu0 0.0
      %2243 = vmatpush1.msra.mxu0 0.0
      %2244 = vmatprep.subr.mxu0 0.0
      %2245 = vmatpush1.msra.mxu0 0.0
      %2246 = vmatprep.subr.mxu0 0.0
      %2247 = vmatpush1.msra.mxu0 0.0
      %2248 = vmatprep.subr.mxu0 0.0
      %2249 = vmatpush1.msra.mxu0 0.0
      %2250 = vmatprep.subr.mxu0 0.0
      %2251 = vmatpush1.msra.mxu0 0.0
      %2252 = vmatprep.subr.mxu0 0.0
      %2253 = vmatpush1.msra.mxu0 0.0
      %2254 = vmatprep.subr.mxu0 0.0
      %2255 = vmatpush1.msra.mxu0 0.0
      %2256 = vmatprep.subr.mxu0 0.0
      %2257 = vmatpush1.msra.mxu0 0.0
      %2258 = vmatprep.subr.mxu0 0.0
      %2259 = vmatpush1.msra.mxu0 0.0
      %2260 = vmatprep.subr.mxu0 0.0
      %2261 = vmatpush1.msra.mxu0 0.0
      %2262 = vmatprep.subr.mxu0 0.0
      %2263 = vmatpush1.msra.mxu0 0.0
      %2264 = vmatprep.subr.mxu0 0.0
      %2265 = vmatpush1.msra.mxu0 0.0
      %2266 = vmatprep.subr.mxu0 0.0
      %2267 = vmatpush1.msra.mxu0 0.0
      %2268 = vmatprep.subr.mxu0 0.0
      %2269 = vmatpush1.msra.mxu0 0.0
      %2270 = vmatprep.subr.mxu0 0.0
      %2271 = vmatpush1.msra.mxu0 0.0
      %2272 = vmatprep.subr.mxu0 0.0
      %2273 = vmatpush1.msra.mxu0 0.0
      %2274 = vmatprep.mubr.f32.mxu0 0.0
      %2275 = vmatmul.mubr.f32.gmra.mrb[0].mxu0 %v483
      %v2276 = vpop.f32.mrb[0].mxu0
      %v2277 = vadd.f32 0.0, %v2276
      %v2278 = vpop.f32.mrb[0].mxu0
      %2279 = vmatprep.mubr.f32.mxu0 0.0
      %2280 = vmatmul.mubr.f32.gmra.mrb[0].mxu0 %v486
      %v2281 = vpop.f32.mrb[0].mxu0
      %v2282 = vadd.f32 0.0, %v2281
      %v2283 = vpop.f32.mrb[0].mxu0
      %2284 = vdwg.mxu0
      %v2285 = vmul.f32 %v391, %v2277
      %v2286 = vmul.f32 %v392, %v2282
      %v2287 = vmul.f32 %v464, %v2206
      %v2288 = vmul.f32 %v465, %v2207
      %v2289 = vadd.f32 %v2285, %v2287
      %v2290 = vadd.f32 %v2286, %v2288
      %v2291 = vmul.f32 %v2206, %v2289
      %v2292 = vmul.f32 %v2207, %v2290
      %v2293 = vadd.f32 %v2291, %v2292
      %v2294 = vrot.slane %v2293, 4
      %v2295 = vadd.f32 %v2293, %v2294
      %v2296 = vrot.slane %v2295, 2
      %v2297 = vadd.f32 %v2295, %v2296
      %v2298 = vrot.slane %v2297, 1
      %v2299 = vadd.f32 %v2297, %v2298
      %vm2300 = vcmp.gt.f32.partialorder %v2299, 0.0
      %v2301 = vsel %vm2300, %v2299, 1.0
      %v2302 = vrcp.pop %v2301
      %v2303 = vmul.f32 %v2198, %v2302
      %v2304 = vsel %vm2300, %v2303, 0.0
      %v2305 = vmul.f32 %v2304, %v2206
      %v2306 = vmul.f32 %v2304, %v2207
      %v2307 = vadd.f32 %v2184, %v2305
      %v2308 = vadd.f32 %v2185, %v2306
      %v2309 = vmul.f32 %v2304, %v2289
      %v2310 = vmul.f32 %v2304, %v2290
      %v2311 = vsub.f32 %v2188, %v2309
      %v2312 = vsub.f32 %v2189, %v2310
      %v2313 = vmul.f32 %v2311, %v2311
      %v2314 = vmul.f32 %v2312, %v2312
      %v2315 = vadd.f32 %v2313, %v2314
      %v2316 = vrot.slane %v2315, 4
      %v2317 = vadd.f32 %v2315, %v2316
      %v2318 = vrot.slane %v2317, 2
      %v2319 = vadd.f32 %v2317, %v2318
      %v2320 = vrot.slane %v2319, 1
      %v2321 = vadd.f32 %v2319, %v2320
      %vm2322 = vcmp.gt.f32.partialorder %v2198, 0.0
      %v2323 = vsel %vm2322, %v2198, 1.0
      %v2324 = vrcp.pop %v2323
      %v2325 = vmul.f32 %v2321, %v2324
      %v2326 = vsel %vm2322, %v2325, 0.0
      %v2327 = vmul.f32 %v2326, %v2206
      %v2328 = vmul.f32 %v2326, %v2207
      %v2329 = vadd.f32 %v2311, %v2327
      %v2330 = vadd.f32 %v2312, %v2328
      %v2331 = vmul.f32 %v458, %v2329
      %v2332 = vmul.f32 %v459, %v2330
      %2333 = vmatprep.subr.mxu0 0.0
      %2334 = vmatpush1.msra.mxu0 %v2331
      %2335 = vmatprep.subr.mxu0 0.0
      %2336 = vmatpush1.msra.mxu0 %v2332
      %2337 = vmatprep.subr.mxu0 0.0
      %2338 = vmatpush1.msra.mxu0 0.0
      %2339 = vmatprep.subr.mxu0 0.0
      %2340 = vmatpush1.msra.mxu0 0.0
      %2341 = vmatprep.subr.mxu0 0.0
      %2342 = vmatpush1.msra.mxu0 0.0
      %2343 = vmatprep.subr.mxu0 0.0
      %2344 = vmatpush1.msra.mxu0 0.0
      %2345 = vmatprep.subr.mxu0 0.0
      %2346 = vmatpush1.msra.mxu0 0.0
      %2347 = vmatprep.subr.mxu0 0.0
      %2348 = vmatpush1.msra.mxu0 0.0
      %2349 = vmatprep.subr.mxu0 0.0
      %2350 = vmatpush1.msra.mxu0 0.0
      %2351 = vmatprep.subr.mxu0 0.0
      %2352 = vmatpush1.msra.mxu0 0.0
      %2353 = vmatprep.subr.mxu0 0.0
      %2354 = vmatpush1.msra.mxu0 0.0
      %2355 = vmatprep.subr.mxu0 0.0
      %2356 = vmatpush1.msra.mxu0 0.0
      %2357 = vmatprep.subr.mxu0 0.0
      %2358 = vmatpush1.msra.mxu0 0.0
      %2359 = vmatprep.subr.mxu0 0.0
      %2360 = vmatpush1.msra.mxu0 0.0
      %2361 = vmatprep.subr.mxu0 0.0
      %2362 = vmatpush1.msra.mxu0 0.0
      %2363 = vmatprep.subr.mxu0 0.0
      %2364 = vmatpush1.msra.mxu0 0.0
      %2365 = vmatprep.subr.mxu0 0.0
      %2366 = vmatpush1.msra.mxu0 0.0
      %2367 = vmatprep.subr.mxu0 0.0
      %2368 = vmatpush1.msra.mxu0 0.0
      %2369 = vmatprep.subr.mxu0 0.0
      %2370 = vmatpush1.msra.mxu0 0.0
      %2371 = vmatprep.subr.mxu0 0.0
      %2372 = vmatpush1.msra.mxu0 0.0
      %2373 = vmatprep.subr.mxu0 0.0
      %2374 = vmatpush1.msra.mxu0 0.0
      %2375 = vmatprep.subr.mxu0 0.0
      %2376 = vmatpush1.msra.mxu0 0.0
      %2377 = vmatprep.subr.mxu0 0.0
      %2378 = vmatpush1.msra.mxu0 0.0
      %2379 = vmatprep.subr.mxu0 0.0
      %2380 = vmatpush1.msra.mxu0 0.0
      %2381 = vmatprep.subr.mxu0 0.0
      %2382 = vmatpush1.msra.mxu0 0.0
      %2383 = vmatprep.subr.mxu0 0.0
      %2384 = vmatpush1.msra.mxu0 0.0
      %2385 = vmatprep.subr.mxu0 0.0
      %2386 = vmatpush1.msra.mxu0 0.0
      %2387 = vmatprep.subr.mxu0 0.0
      %2388 = vmatpush1.msra.mxu0 0.0
      %2389 = vmatprep.subr.mxu0 0.0
      %2390 = vmatpush1.msra.mxu0 0.0
      %2391 = vmatprep.subr.mxu0 0.0
      %2392 = vmatpush1.msra.mxu0 0.0
      %2393 = vmatprep.subr.mxu0 0.0
      %2394 = vmatpush1.msra.mxu0 0.0
      %2395 = vmatprep.subr.mxu0 0.0
      %2396 = vmatpush1.msra.mxu0 0.0
      %2397 = vmatprep.mubr.f32.mxu0 0.0
      %2398 = vmatmul.mubr.f32.gmra.mrb[0].mxu0 %v483
      %v2399 = vpop.f32.mrb[0].mxu0
      %v2400 = vadd.f32 0.0, %v2399
      %v2401 = vpop.f32.mrb[0].mxu0
      %2402 = vmatprep.mubr.f32.mxu0 0.0
      %2403 = vmatmul.mubr.f32.gmra.mrb[0].mxu0 %v486
      %v2404 = vpop.f32.mrb[0].mxu0
      %v2405 = vadd.f32 0.0, %v2404
      %v2406 = vpop.f32.mrb[0].mxu0
      %2407 = vdwg.mxu0
      %v2408 = vmul.f32 %v391, %v2400
      %v2409 = vmul.f32 %v392, %v2405
      %v2410 = vmul.f32 %v464, %v2329
      %v2411 = vmul.f32 %v465, %v2330
      %v2412 = vadd.f32 %v2408, %v2410
      %v2413 = vadd.f32 %v2409, %v2411
      %v2414 = vmul.f32 %v2329, %v2412
      %v2415 = vmul.f32 %v2330, %v2413
      %v2416 = vadd.f32 %v2414, %v2415
      %v2417 = vrot.slane %v2416, 4
      %v2418 = vadd.f32 %v2416, %v2417
      %v2419 = vrot.slane %v2418, 2
      %v2420 = vadd.f32 %v2418, %v2419
      %v2421 = vrot.slane %v2420, 1
      %v2422 = vadd.f32 %v2420, %v2421
      %vm2423 = vcmp.gt.f32.partialorder %v2422, 0.0
      %v2424 = vsel %vm2423, %v2422, 1.0
      %v2425 = vrcp.pop %v2424
      %v2426 = vmul.f32 %v2321, %v2425
      %v2427 = vsel %vm2423, %v2426, 0.0
      %v2428 = vmul.f32 %v2427, %v2329
      %v2429 = vmul.f32 %v2427, %v2330
      %v2430 = vadd.f32 %v2307, %v2428
      %v2431 = vadd.f32 %v2308, %v2429
      %v2432 = vmul.f32 %v2427, %v2412
      %v2433 = vmul.f32 %v2427, %v2413
      %v2434 = vsub.f32 %v2311, %v2432
      %v2435 = vsub.f32 %v2312, %v2433
      %v2436 = vmul.f32 %v2434, %v2434
      %v2437 = vmul.f32 %v2435, %v2435
      %v2438 = vadd.f32 %v2436, %v2437
      %v2439 = vrot.slane %v2438, 4
      %v2440 = vadd.f32 %v2438, %v2439
      %v2441 = vrot.slane %v2440, 2
      %v2442 = vadd.f32 %v2440, %v2441
      %v2443 = vrot.slane %v2442, 1
      %v2444 = vadd.f32 %v2442, %v2443
      %vm2445 = vcmp.gt.f32.partialorder %v2321, 0.0
      %v2446 = vsel %vm2445, %v2321, 1.0
      %v2447 = vrcp.pop %v2446
      %v2448 = vmul.f32 %v2444, %v2447
      %v2449 = vsel %vm2445, %v2448, 0.0
      %v2450 = vmul.f32 %v2449, %v2329
      %v2451 = vmul.f32 %v2449, %v2330
      %v2452 = vadd.f32 %v2434, %v2450
      %v2453 = vadd.f32 %v2435, %v2451
      %v2454 = vmul.f32 %v458, %v2452
      %v2455 = vmul.f32 %v459, %v2453
      %2456 = vmatprep.subr.mxu0 0.0
      %2457 = vmatpush1.msra.mxu0 %v2454
      %2458 = vmatprep.subr.mxu0 0.0
      %2459 = vmatpush1.msra.mxu0 %v2455
      %2460 = vmatprep.subr.mxu0 0.0
      %2461 = vmatpush1.msra.mxu0 0.0
      %2462 = vmatprep.subr.mxu0 0.0
      %2463 = vmatpush1.msra.mxu0 0.0
      %2464 = vmatprep.subr.mxu0 0.0
      %2465 = vmatpush1.msra.mxu0 0.0
      %2466 = vmatprep.subr.mxu0 0.0
      %2467 = vmatpush1.msra.mxu0 0.0
      %2468 = vmatprep.subr.mxu0 0.0
      %2469 = vmatpush1.msra.mxu0 0.0
      %2470 = vmatprep.subr.mxu0 0.0
      %2471 = vmatpush1.msra.mxu0 0.0
      %2472 = vmatprep.subr.mxu0 0.0
      %2473 = vmatpush1.msra.mxu0 0.0
      %2474 = vmatprep.subr.mxu0 0.0
      %2475 = vmatpush1.msra.mxu0 0.0
      %2476 = vmatprep.subr.mxu0 0.0
      %2477 = vmatpush1.msra.mxu0 0.0
      %2478 = vmatprep.subr.mxu0 0.0
      %2479 = vmatpush1.msra.mxu0 0.0
      %2480 = vmatprep.subr.mxu0 0.0
      %2481 = vmatpush1.msra.mxu0 0.0
      %2482 = vmatprep.subr.mxu0 0.0
      %2483 = vmatpush1.msra.mxu0 0.0
      %2484 = vmatprep.subr.mxu0 0.0
      %2485 = vmatpush1.msra.mxu0 0.0
      %2486 = vmatprep.subr.mxu0 0.0
      %2487 = vmatpush1.msra.mxu0 0.0
      %2488 = vmatprep.subr.mxu0 0.0
      %2489 = vmatpush1.msra.mxu0 0.0
      %2490 = vmatprep.subr.mxu0 0.0
      %2491 = vmatpush1.msra.mxu0 0.0
      %2492 = vmatprep.subr.mxu0 0.0
      %2493 = vmatpush1.msra.mxu0 0.0
      %2494 = vmatprep.subr.mxu0 0.0
      %2495 = vmatpush1.msra.mxu0 0.0
      %2496 = vmatprep.subr.mxu0 0.0
      %2497 = vmatpush1.msra.mxu0 0.0
      %2498 = vmatprep.subr.mxu0 0.0
      %2499 = vmatpush1.msra.mxu0 0.0
      %2500 = vmatprep.subr.mxu0 0.0
      %2501 = vmatpush1.msra.mxu0 0.0
      %2502 = vmatprep.subr.mxu0 0.0
      %2503 = vmatpush1.msra.mxu0 0.0
      %2504 = vmatprep.subr.mxu0 0.0
      %2505 = vmatpush1.msra.mxu0 0.0
      %2506 = vmatprep.subr.mxu0 0.0
      %2507 = vmatpush1.msra.mxu0 0.0
      %2508 = vmatprep.subr.mxu0 0.0
      %2509 = vmatpush1.msra.mxu0 0.0
      %2510 = vmatprep.subr.mxu0 0.0
      %2511 = vmatpush1.msra.mxu0 0.0
      %2512 = vmatprep.subr.mxu0 0.0
      %2513 = vmatpush1.msra.mxu0 0.0
      %2514 = vmatprep.subr.mxu0 0.0
      %2515 = vmatpush1.msra.mxu0 0.0
      %2516 = vmatprep.subr.mxu0 0.0
      %2517 = vmatpush1.msra.mxu0 0.0
      %2518 = vmatprep.subr.mxu0 0.0
      %2519 = vmatpush1.msra.mxu0 0.0
      %2520 = vmatprep.mubr.f32.mxu0 0.0
      %2521 = vmatmul.mubr.f32.gmra.mrb[0].mxu0 %v483
      %v2522 = vpop.f32.mrb[0].mxu0
      %v2523 = vadd.f32 0.0, %v2522
      %v2524 = vpop.f32.mrb[0].mxu0
      %2525 = vmatprep.mubr.f32.mxu0 0.0
      %2526 = vmatmul.mubr.f32.gmra.mrb[0].mxu0 %v486
      %v2527 = vpop.f32.mrb[0].mxu0
      %v2528 = vadd.f32 0.0, %v2527
      %v2529 = vpop.f32.mrb[0].mxu0
      %2530 = vdwg.mxu0
      %v2531 = vmul.f32 %v391, %v2523
      %v2532 = vmul.f32 %v392, %v2528
      %v2533 = vmul.f32 %v464, %v2452
      %v2534 = vmul.f32 %v465, %v2453
      %v2535 = vadd.f32 %v2531, %v2533
      %v2536 = vadd.f32 %v2532, %v2534
      %v2537 = vmul.f32 %v2452, %v2535
      %v2538 = vmul.f32 %v2453, %v2536
      %v2539 = vadd.f32 %v2537, %v2538
      %v2540 = vrot.slane %v2539, 4
      %v2541 = vadd.f32 %v2539, %v2540
      %v2542 = vrot.slane %v2541, 2
      %v2543 = vadd.f32 %v2541, %v2542
      %v2544 = vrot.slane %v2543, 1
      %v2545 = vadd.f32 %v2543, %v2544
      %vm2546 = vcmp.gt.f32.partialorder %v2545, 0.0
      %v2547 = vsel %vm2546, %v2545, 1.0
      %v2548 = vrcp.pop %v2547
      %v2549 = vmul.f32 %v2444, %v2548
      %v2550 = vsel %vm2546, %v2549, 0.0
      %v2551 = vmul.f32 %v2550, %v2452
      %v2552 = vmul.f32 %v2550, %v2453
      %v2553 = vadd.f32 %v2430, %v2551
      %v2554 = vadd.f32 %v2431, %v2552
      %v2555 = vmul.f32 %v2550, %v2535
      %v2556 = vmul.f32 %v2550, %v2536
      %v2557 = vsub.f32 %v2434, %v2555
      %v2558 = vsub.f32 %v2435, %v2556
      %v2559 = vmul.f32 %v2557, %v2557
      %v2560 = vmul.f32 %v2558, %v2558
      %v2561 = vadd.f32 %v2559, %v2560
      %v2562 = vrot.slane %v2561, 4
      %v2563 = vadd.f32 %v2561, %v2562
      %v2564 = vrot.slane %v2563, 2
      %v2565 = vadd.f32 %v2563, %v2564
      %v2566 = vrot.slane %v2565, 1
      %v2567 = vadd.f32 %v2565, %v2566
      %vm2568 = vcmp.gt.f32.partialorder %v2444, 0.0
      %v2569 = vsel %vm2568, %v2444, 1.0
      %v2570 = vrcp.pop %v2569
      %v2571 = vmul.f32 %v2567, %v2570
      %v2572 = vsel %vm2568, %v2571, 0.0
      %v2573 = vmul.f32 %v2572, %v2452
      %v2574 = vmul.f32 %v2572, %v2453
      %v2575 = vadd.f32 %v2557, %v2573
      %v2576 = vadd.f32 %v2558, %v2574
      %v2577 = vmul.f32 %v458, %v2575
      %v2578 = vmul.f32 %v459, %v2576
      %2579 = vmatprep.subr.mxu0 0.0
      %2580 = vmatpush1.msra.mxu0 %v2577
      %2581 = vmatprep.subr.mxu0 0.0
      %2582 = vmatpush1.msra.mxu0 %v2578
      %2583 = vmatprep.subr.mxu0 0.0
      %2584 = vmatpush1.msra.mxu0 0.0
      %2585 = vmatprep.subr.mxu0 0.0
      %2586 = vmatpush1.msra.mxu0 0.0
      %2587 = vmatprep.subr.mxu0 0.0
      %2588 = vmatpush1.msra.mxu0 0.0
      %2589 = vmatprep.subr.mxu0 0.0
      %2590 = vmatpush1.msra.mxu0 0.0
      %2591 = vmatprep.subr.mxu0 0.0
      %2592 = vmatpush1.msra.mxu0 0.0
      %2593 = vmatprep.subr.mxu0 0.0
      %2594 = vmatpush1.msra.mxu0 0.0
      %2595 = vmatprep.subr.mxu0 0.0
      %2596 = vmatpush1.msra.mxu0 0.0
      %2597 = vmatprep.subr.mxu0 0.0
      %2598 = vmatpush1.msra.mxu0 0.0
      %2599 = vmatprep.subr.mxu0 0.0
      %2600 = vmatpush1.msra.mxu0 0.0
      %2601 = vmatprep.subr.mxu0 0.0
      %2602 = vmatpush1.msra.mxu0 0.0
      %2603 = vmatprep.subr.mxu0 0.0
      %2604 = vmatpush1.msra.mxu0 0.0
      %2605 = vmatprep.subr.mxu0 0.0
      %2606 = vmatpush1.msra.mxu0 0.0
      %2607 = vmatprep.subr.mxu0 0.0
      %2608 = vmatpush1.msra.mxu0 0.0
      %2609 = vmatprep.subr.mxu0 0.0
      %2610 = vmatpush1.msra.mxu0 0.0
      %2611 = vmatprep.subr.mxu0 0.0
      %2612 = vmatpush1.msra.mxu0 0.0
      %2613 = vmatprep.subr.mxu0 0.0
      %2614 = vmatpush1.msra.mxu0 0.0
      %2615 = vmatprep.subr.mxu0 0.0
      %2616 = vmatpush1.msra.mxu0 0.0
      %2617 = vmatprep.subr.mxu0 0.0
      %2618 = vmatpush1.msra.mxu0 0.0
      %2619 = vmatprep.subr.mxu0 0.0
      %2620 = vmatpush1.msra.mxu0 0.0
      %2621 = vmatprep.subr.mxu0 0.0
      %2622 = vmatpush1.msra.mxu0 0.0
      %2623 = vmatprep.subr.mxu0 0.0
      %2624 = vmatpush1.msra.mxu0 0.0
      %2625 = vmatprep.subr.mxu0 0.0
      %2626 = vmatpush1.msra.mxu0 0.0
      %2627 = vmatprep.subr.mxu0 0.0
      %2628 = vmatpush1.msra.mxu0 0.0
      %2629 = vmatprep.subr.mxu0 0.0
      %2630 = vmatpush1.msra.mxu0 0.0
      %2631 = vmatprep.subr.mxu0 0.0
      %2632 = vmatpush1.msra.mxu0 0.0
      %2633 = vmatprep.subr.mxu0 0.0
      %2634 = vmatpush1.msra.mxu0 0.0
      %2635 = vmatprep.subr.mxu0 0.0
      %2636 = vmatpush1.msra.mxu0 0.0
      %2637 = vmatprep.subr.mxu0 0.0
      %2638 = vmatpush1.msra.mxu0 0.0
      %2639 = vmatprep.subr.mxu0 0.0
      %2640 = vmatpush1.msra.mxu0 0.0
      %2641 = vmatprep.subr.mxu0 0.0
      %2642 = vmatpush1.msra.mxu0 0.0
      %2643 = vmatprep.mubr.f32.mxu0 0.0
      %2644 = vmatmul.mubr.f32.gmra.mrb[0].mxu0 %v483
      %v2645 = vpop.f32.mrb[0].mxu0
      %v2646 = vadd.f32 0.0, %v2645
      %v2647 = vpop.f32.mrb[0].mxu0
      %2648 = vmatprep.mubr.f32.mxu0 0.0
      %2649 = vmatmul.mubr.f32.gmra.mrb[0].mxu0 %v486
      %v2650 = vpop.f32.mrb[0].mxu0
      %v2651 = vadd.f32 0.0, %v2650
      %v2652 = vpop.f32.mrb[0].mxu0
      %2653 = vdwg.mxu0
      %v2654 = vmul.f32 %v391, %v2646
      %v2655 = vmul.f32 %v392, %v2651
      %v2656 = vmul.f32 %v464, %v2575
      %v2657 = vmul.f32 %v465, %v2576
      %v2658 = vadd.f32 %v2654, %v2656
      %v2659 = vadd.f32 %v2655, %v2657
      %v2660 = vmul.f32 %v2575, %v2658
      %v2661 = vmul.f32 %v2576, %v2659
      %v2662 = vadd.f32 %v2660, %v2661
      %v2663 = vrot.slane %v2662, 4
      %v2664 = vadd.f32 %v2662, %v2663
      %v2665 = vrot.slane %v2664, 2
      %v2666 = vadd.f32 %v2664, %v2665
      %v2667 = vrot.slane %v2666, 1
      %v2668 = vadd.f32 %v2666, %v2667
      %vm2669 = vcmp.gt.f32.partialorder %v2668, 0.0
      %v2670 = vsel %vm2669, %v2668, 1.0
      %v2671 = vrcp.pop %v2670
      %v2672 = vmul.f32 %v2567, %v2671
      %v2673 = vsel %vm2669, %v2672, 0.0
      %v2674 = vmul.f32 %v2673, %v2575
      %v2675 = vmul.f32 %v2673, %v2576
      %v2676 = vadd.f32 %v2553, %v2674
      %v2677 = vadd.f32 %v2554, %v2675
      %v2678 = vmul.f32 %v2673, %v2658
      %v2679 = vmul.f32 %v2673, %v2659
      %v2680 = vsub.f32 %v2557, %v2678
      %v2681 = vsub.f32 %v2558, %v2679
      %v2682 = vmul.f32 %v2680, %v2680
      %v2683 = vmul.f32 %v2681, %v2681
      %v2684 = vadd.f32 %v2682, %v2683
      %v2685 = vrot.slane %v2684, 4
      %v2686 = vadd.f32 %v2684, %v2685
      %v2687 = vrot.slane %v2686, 2
      %v2688 = vadd.f32 %v2686, %v2687
      %v2689 = vrot.slane %v2688, 1
      %v2690 = vadd.f32 %v2688, %v2689
      %vm2691 = vcmp.gt.f32.partialorder %v2567, 0.0
      %v2692 = vsel %vm2691, %v2567, 1.0
      %v2693 = vrcp.pop %v2692
      %v2694 = vmul.f32 %v2690, %v2693
      %v2695 = vsel %vm2691, %v2694, 0.0
      %v2696 = vmul.f32 %v2695, %v2575
      %v2697 = vmul.f32 %v2695, %v2576
      %v2698 = vadd.f32 %v2680, %v2696
      %v2699 = vadd.f32 %v2681, %v2697
      %v2700 = vmul.f32 %v458, %v2698
      %v2701 = vmul.f32 %v459, %v2699
      %2702 = vmatprep.subr.mxu0 0.0
      %2703 = vmatpush1.msra.mxu0 %v2700
      %2704 = vmatprep.subr.mxu0 0.0
      %2705 = vmatpush1.msra.mxu0 %v2701
      %2706 = vmatprep.subr.mxu0 0.0
      %2707 = vmatpush1.msra.mxu0 0.0
      %2708 = vmatprep.subr.mxu0 0.0
      %2709 = vmatpush1.msra.mxu0 0.0
      %2710 = vmatprep.subr.mxu0 0.0
      %2711 = vmatpush1.msra.mxu0 0.0
      %2712 = vmatprep.subr.mxu0 0.0
      %2713 = vmatpush1.msra.mxu0 0.0
      %2714 = vmatprep.subr.mxu0 0.0
      %2715 = vmatpush1.msra.mxu0 0.0
      %2716 = vmatprep.subr.mxu0 0.0
      %2717 = vmatpush1.msra.mxu0 0.0
      %2718 = vmatprep.subr.mxu0 0.0
      %2719 = vmatpush1.msra.mxu0 0.0
      %2720 = vmatprep.subr.mxu0 0.0
      %2721 = vmatpush1.msra.mxu0 0.0
      %2722 = vmatprep.subr.mxu0 0.0
      %2723 = vmatpush1.msra.mxu0 0.0
      %2724 = vmatprep.subr.mxu0 0.0
      %2725 = vmatpush1.msra.mxu0 0.0
      %2726 = vmatprep.subr.mxu0 0.0
      %2727 = vmatpush1.msra.mxu0 0.0
      %2728 = vmatprep.subr.mxu0 0.0
      %2729 = vmatpush1.msra.mxu0 0.0
      %2730 = vmatprep.subr.mxu0 0.0
      %2731 = vmatpush1.msra.mxu0 0.0
      %2732 = vmatprep.subr.mxu0 0.0
      %2733 = vmatpush1.msra.mxu0 0.0
      %2734 = vmatprep.subr.mxu0 0.0
      %2735 = vmatpush1.msra.mxu0 0.0
      %2736 = vmatprep.subr.mxu0 0.0
      %2737 = vmatpush1.msra.mxu0 0.0
      %2738 = vmatprep.subr.mxu0 0.0
      %2739 = vmatpush1.msra.mxu0 0.0
      %2740 = vmatprep.subr.mxu0 0.0
      %2741 = vmatpush1.msra.mxu0 0.0
      %2742 = vmatprep.subr.mxu0 0.0
      %2743 = vmatpush1.msra.mxu0 0.0
      %2744 = vmatprep.subr.mxu0 0.0
      %2745 = vmatpush1.msra.mxu0 0.0
      %2746 = vmatprep.subr.mxu0 0.0
      %2747 = vmatpush1.msra.mxu0 0.0
      %2748 = vmatprep.subr.mxu0 0.0
      %2749 = vmatpush1.msra.mxu0 0.0
      %2750 = vmatprep.subr.mxu0 0.0
      %2751 = vmatpush1.msra.mxu0 0.0
      %2752 = vmatprep.subr.mxu0 0.0
      %2753 = vmatpush1.msra.mxu0 0.0
      %2754 = vmatprep.subr.mxu0 0.0
      %2755 = vmatpush1.msra.mxu0 0.0
      %2756 = vmatprep.subr.mxu0 0.0
      %2757 = vmatpush1.msra.mxu0 0.0
      %2758 = vmatprep.subr.mxu0 0.0
      %2759 = vmatpush1.msra.mxu0 0.0
      %2760 = vmatprep.subr.mxu0 0.0
      %2761 = vmatpush1.msra.mxu0 0.0
      %2762 = vmatprep.subr.mxu0 0.0
      %2763 = vmatpush1.msra.mxu0 0.0
      %2764 = vmatprep.subr.mxu0 0.0
      %2765 = vmatpush1.msra.mxu0 0.0
      %2766 = vmatprep.mubr.f32.mxu0 0.0
      %2767 = vmatmul.mubr.f32.gmra.mrb[0].mxu0 %v483
      %v2768 = vpop.f32.mrb[0].mxu0
      %v2769 = vadd.f32 0.0, %v2768
      %v2770 = vpop.f32.mrb[0].mxu0
      %2771 = vmatprep.mubr.f32.mxu0 0.0
      %2772 = vmatmul.mubr.f32.gmra.mrb[0].mxu0 %v486
      %v2773 = vpop.f32.mrb[0].mxu0
      %v2774 = vadd.f32 0.0, %v2773
      %v2775 = vpop.f32.mrb[0].mxu0
      %2776 = vdwg.mxu0
      %v2777 = vmul.f32 %v391, %v2769
      %v2778 = vmul.f32 %v392, %v2774
      %v2779 = vmul.f32 %v464, %v2698
      %v2780 = vmul.f32 %v465, %v2699
      %v2781 = vadd.f32 %v2777, %v2779
      %v2782 = vadd.f32 %v2778, %v2780
      %v2783 = vmul.f32 %v2698, %v2781
      %v2784 = vmul.f32 %v2699, %v2782
      %v2785 = vadd.f32 %v2783, %v2784
      %v2786 = vrot.slane %v2785, 4
      %v2787 = vadd.f32 %v2785, %v2786
      %v2788 = vrot.slane %v2787, 2
      %v2789 = vadd.f32 %v2787, %v2788
      %v2790 = vrot.slane %v2789, 1
      %v2791 = vadd.f32 %v2789, %v2790
      %vm2792 = vcmp.gt.f32.partialorder %v2791, 0.0
      %v2793 = vsel %vm2792, %v2791, 1.0
      %v2794 = vrcp.pop %v2793
      %v2795 = vmul.f32 %v2690, %v2794
      %v2796 = vsel %vm2792, %v2795, 0.0
      %v2797 = vmul.f32 %v2796, %v2698
      %v2798 = vmul.f32 %v2796, %v2699
      %v2799 = vadd.f32 %v2676, %v2797
      %v2800 = vadd.f32 %v2677, %v2798
      %v2801 = vmul.f32 %v2796, %v2781
      %v2802 = vmul.f32 %v2796, %v2782
      %v2803 = vsub.f32 %v2680, %v2801
      %v2804 = vsub.f32 %v2681, %v2802
      %v2805 = vmul.f32 %v2803, %v2803
      %v2806 = vmul.f32 %v2804, %v2804
      %v2807 = vadd.f32 %v2805, %v2806
      %v2808 = vrot.slane %v2807, 4
      %v2809 = vadd.f32 %v2807, %v2808
      %v2810 = vrot.slane %v2809, 2
      %v2811 = vadd.f32 %v2809, %v2810
      %v2812 = vrot.slane %v2811, 1
      %v2813 = vadd.f32 %v2811, %v2812
      %vm2814 = vcmp.gt.f32.partialorder %v2690, 0.0
      %v2815 = vsel %vm2814, %v2690, 1.0
      %v2816 = vrcp.pop %v2815
      %v2817 = vmul.f32 %v2813, %v2816
      %v2818 = vsel %vm2814, %v2817, 0.0
      %v2819 = vmul.f32 %v2818, %v2698
      %v2820 = vmul.f32 %v2818, %v2699
      %v2821 = vadd.f32 %v2803, %v2819
      %v2822 = vadd.f32 %v2804, %v2820
      %v2823 = vmul.f32 %v458, %v2821
      %v2824 = vmul.f32 %v459, %v2822
      %2825 = vmatprep.subr.mxu0 0.0
      %2826 = vmatpush1.msra.mxu0 %v2823
      %2827 = vmatprep.subr.mxu0 0.0
      %2828 = vmatpush1.msra.mxu0 %v2824
      %2829 = vmatprep.subr.mxu0 0.0
      %2830 = vmatpush1.msra.mxu0 0.0
      %2831 = vmatprep.subr.mxu0 0.0
      %2832 = vmatpush1.msra.mxu0 0.0
      %2833 = vmatprep.subr.mxu0 0.0
      %2834 = vmatpush1.msra.mxu0 0.0
      %2835 = vmatprep.subr.mxu0 0.0
      %2836 = vmatpush1.msra.mxu0 0.0
      %2837 = vmatprep.subr.mxu0 0.0
      %2838 = vmatpush1.msra.mxu0 0.0
      %2839 = vmatprep.subr.mxu0 0.0
      %2840 = vmatpush1.msra.mxu0 0.0
      %2841 = vmatprep.subr.mxu0 0.0
      %2842 = vmatpush1.msra.mxu0 0.0
      %2843 = vmatprep.subr.mxu0 0.0
      %2844 = vmatpush1.msra.mxu0 0.0
      %2845 = vmatprep.subr.mxu0 0.0
      %2846 = vmatpush1.msra.mxu0 0.0
      %2847 = vmatprep.subr.mxu0 0.0
      %2848 = vmatpush1.msra.mxu0 0.0
      %2849 = vmatprep.subr.mxu0 0.0
      %2850 = vmatpush1.msra.mxu0 0.0
      %2851 = vmatprep.subr.mxu0 0.0
      %2852 = vmatpush1.msra.mxu0 0.0
      %2853 = vmatprep.subr.mxu0 0.0
      %2854 = vmatpush1.msra.mxu0 0.0
      %2855 = vmatprep.subr.mxu0 0.0
      %2856 = vmatpush1.msra.mxu0 0.0
      %2857 = vmatprep.subr.mxu0 0.0
      %2858 = vmatpush1.msra.mxu0 0.0
      %2859 = vmatprep.subr.mxu0 0.0
      %2860 = vmatpush1.msra.mxu0 0.0
      %2861 = vmatprep.subr.mxu0 0.0
      %2862 = vmatpush1.msra.mxu0 0.0
      %2863 = vmatprep.subr.mxu0 0.0
      %2864 = vmatpush1.msra.mxu0 0.0
      %2865 = vmatprep.subr.mxu0 0.0
      %2866 = vmatpush1.msra.mxu0 0.0
      %2867 = vmatprep.subr.mxu0 0.0
      %2868 = vmatpush1.msra.mxu0 0.0
      %2869 = vmatprep.subr.mxu0 0.0
      %2870 = vmatpush1.msra.mxu0 0.0
      %2871 = vmatprep.subr.mxu0 0.0
      %2872 = vmatpush1.msra.mxu0 0.0
      %2873 = vmatprep.subr.mxu0 0.0
      %2874 = vmatpush1.msra.mxu0 0.0
      %2875 = vmatprep.subr.mxu0 0.0
      %2876 = vmatpush1.msra.mxu0 0.0
      %2877 = vmatprep.subr.mxu0 0.0
      %2878 = vmatpush1.msra.mxu0 0.0
      %2879 = vmatprep.subr.mxu0 0.0
      %2880 = vmatpush1.msra.mxu0 0.0
      %2881 = vmatprep.subr.mxu0 0.0
      %2882 = vmatpush1.msra.mxu0 0.0
      %2883 = vmatprep.subr.mxu0 0.0
      %2884 = vmatpush1.msra.mxu0 0.0
      %2885 = vmatprep.subr.mxu0 0.0
      %2886 = vmatpush1.msra.mxu0 0.0
      %2887 = vmatprep.subr.mxu0 0.0
      %2888 = vmatpush1.msra.mxu0 0.0
      %2889 = vmatprep.mubr.f32.mxu0 0.0
      %2890 = vmatmul.mubr.f32.gmra.mrb[0].mxu0 %v483
      %v2891 = vpop.f32.mrb[0].mxu0
      %v2892 = vadd.f32 0.0, %v2891
      %v2893 = vpop.f32.mrb[0].mxu0
      %2894 = vmatprep.mubr.f32.mxu0 0.0
      %2895 = vmatmul.mubr.f32.gmra.mrb[0].mxu0 %v486
      %v2896 = vpop.f32.mrb[0].mxu0
      %v2897 = vadd.f32 0.0, %v2896
      %v2898 = vpop.f32.mrb[0].mxu0
      %2899 = vdwg.mxu0
      %v2900 = vmul.f32 %v391, %v2892
      %v2901 = vmul.f32 %v392, %v2897
      %v2902 = vmul.f32 %v464, %v2821
      %v2903 = vmul.f32 %v465, %v2822
      %v2904 = vadd.f32 %v2900, %v2902
      %v2905 = vadd.f32 %v2901, %v2903
      %v2906 = vmul.f32 %v2821, %v2904
      %v2907 = vmul.f32 %v2822, %v2905
      %v2908 = vadd.f32 %v2906, %v2907
      %v2909 = vrot.slane %v2908, 4
      %v2910 = vadd.f32 %v2908, %v2909
      %v2911 = vrot.slane %v2910, 2
      %v2912 = vadd.f32 %v2910, %v2911
      %v2913 = vrot.slane %v2912, 1
      %v2914 = vadd.f32 %v2912, %v2913
      %vm2915 = vcmp.gt.f32.partialorder %v2914, 0.0
      %v2916 = vsel %vm2915, %v2914, 1.0
      %v2917 = vrcp.pop %v2916
      %v2918 = vmul.f32 %v2813, %v2917
      %v2919 = vsel %vm2915, %v2918, 0.0
      %v2920 = vmul.f32 %v2919, %v2821
      %v2921 = vmul.f32 %v2919, %v2822
      %v2922 = vadd.f32 %v2799, %v2920
      %v2923 = vadd.f32 %v2800, %v2921
      %v2924 = vmul.f32 %v2919, %v2904
      %v2925 = vmul.f32 %v2919, %v2905
      %v2926 = vsub.f32 %v2803, %v2924
      %v2927 = vsub.f32 %v2804, %v2925
      %v2928 = vmul.f32 %v2926, %v2926
      %v2929 = vmul.f32 %v2927, %v2927
      %v2930 = vadd.f32 %v2928, %v2929
      %v2931 = vrot.slane %v2930, 4
      %v2932 = vadd.f32 %v2930, %v2931
      %v2933 = vrot.slane %v2932, 2
      %v2934 = vadd.f32 %v2932, %v2933
      %v2935 = vrot.slane %v2934, 1
      %v2936 = vadd.f32 %v2934, %v2935
      %vm2937 = vcmp.gt.f32.partialorder %v2813, 0.0
      %v2938 = vsel %vm2937, %v2813, 1.0
      %v2939 = vrcp.pop %v2938
      %v2940 = vmul.f32 %v2936, %v2939
      %v2941 = vsel %vm2937, %v2940, 0.0
      %v2942 = vmul.f32 %v2941, %v2821
      %v2943 = vmul.f32 %v2941, %v2822
      %v2944 = vadd.f32 %v2926, %v2942
      %v2945 = vadd.f32 %v2927, %v2943
      %v2946 = vmul.f32 %v458, %v2944
      %v2947 = vmul.f32 %v459, %v2945
      %2948 = vmatprep.subr.mxu0 0.0
      %2949 = vmatpush1.msra.mxu0 %v2946
      %2950 = vmatprep.subr.mxu0 0.0
      %2951 = vmatpush1.msra.mxu0 %v2947
      %2952 = vmatprep.subr.mxu0 0.0
      %2953 = vmatpush1.msra.mxu0 0.0
      %2954 = vmatprep.subr.mxu0 0.0
      %2955 = vmatpush1.msra.mxu0 0.0
      %2956 = vmatprep.subr.mxu0 0.0
      %2957 = vmatpush1.msra.mxu0 0.0
      %2958 = vmatprep.subr.mxu0 0.0
      %2959 = vmatpush1.msra.mxu0 0.0
      %2960 = vmatprep.subr.mxu0 0.0
      %2961 = vmatpush1.msra.mxu0 0.0
      %2962 = vmatprep.subr.mxu0 0.0
      %2963 = vmatpush1.msra.mxu0 0.0
      %2964 = vmatprep.subr.mxu0 0.0
      %2965 = vmatpush1.msra.mxu0 0.0
      %2966 = vmatprep.subr.mxu0 0.0
      %2967 = vmatpush1.msra.mxu0 0.0
      %2968 = vmatprep.subr.mxu0 0.0
      %2969 = vmatpush1.msra.mxu0 0.0
      %2970 = vmatprep.subr.mxu0 0.0
      %2971 = vmatpush1.msra.mxu0 0.0
      %2972 = vmatprep.subr.mxu0 0.0
      %2973 = vmatpush1.msra.mxu0 0.0
      %2974 = vmatprep.subr.mxu0 0.0
      %2975 = vmatpush1.msra.mxu0 0.0
      %2976 = vmatprep.subr.mxu0 0.0
      %2977 = vmatpush1.msra.mxu0 0.0
      %2978 = vmatprep.subr.mxu0 0.0
      %2979 = vmatpush1.msra.mxu0 0.0
      %2980 = vmatprep.subr.mxu0 0.0
      %2981 = vmatpush1.msra.mxu0 0.0
      %2982 = vmatprep.subr.mxu0 0.0
      %2983 = vmatpush1.msra.mxu0 0.0
      %2984 = vmatprep.subr.mxu0 0.0
      %2985 = vmatpush1.msra.mxu0 0.0
      %2986 = vmatprep.subr.mxu0 0.0
      %2987 = vmatpush1.msra.mxu0 0.0
      %2988 = vmatprep.subr.mxu0 0.0
      %2989 = vmatpush1.msra.mxu0 0.0
      %2990 = vmatprep.subr.mxu0 0.0
      %2991 = vmatpush1.msra.mxu0 0.0
      %2992 = vmatprep.subr.mxu0 0.0
      %2993 = vmatpush1.msra.mxu0 0.0
      %2994 = vmatprep.subr.mxu0 0.0
      %2995 = vmatpush1.msra.mxu0 0.0
      %2996 = vmatprep.subr.mxu0 0.0
      %2997 = vmatpush1.msra.mxu0 0.0
      %2998 = vmatprep.subr.mxu0 0.0
      %2999 = vmatpush1.msra.mxu0 0.0
      %3000 = vmatprep.subr.mxu0 0.0
      %3001 = vmatpush1.msra.mxu0 0.0
      %3002 = vmatprep.subr.mxu0 0.0
      %3003 = vmatpush1.msra.mxu0 0.0
      %3004 = vmatprep.subr.mxu0 0.0
      %3005 = vmatpush1.msra.mxu0 0.0
      %3006 = vmatprep.subr.mxu0 0.0
      %3007 = vmatpush1.msra.mxu0 0.0
      %3008 = vmatprep.subr.mxu0 0.0
      %3009 = vmatpush1.msra.mxu0 0.0
      %3010 = vmatprep.subr.mxu0 0.0
      %3011 = vmatpush1.msra.mxu0 0.0
      %3012 = vmatprep.mubr.f32.mxu0 0.0
      %3013 = vmatmul.mubr.f32.gmra.mrb[0].mxu0 %v483
      %v3014 = vpop.f32.mrb[0].mxu0
      %v3015 = vadd.f32 0.0, %v3014
      %v3016 = vpop.f32.mrb[0].mxu0
      %3017 = vmatprep.mubr.f32.mxu0 0.0
      %3018 = vmatmul.mubr.f32.gmra.mrb[0].mxu0 %v486
      %v3019 = vpop.f32.mrb[0].mxu0
      %v3020 = vadd.f32 0.0, %v3019
      %v3021 = vpop.f32.mrb[0].mxu0
      %3022 = vdwg.mxu0
      %v3023 = vmul.f32 %v391, %v3015
      %v3024 = vmul.f32 %v392, %v3020
      %v3025 = vmul.f32 %v464, %v2944
      %v3026 = vmul.f32 %v465, %v2945
      %v3027 = vadd.f32 %v3023, %v3025
      %v3028 = vadd.f32 %v3024, %v3026
      %v3029 = vmul.f32 %v2944, %v3027
      %v3030 = vmul.f32 %v2945, %v3028
      %v3031 = vadd.f32 %v3029, %v3030
      %v3032 = vrot.slane %v3031, 4
      %v3033 = vadd.f32 %v3031, %v3032
      %v3034 = vrot.slane %v3033, 2
      %v3035 = vadd.f32 %v3033, %v3034
      %v3036 = vrot.slane %v3035, 1
      %v3037 = vadd.f32 %v3035, %v3036
      %vm3038 = vcmp.gt.f32.partialorder %v3037, 0.0
      %v3039 = vsel %vm3038, %v3037, 1.0
      %v3040 = vrcp.pop %v3039
      %v3041 = vmul.f32 %v2936, %v3040
      %v3042 = vsel %vm3038, %v3041, 0.0
      %v3043 = vmul.f32 %v3042, %v2944
      %v3044 = vmul.f32 %v3042, %v2945
      %v3045 = vadd.f32 %v2922, %v3043
      %v3046 = vadd.f32 %v2923, %v3044
      %v3047 = vmul.f32 %v3042, %v3027
      %v3048 = vmul.f32 %v3042, %v3028
      %v3049 = vsub.f32 %v2926, %v3047
      %v3050 = vsub.f32 %v2927, %v3048
      %v3051 = vmul.f32 %v3049, %v3049
      %v3052 = vmul.f32 %v3050, %v3050
      %v3053 = vadd.f32 %v3051, %v3052
      %v3054 = vrot.slane %v3053, 4
      %v3055 = vadd.f32 %v3053, %v3054
      %v3056 = vrot.slane %v3055, 2
      %v3057 = vadd.f32 %v3055, %v3056
      %v3058 = vrot.slane %v3057, 1
      %v3059 = vadd.f32 %v3057, %v3058
      %vm3060 = vcmp.gt.f32.partialorder %v2936, 0.0
      %v3061 = vsel %vm3060, %v2936, 1.0
      %v3062 = vrcp.pop %v3061
      %v3063 = vmul.f32 %v3059, %v3062
      %v3064 = vsel %vm3060, %v3063, 0.0
      %v3065 = vmul.f32 %v3064, %v2944
      %v3066 = vmul.f32 %v3064, %v2945
      %v3067 = vadd.f32 %v3049, %v3065
      %v3068 = vadd.f32 %v3050, %v3066
      %v3069 = vmul.f32 %v458, %v3067
      %v3070 = vmul.f32 %v459, %v3068
      %3071 = vmatprep.subr.mxu0 0.0
      %3072 = vmatpush1.msra.mxu0 %v3069
      %3073 = vmatprep.subr.mxu0 0.0
      %3074 = vmatpush1.msra.mxu0 %v3070
      %3075 = vmatprep.subr.mxu0 0.0
      %3076 = vmatpush1.msra.mxu0 0.0
      %3077 = vmatprep.subr.mxu0 0.0
      %3078 = vmatpush1.msra.mxu0 0.0
      %3079 = vmatprep.subr.mxu0 0.0
      %3080 = vmatpush1.msra.mxu0 0.0
      %3081 = vmatprep.subr.mxu0 0.0
      %3082 = vmatpush1.msra.mxu0 0.0
      %3083 = vmatprep.subr.mxu0 0.0
      %3084 = vmatpush1.msra.mxu0 0.0
      %3085 = vmatprep.subr.mxu0 0.0
      %3086 = vmatpush1.msra.mxu0 0.0
      %3087 = vmatprep.subr.mxu0 0.0
      %3088 = vmatpush1.msra.mxu0 0.0
      %3089 = vmatprep.subr.mxu0 0.0
      %3090 = vmatpush1.msra.mxu0 0.0
      %3091 = vmatprep.subr.mxu0 0.0
      %3092 = vmatpush1.msra.mxu0 0.0
      %3093 = vmatprep.subr.mxu0 0.0
      %3094 = vmatpush1.msra.mxu0 0.0
      %3095 = vmatprep.subr.mxu0 0.0
      %3096 = vmatpush1.msra.mxu0 0.0
      %3097 = vmatprep.subr.mxu0 0.0
      %3098 = vmatpush1.msra.mxu0 0.0
      %3099 = vmatprep.subr.mxu0 0.0
      %3100 = vmatpush1.msra.mxu0 0.0
      %3101 = vmatprep.subr.mxu0 0.0
      %3102 = vmatpush1.msra.mxu0 0.0
      %3103 = vmatprep.subr.mxu0 0.0
      %3104 = vmatpush1.msra.mxu0 0.0
      %3105 = vmatprep.subr.mxu0 0.0
      %3106 = vmatpush1.msra.mxu0 0.0
      %3107 = vmatprep.subr.mxu0 0.0
      %3108 = vmatpush1.msra.mxu0 0.0
      %3109 = vmatprep.subr.mxu0 0.0
      %3110 = vmatpush1.msra.mxu0 0.0
      %3111 = vmatprep.subr.mxu0 0.0
      %3112 = vmatpush1.msra.mxu0 0.0
      %3113 = vmatprep.subr.mxu0 0.0
      %3114 = vmatpush1.msra.mxu0 0.0
      %3115 = vmatprep.subr.mxu0 0.0
      %3116 = vmatpush1.msra.mxu0 0.0
      %3117 = vmatprep.subr.mxu0 0.0
      %3118 = vmatpush1.msra.mxu0 0.0
      %3119 = vmatprep.subr.mxu0 0.0
      %3120 = vmatpush1.msra.mxu0 0.0
      %3121 = vmatprep.subr.mxu0 0.0
      %3122 = vmatpush1.msra.mxu0 0.0
      %3123 = vmatprep.subr.mxu0 0.0
      %3124 = vmatpush1.msra.mxu0 0.0
      %3125 = vmatprep.subr.mxu0 0.0
      %3126 = vmatpush1.msra.mxu0 0.0
      %3127 = vmatprep.subr.mxu0 0.0
      %3128 = vmatpush1.msra.mxu0 0.0
      %3129 = vmatprep.subr.mxu0 0.0
      %3130 = vmatpush1.msra.mxu0 0.0
      %3131 = vmatprep.subr.mxu0 0.0
      %3132 = vmatpush1.msra.mxu0 0.0
      %3133 = vmatprep.subr.mxu0 0.0
      %3134 = vmatpush1.msra.mxu0 0.0
      %3135 = vmatprep.mubr.f32.mxu0 0.0
      %3136 = vmatmul.mubr.f32.gmra.mrb[0].mxu0 %v483
      %v3137 = vpop.f32.mrb[0].mxu0
      %v3138 = vadd.f32 0.0, %v3137
      %v3139 = vpop.f32.mrb[0].mxu0
      %3140 = vmatprep.mubr.f32.mxu0 0.0
      %3141 = vmatmul.mubr.f32.gmra.mrb[0].mxu0 %v486
      %v3142 = vpop.f32.mrb[0].mxu0
      %v3143 = vadd.f32 0.0, %v3142
      %v3144 = vpop.f32.mrb[0].mxu0
      %3145 = vdwg.mxu0
      %v3146 = vmul.f32 %v391, %v3138
      %v3147 = vmul.f32 %v392, %v3143
      %v3148 = vmul.f32 %v464, %v3067
      %v3149 = vmul.f32 %v465, %v3068
      %v3150 = vadd.f32 %v3146, %v3148
      %v3151 = vadd.f32 %v3147, %v3149
      %v3152 = vmul.f32 %v3067, %v3150
      %v3153 = vmul.f32 %v3068, %v3151
      %v3154 = vadd.f32 %v3152, %v3153
      %v3155 = vrot.slane %v3154, 4
      %v3156 = vadd.f32 %v3154, %v3155
      %v3157 = vrot.slane %v3156, 2
      %v3158 = vadd.f32 %v3156, %v3157
      %v3159 = vrot.slane %v3158, 1
      %v3160 = vadd.f32 %v3158, %v3159
      %vm3161 = vcmp.gt.f32.partialorder %v3160, 0.0
      %v3162 = vsel %vm3161, %v3160, 1.0
      %v3163 = vrcp.pop %v3162
      %v3164 = vmul.f32 %v3059, %v3163
      %v3165 = vsel %vm3161, %v3164, 0.0
      %v3166 = vmul.f32 %v3165, %v3067
      %v3167 = vmul.f32 %v3165, %v3068
      %v3168 = vadd.f32 %v3045, %v3166
      %v3169 = vadd.f32 %v3046, %v3167
      %v3170 = vmul.f32 %v3165, %v3150
      %v3171 = vmul.f32 %v3165, %v3151
      %v3172 = vsub.f32 %v3049, %v3170
      %v3173 = vsub.f32 %v3050, %v3171
      %v3174 = vmul.f32 %v3172, %v3172
      %v3175 = vmul.f32 %v3173, %v3173
      %v3176 = vadd.f32 %v3174, %v3175
      %v3177 = vrot.slane %v3176, 4
      %v3178 = vadd.f32 %v3176, %v3177
      %v3179 = vrot.slane %v3178, 2
      %v3180 = vadd.f32 %v3178, %v3179
      %v3181 = vrot.slane %v3180, 1
      %v3182 = vadd.f32 %v3180, %v3181
      %vm3183 = vcmp.gt.f32.partialorder %v3059, 0.0
      %v3184 = vsel %vm3183, %v3059, 1.0
      %v3185 = vrcp.pop %v3184
      %v3186 = vmul.f32 %v3182, %v3185
      %v3187 = vsel %vm3183, %v3186, 0.0
      %v3188 = vmul.f32 %v3187, %v3067
      %v3189 = vmul.f32 %v3187, %v3068
      %v3190 = vadd.f32 %v3172, %v3188
      %v3191 = vadd.f32 %v3173, %v3189
      %v3192 = vmul.f32 %v458, %v3190
      %v3193 = vmul.f32 %v459, %v3191
      %3194 = vmatprep.subr.mxu0 0.0
      %3195 = vmatpush1.msra.mxu0 %v3192
      %3196 = vmatprep.subr.mxu0 0.0
      %3197 = vmatpush1.msra.mxu0 %v3193
      %3198 = vmatprep.subr.mxu0 0.0
      %3199 = vmatpush1.msra.mxu0 0.0
      %3200 = vmatprep.subr.mxu0 0.0
      %3201 = vmatpush1.msra.mxu0 0.0
      %3202 = vmatprep.subr.mxu0 0.0
      %3203 = vmatpush1.msra.mxu0 0.0
      %3204 = vmatprep.subr.mxu0 0.0
      %3205 = vmatpush1.msra.mxu0 0.0
      %3206 = vmatprep.subr.mxu0 0.0
      %3207 = vmatpush1.msra.mxu0 0.0
      %3208 = vmatprep.subr.mxu0 0.0
      %3209 = vmatpush1.msra.mxu0 0.0
      %3210 = vmatprep.subr.mxu0 0.0
      %3211 = vmatpush1.msra.mxu0 0.0
      %3212 = vmatprep.subr.mxu0 0.0
      %3213 = vmatpush1.msra.mxu0 0.0
      %3214 = vmatprep.subr.mxu0 0.0
      %3215 = vmatpush1.msra.mxu0 0.0
      %3216 = vmatprep.subr.mxu0 0.0
      %3217 = vmatpush1.msra.mxu0 0.0
      %3218 = vmatprep.subr.mxu0 0.0
      %3219 = vmatpush1.msra.mxu0 0.0
      %3220 = vmatprep.subr.mxu0 0.0
      %3221 = vmatpush1.msra.mxu0 0.0
      %3222 = vmatprep.subr.mxu0 0.0
      %3223 = vmatpush1.msra.mxu0 0.0
      %3224 = vmatprep.subr.mxu0 0.0
      %3225 = vmatpush1.msra.mxu0 0.0
      %3226 = vmatprep.subr.mxu0 0.0
      %3227 = vmatpush1.msra.mxu0 0.0
      %3228 = vmatprep.subr.mxu0 0.0
      %3229 = vmatpush1.msra.mxu0 0.0
      %3230 = vmatprep.subr.mxu0 0.0
      %3231 = vmatpush1.msra.mxu0 0.0
      %3232 = vmatprep.subr.mxu0 0.0
      %3233 = vmatpush1.msra.mxu0 0.0
      %3234 = vmatprep.subr.mxu0 0.0
      %3235 = vmatpush1.msra.mxu0 0.0
      %3236 = vmatprep.subr.mxu0 0.0
      %3237 = vmatpush1.msra.mxu0 0.0
      %3238 = vmatprep.subr.mxu0 0.0
      %3239 = vmatpush1.msra.mxu0 0.0
      %3240 = vmatprep.subr.mxu0 0.0
      %3241 = vmatpush1.msra.mxu0 0.0
      %3242 = vmatprep.subr.mxu0 0.0
      %3243 = vmatpush1.msra.mxu0 0.0
      %3244 = vmatprep.subr.mxu0 0.0
      %3245 = vmatpush1.msra.mxu0 0.0
      %3246 = vmatprep.subr.mxu0 0.0
      %3247 = vmatpush1.msra.mxu0 0.0
      %3248 = vmatprep.subr.mxu0 0.0
      %3249 = vmatpush1.msra.mxu0 0.0
      %3250 = vmatprep.subr.mxu0 0.0
      %3251 = vmatpush1.msra.mxu0 0.0
      %3252 = vmatprep.subr.mxu0 0.0
      %3253 = vmatpush1.msra.mxu0 0.0
      %3254 = vmatprep.subr.mxu0 0.0
      %3255 = vmatpush1.msra.mxu0 0.0
      %3256 = vmatprep.subr.mxu0 0.0
      %3257 = vmatpush1.msra.mxu0 0.0
      %3258 = vmatprep.mubr.f32.mxu0 0.0
      %3259 = vmatmul.mubr.f32.gmra.mrb[0].mxu0 %v483
      %v3260 = vpop.f32.mrb[0].mxu0
      %v3261 = vadd.f32 0.0, %v3260
      %v3262 = vpop.f32.mrb[0].mxu0
      %3263 = vmatprep.mubr.f32.mxu0 0.0
      %3264 = vmatmul.mubr.f32.gmra.mrb[0].mxu0 %v486
      %v3265 = vpop.f32.mrb[0].mxu0
      %v3266 = vadd.f32 0.0, %v3265
      %v3267 = vpop.f32.mrb[0].mxu0
      %3268 = vdwg.mxu0
      %v3269 = vmul.f32 %v391, %v3261
      %v3270 = vmul.f32 %v392, %v3266
      %v3271 = vmul.f32 %v464, %v3190
      %v3272 = vmul.f32 %v465, %v3191
      %v3273 = vadd.f32 %v3269, %v3271
      %v3274 = vadd.f32 %v3270, %v3272
      %v3275 = vmul.f32 %v3190, %v3273
      %v3276 = vmul.f32 %v3191, %v3274
      %v3277 = vadd.f32 %v3275, %v3276
      %v3278 = vrot.slane %v3277, 4
      %v3279 = vadd.f32 %v3277, %v3278
      %v3280 = vrot.slane %v3279, 2
      %v3281 = vadd.f32 %v3279, %v3280
      %v3282 = vrot.slane %v3281, 1
      %v3283 = vadd.f32 %v3281, %v3282
      %vm3284 = vcmp.gt.f32.partialorder %v3283, 0.0
      %v3285 = vsel %vm3284, %v3283, 1.0
      %v3286 = vrcp.pop %v3285
      %v3287 = vmul.f32 %v3182, %v3286
      %v3288 = vsel %vm3284, %v3287, 0.0
      %v3289 = vmul.f32 %v3288, %v3190
      %v3290 = vmul.f32 %v3288, %v3191
      %v3291 = vadd.f32 %v3168, %v3289
      %v3292 = vadd.f32 %v3169, %v3290
      %v3293 = vmul.f32 %v3288, %v3273
      %v3294 = vmul.f32 %v3288, %v3274
      %v3295 = vsub.f32 %v3172, %v3293
      %v3296 = vsub.f32 %v3173, %v3294
      %v3297 = vmul.f32 %v3295, %v3295
      %v3298 = vmul.f32 %v3296, %v3296
      %v3299 = vadd.f32 %v3297, %v3298
      %v3300 = vrot.slane %v3299, 4
      %v3301 = vadd.f32 %v3299, %v3300
      %v3302 = vrot.slane %v3301, 2
      %v3303 = vadd.f32 %v3301, %v3302
      %v3304 = vrot.slane %v3303, 1
      %v3305 = vadd.f32 %v3303, %v3304
      %vm3306 = vcmp.gt.f32.partialorder %v3182, 0.0
      %v3307 = vsel %vm3306, %v3182, 1.0
      %v3308 = vrcp.pop %v3307
      %v3309 = vmul.f32 %v3305, %v3308
      %v3310 = vsel %vm3306, %v3309, 0.0
      %v3311 = vmul.f32 %v3310, %v3190
      %v3312 = vmul.f32 %v3310, %v3191
      %v3313 = vadd.f32 %v3295, %v3311
      %v3314 = vadd.f32 %v3296, %v3312
      %v3315 = vmul.f32 %v458, %v3313
      %v3316 = vmul.f32 %v459, %v3314
      %3317 = vmatprep.subr.mxu0 0.0
      %3318 = vmatpush1.msra.mxu0 %v3315
      %3319 = vmatprep.subr.mxu0 0.0
      %3320 = vmatpush1.msra.mxu0 %v3316
      %3321 = vmatprep.subr.mxu0 0.0
      %3322 = vmatpush1.msra.mxu0 0.0
      %3323 = vmatprep.subr.mxu0 0.0
      %3324 = vmatpush1.msra.mxu0 0.0
      %3325 = vmatprep.subr.mxu0 0.0
      %3326 = vmatpush1.msra.mxu0 0.0
      %3327 = vmatprep.subr.mxu0 0.0
      %3328 = vmatpush1.msra.mxu0 0.0
      %3329 = vmatprep.subr.mxu0 0.0
      %3330 = vmatpush1.msra.mxu0 0.0
      %3331 = vmatprep.subr.mxu0 0.0
      %3332 = vmatpush1.msra.mxu0 0.0
      %3333 = vmatprep.subr.mxu0 0.0
      %3334 = vmatpush1.msra.mxu0 0.0
      %3335 = vmatprep.subr.mxu0 0.0
      %3336 = vmatpush1.msra.mxu0 0.0
      %3337 = vmatprep.subr.mxu0 0.0
      %3338 = vmatpush1.msra.mxu0 0.0
      %3339 = vmatprep.subr.mxu0 0.0
      %3340 = vmatpush1.msra.mxu0 0.0
      %3341 = vmatprep.subr.mxu0 0.0
      %3342 = vmatpush1.msra.mxu0 0.0
      %3343 = vmatprep.subr.mxu0 0.0
      %3344 = vmatpush1.msra.mxu0 0.0
      %3345 = vmatprep.subr.mxu0 0.0
      %3346 = vmatpush1.msra.mxu0 0.0
      %3347 = vmatprep.subr.mxu0 0.0
      %3348 = vmatpush1.msra.mxu0 0.0
      %3349 = vmatprep.subr.mxu0 0.0
      %3350 = vmatpush1.msra.mxu0 0.0
      %3351 = vmatprep.subr.mxu0 0.0
      %3352 = vmatpush1.msra.mxu0 0.0
      %3353 = vmatprep.subr.mxu0 0.0
      %3354 = vmatpush1.msra.mxu0 0.0
      %3355 = vmatprep.subr.mxu0 0.0
      %3356 = vmatpush1.msra.mxu0 0.0
      %3357 = vmatprep.subr.mxu0 0.0
      %3358 = vmatpush1.msra.mxu0 0.0
      %3359 = vmatprep.subr.mxu0 0.0
      %3360 = vmatpush1.msra.mxu0 0.0
      %3361 = vmatprep.subr.mxu0 0.0
      %3362 = vmatpush1.msra.mxu0 0.0
      %3363 = vmatprep.subr.mxu0 0.0
      %3364 = vmatpush1.msra.mxu0 0.0
      %3365 = vmatprep.subr.mxu0 0.0
      %3366 = vmatpush1.msra.mxu0 0.0
      %3367 = vmatprep.subr.mxu0 0.0
      %3368 = vmatpush1.msra.mxu0 0.0
      %3369 = vmatprep.subr.mxu0 0.0
      %3370 = vmatpush1.msra.mxu0 0.0
      %3371 = vmatprep.subr.mxu0 0.0
      %3372 = vmatpush1.msra.mxu0 0.0
      %3373 = vmatprep.subr.mxu0 0.0
      %3374 = vmatpush1.msra.mxu0 0.0
      %3375 = vmatprep.subr.mxu0 0.0
      %3376 = vmatpush1.msra.mxu0 0.0
      %3377 = vmatprep.subr.mxu0 0.0
      %3378 = vmatpush1.msra.mxu0 0.0
      %3379 = vmatprep.subr.mxu0 0.0
      %3380 = vmatpush1.msra.mxu0 0.0
      %3381 = vmatprep.mubr.f32.mxu0 0.0
      %3382 = vmatmul.mubr.f32.gmra.mrb[0].mxu0 %v483
      %v3383 = vpop.f32.mrb[0].mxu0
      %v3384 = vadd.f32 0.0, %v3383
      %v3385 = vpop.f32.mrb[0].mxu0
      %3386 = vmatprep.mubr.f32.mxu0 0.0
      %3387 = vmatmul.mubr.f32.gmra.mrb[0].mxu0 %v486
      %v3388 = vpop.f32.mrb[0].mxu0
      %v3389 = vadd.f32 0.0, %v3388
      %v3390 = vpop.f32.mrb[0].mxu0
      %3391 = vdwg.mxu0
      %v3392 = vmul.f32 %v391, %v3384
      %v3393 = vmul.f32 %v392, %v3389
      %v3394 = vmul.f32 %v464, %v3313
      %v3395 = vmul.f32 %v465, %v3314
      %v3396 = vadd.f32 %v3392, %v3394
      %v3397 = vadd.f32 %v3393, %v3395
      %v3398 = vmul.f32 %v3313, %v3396
      %v3399 = vmul.f32 %v3314, %v3397
      %v3400 = vadd.f32 %v3398, %v3399
      %v3401 = vrot.slane %v3400, 4
      %v3402 = vadd.f32 %v3400, %v3401
      %v3403 = vrot.slane %v3402, 2
      %v3404 = vadd.f32 %v3402, %v3403
      %v3405 = vrot.slane %v3404, 1
      %v3406 = vadd.f32 %v3404, %v3405
      %vm3407 = vcmp.gt.f32.partialorder %v3406, 0.0
      %v3408 = vsel %vm3407, %v3406, 1.0
      %v3409 = vrcp.pop %v3408
      %v3410 = vmul.f32 %v3305, %v3409
      %v3411 = vsel %vm3407, %v3410, 0.0
      %v3412 = vmul.f32 %v3411, %v3313
      %v3413 = vmul.f32 %v3411, %v3314
      %v3414 = vadd.f32 %v3291, %v3412
      %v3415 = vadd.f32 %v3292, %v3413
      %v3416 = vmul.f32 %v3411, %v3396
      %v3417 = vmul.f32 %v3411, %v3397
      %v3418 = vsub.f32 %v3295, %v3416
      %v3419 = vsub.f32 %v3296, %v3417
      %v3420 = vmul.f32 %v3418, %v3418
      %v3421 = vmul.f32 %v3419, %v3419
      %v3422 = vadd.f32 %v3420, %v3421
      %v3423 = vrot.slane %v3422, 4
      %v3424 = vadd.f32 %v3422, %v3423
      %v3425 = vrot.slane %v3424, 2
      %v3426 = vadd.f32 %v3424, %v3425
      %v3427 = vrot.slane %v3426, 1
      %v3428 = vadd.f32 %v3426, %v3427
      %vm3429 = vcmp.gt.f32.partialorder %v3305, 0.0
      %v3430 = vsel %vm3429, %v3305, 1.0
      %v3431 = vrcp.pop %v3430
      %v3432 = vmul.f32 %v3428, %v3431
      %v3433 = vsel %vm3429, %v3432, 0.0
      %v3434 = vmul.f32 %v3433, %v3313
      %v3435 = vmul.f32 %v3433, %v3314
      %v3436 = vadd.f32 %v3418, %v3434
      %v3437 = vadd.f32 %v3419, %v3435
      %v3438 = vmul.f32 %v458, %v3436
      %v3439 = vmul.f32 %v459, %v3437
      %3440 = vmatprep.subr.mxu0 0.0
      %3441 = vmatpush1.msra.mxu0 %v3438
      %3442 = vmatprep.subr.mxu0 0.0
      %3443 = vmatpush1.msra.mxu0 %v3439
      %3444 = vmatprep.subr.mxu0 0.0
      %3445 = vmatpush1.msra.mxu0 0.0
      %3446 = vmatprep.subr.mxu0 0.0
      %3447 = vmatpush1.msra.mxu0 0.0
      %3448 = vmatprep.subr.mxu0 0.0
      %3449 = vmatpush1.msra.mxu0 0.0
      %3450 = vmatprep.subr.mxu0 0.0
      %3451 = vmatpush1.msra.mxu0 0.0
      %3452 = vmatprep.subr.mxu0 0.0
      %3453 = vmatpush1.msra.mxu0 0.0
      %3454 = vmatprep.subr.mxu0 0.0
      %3455 = vmatpush1.msra.mxu0 0.0
      %3456 = vmatprep.subr.mxu0 0.0
      %3457 = vmatpush1.msra.mxu0 0.0
      %3458 = vmatprep.subr.mxu0 0.0
      %3459 = vmatpush1.msra.mxu0 0.0
      %3460 = vmatprep.subr.mxu0 0.0
      %3461 = vmatpush1.msra.mxu0 0.0
      %3462 = vmatprep.subr.mxu0 0.0
      %3463 = vmatpush1.msra.mxu0 0.0
      %3464 = vmatprep.subr.mxu0 0.0
      %3465 = vmatpush1.msra.mxu0 0.0
      %3466 = vmatprep.subr.mxu0 0.0
      %3467 = vmatpush1.msra.mxu0 0.0
      %3468 = vmatprep.subr.mxu0 0.0
      %3469 = vmatpush1.msra.mxu0 0.0
      %3470 = vmatprep.subr.mxu0 0.0
      %3471 = vmatpush1.msra.mxu0 0.0
      %3472 = vmatprep.subr.mxu0 0.0
      %3473 = vmatpush1.msra.mxu0 0.0
      %3474 = vmatprep.subr.mxu0 0.0
      %3475 = vmatpush1.msra.mxu0 0.0
      %3476 = vmatprep.subr.mxu0 0.0
      %3477 = vmatpush1.msra.mxu0 0.0
      %3478 = vmatprep.subr.mxu0 0.0
      %3479 = vmatpush1.msra.mxu0 0.0
      %3480 = vmatprep.subr.mxu0 0.0
      %3481 = vmatpush1.msra.mxu0 0.0
      %3482 = vmatprep.subr.mxu0 0.0
      %3483 = vmatpush1.msra.mxu0 0.0
      %3484 = vmatprep.subr.mxu0 0.0
      %3485 = vmatpush1.msra.mxu0 0.0
      %3486 = vmatprep.subr.mxu0 0.0
      %3487 = vmatpush1.msra.mxu0 0.0
      %3488 = vmatprep.subr.mxu0 0.0
      %3489 = vmatpush1.msra.mxu0 0.0
      %3490 = vmatprep.subr.mxu0 0.0
      %3491 = vmatpush1.msra.mxu0 0.0
      %3492 = vmatprep.subr.mxu0 0.0
      %3493 = vmatpush1.msra.mxu0 0.0
      %3494 = vmatprep.subr.mxu0 0.0
      %3495 = vmatpush1.msra.mxu0 0.0
      %3496 = vmatprep.subr.mxu0 0.0
      %3497 = vmatpush1.msra.mxu0 0.0
      %3498 = vmatprep.subr.mxu0 0.0
      %3499 = vmatpush1.msra.mxu0 0.0
      %3500 = vmatprep.subr.mxu0 0.0
      %3501 = vmatpush1.msra.mxu0 0.0
      %3502 = vmatprep.subr.mxu0 0.0
      %3503 = vmatpush1.msra.mxu0 0.0
      %3504 = vmatprep.mubr.f32.mxu0 0.0
      %3505 = vmatmul.mubr.f32.gmra.mrb[0].mxu0 %v483
      %v3506 = vpop.f32.mrb[0].mxu0
      %v3507 = vadd.f32 0.0, %v3506
      %v3508 = vpop.f32.mrb[0].mxu0
      %3509 = vmatprep.mubr.f32.mxu0 0.0
      %3510 = vmatmul.mubr.f32.gmra.mrb[0].mxu0 %v486
      %v3511 = vpop.f32.mrb[0].mxu0
      %v3512 = vadd.f32 0.0, %v3511
      %v3513 = vpop.f32.mrb[0].mxu0
      %3514 = vdwg.mxu0
      %v3515 = vmul.f32 %v391, %v3507
      %v3516 = vmul.f32 %v392, %v3512
      %v3517 = vmul.f32 %v464, %v3436
      %v3518 = vmul.f32 %v465, %v3437
      %v3519 = vadd.f32 %v3515, %v3517
      %v3520 = vadd.f32 %v3516, %v3518
      %v3521 = vmul.f32 %v3436, %v3519
      %v3522 = vmul.f32 %v3437, %v3520
      %v3523 = vadd.f32 %v3521, %v3522
      %v3524 = vrot.slane %v3523, 4
      %v3525 = vadd.f32 %v3523, %v3524
      %v3526 = vrot.slane %v3525, 2
      %v3527 = vadd.f32 %v3525, %v3526
      %v3528 = vrot.slane %v3527, 1
      %v3529 = vadd.f32 %v3527, %v3528
      %vm3530 = vcmp.gt.f32.partialorder %v3529, 0.0
      %v3531 = vsel %vm3530, %v3529, 1.0
      %v3532 = vrcp.pop %v3531
      %v3533 = vmul.f32 %v3428, %v3532
      %v3534 = vsel %vm3530, %v3533, 0.0
      %v3535 = vmul.f32 %v3534, %v3436
      %v3536 = vmul.f32 %v3534, %v3437
      %v3537 = vadd.f32 %v3414, %v3535
      %v3538 = vadd.f32 %v3415, %v3536
      %v3539 = vmul.f32 %v3534, %v3519
      %v3540 = vmul.f32 %v3534, %v3520
      %v3541 = vsub.f32 %v3418, %v3539
      %v3542 = vsub.f32 %v3419, %v3540
      %v3543 = vmul.f32 %v3541, %v3541
      %v3544 = vmul.f32 %v3542, %v3542
      %v3545 = vadd.f32 %v3543, %v3544
      %v3546 = vrot.slane %v3545, 4
      %v3547 = vadd.f32 %v3545, %v3546
      %v3548 = vrot.slane %v3547, 2
      %v3549 = vadd.f32 %v3547, %v3548
      %v3550 = vrot.slane %v3549, 1
      %v3551 = vadd.f32 %v3549, %v3550
      %vm3552 = vcmp.gt.f32.partialorder %v3428, 0.0
      %v3553 = vsel %vm3552, %v3428, 1.0
      %v3554 = vrcp.pop %v3553
      %v3555 = vmul.f32 %v3551, %v3554
      %v3556 = vsel %vm3552, %v3555, 0.0
      %v3557 = vmul.f32 %v3556, %v3436
      %v3558 = vmul.f32 %v3556, %v3437
      %v3559 = vadd.f32 %v3541, %v3557
      %v3560 = vadd.f32 %v3542, %v3558
      %v3561 = vmul.f32 %v458, %v3559
      %v3562 = vmul.f32 %v459, %v3560
      %3563 = vmatprep.subr.mxu0 0.0
      %3564 = vmatpush1.msra.mxu0 %v3561
      %3565 = vmatprep.subr.mxu0 0.0
      %3566 = vmatpush1.msra.mxu0 %v3562
      %3567 = vmatprep.subr.mxu0 0.0
      %3568 = vmatpush1.msra.mxu0 0.0
      %3569 = vmatprep.subr.mxu0 0.0
      %3570 = vmatpush1.msra.mxu0 0.0
      %3571 = vmatprep.subr.mxu0 0.0
      %3572 = vmatpush1.msra.mxu0 0.0
      %3573 = vmatprep.subr.mxu0 0.0
      %3574 = vmatpush1.msra.mxu0 0.0
      %3575 = vmatprep.subr.mxu0 0.0
      %3576 = vmatpush1.msra.mxu0 0.0
      %3577 = vmatprep.subr.mxu0 0.0
      %3578 = vmatpush1.msra.mxu0 0.0
      %3579 = vmatprep.subr.mxu0 0.0
      %3580 = vmatpush1.msra.mxu0 0.0
      %3581 = vmatprep.subr.mxu0 0.0
      %3582 = vmatpush1.msra.mxu0 0.0
      %3583 = vmatprep.subr.mxu0 0.0
      %3584 = vmatpush1.msra.mxu0 0.0
      %3585 = vmatprep.subr.mxu0 0.0
      %3586 = vmatpush1.msra.mxu0 0.0
      %3587 = vmatprep.subr.mxu0 0.0
      %3588 = vmatpush1.msra.mxu0 0.0
      %3589 = vmatprep.subr.mxu0 0.0
      %3590 = vmatpush1.msra.mxu0 0.0
      %3591 = vmatprep.subr.mxu0 0.0
      %3592 = vmatpush1.msra.mxu0 0.0
      %3593 = vmatprep.subr.mxu0 0.0
      %3594 = vmatpush1.msra.mxu0 0.0
      %3595 = vmatprep.subr.mxu0 0.0
      %3596 = vmatpush1.msra.mxu0 0.0
      %3597 = vmatprep.subr.mxu0 0.0
      %3598 = vmatpush1.msra.mxu0 0.0
      %3599 = vmatprep.subr.mxu0 0.0
      %3600 = vmatpush1.msra.mxu0 0.0
      %3601 = vmatprep.subr.mxu0 0.0
      %3602 = vmatpush1.msra.mxu0 0.0
      %3603 = vmatprep.subr.mxu0 0.0
      %3604 = vmatpush1.msra.mxu0 0.0
      %3605 = vmatprep.subr.mxu0 0.0
      %3606 = vmatpush1.msra.mxu0 0.0
      %3607 = vmatprep.subr.mxu0 0.0
      %3608 = vmatpush1.msra.mxu0 0.0
      %3609 = vmatprep.subr.mxu0 0.0
      %3610 = vmatpush1.msra.mxu0 0.0
      %3611 = vmatprep.subr.mxu0 0.0
      %3612 = vmatpush1.msra.mxu0 0.0
      %3613 = vmatprep.subr.mxu0 0.0
      %3614 = vmatpush1.msra.mxu0 0.0
      %3615 = vmatprep.subr.mxu0 0.0
      %3616 = vmatpush1.msra.mxu0 0.0
      %3617 = vmatprep.subr.mxu0 0.0
      %3618 = vmatpush1.msra.mxu0 0.0
      %3619 = vmatprep.subr.mxu0 0.0
      %3620 = vmatpush1.msra.mxu0 0.0
      %3621 = vmatprep.subr.mxu0 0.0
      %3622 = vmatpush1.msra.mxu0 0.0
      %3623 = vmatprep.subr.mxu0 0.0
      %3624 = vmatpush1.msra.mxu0 0.0
      %3625 = vmatprep.subr.mxu0 0.0
      %3626 = vmatpush1.msra.mxu0 0.0
      %3627 = vmatprep.mubr.f32.mxu0 0.0
      %3628 = vmatmul.mubr.f32.gmra.mrb[0].mxu0 %v483
      %v3629 = vpop.f32.mrb[0].mxu0
      %v3630 = vadd.f32 0.0, %v3629
      %v3631 = vpop.f32.mrb[0].mxu0
      %3632 = vmatprep.mubr.f32.mxu0 0.0
      %3633 = vmatmul.mubr.f32.gmra.mrb[0].mxu0 %v486
      %v3634 = vpop.f32.mrb[0].mxu0
      %v3635 = vadd.f32 0.0, %v3634
      %v3636 = vpop.f32.mrb[0].mxu0
      %3637 = vdwg.mxu0
      %v3638 = vmul.f32 %v391, %v3630
      %v3639 = vmul.f32 %v392, %v3635
      %v3640 = vmul.f32 %v464, %v3559
      %v3641 = vmul.f32 %v465, %v3560
      %v3642 = vadd.f32 %v3638, %v3640
      %v3643 = vadd.f32 %v3639, %v3641
      %v3644 = vmul.f32 %v3559, %v3642
      %v3645 = vmul.f32 %v3560, %v3643
      %v3646 = vadd.f32 %v3644, %v3645
      %v3647 = vrot.slane %v3646, 4
      %v3648 = vadd.f32 %v3646, %v3647
      %v3649 = vrot.slane %v3648, 2
      %v3650 = vadd.f32 %v3648, %v3649
      %v3651 = vrot.slane %v3650, 1
      %v3652 = vadd.f32 %v3650, %v3651
      %vm3653 = vcmp.gt.f32.partialorder %v3652, 0.0
      %v3654 = vsel %vm3653, %v3652, 1.0
      %v3655 = vrcp.pop %v3654
      %v3656 = vmul.f32 %v3551, %v3655
      %v3657 = vsel %vm3653, %v3656, 0.0
      %v3658 = vmul.f32 %v3657, %v3559
      %v3659 = vmul.f32 %v3657, %v3560
      %v3660 = vadd.f32 %v3537, %v3658
      %v3661 = vadd.f32 %v3538, %v3659
      %v3662 = vmul.f32 %v3657, %v3642
      %v3663 = vmul.f32 %v3657, %v3643
      %v3664 = vsub.f32 %v3541, %v3662
      %v3665 = vsub.f32 %v3542, %v3663
      %v3666 = vmul.f32 %v3664, %v3664
      %v3667 = vmul.f32 %v3665, %v3665
      %v3668 = vadd.f32 %v3666, %v3667
      %v3669 = vrot.slane %v3668, 4
      %v3670 = vadd.f32 %v3668, %v3669
      %v3671 = vrot.slane %v3670, 2
      %v3672 = vadd.f32 %v3670, %v3671
      %v3673 = vrot.slane %v3672, 1
      %v3674 = vadd.f32 %v3672, %v3673
      %vm3675 = vcmp.gt.f32.partialorder %v3551, 0.0
      %v3676 = vsel %vm3675, %v3551, 1.0
      %v3677 = vrcp.pop %v3676
      %v3678 = vmul.f32 %v3674, %v3677
      %v3679 = vsel %vm3675, %v3678, 0.0
      %v3680 = vmul.f32 %v3679, %v3559
      %v3681 = vmul.f32 %v3679, %v3560
      %v3682 = vadd.f32 %v3664, %v3680
      %v3683 = vadd.f32 %v3665, %v3681
      %v3684 = vmul.f32 %v458, %v3682
      %v3685 = vmul.f32 %v459, %v3683
      %3686 = vmatprep.subr.mxu0 0.0
      %3687 = vmatpush1.msra.mxu0 %v3684
      %3688 = vmatprep.subr.mxu0 0.0
      %3689 = vmatpush1.msra.mxu0 %v3685
      %3690 = vmatprep.subr.mxu0 0.0
      %3691 = vmatpush1.msra.mxu0 0.0
      %3692 = vmatprep.subr.mxu0 0.0
      %3693 = vmatpush1.msra.mxu0 0.0
      %3694 = vmatprep.subr.mxu0 0.0
      %3695 = vmatpush1.msra.mxu0 0.0
      %3696 = vmatprep.subr.mxu0 0.0
      %3697 = vmatpush1.msra.mxu0 0.0
      %3698 = vmatprep.subr.mxu0 0.0
      %3699 = vmatpush1.msra.mxu0 0.0
      %3700 = vmatprep.subr.mxu0 0.0
      %3701 = vmatpush1.msra.mxu0 0.0
      %3702 = vmatprep.subr.mxu0 0.0
      %3703 = vmatpush1.msra.mxu0 0.0
      %3704 = vmatprep.subr.mxu0 0.0
      %3705 = vmatpush1.msra.mxu0 0.0
      %3706 = vmatprep.subr.mxu0 0.0
      %3707 = vmatpush1.msra.mxu0 0.0
      %3708 = vmatprep.subr.mxu0 0.0
      %3709 = vmatpush1.msra.mxu0 0.0
      %3710 = vmatprep.subr.mxu0 0.0
      %3711 = vmatpush1.msra.mxu0 0.0
      %3712 = vmatprep.subr.mxu0 0.0
      %3713 = vmatpush1.msra.mxu0 0.0
      %3714 = vmatprep.subr.mxu0 0.0
      %3715 = vmatpush1.msra.mxu0 0.0
      %3716 = vmatprep.subr.mxu0 0.0
      %3717 = vmatpush1.msra.mxu0 0.0
      %3718 = vmatprep.subr.mxu0 0.0
      %3719 = vmatpush1.msra.mxu0 0.0
      %3720 = vmatprep.subr.mxu0 0.0
      %3721 = vmatpush1.msra.mxu0 0.0
      %3722 = vmatprep.subr.mxu0 0.0
      %3723 = vmatpush1.msra.mxu0 0.0
      %3724 = vmatprep.subr.mxu0 0.0
      %3725 = vmatpush1.msra.mxu0 0.0
      %3726 = vmatprep.subr.mxu0 0.0
      %3727 = vmatpush1.msra.mxu0 0.0
      %3728 = vmatprep.subr.mxu0 0.0
      %3729 = vmatpush1.msra.mxu0 0.0
      %3730 = vmatprep.subr.mxu0 0.0
      %3731 = vmatpush1.msra.mxu0 0.0
      %3732 = vmatprep.subr.mxu0 0.0
      %3733 = vmatpush1.msra.mxu0 0.0
      %3734 = vmatprep.subr.mxu0 0.0
      %3735 = vmatpush1.msra.mxu0 0.0
      %3736 = vmatprep.subr.mxu0 0.0
      %3737 = vmatpush1.msra.mxu0 0.0
      %3738 = vmatprep.subr.mxu0 0.0
      %3739 = vmatpush1.msra.mxu0 0.0
      %3740 = vmatprep.subr.mxu0 0.0
      %3741 = vmatpush1.msra.mxu0 0.0
      %3742 = vmatprep.subr.mxu0 0.0
      %3743 = vmatpush1.msra.mxu0 0.0
      %3744 = vmatprep.subr.mxu0 0.0
      %3745 = vmatpush1.msra.mxu0 0.0
      %3746 = vmatprep.subr.mxu0 0.0
      %3747 = vmatpush1.msra.mxu0 0.0
      %3748 = vmatprep.subr.mxu0 0.0
      %3749 = vmatpush1.msra.mxu0 0.0
      %3750 = vmatprep.mubr.f32.mxu0 0.0
      %3751 = vmatmul.mubr.f32.gmra.mrb[0].mxu0 %v483
      %v3752 = vpop.f32.mrb[0].mxu0
      %v3753 = vadd.f32 0.0, %v3752
      %v3754 = vpop.f32.mrb[0].mxu0
      %3755 = vmatprep.mubr.f32.mxu0 0.0
      %3756 = vmatmul.mubr.f32.gmra.mrb[0].mxu0 %v486
      %v3757 = vpop.f32.mrb[0].mxu0
      %v3758 = vadd.f32 0.0, %v3757
      %v3759 = vpop.f32.mrb[0].mxu0
      %3760 = vdwg.mxu0
      %v3761 = vmul.f32 %v391, %v3753
      %v3762 = vmul.f32 %v392, %v3758
      %v3763 = vmul.f32 %v464, %v3682
      %v3764 = vmul.f32 %v465, %v3683
      %v3765 = vadd.f32 %v3761, %v3763
      %v3766 = vadd.f32 %v3762, %v3764
      %v3767 = vmul.f32 %v3682, %v3765
      %v3768 = vmul.f32 %v3683, %v3766
      %v3769 = vadd.f32 %v3767, %v3768
      %v3770 = vrot.slane %v3769, 4
      %v3771 = vadd.f32 %v3769, %v3770
      %v3772 = vrot.slane %v3771, 2
      %v3773 = vadd.f32 %v3771, %v3772
      %v3774 = vrot.slane %v3773, 1
      %v3775 = vadd.f32 %v3773, %v3774
      %vm3776 = vcmp.gt.f32.partialorder %v3775, 0.0
      %v3777 = vsel %vm3776, %v3775, 1.0
      %v3778 = vrcp.pop %v3777
      %v3779 = vmul.f32 %v3674, %v3778
      %v3780 = vsel %vm3776, %v3779, 0.0
      %v3781 = vmul.f32 %v3780, %v3682
      %v3782 = vmul.f32 %v3780, %v3683
      %v3783 = vadd.f32 %v3660, %v3781
      %v3784 = vadd.f32 %v3661, %v3782
      %v3785 = vmul.f32 %v3780, %v3765
      %v3786 = vmul.f32 %v3780, %v3766
      %v3787 = vsub.f32 %v3664, %v3785
      %v3788 = vsub.f32 %v3665, %v3786
      %v3789 = vmul.f32 %v3787, %v3787
      %v3790 = vmul.f32 %v3788, %v3788
      %v3791 = vadd.f32 %v3789, %v3790
      %v3792 = vrot.slane %v3791, 4
      %v3793 = vadd.f32 %v3791, %v3792
      %v3794 = vrot.slane %v3793, 2
      %v3795 = vadd.f32 %v3793, %v3794
      %v3796 = vrot.slane %v3795, 1
      %v3797 = vadd.f32 %v3795, %v3796
      %vm3798 = vcmp.gt.f32.partialorder %v3674, 0.0
      %v3799 = vsel %vm3798, %v3674, 1.0
      %v3800 = vrcp.pop %v3799
      %v3801 = vmul.f32 %v3797, %v3800
      %v3802 = vsel %vm3798, %v3801, 0.0
      %v3803 = vmul.f32 %v3802, %v3682
      %v3804 = vmul.f32 %v3802, %v3683
      %v3805 = vadd.f32 %v3787, %v3803
      %v3806 = vadd.f32 %v3788, %v3804
      %v3807 = vmul.f32 %v458, %v3805
      %v3808 = vmul.f32 %v459, %v3806
      %3809 = vmatprep.subr.mxu0 0.0
      %3810 = vmatpush1.msra.mxu0 %v3807
      %3811 = vmatprep.subr.mxu0 0.0
      %3812 = vmatpush1.msra.mxu0 %v3808
      %3813 = vmatprep.subr.mxu0 0.0
      %3814 = vmatpush1.msra.mxu0 0.0
      %3815 = vmatprep.subr.mxu0 0.0
      %3816 = vmatpush1.msra.mxu0 0.0
      %3817 = vmatprep.subr.mxu0 0.0
      %3818 = vmatpush1.msra.mxu0 0.0
      %3819 = vmatprep.subr.mxu0 0.0
      %3820 = vmatpush1.msra.mxu0 0.0
      %3821 = vmatprep.subr.mxu0 0.0
      %3822 = vmatpush1.msra.mxu0 0.0
      %3823 = vmatprep.subr.mxu0 0.0
      %3824 = vmatpush1.msra.mxu0 0.0
      %3825 = vmatprep.subr.mxu0 0.0
      %3826 = vmatpush1.msra.mxu0 0.0
      %3827 = vmatprep.subr.mxu0 0.0
      %3828 = vmatpush1.msra.mxu0 0.0
      %3829 = vmatprep.subr.mxu0 0.0
      %3830 = vmatpush1.msra.mxu0 0.0
      %3831 = vmatprep.subr.mxu0 0.0
      %3832 = vmatpush1.msra.mxu0 0.0
      %3833 = vmatprep.subr.mxu0 0.0
      %3834 = vmatpush1.msra.mxu0 0.0
      %3835 = vmatprep.subr.mxu0 0.0
      %3836 = vmatpush1.msra.mxu0 0.0
      %3837 = vmatprep.subr.mxu0 0.0
      %3838 = vmatpush1.msra.mxu0 0.0
      %3839 = vmatprep.subr.mxu0 0.0
      %3840 = vmatpush1.msra.mxu0 0.0
      %3841 = vmatprep.subr.mxu0 0.0
      %3842 = vmatpush1.msra.mxu0 0.0
      %3843 = vmatprep.subr.mxu0 0.0
      %3844 = vmatpush1.msra.mxu0 0.0
      %3845 = vmatprep.subr.mxu0 0.0
      %3846 = vmatpush1.msra.mxu0 0.0
      %3847 = vmatprep.subr.mxu0 0.0
      %3848 = vmatpush1.msra.mxu0 0.0
      %3849 = vmatprep.subr.mxu0 0.0
      %3850 = vmatpush1.msra.mxu0 0.0
      %3851 = vmatprep.subr.mxu0 0.0
      %3852 = vmatpush1.msra.mxu0 0.0
      %3853 = vmatprep.subr.mxu0 0.0
      %3854 = vmatpush1.msra.mxu0 0.0
      %3855 = vmatprep.subr.mxu0 0.0
      %3856 = vmatpush1.msra.mxu0 0.0
      %3857 = vmatprep.subr.mxu0 0.0
      %3858 = vmatpush1.msra.mxu0 0.0
      %3859 = vmatprep.subr.mxu0 0.0
      %3860 = vmatpush1.msra.mxu0 0.0
      %3861 = vmatprep.subr.mxu0 0.0
      %3862 = vmatpush1.msra.mxu0 0.0
      %3863 = vmatprep.subr.mxu0 0.0
      %3864 = vmatpush1.msra.mxu0 0.0
      %3865 = vmatprep.subr.mxu0 0.0
      %3866 = vmatpush1.msra.mxu0 0.0
      %3867 = vmatprep.subr.mxu0 0.0
      %3868 = vmatpush1.msra.mxu0 0.0
      %3869 = vmatprep.subr.mxu0 0.0
      %3870 = vmatpush1.msra.mxu0 0.0
      %3871 = vmatprep.subr.mxu0 0.0
      %3872 = vmatpush1.msra.mxu0 0.0
      %3873 = vmatprep.mubr.f32.mxu0 0.0
      %3874 = vmatmul.mubr.f32.gmra.mrb[0].mxu0 %v483
      %v3875 = vpop.f32.mrb[0].mxu0
      %v3876 = vadd.f32 0.0, %v3875
      %v3877 = vpop.f32.mrb[0].mxu0
      %3878 = vmatprep.mubr.f32.mxu0 0.0
      %3879 = vmatmul.mubr.f32.gmra.mrb[0].mxu0 %v486
      %v3880 = vpop.f32.mrb[0].mxu0
      %v3881 = vadd.f32 0.0, %v3880
      %v3882 = vpop.f32.mrb[0].mxu0
      %3883 = vdwg.mxu0
      %v3884 = vmul.f32 %v391, %v3876
      %v3885 = vmul.f32 %v392, %v3881
      %v3886 = vmul.f32 %v464, %v3805
      %v3887 = vmul.f32 %v465, %v3806
      %v3888 = vadd.f32 %v3884, %v3886
      %v3889 = vadd.f32 %v3885, %v3887
      %v3890 = vmul.f32 %v3805, %v3888
      %v3891 = vmul.f32 %v3806, %v3889
      %v3892 = vadd.f32 %v3890, %v3891
      %v3893 = vrot.slane %v3892, 4
      %v3894 = vadd.f32 %v3892, %v3893
      %v3895 = vrot.slane %v3894, 2
      %v3896 = vadd.f32 %v3894, %v3895
      %v3897 = vrot.slane %v3896, 1
      %v3898 = vadd.f32 %v3896, %v3897
      %vm3899 = vcmp.gt.f32.partialorder %v3898, 0.0
      %v3900 = vsel %vm3899, %v3898, 1.0
      %v3901 = vrcp.pop %v3900
      %v3902 = vmul.f32 %v3797, %v3901
      %v3903 = vsel %vm3899, %v3902, 0.0
      %v3904 = vmul.f32 %v3903, %v3805
      %v3905 = vmul.f32 %v3903, %v3806
      %v3906 = vadd.f32 %v3783, %v3904
      %v3907 = vadd.f32 %v3784, %v3905
      %v3908 = vmul.f32 %v3903, %v3888
      %v3909 = vmul.f32 %v3903, %v3889
      %v3910 = vsub.f32 %v3787, %v3908
      %v3911 = vsub.f32 %v3788, %v3909
      %v3912 = vmul.f32 %v3910, %v3910
      %v3913 = vmul.f32 %v3911, %v3911
      %v3914 = vadd.f32 %v3912, %v3913
      %v3915 = vrot.slane %v3914, 4
      %v3916 = vadd.f32 %v3914, %v3915
      %v3917 = vrot.slane %v3916, 2
      %v3918 = vadd.f32 %v3916, %v3917
      %v3919 = vrot.slane %v3918, 1
      %v3920 = vadd.f32 %v3918, %v3919
      %vm3921 = vcmp.gt.f32.partialorder %v3797, 0.0
      %v3922 = vsel %vm3921, %v3797, 1.0
      %v3923 = vrcp.pop %v3922
      %v3924 = vmul.f32 %v3920, %v3923
      %v3925 = vsel %vm3921, %v3924, 0.0
      %v3926 = vmul.f32 %v3925, %v3805
      %v3927 = vmul.f32 %v3925, %v3806
      %v3928 = vadd.f32 %v3910, %v3926
      %v3929 = vadd.f32 %v3911, %v3927
      %v3930 = vmul.f32 %v458, %v3928
      %v3931 = vmul.f32 %v459, %v3929
      %3932 = vmatprep.subr.mxu0 0.0
      %3933 = vmatpush1.msra.mxu0 %v3930
      %3934 = vmatprep.subr.mxu0 0.0
      %3935 = vmatpush1.msra.mxu0 %v3931
      %3936 = vmatprep.subr.mxu0 0.0
      %3937 = vmatpush1.msra.mxu0 0.0
      %3938 = vmatprep.subr.mxu0 0.0
      %3939 = vmatpush1.msra.mxu0 0.0
      %3940 = vmatprep.subr.mxu0 0.0
      %3941 = vmatpush1.msra.mxu0 0.0
      %3942 = vmatprep.subr.mxu0 0.0
      %3943 = vmatpush1.msra.mxu0 0.0
      %3944 = vmatprep.subr.mxu0 0.0
      %3945 = vmatpush1.msra.mxu0 0.0
      %3946 = vmatprep.subr.mxu0 0.0
      %3947 = vmatpush1.msra.mxu0 0.0
      %3948 = vmatprep.subr.mxu0 0.0
      %3949 = vmatpush1.msra.mxu0 0.0
      %3950 = vmatprep.subr.mxu0 0.0
      %3951 = vmatpush1.msra.mxu0 0.0
      %3952 = vmatprep.subr.mxu0 0.0
      %3953 = vmatpush1.msra.mxu0 0.0
      %3954 = vmatprep.subr.mxu0 0.0
      %3955 = vmatpush1.msra.mxu0 0.0
      %3956 = vmatprep.subr.mxu0 0.0
      %3957 = vmatpush1.msra.mxu0 0.0
      %3958 = vmatprep.subr.mxu0 0.0
      %3959 = vmatpush1.msra.mxu0 0.0
      %3960 = vmatprep.subr.mxu0 0.0
      %3961 = vmatpush1.msra.mxu0 0.0
      %3962 = vmatprep.subr.mxu0 0.0
      %3963 = vmatpush1.msra.mxu0 0.0
      %3964 = vmatprep.subr.mxu0 0.0
      %3965 = vmatpush1.msra.mxu0 0.0
      %3966 = vmatprep.subr.mxu0 0.0
      %3967 = vmatpush1.msra.mxu0 0.0
      %3968 = vmatprep.subr.mxu0 0.0
      %3969 = vmatpush1.msra.mxu0 0.0
      %3970 = vmatprep.subr.mxu0 0.0
      %3971 = vmatpush1.msra.mxu0 0.0
      %3972 = vmatprep.subr.mxu0 0.0
      %3973 = vmatpush1.msra.mxu0 0.0
      %3974 = vmatprep.subr.mxu0 0.0
      %3975 = vmatpush1.msra.mxu0 0.0
      %3976 = vmatprep.subr.mxu0 0.0
      %3977 = vmatpush1.msra.mxu0 0.0
      %3978 = vmatprep.subr.mxu0 0.0
      %3979 = vmatpush1.msra.mxu0 0.0
      %3980 = vmatprep.subr.mxu0 0.0
      %3981 = vmatpush1.msra.mxu0 0.0
      %3982 = vmatprep.subr.mxu0 0.0
      %3983 = vmatpush1.msra.mxu0 0.0
      %3984 = vmatprep.subr.mxu0 0.0
      %3985 = vmatpush1.msra.mxu0 0.0
      %3986 = vmatprep.subr.mxu0 0.0
      %3987 = vmatpush1.msra.mxu0 0.0
      %3988 = vmatprep.subr.mxu0 0.0
      %3989 = vmatpush1.msra.mxu0 0.0
      %3990 = vmatprep.subr.mxu0 0.0
      %3991 = vmatpush1.msra.mxu0 0.0
      %3992 = vmatprep.subr.mxu0 0.0
      %3993 = vmatpush1.msra.mxu0 0.0
      %3994 = vmatprep.subr.mxu0 0.0
      %3995 = vmatpush1.msra.mxu0 0.0
      %3996 = vmatprep.mubr.f32.mxu0 0.0
      %3997 = vmatmul.mubr.f32.gmra.mrb[0].mxu0 %v483
      %v3998 = vpop.f32.mrb[0].mxu0
      %v3999 = vadd.f32 0.0, %v3998
      %v4000 = vpop.f32.mrb[0].mxu0
      %4001 = vmatprep.mubr.f32.mxu0 0.0
      %4002 = vmatmul.mubr.f32.gmra.mrb[0].mxu0 %v486
      %v4003 = vpop.f32.mrb[0].mxu0
      %v4004 = vadd.f32 0.0, %v4003
      %v4005 = vpop.f32.mrb[0].mxu0
      %4006 = vdwg.mxu0
      %v4007 = vmul.f32 %v391, %v3999
      %v4008 = vmul.f32 %v392, %v4004
      %v4009 = vmul.f32 %v464, %v3928
      %v4010 = vmul.f32 %v465, %v3929
      %v4011 = vadd.f32 %v4007, %v4009
      %v4012 = vadd.f32 %v4008, %v4010
      %v4013 = vmul.f32 %v3928, %v4011
      %v4014 = vmul.f32 %v3929, %v4012
      %v4015 = vadd.f32 %v4013, %v4014
      %v4016 = vrot.slane %v4015, 4
      %v4017 = vadd.f32 %v4015, %v4016
      %v4018 = vrot.slane %v4017, 2
      %v4019 = vadd.f32 %v4017, %v4018
      %v4020 = vrot.slane %v4019, 1
      %v4021 = vadd.f32 %v4019, %v4020
      %vm4022 = vcmp.gt.f32.partialorder %v4021, 0.0
      %v4023 = vsel %vm4022, %v4021, 1.0
      %v4024 = vrcp.pop %v4023
      %v4025 = vmul.f32 %v3920, %v4024
      %v4026 = vsel %vm4022, %v4025, 0.0
      %v4027 = vmul.f32 %v4026, %v3928
      %v4028 = vmul.f32 %v4026, %v3929
      %v4029 = vadd.f32 %v3906, %v4027
      %v4030 = vadd.f32 %v3907, %v4028
      %v4031 = vmul.f32 %v4026, %v4011
      %v4032 = vmul.f32 %v4026, %v4012
      %v4033 = vsub.f32 %v3910, %v4031
      %v4034 = vsub.f32 %v3911, %v4032
      %v4035 = vmul.f32 %v4033, %v4033
      %v4036 = vmul.f32 %v4034, %v4034
      %v4037 = vadd.f32 %v4035, %v4036
      %v4038 = vrot.slane %v4037, 4
      %v4039 = vadd.f32 %v4037, %v4038
      %v4040 = vrot.slane %v4039, 2
      %v4041 = vadd.f32 %v4039, %v4040
      %v4042 = vrot.slane %v4041, 1
      %v4043 = vadd.f32 %v4041, %v4042
      %vm4044 = vcmp.gt.f32.partialorder %v3920, 0.0
      %v4045 = vsel %vm4044, %v3920, 1.0
      %v4046 = vrcp.pop %v4045
      %v4047 = vmul.f32 %v4043, %v4046
      %v4048 = vsel %vm4044, %v4047, 0.0
      %v4049 = vmul.f32 %v4048, %v3928
      %v4050 = vmul.f32 %v4048, %v3929
      %v4051 = vadd.f32 %v4033, %v4049
      %v4052 = vadd.f32 %v4034, %v4050
      %v4053 = vmul.f32 %v458, %v4051
      %v4054 = vmul.f32 %v459, %v4052
      %4055 = vmatprep.subr.mxu0 0.0
      %4056 = vmatpush1.msra.mxu0 %v4053
      %4057 = vmatprep.subr.mxu0 0.0
      %4058 = vmatpush1.msra.mxu0 %v4054
      %4059 = vmatprep.subr.mxu0 0.0
      %4060 = vmatpush1.msra.mxu0 0.0
      %4061 = vmatprep.subr.mxu0 0.0
      %4062 = vmatpush1.msra.mxu0 0.0
      %4063 = vmatprep.subr.mxu0 0.0
      %4064 = vmatpush1.msra.mxu0 0.0
      %4065 = vmatprep.subr.mxu0 0.0
      %4066 = vmatpush1.msra.mxu0 0.0
      %4067 = vmatprep.subr.mxu0 0.0
      %4068 = vmatpush1.msra.mxu0 0.0
      %4069 = vmatprep.subr.mxu0 0.0
      %4070 = vmatpush1.msra.mxu0 0.0
      %4071 = vmatprep.subr.mxu0 0.0
      %4072 = vmatpush1.msra.mxu0 0.0
      %4073 = vmatprep.subr.mxu0 0.0
      %4074 = vmatpush1.msra.mxu0 0.0
      %4075 = vmatprep.subr.mxu0 0.0
      %4076 = vmatpush1.msra.mxu0 0.0
      %4077 = vmatprep.subr.mxu0 0.0
      %4078 = vmatpush1.msra.mxu0 0.0
      %4079 = vmatprep.subr.mxu0 0.0
      %4080 = vmatpush1.msra.mxu0 0.0
      %4081 = vmatprep.subr.mxu0 0.0
      %4082 = vmatpush1.msra.mxu0 0.0
      %4083 = vmatprep.subr.mxu0 0.0
      %4084 = vmatpush1.msra.mxu0 0.0
      %4085 = vmatprep.subr.mxu0 0.0
      %4086 = vmatpush1.msra.mxu0 0.0
      %4087 = vmatprep.subr.mxu0 0.0
      %4088 = vmatpush1.msra.mxu0 0.0
      %4089 = vmatprep.subr.mxu0 0.0
      %4090 = vmatpush1.msra.mxu0 0.0
      %4091 = vmatprep.subr.mxu0 0.0
      %4092 = vmatpush1.msra.mxu0 0.0
      %4093 = vmatprep.subr.mxu0 0.0
      %4094 = vmatpush1.msra.mxu0 0.0
      %4095 = vmatprep.subr.mxu0 0.0
      %4096 = vmatpush1.msra.mxu0 0.0
      %4097 = vmatprep.subr.mxu0 0.0
      %4098 = vmatpush1.msra.mxu0 0.0
      %4099 = vmatprep.subr.mxu0 0.0
      %4100 = vmatpush1.msra.mxu0 0.0
      %4101 = vmatprep.subr.mxu0 0.0
      %4102 = vmatpush1.msra.mxu0 0.0
      %4103 = vmatprep.subr.mxu0 0.0
      %4104 = vmatpush1.msra.mxu0 0.0
      %4105 = vmatprep.subr.mxu0 0.0
      %4106 = vmatpush1.msra.mxu0 0.0
      %4107 = vmatprep.subr.mxu0 0.0
      %4108 = vmatpush1.msra.mxu0 0.0
      %4109 = vmatprep.subr.mxu0 0.0
      %4110 = vmatpush1.msra.mxu0 0.0
      %4111 = vmatprep.subr.mxu0 0.0
      %4112 = vmatpush1.msra.mxu0 0.0
      %4113 = vmatprep.subr.mxu0 0.0
      %4114 = vmatpush1.msra.mxu0 0.0
      %4115 = vmatprep.subr.mxu0 0.0
      %4116 = vmatpush1.msra.mxu0 0.0
      %4117 = vmatprep.subr.mxu0 0.0
      %4118 = vmatpush1.msra.mxu0 0.0
      %4119 = vmatprep.mubr.f32.mxu0 0.0
      %4120 = vmatmul.mubr.f32.gmra.mrb[0].mxu0 %v483
      %v4121 = vpop.f32.mrb[0].mxu0
      %v4122 = vadd.f32 0.0, %v4121
      %v4123 = vpop.f32.mrb[0].mxu0
      %4124 = vmatprep.mubr.f32.mxu0 0.0
      %4125 = vmatmul.mubr.f32.gmra.mrb[0].mxu0 %v486
      %v4126 = vpop.f32.mrb[0].mxu0
      %v4127 = vadd.f32 0.0, %v4126
      %v4128 = vpop.f32.mrb[0].mxu0
      %4129 = vdwg.mxu0
      %v4130 = vmul.f32 %v391, %v4122
      %v4131 = vmul.f32 %v392, %v4127
      %v4132 = vmul.f32 %v464, %v4051
      %v4133 = vmul.f32 %v465, %v4052
      %v4134 = vadd.f32 %v4130, %v4132
      %v4135 = vadd.f32 %v4131, %v4133
      %v4136 = vmul.f32 %v4051, %v4134
      %v4137 = vmul.f32 %v4052, %v4135
      %v4138 = vadd.f32 %v4136, %v4137
      %v4139 = vrot.slane %v4138, 4
      %v4140 = vadd.f32 %v4138, %v4139
      %v4141 = vrot.slane %v4140, 2
      %v4142 = vadd.f32 %v4140, %v4141
      %v4143 = vrot.slane %v4142, 1
      %v4144 = vadd.f32 %v4142, %v4143
      %vm4145 = vcmp.gt.f32.partialorder %v4144, 0.0
      %v4146 = vsel %vm4145, %v4144, 1.0
      %v4147 = vrcp.pop %v4146
      %v4148 = vmul.f32 %v4043, %v4147
      %v4149 = vsel %vm4145, %v4148, 0.0
      %v4150 = vmul.f32 %v4149, %v4051
      %v4151 = vmul.f32 %v4149, %v4052
      %v4152 = vadd.f32 %v4029, %v4150
      %v4153 = vadd.f32 %v4030, %v4151
      %v4154 = vmul.f32 %v4149, %v4134
      %v4155 = vmul.f32 %v4149, %v4135
      %v4156 = vsub.f32 %v4033, %v4154
      %v4157 = vsub.f32 %v4034, %v4155
      %v4158 = vmul.f32 %v4156, %v4156
      %v4159 = vmul.f32 %v4157, %v4157
      %v4160 = vadd.f32 %v4158, %v4159
      %v4161 = vrot.slane %v4160, 4
      %v4162 = vadd.f32 %v4160, %v4161
      %v4163 = vrot.slane %v4162, 2
      %v4164 = vadd.f32 %v4162, %v4163
      %v4165 = vrot.slane %v4164, 1
      %v4166 = vadd.f32 %v4164, %v4165
      %vm4167 = vcmp.gt.f32.partialorder %v4043, 0.0
      %v4168 = vsel %vm4167, %v4043, 1.0
      %v4169 = vrcp.pop %v4168
      %v4170 = vmul.f32 %v4166, %v4169
      %v4171 = vsel %vm4167, %v4170, 0.0
      %v4172 = vmul.f32 %v4171, %v4051
      %v4173 = vmul.f32 %v4171, %v4052
      %v4174 = vadd.f32 %v4156, %v4172
      %v4175 = vadd.f32 %v4157, %v4173
      %v4176 = vmul.f32 %v458, %v4174
      %v4177 = vmul.f32 %v459, %v4175
      %4178 = vmatprep.subr.mxu0 0.0
      %4179 = vmatpush1.msra.mxu0 %v4176
      %4180 = vmatprep.subr.mxu0 0.0
      %4181 = vmatpush1.msra.mxu0 %v4177
      %4182 = vmatprep.subr.mxu0 0.0
      %4183 = vmatpush1.msra.mxu0 0.0
      %4184 = vmatprep.subr.mxu0 0.0
      %4185 = vmatpush1.msra.mxu0 0.0
      %4186 = vmatprep.subr.mxu0 0.0
      %4187 = vmatpush1.msra.mxu0 0.0
      %4188 = vmatprep.subr.mxu0 0.0
      %4189 = vmatpush1.msra.mxu0 0.0
      %4190 = vmatprep.subr.mxu0 0.0
      %4191 = vmatpush1.msra.mxu0 0.0
      %4192 = vmatprep.subr.mxu0 0.0
      %4193 = vmatpush1.msra.mxu0 0.0
      %4194 = vmatprep.subr.mxu0 0.0
      %4195 = vmatpush1.msra.mxu0 0.0
      %4196 = vmatprep.subr.mxu0 0.0
      %4197 = vmatpush1.msra.mxu0 0.0
      %4198 = vmatprep.subr.mxu0 0.0
      %4199 = vmatpush1.msra.mxu0 0.0
      %4200 = vmatprep.subr.mxu0 0.0
      %4201 = vmatpush1.msra.mxu0 0.0
      %4202 = vmatprep.subr.mxu0 0.0
      %4203 = vmatpush1.msra.mxu0 0.0
      %4204 = vmatprep.subr.mxu0 0.0
      %4205 = vmatpush1.msra.mxu0 0.0
      %4206 = vmatprep.subr.mxu0 0.0
      %4207 = vmatpush1.msra.mxu0 0.0
      %4208 = vmatprep.subr.mxu0 0.0
      %4209 = vmatpush1.msra.mxu0 0.0
      %4210 = vmatprep.subr.mxu0 0.0
      %4211 = vmatpush1.msra.mxu0 0.0
      %4212 = vmatprep.subr.mxu0 0.0
      %4213 = vmatpush1.msra.mxu0 0.0
      %4214 = vmatprep.subr.mxu0 0.0
      %4215 = vmatpush1.msra.mxu0 0.0
      %4216 = vmatprep.subr.mxu0 0.0
      %4217 = vmatpush1.msra.mxu0 0.0
      %4218 = vmatprep.subr.mxu0 0.0
      %4219 = vmatpush1.msra.mxu0 0.0
      %4220 = vmatprep.subr.mxu0 0.0
      %4221 = vmatpush1.msra.mxu0 0.0
      %4222 = vmatprep.subr.mxu0 0.0
      %4223 = vmatpush1.msra.mxu0 0.0
      %4224 = vmatprep.subr.mxu0 0.0
      %4225 = vmatpush1.msra.mxu0 0.0
      %4226 = vmatprep.subr.mxu0 0.0
      %4227 = vmatpush1.msra.mxu0 0.0
      %4228 = vmatprep.subr.mxu0 0.0
      %4229 = vmatpush1.msra.mxu0 0.0
      %4230 = vmatprep.subr.mxu0 0.0
      %4231 = vmatpush1.msra.mxu0 0.0
      %4232 = vmatprep.subr.mxu0 0.0
      %4233 = vmatpush1.msra.mxu0 0.0
      %4234 = vmatprep.subr.mxu0 0.0
      %4235 = vmatpush1.msra.mxu0 0.0
      %4236 = vmatprep.subr.mxu0 0.0
      %4237 = vmatpush1.msra.mxu0 0.0
      %4238 = vmatprep.subr.mxu0 0.0
      %4239 = vmatpush1.msra.mxu0 0.0
      %4240 = vmatprep.subr.mxu0 0.0
      %4241 = vmatpush1.msra.mxu0 0.0
      %4242 = vmatprep.mubr.f32.mxu0 0.0
      %4243 = vmatmul.mubr.f32.gmra.mrb[0].mxu0 %v483
      %v4244 = vpop.f32.mrb[0].mxu0
      %v4245 = vadd.f32 0.0, %v4244
      %v4246 = vpop.f32.mrb[0].mxu0
      %4247 = vmatprep.mubr.f32.mxu0 0.0
      %4248 = vmatmul.mubr.f32.gmra.mrb[0].mxu0 %v486
      %v4249 = vpop.f32.mrb[0].mxu0
      %v4250 = vadd.f32 0.0, %v4249
      %v4251 = vpop.f32.mrb[0].mxu0
      %4252 = vdwg.mxu0
      %v4253 = vmul.f32 %v391, %v4245
      %v4254 = vmul.f32 %v392, %v4250
      %v4255 = vmul.f32 %v464, %v4174
      %v4256 = vmul.f32 %v465, %v4175
      %v4257 = vadd.f32 %v4253, %v4255
      %v4258 = vadd.f32 %v4254, %v4256
      %v4259 = vmul.f32 %v4174, %v4257
      %v4260 = vmul.f32 %v4175, %v4258
      %v4261 = vadd.f32 %v4259, %v4260
      %v4262 = vrot.slane %v4261, 4
      %v4263 = vadd.f32 %v4261, %v4262
      %v4264 = vrot.slane %v4263, 2
      %v4265 = vadd.f32 %v4263, %v4264
      %v4266 = vrot.slane %v4265, 1
      %v4267 = vadd.f32 %v4265, %v4266
      %vm4268 = vcmp.gt.f32.partialorder %v4267, 0.0
      %v4269 = vsel %vm4268, %v4267, 1.0
      %v4270 = vrcp.pop %v4269
      %v4271 = vmul.f32 %v4166, %v4270
      %v4272 = vsel %vm4268, %v4271, 0.0
      %v4273 = vmul.f32 %v4272, %v4174
      %v4274 = vmul.f32 %v4272, %v4175
      %v4275 = vadd.f32 %v4152, %v4273
      %v4276 = vadd.f32 %v4153, %v4274
      %v4277 = vmul.f32 %v4272, %v4257
      %v4278 = vmul.f32 %v4272, %v4258
      %v4279 = vsub.f32 %v4156, %v4277
      %v4280 = vsub.f32 %v4157, %v4278
      %v4281 = vmul.f32 %v4279, %v4279
      %v4282 = vmul.f32 %v4280, %v4280
      %v4283 = vadd.f32 %v4281, %v4282
      %v4284 = vrot.slane %v4283, 4
      %v4285 = vadd.f32 %v4283, %v4284
      %v4286 = vrot.slane %v4285, 2
      %v4287 = vadd.f32 %v4285, %v4286
      %v4288 = vrot.slane %v4287, 1
      %v4289 = vadd.f32 %v4287, %v4288
      %vm4290 = vcmp.gt.f32.partialorder %v4166, 0.0
      %v4291 = vsel %vm4290, %v4166, 1.0
      %v4292 = vrcp.pop %v4291
      %v4293 = vmul.f32 %v4289, %v4292
      %v4294 = vsel %vm4290, %v4293, 0.0
      %v4295 = vmul.f32 %v4294, %v4174
      %v4296 = vmul.f32 %v4294, %v4175
      %v4297 = vadd.f32 %v4279, %v4295
      %v4298 = vadd.f32 %v4280, %v4296
      %v4299 = vmul.f32 %v458, %v4297
      %v4300 = vmul.f32 %v459, %v4298
      %4301 = vmatprep.subr.mxu0 0.0
      %4302 = vmatpush1.msra.mxu0 %v4299
      %4303 = vmatprep.subr.mxu0 0.0
      %4304 = vmatpush1.msra.mxu0 %v4300
      %4305 = vmatprep.subr.mxu0 0.0
      %4306 = vmatpush1.msra.mxu0 0.0
      %4307 = vmatprep.subr.mxu0 0.0
      %4308 = vmatpush1.msra.mxu0 0.0
      %4309 = vmatprep.subr.mxu0 0.0
      %4310 = vmatpush1.msra.mxu0 0.0
      %4311 = vmatprep.subr.mxu0 0.0
      %4312 = vmatpush1.msra.mxu0 0.0
      %4313 = vmatprep.subr.mxu0 0.0
      %4314 = vmatpush1.msra.mxu0 0.0
      %4315 = vmatprep.subr.mxu0 0.0
      %4316 = vmatpush1.msra.mxu0 0.0
      %4317 = vmatprep.subr.mxu0 0.0
      %4318 = vmatpush1.msra.mxu0 0.0
      %4319 = vmatprep.subr.mxu0 0.0
      %4320 = vmatpush1.msra.mxu0 0.0
      %4321 = vmatprep.subr.mxu0 0.0
      %4322 = vmatpush1.msra.mxu0 0.0
      %4323 = vmatprep.subr.mxu0 0.0
      %4324 = vmatpush1.msra.mxu0 0.0
      %4325 = vmatprep.subr.mxu0 0.0
      %4326 = vmatpush1.msra.mxu0 0.0
      %4327 = vmatprep.subr.mxu0 0.0
      %4328 = vmatpush1.msra.mxu0 0.0
      %4329 = vmatprep.subr.mxu0 0.0
      %4330 = vmatpush1.msra.mxu0 0.0
      %4331 = vmatprep.subr.mxu0 0.0
      %4332 = vmatpush1.msra.mxu0 0.0
      %4333 = vmatprep.subr.mxu0 0.0
      %4334 = vmatpush1.msra.mxu0 0.0
      %4335 = vmatprep.subr.mxu0 0.0
      %4336 = vmatpush1.msra.mxu0 0.0
      %4337 = vmatprep.subr.mxu0 0.0
      %4338 = vmatpush1.msra.mxu0 0.0
      %4339 = vmatprep.subr.mxu0 0.0
      %4340 = vmatpush1.msra.mxu0 0.0
      %4341 = vmatprep.subr.mxu0 0.0
      %4342 = vmatpush1.msra.mxu0 0.0
      %4343 = vmatprep.subr.mxu0 0.0
      %4344 = vmatpush1.msra.mxu0 0.0
      %4345 = vmatprep.subr.mxu0 0.0
      %4346 = vmatpush1.msra.mxu0 0.0
      %4347 = vmatprep.subr.mxu0 0.0
      %4348 = vmatpush1.msra.mxu0 0.0
      %4349 = vmatprep.subr.mxu0 0.0
      %4350 = vmatpush1.msra.mxu0 0.0
      %4351 = vmatprep.subr.mxu0 0.0
      %4352 = vmatpush1.msra.mxu0 0.0
      %4353 = vmatprep.subr.mxu0 0.0
      %4354 = vmatpush1.msra.mxu0 0.0
      %4355 = vmatprep.subr.mxu0 0.0
      %4356 = vmatpush1.msra.mxu0 0.0
      %4357 = vmatprep.subr.mxu0 0.0
      %4358 = vmatpush1.msra.mxu0 0.0
      %4359 = vmatprep.subr.mxu0 0.0
      %4360 = vmatpush1.msra.mxu0 0.0
      %4361 = vmatprep.subr.mxu0 0.0
      %4362 = vmatpush1.msra.mxu0 0.0
      %4363 = vmatprep.subr.mxu0 0.0
      %4364 = vmatpush1.msra.mxu0 0.0
      %4365 = vmatprep.mubr.f32.mxu0 0.0
      %4366 = vmatmul.mubr.f32.gmra.mrb[0].mxu0 %v483
      %v4367 = vpop.f32.mrb[0].mxu0
      %v4368 = vadd.f32 0.0, %v4367
      %v4369 = vpop.f32.mrb[0].mxu0
      %4370 = vmatprep.mubr.f32.mxu0 0.0
      %4371 = vmatmul.mubr.f32.gmra.mrb[0].mxu0 %v486
      %v4372 = vpop.f32.mrb[0].mxu0
      %v4373 = vadd.f32 0.0, %v4372
      %v4374 = vpop.f32.mrb[0].mxu0
      %4375 = vdwg.mxu0
      %v4376 = vmul.f32 %v391, %v4368
      %v4377 = vmul.f32 %v392, %v4373
      %v4378 = vmul.f32 %v464, %v4297
      %v4379 = vmul.f32 %v465, %v4298
      %v4380 = vadd.f32 %v4376, %v4378
      %v4381 = vadd.f32 %v4377, %v4379
      %v4382 = vmul.f32 %v4297, %v4380
      %v4383 = vmul.f32 %v4298, %v4381
      %v4384 = vadd.f32 %v4382, %v4383
      %v4385 = vrot.slane %v4384, 4
      %v4386 = vadd.f32 %v4384, %v4385
      %v4387 = vrot.slane %v4386, 2
      %v4388 = vadd.f32 %v4386, %v4387
      %v4389 = vrot.slane %v4388, 1
      %v4390 = vadd.f32 %v4388, %v4389
      %vm4391 = vcmp.gt.f32.partialorder %v4390, 0.0
      %v4392 = vsel %vm4391, %v4390, 1.0
      %v4393 = vrcp.pop %v4392
      %v4394 = vmul.f32 %v4289, %v4393
      %v4395 = vsel %vm4391, %v4394, 0.0
      %v4396 = vmul.f32 %v4395, %v4297
      %v4397 = vmul.f32 %v4395, %v4298
      %v4398 = vadd.f32 %v4275, %v4396
      %v4399 = vadd.f32 %v4276, %v4397
      %v4400 = vmul.f32 %v4398, %v391
      %v4401 = vmul.f32 %v4399, %v392
      %v4402 = vmul.f32 %v4400, %v391
      %v4403 = vmul.f32 %v4401, %v392
      %v4404 = vmul.f32 %v4402, %v456
      %v4405 = vmul.f32 %v4403, %v456
      %v4406 = vmul.f32 %v389, %v4404
      %v4407 = vmul.f32 %v390, %v4405
      %v4408 = vadd.f32 %v4406, %v4407
      %v4409 = vrot.slane %v4408, 4
      %v4410 = vadd.f32 %v4408, %v4409
      %v4411 = vrot.slane %v4410, 2
      %v4412 = vadd.f32 %v4410, %v4411
      %v4413 = vrot.slane %v4412, 1
      %v4414 = vadd.f32 %v4412, %v4413
      %4415 = vst [vmem:[%s381] sm:$0x1] %v4414
      %v4416 = vmul.f32 %v444, %v4404
      %v4417 = vmul.f32 %v445, %v4405
      %v4418 = vadd.f32 %v4416, %v4417
      %v4419 = vrot.slane %v4418, 4
      %v4420 = vadd.f32 %v4418, %v4419
      %v4421 = vrot.slane %v4420, 2
      %v4422 = vadd.f32 %v4420, %v4421
      %v4423 = vrot.slane %v4422, 1
      %v4424 = vadd.f32 %v4422, %v4423
      %4425 = vst [vmem:[%s384] sm:$0x1] %v4424
      %p4426 = scmp.lt.s32.totalorder %s20, 1
      %s4427 = scalar_select %p4426, %s20, 1
      %s4428 = scalar_lea.vmem %s7, %s4427
      %p4429 = scmp.lt.s32.totalorder %s20, 1
      %s4430 = scalar_select %p4429, %s20, 1
      %s4431 = scalar_lea.vmem %s8, %s4430
      // Predicated region
      $region49: #{gp_interpolate_forward.1} parent=47 // pred_check
        %p4432 = pneg %p210
      $region50: #{gp_interpolate_forward.1} parent=47 // pred_check_branch
        %4434 = sbr.rel (%p4432) target = $region52
      $region51: #{gp_interpolate_forward.1} parent=47 // pred_region
        _
      $region52: #{gp_interpolate_forward.1} parent=47 // pred_fallthru
        _
      // Predicated region
      $region53: #{gp_interpolate_forward.1} parent=47 // pred_check
        %p4435 = pneg %p236
      $region54: #{gp_interpolate_forward.1} parent=47 // pred_check_branch
        %4437 = sbr.rel (%p4435) target = $region56
      $region55: #{gp_interpolate_forward.1} parent=47 // pred_region
        _
      $region56: #{gp_interpolate_forward.1} parent=47 // pred_fallthru
        _
    $region48: #{gp_interpolate_forward.1} parent=5 // pred_fallthru
      _
    %p4438 = scmp.le.s32.totalorder 2, %s15
    // Predicated region
    $region57: #{gp_interpolate_forward.1} parent=5 // pred_check
      %p4439 = pneg %p4438
    $region58: #{gp_interpolate_forward.1} parent=5 // pred_check_branch
      %4441 = sbr.rel (%p4439) target = $region60
    $region59: #{gp_interpolate_forward.1} parent=5 // pred_region
      %s4442 = ssub.s32 %s15, 2
      // Predicated region
      $region61: #{gp_interpolate_forward.1} parent=59 // pred_check
        %p4443 = pneg %p216
      $region62: #{gp_interpolate_forward.1} parent=59 // pred_check_branch
        %4445 = sbr.rel (%p4443) target = $region64
      $region63: #{gp_interpolate_forward.1} parent=59 // pred_region
        %p4446 = scmp.lt.s32.totalorder %s21, 1
        %s4447 = scalar_select %p4446, %s21, 1
        %s4448 = scalar_lea.vmem %s7, %s4447
      $region64: #{gp_interpolate_forward.1} parent=59 // pred_fallthru
        _
      // Predicated region
      $region65: #{gp_interpolate_forward.1} parent=59 // pred_check
        %p4449 = pneg %p242
      $region66: #{gp_interpolate_forward.1} parent=59 // pred_check_branch
        %4451 = sbr.rel (%p4449) target = $region68
      $region67: #{gp_interpolate_forward.1} parent=59 // pred_region
        %p4452 = scmp.lt.s32.totalorder %s21, 1
        %s4453 = scalar_select %p4452, %s21, 1
        %s4454 = scalar_lea.vmem %s8, %s4453
      $region68: #{gp_interpolate_forward.1} parent=59 // pred_fallthru
        _
    $region60: #{gp_interpolate_forward.1} parent=5 // pred_fallthru
      _
  $region6: #{gp_interpolate_forward.1} parent=0 // loop_footer
    %s19 = sadd.s32 1, %s15
  $region7: #{gp_interpolate_forward.1} parent=0 // loop_footer_branch
    %14 = sbr.rel target = $region3
  $region8: #{gp_interpolate_forward.1} parent=0 // loop_exit
    _

</llo_original>
